<compile_context>
chip_gen: v5e
topology: v5e:2x2
jax: 0.10.0
libtpu: 0.0.40
codegen_flags: <defaults>
</compile_context>

<pallas_src>
import functools

import jax
import jax.numpy as jnp
import numpy as np
from jax.experimental import pallas as pl
from jax.experimental.pallas import tpu as pltpu


def _round_up(x, m):
    return ((x + m - 1) // m) * m


# ----------------------------------------------------------------------------
# Pallas kernels
# ----------------------------------------------------------------------------
def _fused_matmul_kernel(p_ref, w_ref, s_ref, t_ref, o_ref, *, apply_act):
    """o = LeakyReLU((p @ w) * s + t) — one conv layer (grouped im2col matmul)."""
    acc = jnp.dot(p_ref[...], w_ref[...], preferred_element_type=jnp.float32)
    acc = acc * s_ref[...] + t_ref[...]          # folded conv-bias + BN affine
    if apply_act:
        acc = jnp.where(acc >= 0.0, acc, jnp.float32(0.2) * acc)
    o_ref[...] = acc


def _tail_kernel(p5_ref, w5_ref, s5_ref, t5_ref,
                 sel6_ref, w6_ref, s6_ref, t6_ref,
                 w7_ref, asel_ref, b7_ref, o_ref, *, n_taps, m6, cin6):
    """Layers 5, 6, 7 fused; all intermediates stay in VMEM / vregs."""
    # ---- layer 5: conv + BN + LeakyReLU (im2col patches precomputed) ----
    a5 = jnp.dot(p5_ref[...], w5_ref[...], preferred_element_type=jnp.float32)
    a5 = a5 * s5_ref[...] + t5_ref[...]
    a5 = jnp.where(a5 >= 0.0, a5, jnp.float32(0.2) * a5)            # (M5, C5)

    # ---- layer 6: stride-2/pad-1 taps via a constant 0/1 selection matmul ----
    taps = jnp.dot(sel6_ref[...], a5, preferred_element_type=jnp.float32)
    a6 = jnp.zeros((m6, w6_ref.shape[1]), jnp.float32)
    for t in range(n_taps):
        a6 = a6 + jnp.dot(taps[t * m6:(t + 1) * m6, :],
                          w6_ref[t * cin6:(t + 1) * cin6, :],
                          preferred_element_type=jnp.float32)
    a6 = a6 * s6_ref[...] + t6_ref[...]
    a6 = jnp.where(a6 >= 0.0, a6, jnp.float32(0.2) * a6)            # (M6, C6)

    # ---- layer 7: 4x4 valid conv to 1 channel == per-image weighted sum ----
    prod = a6 * w7_ref[...]                                          # (M6, C6)
    per_img = jnp.dot(asel_ref[...], prod, preferred_element_type=jnp.float32)
    o_ref[...] = jnp.sum(per_img, axis=1, keepdims=True) + b7_ref[...]


# ----------------------------------------------------------------------------
# JAX glue: im2col, per-layer wrapper, fused tail wrapper
# ----------------------------------------------------------------------------
def _im2col(x_nhwc, kh_sz, kw_sz, stride, pad, k_pad):
    """(N,H,W,Cin) -> (N*Ho*Wo, k_pad) patches, tap order (kh, kw, ci)."""
    N, H, W, Cin = x_nhwc.shape
    Ho = (H + 2 * pad - kh_sz) // stride + 1
    Wo = (W + 2 * pad - kw_sz) // stride + 1
    xp = jnp.pad(x_nhwc, ((0, 0), (pad, pad), (pad, pad), (0, 0)))
    taps = []
    for i in range(kh_sz):
        for j in range(kw_sz):
            taps.append(xp[:, i:i + stride * (Ho - 1) + 1:stride,
                           j:j + stride * (Wo - 1) + 1:stride, :])
    p = jnp.concatenate(taps, axis=-1)                   # (N, Ho, Wo, K)
    K = kh_sz * kw_sz * Cin
    if k_pad > K:
        p = jnp.pad(p, ((0, 0), (0, 0), (0, 0), (0, k_pad - K)))
    return p.reshape(N * Ho * Wo, k_pad), Ho, Wo


def conv_bn_lrelu_layer(x_nhwc, w_oihw, bias, bn_scale, bn_shift, *,
                        stride, pad, apply_act, tile_rows=512):
    """One conv+BN+LeakyReLU layer, lane-dense grouped-row matmul kernel."""
    N, H, W, Cin = x_nhwc.shape
    Cout, _, KH, KW = w_oihw.shape

    # lane-density grouping factor (r consecutive output rows -> one kernel row)
    r = 128 // Cout if (Cout < 128 and 128 % Cout == 0) else 1
    K = KH * KW * Cin
    Kp = _round_up(K, 128 // r)                  # so r*Kp is a multiple of 128

    patches, Ho, Wo = _im2col(x_nhwc, KH, KW, stride, pad, Kp)
    M = N * Ho * Wo
    M_r = _round_up(M, r)
    if M_r > M:
        patches = jnp.pad(patches, ((0, M_r - M), (0, 0)))
    Mg, Kg, Cg = M_r // r, r * Kp, r * Cout
    G = patches.reshape(Mg, Kg)

    # block-diagonal weights (r copies of the (Kp, Cout) matrix on the diagonal)
    w_mat = jnp.transpose(w_oihw, (2, 3, 1, 0)).reshape(K, Cout).astype(jnp.float32)
    w_p = jnp.pad(w_mat, ((0, Kp - K), (0, 0)))
    w_bd = (jnp.eye(r, dtype=jnp.float32)[:, None, :, None]
            * w_p[None, :, None, :]).reshape(Kg, Cg)

    # fold conv bias into the BN affine:  y = conv*scale + (shift + scale*bias)
    scale = bn_scale.astype(jnp.float32)
    shift = (bn_shift + bn_scale * bias).astype(jnp.float32)
    s_g = jnp.tile(scale, r).reshape(1, Cg)
    t_g = jnp.tile(shift, r).reshape(1, Cg)

    TMg = min(tile_rows, _round_up(Mg, 8))
    Mg_p = _round_up(Mg, TMg)
    if Mg_p > Mg:
        G = jnp.pad(G, ((0, Mg_p - Mg), (0, 0)))

    out_g = pl.pallas_call(
        functools.partial(_fused_matmul_kernel, apply_act=apply_act),
        out_shape=jax.ShapeDtypeStruct((Mg_p, Cg), jnp.float32),
        grid=(Mg_p // TMg,),
        in_specs=[
            pl.BlockSpec((TMg, Kg), lambda i: (i, 0)),   # grouped patches tile
            pl.BlockSpec((Kg, Cg), lambda i: (0, 0)),    # block-diag weights
            pl.BlockSpec((1, Cg), lambda i: (0, 0)),     # scale
            pl.BlockSpec((1, Cg), lambda i: (0, 0)),     # shift (+ folded bias)
        ],
        out_specs=pl.BlockSpec((TMg, Cg), lambda i: (i, 0)),
        compiler_params=pltpu.CompilerParams(
            dimension_semantics=("parallel",),
            vmem_limit_bytes=32 * 1024 * 1024),
    )(G, w_bd, s_g, t_g)

    out = out_g[:Mg].reshape(M_r, Cout)[:M]
    return out.reshape(N, Ho, Wo, Cout)


def tail_layers_567(x_nhwc, p5, p6, p7):
    """Layers 5, 6, 7 fused into a single VMEM-resident Pallas kernel."""
    N, H4, W4, C4 = x_nhwc.shape
    w5, w6, w7 = p5["w"], p6["w"], p7["w"]
    C5, C6 = w5.shape[0], w6.shape[0]
    KH, KW = w5.shape[2], w5.shape[3]

    # layer-5 geometry + im2col patches
    H5 = (H4 + 2 - KH) // 2 + 1
    W5 = (W4 + 2 - KW) // 2 + 1
    M5 = N * H5 * W5
    K5 = KH * KW * C4
    K5p = _round_up(K5, 128)
    patches5, _, _ = _im2col(x_nhwc, KH, KW, 2, 1, K5p)          # (M5, K5p)

    w5_mat = jnp.transpose(w5, (2, 3, 1, 0)).reshape(K5, C5).astype(jnp.float32)
    w5_mat = jnp.pad(w5_mat, ((0, K5p - K5), (0, 0)))
    s5 = p5["scale"].astype(jnp.float32).reshape(1, C5)
    t5 = (p5["shift"] + p5["scale"] * p5["b"]).astype(jnp.float32).reshape(1, C5)

    # layer-6 geometry + constant 0/1 tap-selection matrix (stride 2, pad 1)
    H6 = (H5 + 2 - KH) // 2 + 1
    W6 = (W5 + 2 - KW) // 2 + 1
    M6 = N * H6 * W6
    n_taps = KH * KW
    sel = np.zeros((n_taps * M6, M5), np.float32)
    for kh in range(KH):
        for kw in range(KW):
            t = kh * KW + kw
            for n in range(N):
                for ho in range(H6):
                    for wo in range(W6):
                        hi, wi = 2 * ho + kh - 1, 2 * wo + kw - 1
                        if 0 <= hi < H5 and 0 <= wi < W5:
                            m6 = n * H6 * W6 + ho * W6 + wo
                            m5 = n * H5 * W5 + hi * W5 + wi
                            sel[t * M6 + m6, m5] = 1.0
    sel6 = jnp.asarray(sel)

    w6_mat = jnp.transpose(w6, (2, 3, 1, 0)).reshape(n_taps * C5, C6).astype(jnp.float32)
    s6 = p6["scale"].astype(jnp.float32).reshape(1, C6)
    t6 = (p6["shift"] + p6["scale"] * p6["b"]).astype(jnp.float32).reshape(1, C6)

    # layer 7: 4x4 valid conv -> per-image weighted sum over the (H6*W6, C6) map
    assert w7.shape == (1, C6, H6, W6), "conv7 must consume the full 4x4 map"
    w7_r = jnp.transpose(w7[0], (1, 2, 0)).reshape(H6 * W6, C6).astype(jnp.float32)
    w7_t = jnp.tile(w7_r, (N, 1))                                  # (M6, C6)
    asel = jnp.asarray(np.kron(np.eye(N, dtype=np.float32),
                               np.ones((1, H6 * W6), np.float32)))  # (N, M6)
    b7 = jnp.broadcast_to(p7["b"].astype(jnp.float32).reshape(1, 1), (N, 1))

    kernel = functools.partial(_tail_kernel, n_taps=n_taps, m6=M6, cin6=C5)
    out = pl.pallas_call(
        kernel,
        out_shape=jax.ShapeDtypeStruct((N, 1), jnp.float32),
        grid=(1,),
        in_specs=[
            pl.BlockSpec((M5, K5p), lambda i: (0, 0)),
            pl.BlockSpec((K5p, C5), lambda i: (0, 0)),
            pl.BlockSpec((1, C5), lambda i: (0, 0)),
            pl.BlockSpec((1, C5), lambda i: (0, 0)),
            pl.BlockSpec((n_taps * M6, M5), lambda i: (0, 0)),
            pl.BlockSpec((n_taps * C5, C6), lambda i: (0, 0)),
            pl.BlockSpec((1, C6), lambda i: (0, 0)),
            pl.BlockSpec((1, C6), lambda i: (0, 0)),
            pl.BlockSpec((M6, C6), lambda i: (0, 0)),
            pl.BlockSpec((N, M6), lambda i: (0, 0)),
            pl.BlockSpec((N, 1), lambda i: (0, 0)),
        ],
        out_specs=pl.BlockSpec((N, 1), lambda i: (0, 0)),
        compiler_params=pltpu.CompilerParams(
            dimension_semantics=("arbitrary",),
            vmem_limit_bytes=32 * 1024 * 1024),
    )(patches5, w5_mat, s5, t5, sel6, w6_mat, s6, t6, w7_t, asel, b7)
    return out.reshape(N, 1, 1, 1)


# ----------------------------------------------------------------------------
# Parameter construction (deterministic, synthetic; eval-mode BN folded)
# ----------------------------------------------------------------------------
_LAYER_CFG = [
    # (Cin, Cout, KH, KW, stride, pad, has_bn_act)
    (3,   8,   3, 3, 2, 1, True),
    (8,   16,  3, 3, 2, 1, True),
    (16,  32,  3, 3, 2, 1, True),
    (32,  64,  3, 3, 2, 1, True),
    (64,  128, 3, 3, 2, 1, True),
    (128, 256, 3, 3, 2, 1, True),
    (256, 1,   4, 4, 1, 0, False),
]
_BN_EPS = 1e-5


def init_params(key):
    params = []
    for (cin, cout, kh, kw, stride, pad, has_bn) in _LAYER_CFG:
        key, kw_, kb_, kg_, kbe_, km_, kv_ = jax.random.split(key, 7)
        w = 0.05 * jax.random.normal(kw_, (cout, cin, kh, kw), jnp.float32)
        b = 0.05 * jax.random.normal(kb_, (cout,), jnp.float32)
        if has_bn:
            gamma = 1.0 + 0.1 * jax.random.normal(kg_, (cout,), jnp.float32)
            beta = 0.1 * jax.random.normal(kbe_, (cout,), jnp.float32)
            rmean = 0.1 * jax.random.normal(km_, (cout,), jnp.float32)
            rvar = jax.random.uniform(kv_, (cout,), jnp.float32, 0.5, 1.5)
            scale = gamma / jnp.sqrt(rvar + _BN_EPS)
            shift = beta - rmean * scale
        else:
            scale = jnp.ones((cout,), jnp.float32)
            shift = jnp.zeros((cout,), jnp.float32)
        params.append(dict(w=w, b=b, scale=scale, shift=shift,
                           stride=stride, pad=pad, bn=has_bn))
    return params


# ----------------------------------------------------------------------------
# Full forward (Pallas) and pure-JAX reference
# ----------------------------------------------------------------------------
def discriminator_pallas(x_nchw, params):
    x = jnp.transpose(x_nchw, (0, 2, 3, 1)).astype(jnp.float32)   # NCHW -> NHWC
    for p in params[:4]:
        x = conv_bn_lrelu_layer(x, p["w"], p["b"], p["scale"], p["shift"],
                                stride=p["stride"], pad=p["pad"], apply_act=True)
    return tail_layers_567(x, params[4], params[5], params[6])    # (N,1,1,1) NCHW


def discriminator_ref(x_nchw, params):
    x = x_nchw
    for p in params:
        x = jax.lax.conv_general_dilated(
            x, p["w"], window_strides=(p["stride"], p["stride"]),
            padding=[(p["pad"], p["pad"]), (p["pad"], p["pad"])],
            dimension_numbers=("NCHW", "OIHW", "NCHW"),
            precision=jax.lax.Precision.HIGHEST)
        x = x + p["b"][None, :, None, None]
        if p["bn"]:
            x = x * p["scale"][None, :, None, None] + p["shift"][None, :, None, None]
            x = jnp.where(x >= 0.0, x, 0.2 * x)
    return x


if __name__ == "__main__":
    key = jax.random.PRNGKey(0)
    kp, kx = jax.random.split(key)
    params = init_params(kp)

    # Smallest natural input for this architecture: 6 stride-2 convs then a
    # 4x4 valid conv -> 256x256 input yields a (N, 1, 1, 1) output.
    x = jax.random.normal(kx, (2, 3, 256, 256), jnp.float32)

    fwd = jax.jit(lambda xx: discriminator_pallas(xx, params))
    ref_fwd = jax.jit(lambda xx: discriminator_ref(xx, params))

    out = jax.block_until_ready(fwd(x))
    ref = jax.block_until_ready(ref_fwd(x))

    assert out.shape == (2, 1, 1, 1), out.shape
    np.testing.assert_allclose(np.asarray(out), np.asarray(ref),
                               rtol=1e-3, atol=1e-3)
    print("KERNEL_OK")
</pallas_src>

<mosaic_0001>
module attributes {stable_mosaic.version = 11 : i64} {
  func.func @_fused_matmul_kernel(%arg0: i32, %arg1: memref<512x512xf32, #tpu.memory_space<vmem>>, %arg2: memref<512x128xf32, #tpu.memory_space<vmem>>, %arg3: memref<1x128xf32, #tpu.memory_space<vmem>>, %arg4: memref<1x128xf32, #tpu.memory_space<vmem>>, %arg5: memref<512x128xf32, #tpu.memory_space<vmem>>) attributes {dimension_semantics = [#tpu.dimension_semantics<parallel>], iteration_bounds = array<i64: 4>, scalar_prefetch = 0 : i64, scratch_operands = 0 : i64, tpu.core_type = #tpu.core_type<tc>, window_params = [{transform_indices = @transform_0, window_bounds = array<i64: 512, 512>}, {pipeline_mode = #tpu.pipeline_mode<synchronous>, transform_indices = @transform_1, window_bounds = array<i64: 512, 128>}, {pipeline_mode = #tpu.pipeline_mode<synchronous>, transform_indices = @transform_2, window_bounds = array<i64: 1, 128>}, {pipeline_mode = #tpu.pipeline_mode<synchronous>, transform_indices = @transform_3, window_bounds = array<i64: 1, 128>}, {transform_indices = @transform_4, window_bounds = array<i64: 512, 128>}]} {
    %c0 = arith.constant 0 : index
    %c0_0 = arith.constant 0 : index
    %0 = vector.load %arg1[%c0, %c0_0] : memref<512x512xf32, #tpu.memory_space<vmem>>, vector<512x512xf32>
    %c0_1 = arith.constant 0 : index
    %c0_2 = arith.constant 0 : index
    %1 = vector.load %arg2[%c0_1, %c0_2] : memref<512x128xf32, #tpu.memory_space<vmem>>, vector<512x128xf32>
    %cst = arith.constant dense<0.000000e+00> : vector<512x128xf32>
    %2 = tpu.matmul %0, %1, %cst {dimension_numbers = #tpu.dot_dimension_numbers<[1], [0], [0], [1], [0, 0, 1, 1], [], []>} : vector<512x512xf32>, vector<512x128xf32>, vector<512x128xf32> -> vector<512x128xf32>
    %c0_3 = arith.constant 0 : index
    %c0_4 = arith.constant 0 : index
    %3 = vector.load %arg3[%c0_3, %c0_4] : memref<1x128xf32, #tpu.memory_space<vmem>>, vector<1x128xf32>
    %4 = vector.broadcast %3 : vector<1x128xf32> to vector<512x128xf32>
    %5 = arith.mulf %2, %4 : vector<512x128xf32>
    %c0_5 = arith.constant 0 : index
    %c0_6 = arith.constant 0 : index
    %6 = vector.load %arg4[%c0_5, %c0_6] : memref<1x128xf32, #tpu.memory_space<vmem>>, vector<1x128xf32>
    %7 = vector.broadcast %6 : vector<1x128xf32> to vector<512x128xf32>
    %8 = arith.addf %5, %7 : vector<512x128xf32>
    %cst_7 = arith.constant 0.000000e+00 : f32
    %9 = vector.broadcast %cst_7 : f32 to vector<512x128xf32>
    %10 = arith.cmpf oge, %8, %9 : vector<512x128xf32>
    %cst_8 = arith.constant 2.000000e-01 : f32
    %11 = vector.broadcast %cst_8 : f32 to vector<512x128xf32>
    %12 = arith.mulf %11, %8 : vector<512x128xf32>
    %13 = arith.select %10, %8, %12 : vector<512x128xi1>, vector<512x128xf32>
    %c0_9 = arith.constant 0 : index
    %c0_10 = arith.constant 0 : index
    %14 = vector.load %arg5[%c0_9, %c0_10] : memref<512x128xf32, #tpu.memory_space<vmem>>, vector<512x128xf32>
    tpu.vector_store %arg5[%c0_9, %c0_10], %13 {strides = array<i32>} : memref<512x128xf32, #tpu.memory_space<vmem>>, vector<512x128xf32>,
    return
  }
  func.func @transform_0(%arg0: i32) -> (i32, i32) {
    %c0_i32 = arith.constant 0 : i32
    %c0_i32_0 = arith.constant 0 : i32
    return %arg0, %c0_i32 : i32, i32
  }
  func.func @transform_1(%arg0: i32) -> (i32, i32) {
    %c0_i32 = arith.constant 0 : i32
    %c0_i32_0 = arith.constant 0 : i32
    %c0_i32_1 = arith.constant 0 : i32
    return %c0_i32, %c0_i32_0 : i32, i32
  }
  func.func @transform_2(%arg0: i32) -> (i32, i32) {
    %c0_i32 = arith.constant 0 : i32
    %c0_i32_0 = arith.constant 0 : i32
    %c0_i32_1 = arith.constant 0 : i32
    return %c0_i32, %c0_i32_0 : i32, i32
  }
  func.func @transform_3(%arg0: i32) -> (i32, i32) {
    %c0_i32 = arith.constant 0 : i32
    %c0_i32_0 = arith.constant 0 : i32
    %c0_i32_1 = arith.constant 0 : i32
    return %c0_i32, %c0_i32_0 : i32, i32
  }
  func.func @transform_4(%arg0: i32) -> (i32, i32) {
    %c0_i32 = arith.constant 0 : i32
    %c0_i32_0 = arith.constant 0 : i32
    return %arg0, %c0_i32 : i32, i32
  }
}

module attributes {stable_mosaic.version = 11 : i64} {
  func.func @_fused_matmul_kernel(%arg0: i32, %arg1: memref<512x640xf32, #tpu.memory_space<vmem>>, %arg2: memref<640x128xf32, #tpu.memory_space<vmem>>, %arg3: memref<1x128xf32, #tpu.memory_space<vmem>>, %arg4: memref<1x128xf32, #tpu.memory_space<vmem>>, %arg5: memref<512x128xf32, #tpu.memory_space<vmem>>) attributes {dimension_semantics = [#tpu.dimension_semantics<parallel>], iteration_bounds = array<i64: 2>, scalar_prefetch = 0 : i64, scratch_operands = 0 : i64, tpu.core_type = #tpu.core_type<tc>, window_params = [{transform_indices = @transform_0, window_bounds = array<i64: 512, 640>}, {pipeline_mode = #tpu.pipeline_mode<synchronous>, transform_indices = @transform_1, window_bounds = array<i64: 640, 128>}, {pipeline_mode = #tpu.pipeline_mode<synchronous>, transform_indices = @transform_2, window_bounds = array<i64: 1, 128>}, {pipeline_mode = #tpu.pipeline_mode<synchronous>, transform_indices = @transform_3, window_bounds = array<i64: 1, 128>}, {transform_indices = @transform_4, window_bounds = array<i64: 512, 128>}]} {
    %c0 = arith.constant 0 : index
    %c0_0 = arith.constant 0 : index
    %0 = vector.load %arg1[%c0, %c0_0] : memref<512x640xf32, #tpu.memory_space<vmem>>, vector<512x640xf32>
    %c0_1 = arith.constant 0 : index
    %c0_2 = arith.constant 0 : index
    %1 = vector.load %arg2[%c0_1, %c0_2] : memref<640x128xf32, #tpu.memory_space<vmem>>, vector<640x128xf32>
    %cst = arith.constant dense<0.000000e+00> : vector<512x128xf32>
    %2 = tpu.matmul %0, %1, %cst {dimension_numbers = #tpu.dot_dimension_numbers<[1], [0], [0], [1], [0, 0, 1, 1], [], []>} : vector<512x640xf32>, vector<640x128xf32>, vector<512x128xf32> -> vector<512x128xf32>
    %c0_3 = arith.constant 0 : index
    %c0_4 = arith.constant 0 : index
    %3 = vector.load %arg3[%c0_3, %c0_4] : memref<1x128xf32, #tpu.memory_space<vmem>>, vector<1x128xf32>
    %4 = vector.broadcast %3 : vector<1x128xf32> to vector<512x128xf32>
    %5 = arith.mulf %2, %4 : vector<512x128xf32>
    %c0_5 = arith.constant 0 : index
    %c0_6 = arith.constant 0 : index
    %6 = vector.load %arg4[%c0_5, %c0_6] : memref<1x128xf32, #tpu.memory_space<vmem>>, vector<1x128xf32>
    %7 = vector.broadcast %6 : vector<1x128xf32> to vector<512x128xf32>
    %8 = arith.addf %5, %7 : vector<512x128xf32>
    %cst_7 = arith.constant 0.000000e+00 : f32
    %9 = vector.broadcast %cst_7 : f32 to vector<512x128xf32>
    %10 = arith.cmpf oge, %8, %9 : vector<512x128xf32>
    %cst_8 = arith.constant 2.000000e-01 : f32
    %11 = vector.broadcast %cst_8 : f32 to vector<512x128xf32>
    %12 = arith.mulf %11, %8 : vector<512x128xf32>
    %13 = arith.select %10, %8, %12 : vector<512x128xi1>, vector<512x128xf32>
    %c0_9 = arith.constant 0 : index
    %c0_10 = arith.constant 0 : index
    %14 = vector.load %arg5[%c0_9, %c0_10] : memref<512x128xf32, #tpu.memory_space<vmem>>, vector<512x128xf32>
    tpu.vector_store %arg5[%c0_9, %c0_10], %13 {strides = array<i32>} : memref<512x128xf32, #tpu.memory_space<vmem>>, vector<512x128xf32>,
    return
  }
  func.func @transform_0(%arg0: i32) -> (i32, i32) {
    %c0_i32 = arith.constant 0 : i32
    %c0_i32_0 = arith.constant 0 : i32
    return %arg0, %c0_i32 : i32, i32
  }
  func.func @transform_1(%arg0: i32) -> (i32, i32) {
    %c0_i32 = arith.constant 0 : i32
    %c0_i32_0 = arith.constant 0 : i32
    %c0_i32_1 = arith.constant 0 : i32
    return %c0_i32, %c0_i32_0 : i32, i32
  }
  func.func @transform_2(%arg0: i32) -> (i32, i32) {
    %c0_i32 = arith.constant 0 : i32
    %c0_i32_0 = arith.constant 0 : i32
    %c0_i32_1 = arith.constant 0 : i32
    return %c0_i32, %c0_i32_0 : i32, i32
  }
  func.func @transform_3(%arg0: i32) -> (i32, i32) {
    %c0_i32 = arith.constant 0 : i32
    %c0_i32_0 = arith.constant 0 : i32
    %c0_i32_1 = arith.constant 0 : i32
    return %c0_i32, %c0_i32_0 : i32, i32
  }
  func.func @transform_4(%arg0: i32) -> (i32, i32) {
    %c0_i32 = arith.constant 0 : i32
    %c0_i32_0 = arith.constant 0 : i32
    return %arg0, %c0_i32 : i32, i32
  }
}

module attributes {stable_mosaic.version = 11 : i64} {
  func.func @_fused_matmul_kernel(%arg0: i32, %arg1: memref<512x640xf32, #tpu.memory_space<vmem>>, %arg2: memref<640x128xf32, #tpu.memory_space<vmem>>, %arg3: memref<1x128xf32, #tpu.memory_space<vmem>>, %arg4: memref<1x128xf32, #tpu.memory_space<vmem>>, %arg5: memref<512x128xf32, #tpu.memory_space<vmem>>) attributes {dimension_semantics = [#tpu.dimension_semantics<parallel>], iteration_bounds = array<i64: 1>, scalar_prefetch = 0 : i64, scratch_operands = 0 : i64, tpu.core_type = #tpu.core_type<tc>, window_params = [{transform_indices = @transform_0, window_bounds = array<i64: 512, 640>}, {pipeline_mode = #tpu.pipeline_mode<synchronous>, transform_indices = @transform_1, window_bounds = array<i64: 640, 128>}, {pipeline_mode = #tpu.pipeline_mode<synchronous>, transform_indices = @transform_2, window_bounds = array<i64: 1, 128>}, {pipeline_mode = #tpu.pipeline_mode<synchronous>, transform_indices = @transform_3, window_bounds = array<i64: 1, 128>}, {transform_indices = @transform_4, window_bounds = array<i64: 512, 128>}]} {
    %c0 = arith.constant 0 : index
    %c0_0 = arith.constant 0 : index
    %0 = vector.load %arg1[%c0, %c0_0] : memref<512x640xf32, #tpu.memory_space<vmem>>, vector<512x640xf32>
    %c0_1 = arith.constant 0 : index
    %c0_2 = arith.constant 0 : index
    %1 = vector.load %arg2[%c0_1, %c0_2] : memref<640x128xf32, #tpu.memory_space<vmem>>, vector<640x128xf32>
    %cst = arith.constant dense<0.000000e+00> : vector<512x128xf32>
    %2 = tpu.matmul %0, %1, %cst {dimension_numbers = #tpu.dot_dimension_numbers<[1], [0], [0], [1], [0, 0, 1, 1], [], []>} : vector<512x640xf32>, vector<640x128xf32>, vector<512x128xf32> -> vector<512x128xf32>
    %c0_3 = arith.constant 0 : index
    %c0_4 = arith.constant 0 : index
    %3 = vector.load %arg3[%c0_3, %c0_4] : memref<1x128xf32, #tpu.memory_space<vmem>>, vector<1x128xf32>
    %4 = vector.broadcast %3 : vector<1x128xf32> to vector<512x128xf32>
    %5 = arith.mulf %2, %4 : vector<512x128xf32>
    %c0_5 = arith.constant 0 : index
    %c0_6 = arith.constant 0 : index
    %6 = vector.load %arg4[%c0_5, %c0_6] : memref<1x128xf32, #tpu.memory_space<vmem>>, vector<1x128xf32>
    %7 = vector.broadcast %6 : vector<1x128xf32> to vector<512x128xf32>
    %8 = arith.addf %5, %7 : vector<512x128xf32>
    %cst_7 = arith.constant 0.000000e+00 : f32
    %9 = vector.broadcast %cst_7 : f32 to vector<512x128xf32>
    %10 = arith.cmpf oge, %8, %9 : vector<512x128xf32>
    %cst_8 = arith.constant 2.000000e-01 : f32
    %11 = vector.broadcast %cst_8 : f32 to vector<512x128xf32>
    %12 = arith.mulf %11, %8 : vector<512x128xf32>
    %13 = arith.select %10, %8, %12 : vector<512x128xi1>, vector<512x128xf32>
    %c0_9 = arith.constant 0 : index
    %c0_10 = arith.constant 0 : index
    %14 = vector.load %arg5[%c0_9, %c0_10] : memref<512x128xf32, #tpu.memory_space<vmem>>, vector<512x128xf32>
    tpu.vector_store %arg5[%c0_9, %c0_10], %13 {strides = array<i32>} : memref<512x128xf32, #tpu.memory_space<vmem>>, vector<512x128xf32>,
    return
  }
  func.func @transform_0(%arg0: i32) -> (i32, i32) {
    %c0_i32 = arith.constant 0 : i32
    %c0_i32_0 = arith.constant 0 : i32
    return %arg0, %c0_i32 : i32, i32
  }
  func.func @transform_1(%arg0: i32) -> (i32, i32) {
    %c0_i32 = arith.constant 0 : i32
    %c0_i32_0 = arith.constant 0 : i32
    %c0_i32_1 = arith.constant 0 : i32
    return %c0_i32, %c0_i32_0 : i32, i32
  }
  func.func @transform_2(%arg0: i32) -> (i32, i32) {
    %c0_i32 = arith.constant 0 : i32
    %c0_i32_0 = arith.constant 0 : i32
    %c0_i32_1 = arith.constant 0 : i32
    return %c0_i32, %c0_i32_0 : i32, i32
  }
  func.func @transform_3(%arg0: i32) -> (i32, i32) {
    %c0_i32 = arith.constant 0 : i32
    %c0_i32_0 = arith.constant 0 : i32
    %c0_i32_1 = arith.constant 0 : i32
    return %c0_i32, %c0_i32_0 : i32, i32
  }
  func.func @transform_4(%arg0: i32) -> (i32, i32) {
    %c0_i32 = arith.constant 0 : i32
    %c0_i32_0 = arith.constant 0 : i32
    return %arg0, %c0_i32 : i32, i32
  }
}

module attributes {stable_mosaic.version = 11 : i64} {
  func.func @_fused_matmul_kernel(%arg0: i32, %arg1: memref<256x640xf32, #tpu.memory_space<vmem>>, %arg2: memref<640x128xf32, #tpu.memory_space<vmem>>, %arg3: memref<1x128xf32, #tpu.memory_space<vmem>>, %arg4: memref<1x128xf32, #tpu.memory_space<vmem>>, %arg5: memref<256x128xf32, #tpu.memory_space<vmem>>) attributes {dimension_semantics = [#tpu.dimension_semantics<parallel>], iteration_bounds = array<i64: 1>, scalar_prefetch = 0 : i64, scratch_operands = 0 : i64, tpu.core_type = #tpu.core_type<tc>, window_params = [{transform_indices = @transform_0, window_bounds = array<i64: 256, 640>}, {pipeline_mode = #tpu.pipeline_mode<synchronous>, transform_indices = @transform_1, window_bounds = array<i64: 640, 128>}, {pipeline_mode = #tpu.pipeline_mode<synchronous>, transform_indices = @transform_2, window_bounds = array<i64: 1, 128>}, {pipeline_mode = #tpu.pipeline_mode<synchronous>, transform_indices = @transform_3, window_bounds = array<i64: 1, 128>}, {transform_indices = @transform_4, window_bounds = array<i64: 256, 128>}]} {
    %c0 = arith.constant 0 : index
    %c0_0 = arith.constant 0 : index
    %0 = vector.load %arg1[%c0, %c0_0] : memref<256x640xf32, #tpu.memory_space<vmem>>, vector<256x640xf32>
    %c0_1 = arith.constant 0 : index
    %c0_2 = arith.constant 0 : index
    %1 = vector.load %arg2[%c0_1, %c0_2] : memref<640x128xf32, #tpu.memory_space<vmem>>, vector<640x128xf32>
    %cst = arith.constant dense<0.000000e+00> : vector<256x128xf32>
    %2 = tpu.matmul %0, %1, %cst {dimension_numbers = #tpu.dot_dimension_numbers<[1], [0], [0], [1], [0, 0, 1, 1], [], []>} : vector<256x640xf32>, vector<640x128xf32>, vector<256x128xf32> -> vector<256x128xf32>
    %c0_3 = arith.constant 0 : index
    %c0_4 = arith.constant 0 : index
    %3 = vector.load %arg3[%c0_3, %c0_4] : memref<1x128xf32, #tpu.memory_space<vmem>>, vector<1x128xf32>
    %4 = vector.broadcast %3 : vector<1x128xf32> to vector<256x128xf32>
    %5 = arith.mulf %2, %4 : vector<256x128xf32>
    %c0_5 = arith.constant 0 : index
    %c0_6 = arith.constant 0 : index
    %6 = vector.load %arg4[%c0_5, %c0_6] : memref<1x128xf32, #tpu.memory_space<vmem>>, vector<1x128xf32>
    %7 = vector.broadcast %6 : vector<1x128xf32> to vector<256x128xf32>
    %8 = arith.addf %5, %7 : vector<256x128xf32>
    %cst_7 = arith.constant 0.000000e+00 : f32
    %9 = vector.broadcast %cst_7 : f32 to vector<256x128xf32>
    %10 = arith.cmpf oge, %8, %9 : vector<256x128xf32>
    %cst_8 = arith.constant 2.000000e-01 : f32
    %11 = vector.broadcast %cst_8 : f32 to vector<256x128xf32>
    %12 = arith.mulf %11, %8 : vector<256x128xf32>
    %13 = arith.select %10, %8, %12 : vector<256x128xi1>, vector<256x128xf32>
    %c0_9 = arith.constant 0 : index
    %c0_10 = arith.constant 0 : index
    %14 = vector.load %arg5[%c0_9, %c0_10] : memref<256x128xf32, #tpu.memory_space<vmem>>, vector<256x128xf32>
    tpu.vector_store %arg5[%c0_9, %c0_10], %13 {strides = array<i32>} : memref<256x128xf32, #tpu.memory_space<vmem>>, vector<256x128xf32>,
    return
  }
  func.func @transform_0(%arg0: i32) -> (i32, i32) {
    %c0_i32 = arith.constant 0 : i32
    %c0_i32_0 = arith.constant 0 : i32
    return %arg0, %c0_i32 : i32, i32
  }
  func.func @transform_1(%arg0: i32) -> (i32, i32) {
    %c0_i32 = arith.constant 0 : i32
    %c0_i32_0 = arith.constant 0 : i32
    %c0_i32_1 = arith.constant 0 : i32
    return %c0_i32, %c0_i32_0 : i32, i32
  }
  func.func @transform_2(%arg0: i32) -> (i32, i32) {
    %c0_i32 = arith.constant 0 : i32
    %c0_i32_0 = arith.constant 0 : i32
    %c0_i32_1 = arith.constant 0 : i32
    return %c0_i32, %c0_i32_0 : i32, i32
  }
  func.func @transform_3(%arg0: i32) -> (i32, i32) {
    %c0_i32 = arith.constant 0 : i32
    %c0_i32_0 = arith.constant 0 : i32
    %c0_i32_1 = arith.constant 0 : i32
    return %c0_i32, %c0_i32_0 : i32, i32
  }
  func.func @transform_4(%arg0: i32) -> (i32, i32) {
    %c0_i32 = arith.constant 0 : i32
    %c0_i32_0 = arith.constant 0 : i32
    return %arg0, %c0_i32 : i32, i32
  }
}

module attributes {stable_mosaic.version = 11 : i64} {
  func.func @_tail_kernel(%arg0: i32, %arg1: memref<128x640xf32, #tpu.memory_space<vmem>>, %arg2: memref<640x128xf32, #tpu.memory_space<vmem>>, %arg3: memref<1x128xf32, #tpu.memory_space<vmem>>, %arg4: memref<1x128xf32, #tpu.memory_space<vmem>>, %arg5: memref<288x128xf32, #tpu.memory_space<vmem>>, %arg6: memref<1152x256xf32, #tpu.memory_space<vmem>>, %arg7: memref<1x256xf32, #tpu.memory_space<vmem>>, %arg8: memref<1x256xf32, #tpu.memory_space<vmem>>, %arg9: memref<32x256xf32, #tpu.memory_space<vmem>>, %arg10: memref<2x32xf32, #tpu.memory_space<vmem>>, %arg11: memref<2x1xf32, #tpu.memory_space<vmem>>, %arg12: memref<2x1xf32, #tpu.memory_space<vmem>>) attributes {dimension_semantics = [#tpu.dimension_semantics<arbitrary>], iteration_bounds = array<i64: 1>, scalar_prefetch = 0 : i64, scratch_operands = 0 : i64, tpu.core_type = #tpu.core_type<tc>, window_params = [{pipeline_mode = #tpu.pipeline_mode<synchronous>, transform_indices = @transform_0, window_bounds = array<i64: 128, 640>}, {pipeline_mode = #tpu.pipeline_mode<synchronous>, transform_indices = @transform_1, window_bounds = array<i64: 640, 128>}, {pipeline_mode = #tpu.pipeline_mode<synchronous>, transform_indices = @transform_2, window_bounds = array<i64: 1, 128>}, {pipeline_mode = #tpu.pipeline_mode<synchronous>, transform_indices = @transform_3, window_bounds = array<i64: 1, 128>}, {pipeline_mode = #tpu.pipeline_mode<synchronous>, transform_indices = @transform_4, window_bounds = array<i64: 288, 128>}, {pipeline_mode = #tpu.pipeline_mode<synchronous>, transform_indices = @transform_5, window_bounds = array<i64: 1152, 256>}, {pipeline_mode = #tpu.pipeline_mode<synchronous>, transform_indices = @transform_6, window_bounds = array<i64: 1, 256>}, {pipeline_mode = #tpu.pipeline_mode<synchronous>, transform_indices = @transform_7, window_bounds = array<i64: 1, 256>}, {pipeline_mode = #tpu.pipeline_mode<synchronous>, transform_indices = @transform_8, window_bounds = array<i64: 32, 256>}, {pipeline_mode = #tpu.pipeline_mode<synchronous>, transform_indices = @transform_9, window_bounds = array<i64: 2, 32>}, {pipeline_mode = #tpu.pipeline_mode<synchronous>, transform_indices = @transform_10, window_bounds = array<i64: 2, 1>}, {pipeline_mode = #tpu.pipeline_mode<synchronous>, transform_indices = @transform_11, window_bounds = array<i64: 2, 1>}]} {
    %c0 = arith.constant 0 : index
    %c0_0 = arith.constant 0 : index
    %0 = vector.load %arg1[%c0, %c0_0] : memref<128x640xf32, #tpu.memory_space<vmem>>, vector<128x640xf32>
    %c0_1 = arith.constant 0 : index
    %c0_2 = arith.constant 0 : index
    %1 = vector.load %arg2[%c0_1, %c0_2] : memref<640x128xf32, #tpu.memory_space<vmem>>, vector<640x128xf32>
    %cst = arith.constant dense<0.000000e+00> : vector<128x128xf32>
    %2 = tpu.matmul %0, %1, %cst {dimension_numbers = #tpu.dot_dimension_numbers<[1], [0], [0], [1], [0, 0, 1, 1], [], []>} : vector<128x640xf32>, vector<640x128xf32>, vector<128x128xf32> -> vector<128x128xf32>
    %c0_3 = arith.constant 0 : index
    %c0_4 = arith.constant 0 : index
    %3 = vector.load %arg3[%c0_3, %c0_4] : memref<1x128xf32, #tpu.memory_space<vmem>>, vector<1x128xf32>
    %4 = vector.broadcast %3 : vector<1x128xf32> to vector<128x128xf32>
    %5 = arith.mulf %2, %4 : vector<128x128xf32>
    %c0_5 = arith.constant 0 : index
    %c0_6 = arith.constant 0 : index
    %6 = vector.load %arg4[%c0_5, %c0_6] : memref<1x128xf32, #tpu.memory_space<vmem>>, vector<1x128xf32>
    %7 = vector.broadcast %6 : vector<1x128xf32> to vector<128x128xf32>
    %8 = arith.addf %5, %7 : vector<128x128xf32>
    %cst_7 = arith.constant 0.000000e+00 : f32
    %9 = vector.broadcast %cst_7 : f32 to vector<128x128xf32>
    %10 = arith.cmpf oge, %8, %9 : vector<128x128xf32>
    %cst_8 = arith.constant 2.000000e-01 : f32
    %11 = vector.broadcast %cst_8 : f32 to vector<128x128xf32>
    %12 = arith.mulf %11, %8 : vector<128x128xf32>
    %13 = arith.select %10, %8, %12 : vector<128x128xi1>, vector<128x128xf32>
    %c0_9 = arith.constant 0 : index
    %c0_10 = arith.constant 0 : index
    %14 = vector.load %arg5[%c0_9, %c0_10] : memref<288x128xf32, #tpu.memory_space<vmem>>, vector<288x128xf32>
    %cst_11 = arith.constant dense<0.000000e+00> : vector<288x128xf32>
    %15 = tpu.matmul %14, %13, %cst_11 {dimension_numbers = #tpu.dot_dimension_numbers<[1], [0], [0], [1], [0, 0, 1, 1], [], []>} : vector<288x128xf32>, vector<128x128xf32>, vector<288x128xf32> -> vector<288x128xf32>
    %cst_12 = arith.constant 0.000000e+00 : f32
    %16 = vector.broadcast %cst_12 : f32 to vector<32x256xf32>
    %17 = vector.extract_strided_slice %15 {offsets = [0, 0], sizes = [32, 128], strides = [1, 1]} : vector<288x128xf32> to vector<32x128xf32>
    %c0_13 = arith.constant 0 : index
    %c0_14 = arith.constant 0 : index
    %18 = vector.load %arg6[%c0_13, %c0_14] : memref<1152x256xf32, #tpu.memory_space<vmem>>, vector<128x256xf32>
    %cst_15 = arith.constant dense<0.000000e+00> : vector<32x256xf32>
    %19 = tpu.matmul %17, %18, %cst_15 {dimension_numbers = #tpu.dot_dimension_numbers<[1], [0], [0], [1], [0, 0, 1, 1], [], []>} : vector<32x128xf32>, vector<128x256xf32>, vector<32x256xf32> -> vector<32x256xf32>
    %20 = arith.addf %16, %19 : vector<32x256xf32>
    %21 = vector.extract_strided_slice %15 {offsets = [32, 0], sizes = [32, 128], strides = [1, 1]} : vector<288x128xf32> to vector<32x128xf32>
    %c128 = arith.constant 128 : index
    %c0_16 = arith.constant 0 : index
    %22 = vector.load %arg6[%c128, %c0_16] : memref<1152x256xf32, #tpu.memory_space<vmem>>, vector<128x256xf32>
    %cst_17 = arith.constant dense<0.000000e+00> : vector<32x256xf32>
    %23 = tpu.matmul %21, %22, %cst_17 {dimension_numbers = #tpu.dot_dimension_numbers<[1], [0], [0], [1], [0, 0, 1, 1], [], []>} : vector<32x128xf32>, vector<128x256xf32>, vector<32x256xf32> -> vector<32x256xf32>
    %24 = arith.addf %20, %23 : vector<32x256xf32>
    %25 = vector.extract_strided_slice %15 {offsets = [64, 0], sizes = [32, 128], strides = [1, 1]} : vector<288x128xf32> to vector<32x128xf32>
    %c256 = arith.constant 256 : index
    %c0_18 = arith.constant 0 : index
    %26 = vector.load %arg6[%c256, %c0_18] : memref<1152x256xf32, #tpu.memory_space<vmem>>, vector<128x256xf32>
    %cst_19 = arith.constant dense<0.000000e+00> : vector<32x256xf32>
    %27 = tpu.matmul %25, %26, %cst_19 {dimension_numbers = #tpu.dot_dimension_numbers<[1], [0], [0], [1], [0, 0, 1, 1], [], []>} : vector<32x128xf32>, vector<128x256xf32>, vector<32x256xf32> -> vector<32x256xf32>
    %28 = arith.addf %24, %27 : vector<32x256xf32>
    %29 = vector.extract_strided_slice %15 {offsets = [96, 0], sizes = [32, 128], strides = [1, 1]} : vector<288x128xf32> to vector<32x128xf32>
    %c384 = arith.constant 384 : index
    %c0_20 = arith.constant 0 : index
    %30 = vector.load %arg6[%c384, %c0_20] : memref<1152x256xf32, #tpu.memory_space<vmem>>, vector<128x256xf32>
    %cst_21 = arith.constant dense<0.000000e+00> : vector<32x256xf32>
    %31 = tpu.matmul %29, %30, %cst_21 {dimension_numbers = #tpu.dot_dimension_numbers<[1], [0], [0], [1], [0, 0, 1, 1], [], []>} : vector<32x128xf32>, vector<128x256xf32>, vector<32x256xf32> -> vector<32x256xf32>
    %32 = arith.addf %28, %31 : vector<32x256xf32>
    %33 = vector.extract_strided_slice %15 {offsets = [128, 0], sizes = [32, 128], strides = [1, 1]} : vector<288x128xf32> to vector<32x128xf32>
    %c512 = arith.constant 512 : index
    %c0_22 = arith.constant 0 : index
    %34 = vector.load %arg6[%c512, %c0_22] : memref<1152x256xf32, #tpu.memory_space<vmem>>, vector<128x256xf32>
    %cst_23 = arith.constant dense<0.000000e+00> : vector<32x256xf32>
    %35 = tpu.matmul %33, %34, %cst_23 {dimension_numbers = #tpu.dot_dimension_numbers<[1], [0], [0], [1], [0, 0, 1, 1], [], []>} : vector<32x128xf32>, vector<128x256xf32>, vector<32x256xf32> -> vector<32x256xf32>
    %36 = arith.addf %32, %35 : vector<32x256xf32>
    %37 = vector.extract_strided_slice %15 {offsets = [160, 0], sizes = [32, 128], strides = [1, 1]} : vector<288x128xf32> to vector<32x128xf32>
    %c640 = arith.constant 640 : index
    %c0_24 = arith.constant 0 : index
    %38 = vector.load %arg6[%c640, %c0_24] : memref<1152x256xf32, #tpu.memory_space<vmem>>, vector<128x256xf32>
    %cst_25 = arith.constant dense<0.000000e+00> : vector<32x256xf32>
    %39 = tpu.matmul %37, %38, %cst_25 {dimension_numbers = #tpu.dot_dimension_numbers<[1], [0], [0], [1], [0, 0, 1, 1], [], []>} : vector<32x128xf32>, vector<128x256xf32>, vector<32x256xf32> -> vector<32x256xf32>
    %40 = arith.addf %36, %39 : vector<32x256xf32>
    %41 = vector.extract_strided_slice %15 {offsets = [192, 0], sizes = [32, 128], strides = [1, 1]} : vector<288x128xf32> to vector<32x128xf32>
    %c768 = arith.constant 768 : index
    %c0_26 = arith.constant 0 : index
    %42 = vector.load %arg6[%c768, %c0_26] : memref<1152x256xf32, #tpu.memory_space<vmem>>, vector<128x256xf32>
    %cst_27 = arith.constant dense<0.000000e+00> : vector<32x256xf32>
    %43 = tpu.matmul %41, %42, %cst_27 {dimension_numbers = #tpu.dot_dimension_numbers<[1], [0], [0], [1], [0, 0, 1, 1], [], []>} : vector<32x128xf32>, vector<128x256xf32>, vector<32x256xf32> -> vector<32x256xf32>
    %44 = arith.addf %40, %43 : vector<32x256xf32>
    %45 = vector.extract_strided_slice %15 {offsets = [224, 0], sizes = [32, 128], strides = [1, 1]} : vector<288x128xf32> to vector<32x128xf32>
    %c896 = arith.constant 896 : index
    %c0_28 = arith.constant 0 : index
    %46 = vector.load %arg6[%c896, %c0_28] : memref<1152x256xf32, #tpu.memory_space<vmem>>, vector<128x256xf32>
    %cst_29 = arith.constant dense<0.000000e+00> : vector<32x256xf32>
    %47 = tpu.matmul %45, %46, %cst_29 {dimension_numbers = #tpu.dot_dimension_numbers<[1], [0], [0], [1], [0, 0, 1, 1], [], []>} : vector<32x128xf32>, vector<128x256xf32>, vector<32x256xf32> -> vector<32x256xf32>
    %48 = arith.addf %44, %47 : vector<32x256xf32>
    %49 = vector.extract_strided_slice %15 {offsets = [256, 0], sizes = [32, 128], strides = [1, 1]} : vector<288x128xf32> to vector<32x128xf32>
    %c1024 = arith.constant 1024 : index
    %c0_30 = arith.constant 0 : index
    %50 = vector.load %arg6[%c1024, %c0_30] : memref<1152x256xf32, #tpu.memory_space<vmem>>, vector<128x256xf32>
    %cst_31 = arith.constant dense<0.000000e+00> : vector<32x256xf32>
    %51 = tpu.matmul %49, %50, %cst_31 {dimension_numbers = #tpu.dot_dimension_numbers<[1], [0], [0], [1], [0, 0, 1, 1], [], []>} : vector<32x128xf32>, vector<128x256xf32>, vector<32x256xf32> -> vector<32x256xf32>
    %52 = arith.addf %48, %51 : vector<32x256xf32>
    %c0_32 = arith.constant 0 : index
    %c0_33 = arith.constant 0 : index
    %53 = vector.load %arg7[%c0_32, %c0_33] : memref<1x256xf32, #tpu.memory_space<vmem>>, vector<1x256xf32>
    %54 = vector.broadcast %53 : vector<1x256xf32> to vector<32x256xf32>
    %55 = arith.mulf %52, %54 : vector<32x256xf32>
    %c0_34 = arith.constant 0 : index
    %c0_35 = arith.constant 0 : index
    %56 = vector.load %arg8[%c0_34, %c0_35] : memref<1x256xf32, #tpu.memory_space<vmem>>, vector<1x256xf32>
    %57 = vector.broadcast %56 : vector<1x256xf32> to vector<32x256xf32>
    %58 = arith.addf %55, %57 : vector<32x256xf32>
    %cst_36 = arith.constant 0.000000e+00 : f32
    %59 = vector.broadcast %cst_36 : f32 to vector<32x256xf32>
    %60 = arith.cmpf oge, %58, %59 : vector<32x256xf32>
    %cst_37 = arith.constant 2.000000e-01 : f32
    %61 = vector.broadcast %cst_37 : f32 to vector<32x256xf32>
    %62 = arith.mulf %61, %58 : vector<32x256xf32>
    %63 = arith.select %60, %58, %62 : vector<32x256xi1>, vector<32x256xf32>
    %c0_38 = arith.constant 0 : index
    %c0_39 = arith.constant 0 : index
    %64 = vector.load %arg9[%c0_38, %c0_39] : memref<32x256xf32, #tpu.memory_space<vmem>>, vector<32x256xf32>
    %65 = arith.mulf %63, %64 : vector<32x256xf32>
    %c0_40 = arith.constant 0 : index
    %c0_41 = arith.constant 0 : index
    %66 = vector.load %arg10[%c0_40, %c0_41] : memref<2x32xf32, #tpu.memory_space<vmem>>, vector<2x32xf32>
    %cst_42 = arith.constant dense<0.000000e+00> : vector<2x256xf32>
    %67 = tpu.matmul %66, %65, %cst_42 {dimension_numbers = #tpu.dot_dimension_numbers<[1], [0], [0], [1], [0, 0, 1, 1], [], []>} : vector<2x32xf32>, vector<32x256xf32>, vector<2x256xf32> -> vector<2x256xf32>
    %cst_43 = arith.constant dense<0.000000e+00> : vector<2xf32>
    %68 = vector.multi_reduction <add>, %67, %cst_43 [1] : vector<2x256xf32> to vector<2xf32>
    %69 = vector.shape_cast %68 : vector<2xf32> to vector<2x1xf32>
    %c0_44 = arith.constant 0 : index
    %c0_45 = arith.constant 0 : index
    %70 = vector.load %arg11[%c0_44, %c0_45] : memref<2x1xf32, #tpu.memory_space<vmem>>, vector<2x1xf32>
    %71 = arith.addf %69, %70 : vector<2x1xf32>
    %c0_46 = arith.constant 0 : index
    %c0_47 = arith.constant 0 : index
    %72 = vector.load %arg12[%c0_46, %c0_47] : memref<2x1xf32, #tpu.memory_space<vmem>>, vector<2x1xf32>
    tpu.vector_store %arg12[%c0_46, %c0_47], %71 {strides = array<i32>} : memref<2x1xf32, #tpu.memory_space<vmem>>, vector<2x1xf32>,
    return
  }
  func.func @transform_0(%arg0: i32) -> (i32, i32) {
    %c0_i32 = arith.constant 0 : i32
    %c0_i32_0 = arith.constant 0 : i32
    %c0_i32_1 = arith.constant 0 : i32
    return %c0_i32, %c0_i32_0 : i32, i32
  }
  func.func @transform_1(%arg0: i32) -> (i32, i32) {
    %c0_i32 = arith.constant 0 : i32
    %c0_i32_0 = arith.constant 0 : i32
    %c0_i32_1 = arith.constant 0 : i32
    return %c0_i32, %c0_i32_0 : i32, i32
  }
  func.func @transform_2(%arg0: i32) -> (i32, i32) {
    %c0_i32 = arith.constant 0 : i32
    %c0_i32_0 = arith.constant 0 : i32
    %c0_i32_1 = arith.constant 0 : i32
    return %c0_i32, %c0_i32_0 : i32, i32
  }
  func.func @transform_3(%arg0: i32) -> (i32, i32) {
    %c0_i32 = arith.constant 0 : i32
    %c0_i32_0 = arith.constant 0 : i32
    %c0_i32_1 = arith.constant 0 : i32
    return %c0_i32, %c0_i32_0 : i32, i32
  }
  func.func @transform_4(%arg0: i32) -> (i32, i32) {
    %c0_i32 = arith.constant 0 : i32
    %c0_i32_0 = arith.constant 0 : i32
    %c0_i32_1 = arith.constant 0 : i32
    return %c0_i32, %c0_i32_0 : i32, i32
  }
  func.func @transform_5(%arg0: i32) -> (i32, i32) {
    %c0_i32 = arith.constant 0 : i32
    %c0_i32_0 = arith.constant 0 : i32
    %c0_i32_1 = arith.constant 0 : i32
    return %c0_i32, %c0_i32_0 : i32, i32
  }
  func.func @transform_6(%arg0: i32) -> (i32, i32) {
    %c0_i32 = arith.constant 0 : i32
    %c0_i32_0 = arith.constant 0 : i32
    %c0_i32_1 = arith.constant 0 : i32
    return %c0_i32, %c0_i32_0 : i32, i32
  }
  func.func @transform_7(%arg0: i32) -> (i32, i32) {
    %c0_i32 = arith.constant 0 : i32
    %c0_i32_0 = arith.constant 0 : i32
    %c0_i32_1 = arith.constant 0 : i32
    return %c0_i32, %c0_i32_0 : i32, i32
  }
  func.func @transform_8(%arg0: i32) -> (i32, i32) {
    %c0_i32 = arith.constant 0 : i32
    %c0_i32_0 = arith.constant 0 : i32
    %c0_i32_1 = arith.constant 0 : i32
    return %c0_i32, %c0_i32_0 : i32, i32
  }
  func.func @transform_9(%arg0: i32) -> (i32, i32) {
    %c0_i32 = arith.constant 0 : i32
    %c0_i32_0 = arith.constant 0 : i32
    %c0_i32_1 = arith.constant 0 : i32
    return %c0_i32, %c0_i32_0 : i32, i32
  }
  func.func @transform_10(%arg0: i32) -> (i32, i32) {
    %c0_i32 = arith.constant 0 : i32
    %c0_i32_0 = arith.constant 0 : i32
    %c0_i32_1 = arith.constant 0 : i32
    return %c0_i32, %c0_i32_0 : i32, i32
  }
  func.func @transform_11(%arg0: i32) -> (i32, i32) {
    %c0_i32 = arith.constant 0 : i32
    %c0_i32_0 = arith.constant 0 : i32
    %c0_i32_1 = arith.constant 0 : i32
    return %c0_i32, %c0_i32_0 : i32, i32
  }
}

</mosaic_0001>

<llo_original>
// kernel: tile.38
$region0: #{tile.38}
  #allocation0 [shape = 's32[1]{0}', space=sflag, size = 0x4, scoped, tag = 'scoped memory for tile.38']
  %s0 = inlined_call_operand.vmem [shape: f32[8], index: 0, kind: input, shape index: {}]
  %s1 = inlined_call_operand.vmem [shape: f32[16,8], index: 1, kind: output, shape index: {}]
  // Predicated region
  $region2: #{tile.38} parent=0 // pred_check
    _
  $region3: #{tile.38} parent=0 // pred_check_branch
    %3 = sbr.rel (0) target = $region5
  $region4: #{tile.38} parent=0 // pred_region
    _
  $region5: #{tile.38} parent=0 // pred_fallthru
    _
  %v4 = vld [vmem:[%s0] ss:$0 sm:$0xff]
  %5 = vst [vmem:[%s1] sm:$0xff] %v4
  %s6 = scalar_lea.vmem %s1, 8
  %7 = vst [vmem:[%s6] sm:$0xff] %v4

// kernel: tile.39
$region0: #{tile.39}
  %s0 = inlined_call_operand.vmem [shape: f32[16,8], index: 0, kind: input, shape index: {}]
  %s1 = inlined_call_operand.vmem [shape: f32[1,128], index: 1, kind: output, shape index: {}]
  $region1: #{tile.39} parent=0
    #allocation0 [shape = 'u8[4096]{0}', space=vmem, size = 0x1000, scoped, tag = 'scoped mem for output reshape']
    %v2 = vld [vmem:[%s0] sm:$0x1]
    %vm3 = vcmask 64512
    %4 = vst.msk [vmem:[#allocation0] sm:$0x1] %vm3, %v2
    %s5 = scalar_lea.vmem %s0, 15
    %v6 = vld [vmem:[%s5] sm:$0x1]
    %7 = vrot.lane.b32.xlu0 %v6, 120
    %v8 = vpop.permute.xlu0 %7
    %vm9 = vcmask 1048512
    %10 = vst.msk [vmem:[#allocation0] sm:$0x1] %vm9, %v8
    %s11 = scalar_lea.vmem %s0, 14
    %v12 = vld [vmem:[%s11] sm:$0x1]
    %13 = vrot.lane.b32.xlu0 %v12, 112
    %v14 = vpop.permute.xlu0 %13
    %vm15 = vcmask 982912
    %16 = vst.msk [vmem:[#allocation0] sm:$0x1] %vm15, %v14
    %s17 = scalar_lea.vmem %s0, 13
    %v18 = vld [vmem:[%s17] sm:$0x1]
    %19 = vrot.lane.b32.xlu0 %v18, 104
    %v20 = vpop.permute.xlu0 %19
    %vm21 = vcmask 917312
    %22 = vst.msk [vmem:[#allocation0] sm:$0x1] %vm21, %v20
    %s23 = scalar_lea.vmem %s0, 12
    %v24 = vld [vmem:[%s23] sm:$0x1]
    %25 = vrot.lane.b32.xlu0 %v24, 96
    %v26 = vpop.permute.xlu0 %25
    %vm27 = vcmask 851712
    %28 = vst.msk [vmem:[#allocation0] sm:$0x1] %vm27, %v26
    %s29 = scalar_lea.vmem %s0, 11
    %v30 = vld [vmem:[%s29] sm:$0x1]
    %31 = vrot.lane.b32.xlu0 %v30, 88
    %v32 = vpop.permute.xlu0 %31
    %vm33 = vcmask 786112
    %34 = vst.msk [vmem:[#allocation0] sm:$0x1] %vm33, %v32
    %s35 = scalar_lea.vmem %s0, 10
    %v36 = vld [vmem:[%s35] sm:$0x1]
    %37 = vrot.lane.b32.xlu0 %v36, 80
    %v38 = vpop.permute.xlu0 %37
    %vm39 = vcmask 720512
    %40 = vst.msk [vmem:[#allocation0] sm:$0x1] %vm39, %v38
    %s41 = scalar_lea.vmem %s0, 9
    %v42 = vld [vmem:[%s41] sm:$0x1]
    %43 = vrot.lane.b32.xlu0 %v42, 72
    %v44 = vpop.permute.xlu0 %43
    %vm45 = vcmask 654912
    %46 = vst.msk [vmem:[#allocation0] sm:$0x1] %vm45, %v44
    %s47 = scalar_lea.vmem %s0, 8
    %v48 = vld [vmem:[%s47] sm:$0x1]
    %49 = vrot.lane.b32.xlu0 %v48, 64
    %v50 = vpop.permute.xlu0 %49
    %vm51 = vcmask 589312
    %52 = vst.msk [vmem:[#allocation0] sm:$0x1] %vm51, %v50
    %s53 = scalar_lea.vmem %s0, 7
    %v54 = vld [vmem:[%s53] sm:$0x1]
    %55 = vrot.lane.b32.xlu0 %v54, 56
    %v56 = vpop.permute.xlu0 %55
    %vm57 = vcmask 523712
    %58 = vst.msk [vmem:[#allocation0] sm:$0x1] %vm57, %v56
    %s59 = scalar_lea.vmem %s0, 6
    %v60 = vld [vmem:[%s59] sm:$0x1]
    %61 = vrot.lane.b32.xlu0 %v60, 48
    %v62 = vpop.permute.xlu0 %61
    %vm63 = vcmask 458112
    %64 = vst.msk [vmem:[#allocation0] sm:$0x1] %vm63, %v62
    %s65 = scalar_lea.vmem %s0, 5
    %v66 = vld [vmem:[%s65] sm:$0x1]
    %67 = vrot.lane.b32.xlu0 %v66, 40
    %v68 = vpop.permute.xlu0 %67
    %vm69 = vcmask 392512
    %70 = vst.msk [vmem:[#allocation0] sm:$0x1] %vm69, %v68
    %s71 = scalar_lea.vmem %s0, 4
    %v72 = vld [vmem:[%s71] sm:$0x1]
    %73 = vrot.lane.b32.xlu0 %v72, 32
    %v74 = vpop.permute.xlu0 %73
    %vm75 = vcmask 326912
    %76 = vst.msk [vmem:[#allocation0] sm:$0x1] %vm75, %v74
    %s77 = scalar_lea.vmem %s0, 3
    %v78 = vld [vmem:[%s77] sm:$0x1]
    %79 = vrot.lane.b32.xlu0 %v78, 24
    %v80 = vpop.permute.xlu0 %79
    %vm81 = vcmask 261312
    %82 = vst.msk [vmem:[#allocation0] sm:$0x1] %vm81, %v80
    %s83 = scalar_lea.vmem %s0, 2
    %v84 = vld [vmem:[%s83] sm:$0x1]
    %85 = vrot.lane.b32.xlu0 %v84, 16
    %v86 = vpop.permute.xlu0 %85
    %vm87 = vcmask 195712
    %88 = vst.msk [vmem:[#allocation0] sm:$0x1] %vm87, %v86
    %s89 = scalar_lea.vmem %s0, 1
    %v90 = vld [vmem:[%s89] sm:$0x1]
    %91 = vrot.lane.b32.xlu0 %v90, 8
    %v92 = vpop.permute.xlu0 %91
    %vm93 = vcmask 130112
    %94 = vst.msk [vmem:[#allocation0] sm:$0x1] %vm93, %v92
    %s96 = ssub.s32 2, 1
    %v97 = vld [vmem:[#allocation0] sm:%s96]
    %s99 = ssub.s32 2, 1
    %100 = vst [vmem:[%s1] sm:%s99] %v97

// kernel: _lambda_.5
$region0: #{_lambda_.5}
  #allocation0 [shape = 'u32[]', space=smem, size = 0x4, offset = 0x4, fixed_abs, tag = 'smem constant byte address 0x4 - core index']
  #allocation1 [shape = 'u32[72,128]{1,0:T(1,128)}', space=vmem, size = 0x9000, scoped, tag = 'internal scratch']
  %s0 = inlined_call_operand.vmem [shape: f32[2048,512], index: 0, kind: input, shape index: {}]
  %s1 = inlined_call_operand.vmem [shape: f32[512,128], index: 1, kind: input, shape index: {}]
  %s2 = inlined_call_operand.vmem [shape: f32[1,128], index: 2, kind: input, shape index: {}]
  %s3 = inlined_call_operand.vmem [shape: f32[1,128], index: 3, kind: input, shape index: {}]
  %s4 = inlined_call_operand.vmem [shape: f32[2048,128], index: 4, kind: output, shape index: {}]
  %s5 = sld [smem:[#allocation0]]
  $region49: #{_lambda_.5} parent=0
    _
  %s7 = ssub.s32 1, %s5
  %s8 = scalar_select 0, %s7, %s5
  loop: start=0, step=1, limit=6
  $region2: #{_lambda_.5} parent=0 // loop_pre_header
    _
  $region3: #{_lambda_.5} parent=0 // loop_header
    %s10 = sphi 0, %s14
    %p11 = scmp.ge.s32.totalorder %s10, 6
    %s20 = sphi 0, %s22
    %s23 = sphi 0, %s20
    %s24 = sphi 0, %s23
    %s40 = sphi 0, %s24
    %s44 = sphi 0, %s44
    %s46 = sphi 0, %s44
    %s47 = sphi 0, %s46
    %s61 = sphi 0, %s47
    %s65 = sphi 0, %s65
    %s67 = sphi 0, %s65
    %s68 = sphi 0, %s67
    %s82 = sphi 0, %s68
    %s86 = sphi 0, %s86
    %s88 = sphi 0, %s86
    %s89 = sphi 0, %s88
    %s103 = sphi 0, %s89
    %s109 = sphi 0, %s111
    %s112 = sphi 0, %s109
    %s113 = sphi 0, %s112
    %s129 = sphi 0, %s113
  $region4: #{_lambda_.5} parent=0 // loop_header_branch
    %13 = sbr.rel (%p11) target = $region8
  $region5: #{_lambda_.5} parent=0 // loop_body
    %s15 = ssub.s32 %s10, 1
    %s16 = ssub.s32 %s10, 2
    %s17 = sadd.s32 %s10, 1
    %s18 = ssub.s32 %s10, %s17
    %p19 = scmp.eq.s32.totalorder %s18, 0
    %s21 = sadd.s32 %s20, 1
    %s22 = scalar_select %p19, %s20, %s21
    %p25 = pneg %p19
    %p26 = scmp.eq.s32.totalorder %s10, 3
    %p27 = por %p25, %p26
    %p28 = scmp.ne.s32.totalorder %s20, %s23
    %p29 = scmp.eq.s32.totalorder %s10, 0
    %p30 = por %p28, %p29
    %p31 = scmp.ne.s32.totalorder %s20, %s23
    %p32 = scmp.eq.s32.totalorder %s15, 3
    %p33 = por %p31, %p32
    %p34 = scmp.ne.s32.totalorder %s23, %s24
    %p35 = scmp.eq.s32.totalorder %s15, 0
    %p36 = por %p34, %p35
    %p37 = scmp.ne.s32.totalorder %s23, %s24
    %p38 = scmp.eq.s32.totalorder %s16, 3
    %p39 = por %p37, %p38
    %p41 = scmp.ne.s32.totalorder %s24, %s40
    %p42 = scmp.eq.s32.totalorder %s16, 0
    %p43 = por %p41, %p42
    %s45 = sadd.s32 %s44, 1
    %p48 = scmp.eq.s32.totalorder %s10, 3
    %p49 = scmp.ne.s32.totalorder %s44, %s46
    %p50 = scmp.eq.s32.totalorder %s10, 0
    %p51 = por %p49, %p50
    %p52 = scmp.ne.s32.totalorder %s44, %s46
    %p53 = scmp.eq.s32.totalorder %s15, 3
    %p54 = por %p52, %p53
    %p55 = scmp.ne.s32.totalorder %s46, %s47
    %p56 = scmp.eq.s32.totalorder %s15, 0
    %p57 = por %p55, %p56
    %p58 = scmp.ne.s32.totalorder %s46, %s47
    %p59 = scmp.eq.s32.totalorder %s16, 3
    %p60 = por %p58, %p59
    %p62 = scmp.ne.s32.totalorder %s47, %s61
    %p63 = scmp.eq.s32.totalorder %s16, 0
    %p64 = por %p62, %p63
    %s66 = sadd.s32 %s65, 1
    %p69 = scmp.eq.s32.totalorder %s10, 3
    %p70 = scmp.ne.s32.totalorder %s65, %s67
    %p71 = scmp.eq.s32.totalorder %s10, 0
    %p72 = por %p70, %p71
    %p73 = scmp.ne.s32.totalorder %s65, %s67
    %p74 = scmp.eq.s32.totalorder %s15, 3
    %p75 = por %p73, %p74
    %p76 = scmp.ne.s32.totalorder %s67, %s68
    %p77 = scmp.eq.s32.totalorder %s15, 0
    %p78 = por %p76, %p77
    %p79 = scmp.ne.s32.totalorder %s67, %s68
    %p80 = scmp.eq.s32.totalorder %s16, 3
    %p81 = por %p79, %p80
    %p83 = scmp.ne.s32.totalorder %s68, %s82
    %p84 = scmp.eq.s32.totalorder %s16, 0
    %p85 = por %p83, %p84
    %s87 = sadd.s32 %s86, 1
    %p90 = scmp.eq.s32.totalorder %s10, 3
    %p91 = scmp.ne.s32.totalorder %s86, %s88
    %p92 = scmp.eq.s32.totalorder %s10, 0
    %p93 = por %p91, %p92
    %p94 = scmp.ne.s32.totalorder %s86, %s88
    %p95 = scmp.eq.s32.totalorder %s15, 3
    %p96 = por %p94, %p95
    %p97 = scmp.ne.s32.totalorder %s88, %s89
    %p98 = scmp.eq.s32.totalorder %s15, 0
    %p99 = por %p97, %p98
    %p100 = scmp.ne.s32.totalorder %s88, %s89
    %p101 = scmp.eq.s32.totalorder %s16, 3
    %p102 = por %p100, %p101
    %p104 = scmp.ne.s32.totalorder %s89, %s103
    %p105 = scmp.eq.s32.totalorder %s16, 0
    %p106 = por %p104, %p105
    %s107 = ssub.s32 %s10, %s17
    %p108 = scmp.eq.s32.totalorder %s107, 0
    %s110 = sadd.s32 %s109, 1
    %s111 = scalar_select %p108, %s109, %s110
    %p114 = pneg %p108
    %p115 = scmp.eq.s32.totalorder %s10, 3
    %p116 = por %p114, %p115
    %p117 = scmp.ne.s32.totalorder %s109, %s112
    %p118 = scmp.eq.s32.totalorder %s10, 0
    %p119 = por %p117, %p118
    %p120 = scmp.ne.s32.totalorder %s109, %s112
    %p121 = scmp.eq.s32.totalorder %s15, 3
    %p122 = por %p120, %p121
    %p123 = scmp.ne.s32.totalorder %s112, %s113
    %p124 = scmp.eq.s32.totalorder %s15, 0
    %p125 = por %p123, %p124
    %p126 = scmp.ne.s32.totalorder %s112, %s113
    %p127 = scmp.eq.s32.totalorder %s16, 3
    %p128 = por %p126, %p127
    %p130 = scmp.ne.s32.totalorder %s113, %s129
    %p131 = scmp.eq.s32.totalorder %s16, 0
    %p132 = por %p130, %p131
    %p133 = scmp.le.s32.totalorder 1, %s10
    %p134 = scmp.lt.s32.totalorder %s10, 5
    %p135 = pnand %p133, %p134
    %p136 = pneg %p135
    // Predicated region
    $region9: #{_lambda_.5} parent=5 // pred_check
      _
    $region10: #{_lambda_.5} parent=5 // pred_check_branch
      %138 = sbr.rel (%p135) target = $region12
    $region11: #{_lambda_.5} parent=5 // pred_region
      %s139 = ssub.s32 %s10, 1
      // Predicated region
      $region13: #{_lambda_.5} parent=11 // pred_check
        %p140 = pneg %p57
      $region14: #{_lambda_.5} parent=11 // pred_check_branch
        %142 = sbr.rel (%p140) target = $region16
      $region15: #{_lambda_.5} parent=11 // pred_region
        _
      $region16: #{_lambda_.5} parent=11 // pred_fallthru
        _
      // Predicated region
      $region17: #{_lambda_.5} parent=11 // pred_check
        %p143 = pneg %p78
      $region18: #{_lambda_.5} parent=11 // pred_check_branch
        %145 = sbr.rel (%p143) target = $region20
      $region19: #{_lambda_.5} parent=11 // pred_region
        _
      $region20: #{_lambda_.5} parent=11 // pred_fallthru
        _
      // Predicated region
      $region21: #{_lambda_.5} parent=11 // pred_check
        %p146 = pneg %p99
      $region22: #{_lambda_.5} parent=11 // pred_check_branch
        %148 = sbr.rel (%p146) target = $region24
      $region23: #{_lambda_.5} parent=11 // pred_region
        _
      $region24: #{_lambda_.5} parent=11 // pred_fallthru
        _
    $region12: #{_lambda_.5} parent=5 // pred_fallthru
      _
    %p149 = scmp.lt.s32.totalorder %s10, 4
    // Predicated region
    $region25: #{_lambda_.5} parent=5 // pred_check
      %p150 = pneg %p149
    $region26: #{_lambda_.5} parent=5 // pred_check_branch
      %152 = sbr.rel (%p150) target = $region28
    $region27: #{_lambda_.5} parent=5 // pred_region
      // Predicated region
      $region29: #{_lambda_.5} parent=27 // pred_check
        %p153 = pneg %p30
      $region30: #{_lambda_.5} parent=27 // pred_check_branch
        %155 = sbr.rel (%p153) target = $region32
      $region31: #{_lambda_.5} parent=27 // pred_region
        %s156 = smul.u32 64, %s10
        %p157 = scmp.lt.s32.totalorder %s156, 255
        %s158 = scalar_select %p157, %s156, 255
        %s159 = smul.addr %s158, 4
        %s160 = smul.addr %s159, 8
        %s161 = scalar_lea.vmem %s0, %s160
        %s162 = smul.u32 64, %s10
      $region32: #{_lambda_.5} parent=27 // pred_fallthru
        _
    $region28: #{_lambda_.5} parent=5 // pred_fallthru
      _
    %p163 = scmp.le.s32.totalorder 1, %s10
    %p164 = scmp.lt.s32.totalorder %s10, 5
    %p165 = pnand %p163, %p164
    %p166 = pneg %p165
    // Predicated region
    $region33: #{_lambda_.5} parent=5 // pred_check
      _
    $region34: #{_lambda_.5} parent=5 // pred_check_branch
      %168 = sbr.rel (%p165) target = $region36
    $region35: #{_lambda_.5} parent=5 // pred_region
      %s169 = ssub.s32 %s10, 1
      %s170 = smul.u32 64, %s15
      %p171 = scmp.lt.s32.totalorder %s170, 255
      %s172 = scalar_select %p171, %s170, 255
      %s173 = smul.addr %s172, 4
      %s174 = smul.addr %s173, 8
      %s175 = scalar_lea.vmem %s0, %s174
      %p176 = pneg %p36
      %p177 = pneg %p33
      %p178 = pneg %p57
      %p179 = pneg %p54
      %p180 = pneg %p78
      %p181 = pneg %p75
      %p182 = pneg %p99
      %p183 = pneg %p96
      %p184 = pneg %p125
      %p185 = pneg %p122
      %s186 = smul.u32 64, %s15
      %p187 = scmp.lt.s32.totalorder %s186, 255
      %s188 = scalar_select %p187, %s186, 255
      %s189 = smul.addr %s188, 8
      %s190 = scalar_lea.vmem %s4, %s189
      %s191 = smul.u32 64, %s15
      %p192 = scmp.lt.s32.totalorder %s191, 255
      %s193 = scalar_select %p192, %s191, 255
      %s194 = smul.addr %s193, 4
      %s195 = smul.addr %s194, 8
      %s196 = scalar_lea.vmem %s0, %s195
      %s197 = smul.u32 64, %s15
      %s198 = smul.u32 64, %s15
      %p199 = scmp.lt.s32.totalorder %s198, 255
      %s200 = scalar_select %p199, %s198, 255
      %s201 = smul.addr %s200, 8
      %s202 = scalar_lea.vmem %s4, %s201
      %s203 = smul.u32 64, %s15
      %v204 = vld [vmem:[%s196] sm:$0xff]
      %v205 = vld [vmem:[%s196 + $0x8] sm:$0xff]
      %v206 = vld [vmem:[%s196 + $0x10] sm:$0xff]
      %v207 = vld [vmem:[%s196 + $0x18] sm:$0xff]
      %v208 = vld [vmem:[%s196 + $0x20] sm:$0xff]
      %v209 = vld [vmem:[%s196 + $0x28] sm:$0xff]
      %v210 = vld [vmem:[%s196 + $0x30] sm:$0xff]
      %v211 = vld [vmem:[%s196 + $0x38] sm:$0xff]
      %v212 = vld [vmem:[%s196 + $0x40] sm:$0xff]
      %v213 = vld [vmem:[%s196 + $0x48] sm:$0xff]
      %v214 = vld [vmem:[%s196 + $0x50] sm:$0xff]
      %v215 = vld [vmem:[%s196 + $0x58] sm:$0xff]
      %v216 = vld [vmem:[%s196 + $0x60] sm:$0xff]
      %v217 = vld [vmem:[%s196 + $0x68] sm:$0xff]
      %v218 = vld [vmem:[%s196 + $0x70] sm:$0xff]
      %v219 = vld [vmem:[%s196 + $0x78] sm:$0xff]
      %v220 = vld [vmem:[%s196 + $0x80] sm:$0xff]
      %v221 = vld [vmem:[%s196 + $0x88] sm:$0xff]
      %v222 = vld [vmem:[%s196 + $0x90] sm:$0xff]
      %v223 = vld [vmem:[%s196 + $0x98] sm:$0xff]
      %v224 = vld [vmem:[%s196 + $0xa0] sm:$0xff]
      %v225 = vld [vmem:[%s196 + $0xa8] sm:$0xff]
      %v226 = vld [vmem:[%s196 + $0xb0] sm:$0xff]
      %v227 = vld [vmem:[%s196 + $0xb8] sm:$0xff]
      %v228 = vld [vmem:[%s196 + $0xc0] sm:$0xff]
      %v229 = vld [vmem:[%s196 + $0xc8] sm:$0xff]
      %v230 = vld [vmem:[%s196 + $0xd0] sm:$0xff]
      %v231 = vld [vmem:[%s196 + $0xd8] sm:$0xff]
      %v232 = vld [vmem:[%s196 + $0xe0] sm:$0xff]
      %v233 = vld [vmem:[%s196 + $0xe8] sm:$0xff]
      %v234 = vld [vmem:[%s196 + $0xf0] sm:$0xff]
      %v235 = vld [vmem:[%s196 + $0xf8] sm:$0xff]
      %v236 = vld [vmem:[%s196 + $0x100] sm:$0xff]
      %v237 = vld [vmem:[%s196 + $0x108] sm:$0xff]
      %v238 = vld [vmem:[%s196 + $0x110] sm:$0xff]
      %v239 = vld [vmem:[%s196 + $0x118] sm:$0xff]
      %v240 = vld [vmem:[%s196 + $0x120] sm:$0xff]
      %v241 = vld [vmem:[%s196 + $0x128] sm:$0xff]
      %v242 = vld [vmem:[%s196 + $0x130] sm:$0xff]
      %v243 = vld [vmem:[%s196 + $0x138] sm:$0xff]
      %v244 = vld [vmem:[%s196 + $0x140] sm:$0xff]
      %v245 = vld [vmem:[%s196 + $0x148] sm:$0xff]
      %v246 = vld [vmem:[%s196 + $0x150] sm:$0xff]
      %v247 = vld [vmem:[%s196 + $0x158] sm:$0xff]
      %v248 = vld [vmem:[%s196 + $0x160] sm:$0xff]
      %v249 = vld [vmem:[%s196 + $0x168] sm:$0xff]
      %v250 = vld [vmem:[%s196 + $0x170] sm:$0xff]
      %v251 = vld [vmem:[%s196 + $0x178] sm:$0xff]
      %v252 = vld [vmem:[%s196 + $0x180] sm:$0xff]
      %v253 = vld [vmem:[%s196 + $0x188] sm:$0xff]
      %v254 = vld [vmem:[%s196 + $0x190] sm:$0xff]
      %v255 = vld [vmem:[%s196 + $0x198] sm:$0xff]
      %v256 = vld [vmem:[%s196 + $0x1a0] sm:$0xff]
      %v257 = vld [vmem:[%s196 + $0x1a8] sm:$0xff]
      %v258 = vld [vmem:[%s196 + $0x1b0] sm:$0xff]
      %v259 = vld [vmem:[%s196 + $0x1b8] sm:$0xff]
      %v260 = vld [vmem:[%s196 + $0x1c0] sm:$0xff]
      %v261 = vld [vmem:[%s196 + $0x1c8] sm:$0xff]
      %v262 = vld [vmem:[%s196 + $0x1d0] sm:$0xff]
      %v263 = vld [vmem:[%s196 + $0x1d8] sm:$0xff]
      %v264 = vld [vmem:[%s196 + $0x1e0] sm:$0xff]
      %v265 = vld [vmem:[%s196 + $0x1e8] sm:$0xff]
      %v266 = vld [vmem:[%s196 + $0x1f0] sm:$0xff]
      %v267 = vld [vmem:[%s196 + $0x1f8] sm:$0xff]
      %v268 = vld [vmem:[%s196 + $0x200] sm:$0xff]
      %v269 = vld [vmem:[%s196 + $0x208] sm:$0xff]
      %v270 = vld [vmem:[%s196 + $0x210] sm:$0xff]
      %v271 = vld [vmem:[%s196 + $0x218] sm:$0xff]
      %v272 = vld [vmem:[%s196 + $0x220] sm:$0xff]
      %v273 = vld [vmem:[%s196 + $0x228] sm:$0xff]
      %v274 = vld [vmem:[%s196 + $0x230] sm:$0xff]
      %v275 = vld [vmem:[%s196 + $0x238] sm:$0xff]
      %v276 = vld [vmem:[%s196 + $0x240] sm:$0xff]
      %v277 = vld [vmem:[%s196 + $0x248] sm:$0xff]
      %v278 = vld [vmem:[%s196 + $0x250] sm:$0xff]
      %v279 = vld [vmem:[%s196 + $0x258] sm:$0xff]
      %v280 = vld [vmem:[%s196 + $0x260] sm:$0xff]
      %v281 = vld [vmem:[%s196 + $0x268] sm:$0xff]
      %v282 = vld [vmem:[%s196 + $0x270] sm:$0xff]
      %v283 = vld [vmem:[%s196 + $0x278] sm:$0xff]
      %v284 = vld [vmem:[%s196 + $0x280] sm:$0xff]
      %v285 = vld [vmem:[%s196 + $0x288] sm:$0xff]
      %v286 = vld [vmem:[%s196 + $0x290] sm:$0xff]
      %v287 = vld [vmem:[%s196 + $0x298] sm:$0xff]
      %v288 = vld [vmem:[%s196 + $0x2a0] sm:$0xff]
      %v289 = vld [vmem:[%s196 + $0x2a8] sm:$0xff]
      %v290 = vld [vmem:[%s196 + $0x2b0] sm:$0xff]
      %v291 = vld [vmem:[%s196 + $0x2b8] sm:$0xff]
      %v292 = vld [vmem:[%s196 + $0x2c0] sm:$0xff]
      %v293 = vld [vmem:[%s196 + $0x2c8] sm:$0xff]
      %v294 = vld [vmem:[%s196 + $0x2d0] sm:$0xff]
      %v295 = vld [vmem:[%s196 + $0x2d8] sm:$0xff]
      %v296 = vld [vmem:[%s196 + $0x2e0] sm:$0xff]
      %v297 = vld [vmem:[%s196 + $0x2e8] sm:$0xff]
      %v298 = vld [vmem:[%s196 + $0x2f0] sm:$0xff]
      %v299 = vld [vmem:[%s196 + $0x2f8] sm:$0xff]
      %v300 = vld [vmem:[%s196 + $0x300] sm:$0xff]
      %v301 = vld [vmem:[%s196 + $0x308] sm:$0xff]
      %v302 = vld [vmem:[%s196 + $0x310] sm:$0xff]
      %v303 = vld [vmem:[%s196 + $0x318] sm:$0xff]
      %v304 = vld [vmem:[%s196 + $0x320] sm:$0xff]
      %v305 = vld [vmem:[%s196 + $0x328] sm:$0xff]
      %v306 = vld [vmem:[%s196 + $0x330] sm:$0xff]
      %v307 = vld [vmem:[%s196 + $0x338] sm:$0xff]
      %v308 = vld [vmem:[%s196 + $0x340] sm:$0xff]
      %v309 = vld [vmem:[%s196 + $0x348] sm:$0xff]
      %v310 = vld [vmem:[%s196 + $0x350] sm:$0xff]
      %v311 = vld [vmem:[%s196 + $0x358] sm:$0xff]
      %v312 = vld [vmem:[%s196 + $0x360] sm:$0xff]
      %v313 = vld [vmem:[%s196 + $0x368] sm:$0xff]
      %v314 = vld [vmem:[%s196 + $0x370] sm:$0xff]
      %v315 = vld [vmem:[%s196 + $0x378] sm:$0xff]
      %v316 = vld [vmem:[%s196 + $0x380] sm:$0xff]
      %v317 = vld [vmem:[%s196 + $0x388] sm:$0xff]
      %v318 = vld [vmem:[%s196 + $0x390] sm:$0xff]
      %v319 = vld [vmem:[%s196 + $0x398] sm:$0xff]
      %v320 = vld [vmem:[%s196 + $0x3a0] sm:$0xff]
      %v321 = vld [vmem:[%s196 + $0x3a8] sm:$0xff]
      %v322 = vld [vmem:[%s196 + $0x3b0] sm:$0xff]
      %v323 = vld [vmem:[%s196 + $0x3b8] sm:$0xff]
      %v324 = vld [vmem:[%s196 + $0x3c0] sm:$0xff]
      %v325 = vld [vmem:[%s196 + $0x3c8] sm:$0xff]
      %v326 = vld [vmem:[%s196 + $0x3d0] sm:$0xff]
      %v327 = vld [vmem:[%s196 + $0x3d8] sm:$0xff]
      %v328 = vld [vmem:[%s196 + $0x3e0] sm:$0xff]
      %v329 = vld [vmem:[%s196 + $0x3e8] sm:$0xff]
      %v330 = vld [vmem:[%s196 + $0x3f0] sm:$0xff]
      %v331 = vld [vmem:[%s196 + $0x3f8] sm:$0xff]
      %v332 = vld [vmem:[%s196 + $0x400] sm:$0xff]
      %v333 = vld [vmem:[%s196 + $0x408] sm:$0xff]
      %v334 = vld [vmem:[%s196 + $0x410] sm:$0xff]
      %v335 = vld [vmem:[%s196 + $0x418] sm:$0xff]
      %v336 = vld [vmem:[%s196 + $0x420] sm:$0xff]
      %v337 = vld [vmem:[%s196 + $0x428] sm:$0xff]
      %v338 = vld [vmem:[%s196 + $0x430] sm:$0xff]
      %v339 = vld [vmem:[%s196 + $0x438] sm:$0xff]
      %v340 = vld [vmem:[%s196 + $0x440] sm:$0xff]
      %v341 = vld [vmem:[%s196 + $0x448] sm:$0xff]
      %v342 = vld [vmem:[%s196 + $0x450] sm:$0xff]
      %v343 = vld [vmem:[%s196 + $0x458] sm:$0xff]
      %v344 = vld [vmem:[%s196 + $0x460] sm:$0xff]
      %v345 = vld [vmem:[%s196 + $0x468] sm:$0xff]
      %v346 = vld [vmem:[%s196 + $0x470] sm:$0xff]
      %v347 = vld [vmem:[%s196 + $0x478] sm:$0xff]
      %v348 = vld [vmem:[%s196 + $0x480] sm:$0xff]
      %v349 = vld [vmem:[%s196 + $0x488] sm:$0xff]
      %v350 = vld [vmem:[%s196 + $0x490] sm:$0xff]
      %v351 = vld [vmem:[%s196 + $0x498] sm:$0xff]
      %v352 = vld [vmem:[%s196 + $0x4a0] sm:$0xff]
      %v353 = vld [vmem:[%s196 + $0x4a8] sm:$0xff]
      %v354 = vld [vmem:[%s196 + $0x4b0] sm:$0xff]
      %v355 = vld [vmem:[%s196 + $0x4b8] sm:$0xff]
      %v356 = vld [vmem:[%s196 + $0x4c0] sm:$0xff]
      %v357 = vld [vmem:[%s196 + $0x4c8] sm:$0xff]
      %v358 = vld [vmem:[%s196 + $0x4d0] sm:$0xff]
      %v359 = vld [vmem:[%s196 + $0x4d8] sm:$0xff]
      %v360 = vld [vmem:[%s196 + $0x4e0] sm:$0xff]
      %v361 = vld [vmem:[%s196 + $0x4e8] sm:$0xff]
      %v362 = vld [vmem:[%s196 + $0x4f0] sm:$0xff]
      %v363 = vld [vmem:[%s196 + $0x4f8] sm:$0xff]
      %v364 = vld [vmem:[%s196 + $0x500] sm:$0xff]
      %v365 = vld [vmem:[%s196 + $0x508] sm:$0xff]
      %v366 = vld [vmem:[%s196 + $0x510] sm:$0xff]
      %v367 = vld [vmem:[%s196 + $0x518] sm:$0xff]
      %v368 = vld [vmem:[%s196 + $0x520] sm:$0xff]
      %v369 = vld [vmem:[%s196 + $0x528] sm:$0xff]
      %v370 = vld [vmem:[%s196 + $0x530] sm:$0xff]
      %v371 = vld [vmem:[%s196 + $0x538] sm:$0xff]
      %v372 = vld [vmem:[%s196 + $0x540] sm:$0xff]
      %v373 = vld [vmem:[%s196 + $0x548] sm:$0xff]
      %v374 = vld [vmem:[%s196 + $0x550] sm:$0xff]
      %v375 = vld [vmem:[%s196 + $0x558] sm:$0xff]
      %v376 = vld [vmem:[%s196 + $0x560] sm:$0xff]
      %v377 = vld [vmem:[%s196 + $0x568] sm:$0xff]
      %v378 = vld [vmem:[%s196 + $0x570] sm:$0xff]
      %v379 = vld [vmem:[%s196 + $0x578] sm:$0xff]
      %v380 = vld [vmem:[%s196 + $0x580] sm:$0xff]
      %v381 = vld [vmem:[%s196 + $0x588] sm:$0xff]
      %v382 = vld [vmem:[%s196 + $0x590] sm:$0xff]
      %v383 = vld [vmem:[%s196 + $0x598] sm:$0xff]
      %v384 = vld [vmem:[%s196 + $0x5a0] sm:$0xff]
      %v385 = vld [vmem:[%s196 + $0x5a8] sm:$0xff]
      %v386 = vld [vmem:[%s196 + $0x5b0] sm:$0xff]
      %v387 = vld [vmem:[%s196 + $0x5b8] sm:$0xff]
      %v388 = vld [vmem:[%s196 + $0x5c0] sm:$0xff]
      %v389 = vld [vmem:[%s196 + $0x5c8] sm:$0xff]
      %v390 = vld [vmem:[%s196 + $0x5d0] sm:$0xff]
      %v391 = vld [vmem:[%s196 + $0x5d8] sm:$0xff]
      %v392 = vld [vmem:[%s196 + $0x5e0] sm:$0xff]
      %v393 = vld [vmem:[%s196 + $0x5e8] sm:$0xff]
      %v394 = vld [vmem:[%s196 + $0x5f0] sm:$0xff]
      %v395 = vld [vmem:[%s196 + $0x5f8] sm:$0xff]
      %v396 = vld [vmem:[%s196 + $0x600] sm:$0xff]
      %v397 = vld [vmem:[%s196 + $0x608] sm:$0xff]
      %v398 = vld [vmem:[%s196 + $0x610] sm:$0xff]
      %v399 = vld [vmem:[%s196 + $0x618] sm:$0xff]
      %v400 = vld [vmem:[%s196 + $0x620] sm:$0xff]
      %v401 = vld [vmem:[%s196 + $0x628] sm:$0xff]
      %v402 = vld [vmem:[%s196 + $0x630] sm:$0xff]
      %v403 = vld [vmem:[%s196 + $0x638] sm:$0xff]
      %v404 = vld [vmem:[%s196 + $0x640] sm:$0xff]
      %v405 = vld [vmem:[%s196 + $0x648] sm:$0xff]
      %v406 = vld [vmem:[%s196 + $0x650] sm:$0xff]
      %v407 = vld [vmem:[%s196 + $0x658] sm:$0xff]
      %v408 = vld [vmem:[%s196 + $0x660] sm:$0xff]
      %v409 = vld [vmem:[%s196 + $0x668] sm:$0xff]
      %v410 = vld [vmem:[%s196 + $0x670] sm:$0xff]
      %v411 = vld [vmem:[%s196 + $0x678] sm:$0xff]
      %v412 = vld [vmem:[%s196 + $0x680] sm:$0xff]
      %v413 = vld [vmem:[%s196 + $0x688] sm:$0xff]
      %v414 = vld [vmem:[%s196 + $0x690] sm:$0xff]
      %v415 = vld [vmem:[%s196 + $0x698] sm:$0xff]
      %v416 = vld [vmem:[%s196 + $0x6a0] sm:$0xff]
      %v417 = vld [vmem:[%s196 + $0x6a8] sm:$0xff]
      %v418 = vld [vmem:[%s196 + $0x6b0] sm:$0xff]
      %v419 = vld [vmem:[%s196 + $0x6b8] sm:$0xff]
      %v420 = vld [vmem:[%s196 + $0x6c0] sm:$0xff]
      %v421 = vld [vmem:[%s196 + $0x6c8] sm:$0xff]
      %v422 = vld [vmem:[%s196 + $0x6d0] sm:$0xff]
      %v423 = vld [vmem:[%s196 + $0x6d8] sm:$0xff]
      %v424 = vld [vmem:[%s196 + $0x6e0] sm:$0xff]
      %v425 = vld [vmem:[%s196 + $0x6e8] sm:$0xff]
      %v426 = vld [vmem:[%s196 + $0x6f0] sm:$0xff]
      %v427 = vld [vmem:[%s196 + $0x6f8] sm:$0xff]
      %v428 = vld [vmem:[%s196 + $0x700] sm:$0xff]
      %v429 = vld [vmem:[%s196 + $0x708] sm:$0xff]
      %v430 = vld [vmem:[%s196 + $0x710] sm:$0xff]
      %v431 = vld [vmem:[%s196 + $0x718] sm:$0xff]
      %v432 = vld [vmem:[%s196 + $0x720] sm:$0xff]
      %v433 = vld [vmem:[%s196 + $0x728] sm:$0xff]
      %v434 = vld [vmem:[%s196 + $0x730] sm:$0xff]
      %v435 = vld [vmem:[%s196 + $0x738] sm:$0xff]
      %v436 = vld [vmem:[%s196 + $0x740] sm:$0xff]
      %v437 = vld [vmem:[%s196 + $0x748] sm:$0xff]
      %v438 = vld [vmem:[%s196 + $0x750] sm:$0xff]
      %v439 = vld [vmem:[%s196 + $0x758] sm:$0xff]
      %v440 = vld [vmem:[%s196 + $0x760] sm:$0xff]
      %v441 = vld [vmem:[%s196 + $0x768] sm:$0xff]
      %v442 = vld [vmem:[%s196 + $0x770] sm:$0xff]
      %v443 = vld [vmem:[%s196 + $0x778] sm:$0xff]
      %v444 = vld [vmem:[%s196 + $0x780] sm:$0xff]
      %v445 = vld [vmem:[%s196 + $0x788] sm:$0xff]
      %v446 = vld [vmem:[%s196 + $0x790] sm:$0xff]
      %v447 = vld [vmem:[%s196 + $0x798] sm:$0xff]
      %v448 = vld [vmem:[%s196 + $0x7a0] sm:$0xff]
      %v449 = vld [vmem:[%s196 + $0x7a8] sm:$0xff]
      %v450 = vld [vmem:[%s196 + $0x7b0] sm:$0xff]
      %v451 = vld [vmem:[%s196 + $0x7b8] sm:$0xff]
      %v452 = vld [vmem:[%s196 + $0x7c0] sm:$0xff]
      %v453 = vld [vmem:[%s196 + $0x7c8] sm:$0xff]
      %v454 = vld [vmem:[%s196 + $0x7d0] sm:$0xff]
      %v455 = vld [vmem:[%s196 + $0x7d8] sm:$0xff]
      %v456 = vld [vmem:[%s196 + $0x7e0] sm:$0xff]
      %v457 = vld [vmem:[%s196 + $0x7e8] sm:$0xff]
      %v458 = vld [vmem:[%s196 + $0x7f0] sm:$0xff]
      %v459 = vld [vmem:[%s196 + $0x7f8] sm:$0xff]
      %v460 = vld [vmem:[%s1] sm:$0xff]
      %v461 = vld [vmem:[%s1 + $0x8] sm:$0xff]
      %v462 = vld [vmem:[%s1 + $0x10] sm:$0xff]
      %v463 = vld [vmem:[%s1 + $0x18] sm:$0xff]
      %v464 = vld [vmem:[%s1 + $0x20] sm:$0xff]
      %v465 = vld [vmem:[%s1 + $0x28] sm:$0xff]
      %v466 = vld [vmem:[%s1 + $0x30] sm:$0xff]
      %v467 = vld [vmem:[%s1 + $0x38] sm:$0xff]
      %v468 = vld [vmem:[%s1 + $0x40] sm:$0xff]
      %v469 = vld [vmem:[%s1 + $0x48] sm:$0xff]
      %v470 = vld [vmem:[%s1 + $0x50] sm:$0xff]
      %v471 = vld [vmem:[%s1 + $0x58] sm:$0xff]
      %v472 = vld [vmem:[%s1 + $0x60] sm:$0xff]
      %v473 = vld [vmem:[%s1 + $0x68] sm:$0xff]
      %v474 = vld [vmem:[%s1 + $0x70] sm:$0xff]
      %v475 = vld [vmem:[%s1 + $0x78] sm:$0xff]
      %v476 = vld [vmem:[%s1 + $0x80] sm:$0xff]
      %v477 = vld [vmem:[%s1 + $0x88] sm:$0xff]
      %v478 = vld [vmem:[%s1 + $0x90] sm:$0xff]
      %v479 = vld [vmem:[%s1 + $0x98] sm:$0xff]
      %v480 = vld [vmem:[%s1 + $0xa0] sm:$0xff]
      %v481 = vld [vmem:[%s1 + $0xa8] sm:$0xff]
      %v482 = vld [vmem:[%s1 + $0xb0] sm:$0xff]
      %v483 = vld [vmem:[%s1 + $0xb8] sm:$0xff]
      %v484 = vld [vmem:[%s1 + $0xc0] sm:$0xff]
      %v485 = vld [vmem:[%s1 + $0xc8] sm:$0xff]
      %v486 = vld [vmem:[%s1 + $0xd0] sm:$0xff]
      %v487 = vld [vmem:[%s1 + $0xd8] sm:$0xff]
      %v488 = vld [vmem:[%s1 + $0xe0] sm:$0xff]
      %v489 = vld [vmem:[%s1 + $0xe8] sm:$0xff]
      %v490 = vld [vmem:[%s1 + $0xf0] sm:$0xff]
      %v491 = vld [vmem:[%s1 + $0xf8] sm:$0xff]
      %v492 = vld [vmem:[%s1 + $0x100] sm:$0xff]
      %v493 = vld [vmem:[%s1 + $0x108] sm:$0xff]
      %v494 = vld [vmem:[%s1 + $0x110] sm:$0xff]
      %v495 = vld [vmem:[%s1 + $0x118] sm:$0xff]
      %v496 = vld [vmem:[%s1 + $0x120] sm:$0xff]
      %v497 = vld [vmem:[%s1 + $0x128] sm:$0xff]
      %v498 = vld [vmem:[%s1 + $0x130] sm:$0xff]
      %v499 = vld [vmem:[%s1 + $0x138] sm:$0xff]
      %v500 = vld [vmem:[%s1 + $0x140] sm:$0xff]
      %v501 = vld [vmem:[%s1 + $0x148] sm:$0xff]
      %v502 = vld [vmem:[%s1 + $0x150] sm:$0xff]
      %v503 = vld [vmem:[%s1 + $0x158] sm:$0xff]
      %v504 = vld [vmem:[%s1 + $0x160] sm:$0xff]
      %v505 = vld [vmem:[%s1 + $0x168] sm:$0xff]
      %v506 = vld [vmem:[%s1 + $0x170] sm:$0xff]
      %v507 = vld [vmem:[%s1 + $0x178] sm:$0xff]
      %v508 = vld [vmem:[%s1 + $0x180] sm:$0xff]
      %v509 = vld [vmem:[%s1 + $0x188] sm:$0xff]
      %v510 = vld [vmem:[%s1 + $0x190] sm:$0xff]
      %v511 = vld [vmem:[%s1 + $0x198] sm:$0xff]
      %v512 = vld [vmem:[%s1 + $0x1a0] sm:$0xff]
      %v513 = vld [vmem:[%s1 + $0x1a8] sm:$0xff]
      %v514 = vld [vmem:[%s1 + $0x1b0] sm:$0xff]
      %v515 = vld [vmem:[%s1 + $0x1b8] sm:$0xff]
      %v516 = vld [vmem:[%s1 + $0x1c0] sm:$0xff]
      %v517 = vld [vmem:[%s1 + $0x1c8] sm:$0xff]
      %v518 = vld [vmem:[%s1 + $0x1d0] sm:$0xff]
      %v519 = vld [vmem:[%s1 + $0x1d8] sm:$0xff]
      %v520 = vld [vmem:[%s1 + $0x1e0] sm:$0xff]
      %v521 = vld [vmem:[%s1 + $0x1e8] sm:$0xff]
      %v522 = vld [vmem:[%s1 + $0x1f0] sm:$0xff]
      %v523 = vld [vmem:[%s1 + $0x1f8] sm:$0xff]
      %524 = vmatpush.msra.mxu0 %v475
      %525 = vmatpush.msra.mxu0 %v474
      %526 = vmatpush.msra.mxu0 %v473
      %527 = vmatpush.msra.mxu0 %v472
      %528 = vmatpush.msra.mxu0 %v471
      %529 = vmatpush.msra.mxu0 %v470
      %530 = vmatpush.msra.mxu0 %v469
      %531 = vmatpush.msra.mxu0 %v468
      %532 = vmatpush.msra.mxu0 %v467
      %533 = vmatpush.msra.mxu0 %v466
      %534 = vmatpush.msra.mxu0 %v465
      %535 = vmatpush.msra.mxu0 %v464
      %536 = vmatpush.msra.mxu0 %v463
      %537 = vmatpush.msra.mxu0 %v462
      %538 = vmatpush.msra.mxu0 %v461
      %539 = vmatpush.msra.mxu0 %v460
      %540 = vmatmul.f32.gmra.mxu0 %v204
      %v541 = vpop.f32.mrf.mxu0
      %v542 = vadd.f32 0.0, %v541
      %543 = vmatmul.f32.gmra.mxu0 %v208
      %v544 = vpop.f32.mrf.mxu0
      %v545 = vadd.f32 0.0, %v544
      %546 = vmatmul.f32.gmra.mxu0 %v212
      %v547 = vpop.f32.mrf.mxu0
      %v548 = vadd.f32 0.0, %v547
      %549 = vmatmul.f32.gmra.mxu0 %v216
      %v550 = vpop.f32.mrf.mxu0
      %v551 = vadd.f32 0.0, %v550
      %552 = vmatmul.f32.gmra.mxu0 %v220
      %v553 = vpop.f32.mrf.mxu0
      %v554 = vadd.f32 0.0, %v553
      %555 = vmatmul.f32.gmra.mxu0 %v224
      %v556 = vpop.f32.mrf.mxu0
      %v557 = vadd.f32 0.0, %v556
      %558 = vmatmul.f32.gmra.mxu0 %v228
      %v559 = vpop.f32.mrf.mxu0
      %v560 = vadd.f32 0.0, %v559
      %561 = vmatmul.f32.gmra.mxu0 %v232
      %v562 = vpop.f32.mrf.mxu0
      %v563 = vadd.f32 0.0, %v562
      %564 = vmatmul.f32.gmra.mxu0 %v236
      %v565 = vpop.f32.mrf.mxu0
      %v566 = vadd.f32 0.0, %v565
      %567 = vmatmul.f32.gmra.mxu0 %v240
      %v568 = vpop.f32.mrf.mxu0
      %v569 = vadd.f32 0.0, %v568
      %570 = vmatmul.f32.gmra.mxu0 %v244
      %v571 = vpop.f32.mrf.mxu0
      %v572 = vadd.f32 0.0, %v571
      %573 = vmatmul.f32.gmra.mxu0 %v248
      %v574 = vpop.f32.mrf.mxu0
      %v575 = vadd.f32 0.0, %v574
      %576 = vmatmul.f32.gmra.mxu0 %v252
      %v577 = vpop.f32.mrf.mxu0
      %v578 = vadd.f32 0.0, %v577
      %579 = vmatmul.f32.gmra.mxu0 %v256
      %v580 = vpop.f32.mrf.mxu0
      %v581 = vadd.f32 0.0, %v580
      %582 = vmatmul.f32.gmra.mxu0 %v260
      %v583 = vpop.f32.mrf.mxu0
      %v584 = vadd.f32 0.0, %v583
      %585 = vmatmul.f32.gmra.mxu0 %v264
      %v586 = vpop.f32.mrf.mxu0
      %v587 = vadd.f32 0.0, %v586
      %588 = vmatmul.f32.gmra.mxu0 %v268
      %v589 = vpop.f32.mrf.mxu0
      %v590 = vadd.f32 0.0, %v589
      %591 = vmatmul.f32.gmra.mxu0 %v272
      %v592 = vpop.f32.mrf.mxu0
      %v593 = vadd.f32 0.0, %v592
      %594 = vmatmul.f32.gmra.mxu0 %v276
      %v595 = vpop.f32.mrf.mxu0
      %v596 = vadd.f32 0.0, %v595
      %597 = vmatmul.f32.gmra.mxu0 %v280
      %v598 = vpop.f32.mrf.mxu0
      %v599 = vadd.f32 0.0, %v598
      %600 = vmatmul.f32.gmra.mxu0 %v284
      %v601 = vpop.f32.mrf.mxu0
      %v602 = vadd.f32 0.0, %v601
      %603 = vmatmul.f32.gmra.mxu0 %v288
      %v604 = vpop.f32.mrf.mxu0
      %v605 = vadd.f32 0.0, %v604
      %606 = vmatmul.f32.gmra.mxu0 %v292
      %v607 = vpop.f32.mrf.mxu0
      %v608 = vadd.f32 0.0, %v607
      %609 = vmatmul.f32.gmra.mxu0 %v296
      %v610 = vpop.f32.mrf.mxu0
      %v611 = vadd.f32 0.0, %v610
      %612 = vmatmul.f32.gmra.mxu0 %v300
      %v613 = vpop.f32.mrf.mxu0
      %v614 = vadd.f32 0.0, %v613
      %615 = vmatmul.f32.gmra.mxu0 %v304
      %v616 = vpop.f32.mrf.mxu0
      %v617 = vadd.f32 0.0, %v616
      %618 = vmatmul.f32.gmra.mxu0 %v308
      %v619 = vpop.f32.mrf.mxu0
      %v620 = vadd.f32 0.0, %v619
      %621 = vmatmul.f32.gmra.mxu0 %v312
      %v622 = vpop.f32.mrf.mxu0
      %v623 = vadd.f32 0.0, %v622
      %624 = vmatmul.f32.gmra.mxu0 %v316
      %v625 = vpop.f32.mrf.mxu0
      %v626 = vadd.f32 0.0, %v625
      %627 = vmatmul.f32.gmra.mxu0 %v320
      %v628 = vpop.f32.mrf.mxu0
      %v629 = vadd.f32 0.0, %v628
      %630 = vmatmul.f32.gmra.mxu0 %v324
      %v631 = vpop.f32.mrf.mxu0
      %v632 = vadd.f32 0.0, %v631
      %633 = vmatmul.f32.gmra.mxu0 %v328
      %v634 = vpop.f32.mrf.mxu0
      %v635 = vadd.f32 0.0, %v634
      %636 = vmatmul.f32.gmra.mxu0 %v332
      %v637 = vpop.f32.mrf.mxu0
      %v638 = vadd.f32 0.0, %v637
      %639 = vmatmul.f32.gmra.mxu0 %v336
      %v640 = vpop.f32.mrf.mxu0
      %v641 = vadd.f32 0.0, %v640
      %642 = vmatmul.f32.gmra.mxu0 %v340
      %v643 = vpop.f32.mrf.mxu0
      %v644 = vadd.f32 0.0, %v643
      %645 = vmatmul.f32.gmra.mxu0 %v344
      %v646 = vpop.f32.mrf.mxu0
      %v647 = vadd.f32 0.0, %v646
      %648 = vmatmul.f32.gmra.mxu0 %v348
      %v649 = vpop.f32.mrf.mxu0
      %v650 = vadd.f32 0.0, %v649
      %651 = vmatmul.f32.gmra.mxu0 %v352
      %v652 = vpop.f32.mrf.mxu0
      %v653 = vadd.f32 0.0, %v652
      %654 = vmatmul.f32.gmra.mxu0 %v356
      %v655 = vpop.f32.mrf.mxu0
      %v656 = vadd.f32 0.0, %v655
      %657 = vmatmul.f32.gmra.mxu0 %v360
      %v658 = vpop.f32.mrf.mxu0
      %v659 = vadd.f32 0.0, %v658
      %660 = vmatmul.f32.gmra.mxu0 %v364
      %v661 = vpop.f32.mrf.mxu0
      %v662 = vadd.f32 0.0, %v661
      %663 = vmatmul.f32.gmra.mxu0 %v368
      %v664 = vpop.f32.mrf.mxu0
      %v665 = vadd.f32 0.0, %v664
      %666 = vmatmul.f32.gmra.mxu0 %v372
      %v667 = vpop.f32.mrf.mxu0
      %v668 = vadd.f32 0.0, %v667
      %669 = vmatmul.f32.gmra.mxu0 %v376
      %v670 = vpop.f32.mrf.mxu0
      %v671 = vadd.f32 0.0, %v670
      %672 = vmatmul.f32.gmra.mxu0 %v380
      %v673 = vpop.f32.mrf.mxu0
      %v674 = vadd.f32 0.0, %v673
      %675 = vmatmul.f32.gmra.mxu0 %v384
      %v676 = vpop.f32.mrf.mxu0
      %v677 = vadd.f32 0.0, %v676
      %678 = vmatmul.f32.gmra.mxu0 %v388
      %v679 = vpop.f32.mrf.mxu0
      %v680 = vadd.f32 0.0, %v679
      %681 = vmatmul.f32.gmra.mxu0 %v392
      %v682 = vpop.f32.mrf.mxu0
      %v683 = vadd.f32 0.0, %v682
      %684 = vmatmul.f32.gmra.mxu0 %v396
      %v685 = vpop.f32.mrf.mxu0
      %v686 = vadd.f32 0.0, %v685
      %687 = vmatmul.f32.gmra.mxu0 %v400
      %v688 = vpop.f32.mrf.mxu0
      %v689 = vadd.f32 0.0, %v688
      %690 = vmatmul.f32.gmra.mxu0 %v404
      %v691 = vpop.f32.mrf.mxu0
      %v692 = vadd.f32 0.0, %v691
      %693 = vmatmul.f32.gmra.mxu0 %v408
      %v694 = vpop.f32.mrf.mxu0
      %v695 = vadd.f32 0.0, %v694
      %696 = vmatmul.f32.gmra.mxu0 %v412
      %v697 = vpop.f32.mrf.mxu0
      %v698 = vadd.f32 0.0, %v697
      %699 = vmatmul.f32.gmra.mxu0 %v416
      %v700 = vpop.f32.mrf.mxu0
      %v701 = vadd.f32 0.0, %v700
      %702 = vmatmul.f32.gmra.mxu0 %v420
      %v703 = vpop.f32.mrf.mxu0
      %v704 = vadd.f32 0.0, %v703
      %705 = vmatmul.f32.gmra.mxu0 %v424
      %v706 = vpop.f32.mrf.mxu0
      %v707 = vadd.f32 0.0, %v706
      %708 = vmatmul.f32.gmra.mxu0 %v428
      %v709 = vpop.f32.mrf.mxu0
      %v710 = vadd.f32 0.0, %v709
      %711 = vmatmul.f32.gmra.mxu0 %v432
      %v712 = vpop.f32.mrf.mxu0
      %v713 = vadd.f32 0.0, %v712
      %714 = vmatmul.f32.gmra.mxu0 %v436
      %v715 = vpop.f32.mrf.mxu0
      %v716 = vadd.f32 0.0, %v715
      %717 = vmatmul.f32.gmra.mxu0 %v440
      %v718 = vpop.f32.mrf.mxu0
      %v719 = vadd.f32 0.0, %v718
      %720 = vmatmul.f32.gmra.mxu0 %v444
      %v721 = vpop.f32.mrf.mxu0
      %v722 = vadd.f32 0.0, %v721
      %723 = vmatmul.f32.gmra.mxu0 %v448
      %v724 = vpop.f32.mrf.mxu0
      %v725 = vadd.f32 0.0, %v724
      %726 = vmatmul.f32.gmra.mxu0 %v452
      %v727 = vpop.f32.mrf.mxu0
      %v728 = vadd.f32 0.0, %v727
      %729 = vmatmul.f32.gmra.mxu0 %v456
      %v730 = vpop.f32.mrf.mxu0
      %v731 = vadd.f32 0.0, %v730
      %732 = vdwg.mxu0
      %733 = vmatpush.msra.mxu0 %v491
      %734 = vmatpush.msra.mxu0 %v490
      %735 = vmatpush.msra.mxu0 %v489
      %736 = vmatpush.msra.mxu0 %v488
      %737 = vmatpush.msra.mxu0 %v487
      %738 = vmatpush.msra.mxu0 %v486
      %739 = vmatpush.msra.mxu0 %v485
      %740 = vmatpush.msra.mxu0 %v484
      %741 = vmatpush.msra.mxu0 %v483
      %742 = vmatpush.msra.mxu0 %v482
      %743 = vmatpush.msra.mxu0 %v481
      %744 = vmatpush.msra.mxu0 %v480
      %745 = vmatpush.msra.mxu0 %v479
      %746 = vmatpush.msra.mxu0 %v478
      %747 = vmatpush.msra.mxu0 %v477
      %748 = vmatpush.msra.mxu0 %v476
      %749 = vmatmul.f32.gmra.mxu0 %v205
      %v750 = vpop.f32.mrf.mxu0
      %v751 = vadd.f32 %v542, %v750
      %752 = vmatmul.f32.gmra.mxu0 %v209
      %v753 = vpop.f32.mrf.mxu0
      %v754 = vadd.f32 %v545, %v753
      %755 = vmatmul.f32.gmra.mxu0 %v213
      %v756 = vpop.f32.mrf.mxu0
      %v757 = vadd.f32 %v548, %v756
      %758 = vmatmul.f32.gmra.mxu0 %v217
      %v759 = vpop.f32.mrf.mxu0
      %v760 = vadd.f32 %v551, %v759
      %761 = vmatmul.f32.gmra.mxu0 %v221
      %v762 = vpop.f32.mrf.mxu0
      %v763 = vadd.f32 %v554, %v762
      %764 = vmatmul.f32.gmra.mxu0 %v225
      %v765 = vpop.f32.mrf.mxu0
      %v766 = vadd.f32 %v557, %v765
      %767 = vmatmul.f32.gmra.mxu0 %v229
      %v768 = vpop.f32.mrf.mxu0
      %v769 = vadd.f32 %v560, %v768
      %770 = vmatmul.f32.gmra.mxu0 %v233
      %v771 = vpop.f32.mrf.mxu0
      %v772 = vadd.f32 %v563, %v771
      %773 = vmatmul.f32.gmra.mxu0 %v237
      %v774 = vpop.f32.mrf.mxu0
      %v775 = vadd.f32 %v566, %v774
      %776 = vmatmul.f32.gmra.mxu0 %v241
      %v777 = vpop.f32.mrf.mxu0
      %v778 = vadd.f32 %v569, %v777
      %779 = vmatmul.f32.gmra.mxu0 %v245
      %v780 = vpop.f32.mrf.mxu0
      %v781 = vadd.f32 %v572, %v780
      %782 = vmatmul.f32.gmra.mxu0 %v249
      %v783 = vpop.f32.mrf.mxu0
      %v784 = vadd.f32 %v575, %v783
      %785 = vmatmul.f32.gmra.mxu0 %v253
      %v786 = vpop.f32.mrf.mxu0
      %v787 = vadd.f32 %v578, %v786
      %788 = vmatmul.f32.gmra.mxu0 %v257
      %v789 = vpop.f32.mrf.mxu0
      %v790 = vadd.f32 %v581, %v789
      %791 = vmatmul.f32.gmra.mxu0 %v261
      %v792 = vpop.f32.mrf.mxu0
      %v793 = vadd.f32 %v584, %v792
      %794 = vmatmul.f32.gmra.mxu0 %v265
      %v795 = vpop.f32.mrf.mxu0
      %v796 = vadd.f32 %v587, %v795
      %797 = vmatmul.f32.gmra.mxu0 %v269
      %v798 = vpop.f32.mrf.mxu0
      %v799 = vadd.f32 %v590, %v798
      %800 = vmatmul.f32.gmra.mxu0 %v273
      %v801 = vpop.f32.mrf.mxu0
      %v802 = vadd.f32 %v593, %v801
      %803 = vmatmul.f32.gmra.mxu0 %v277
      %v804 = vpop.f32.mrf.mxu0
      %v805 = vadd.f32 %v596, %v804
      %806 = vmatmul.f32.gmra.mxu0 %v281
      %v807 = vpop.f32.mrf.mxu0
      %v808 = vadd.f32 %v599, %v807
      %809 = vmatmul.f32.gmra.mxu0 %v285
      %v810 = vpop.f32.mrf.mxu0
      %v811 = vadd.f32 %v602, %v810
      %812 = vmatmul.f32.gmra.mxu0 %v289
      %v813 = vpop.f32.mrf.mxu0
      %v814 = vadd.f32 %v605, %v813
      %815 = vmatmul.f32.gmra.mxu0 %v293
      %v816 = vpop.f32.mrf.mxu0
      %v817 = vadd.f32 %v608, %v816
      %818 = vmatmul.f32.gmra.mxu0 %v297
      %v819 = vpop.f32.mrf.mxu0
      %v820 = vadd.f32 %v611, %v819
      %821 = vmatmul.f32.gmra.mxu0 %v301
      %v822 = vpop.f32.mrf.mxu0
      %v823 = vadd.f32 %v614, %v822
      %824 = vmatmul.f32.gmra.mxu0 %v305
      %v825 = vpop.f32.mrf.mxu0
      %v826 = vadd.f32 %v617, %v825
      %827 = vmatmul.f32.gmra.mxu0 %v309
      %v828 = vpop.f32.mrf.mxu0
      %v829 = vadd.f32 %v620, %v828
      %830 = vmatmul.f32.gmra.mxu0 %v313
      %v831 = vpop.f32.mrf.mxu0
      %v832 = vadd.f32 %v623, %v831
      %833 = vmatmul.f32.gmra.mxu0 %v317
      %v834 = vpop.f32.mrf.mxu0
      %v835 = vadd.f32 %v626, %v834
      %836 = vmatmul.f32.gmra.mxu0 %v321
      %v837 = vpop.f32.mrf.mxu0
      %v838 = vadd.f32 %v629, %v837
      %839 = vmatmul.f32.gmra.mxu0 %v325
      %v840 = vpop.f32.mrf.mxu0
      %v841 = vadd.f32 %v632, %v840
      %842 = vmatmul.f32.gmra.mxu0 %v329
      %v843 = vpop.f32.mrf.mxu0
      %v844 = vadd.f32 %v635, %v843
      %845 = vmatmul.f32.gmra.mxu0 %v333
      %v846 = vpop.f32.mrf.mxu0
      %v847 = vadd.f32 %v638, %v846
      %848 = vmatmul.f32.gmra.mxu0 %v337
      %v849 = vpop.f32.mrf.mxu0
      %v850 = vadd.f32 %v641, %v849
      %851 = vmatmul.f32.gmra.mxu0 %v341
      %v852 = vpop.f32.mrf.mxu0
      %v853 = vadd.f32 %v644, %v852
      %854 = vmatmul.f32.gmra.mxu0 %v345
      %v855 = vpop.f32.mrf.mxu0
      %v856 = vadd.f32 %v647, %v855
      %857 = vmatmul.f32.gmra.mxu0 %v349
      %v858 = vpop.f32.mrf.mxu0
      %v859 = vadd.f32 %v650, %v858
      %860 = vmatmul.f32.gmra.mxu0 %v353
      %v861 = vpop.f32.mrf.mxu0
      %v862 = vadd.f32 %v653, %v861
      %863 = vmatmul.f32.gmra.mxu0 %v357
      %v864 = vpop.f32.mrf.mxu0
      %v865 = vadd.f32 %v656, %v864
      %866 = vmatmul.f32.gmra.mxu0 %v361
      %v867 = vpop.f32.mrf.mxu0
      %v868 = vadd.f32 %v659, %v867
      %869 = vmatmul.f32.gmra.mxu0 %v365
      %v870 = vpop.f32.mrf.mxu0
      %v871 = vadd.f32 %v662, %v870
      %872 = vmatmul.f32.gmra.mxu0 %v369
      %v873 = vpop.f32.mrf.mxu0
      %v874 = vadd.f32 %v665, %v873
      %875 = vmatmul.f32.gmra.mxu0 %v373
      %v876 = vpop.f32.mrf.mxu0
      %v877 = vadd.f32 %v668, %v876
      %878 = vmatmul.f32.gmra.mxu0 %v377
      %v879 = vpop.f32.mrf.mxu0
      %v880 = vadd.f32 %v671, %v879
      %881 = vmatmul.f32.gmra.mxu0 %v381
      %v882 = vpop.f32.mrf.mxu0
      %v883 = vadd.f32 %v674, %v882
      %884 = vmatmul.f32.gmra.mxu0 %v385
      %v885 = vpop.f32.mrf.mxu0
      %v886 = vadd.f32 %v677, %v885
      %887 = vmatmul.f32.gmra.mxu0 %v389
      %v888 = vpop.f32.mrf.mxu0
      %v889 = vadd.f32 %v680, %v888
      %890 = vmatmul.f32.gmra.mxu0 %v393
      %v891 = vpop.f32.mrf.mxu0
      %v892 = vadd.f32 %v683, %v891
      %893 = vmatmul.f32.gmra.mxu0 %v397
      %v894 = vpop.f32.mrf.mxu0
      %v895 = vadd.f32 %v686, %v894
      %896 = vmatmul.f32.gmra.mxu0 %v401
      %v897 = vpop.f32.mrf.mxu0
      %v898 = vadd.f32 %v689, %v897
      %899 = vmatmul.f32.gmra.mxu0 %v405
      %v900 = vpop.f32.mrf.mxu0
      %v901 = vadd.f32 %v692, %v900
      %902 = vmatmul.f32.gmra.mxu0 %v409
      %v903 = vpop.f32.mrf.mxu0
      %v904 = vadd.f32 %v695, %v903
      %905 = vmatmul.f32.gmra.mxu0 %v413
      %v906 = vpop.f32.mrf.mxu0
      %v907 = vadd.f32 %v698, %v906
      %908 = vmatmul.f32.gmra.mxu0 %v417
      %v909 = vpop.f32.mrf.mxu0
      %v910 = vadd.f32 %v701, %v909
      %911 = vmatmul.f32.gmra.mxu0 %v421
      %v912 = vpop.f32.mrf.mxu0
      %v913 = vadd.f32 %v704, %v912
      %914 = vmatmul.f32.gmra.mxu0 %v425
      %v915 = vpop.f32.mrf.mxu0
      %v916 = vadd.f32 %v707, %v915
      %917 = vmatmul.f32.gmra.mxu0 %v429
      %v918 = vpop.f32.mrf.mxu0
      %v919 = vadd.f32 %v710, %v918
      %920 = vmatmul.f32.gmra.mxu0 %v433
      %v921 = vpop.f32.mrf.mxu0
      %v922 = vadd.f32 %v713, %v921
      %923 = vmatmul.f32.gmra.mxu0 %v437
      %v924 = vpop.f32.mrf.mxu0
      %v925 = vadd.f32 %v716, %v924
      %926 = vmatmul.f32.gmra.mxu0 %v441
      %v927 = vpop.f32.mrf.mxu0
      %v928 = vadd.f32 %v719, %v927
      %929 = vmatmul.f32.gmra.mxu0 %v445
      %v930 = vpop.f32.mrf.mxu0
      %v931 = vadd.f32 %v722, %v930
      %932 = vmatmul.f32.gmra.mxu0 %v449
      %v933 = vpop.f32.mrf.mxu0
      %v934 = vadd.f32 %v725, %v933
      %935 = vmatmul.f32.gmra.mxu0 %v453
      %v936 = vpop.f32.mrf.mxu0
      %v937 = vadd.f32 %v728, %v936
      %938 = vmatmul.f32.gmra.mxu0 %v457
      %v939 = vpop.f32.mrf.mxu0
      %v940 = vadd.f32 %v731, %v939
      %941 = vdwg.mxu0
      %942 = vmatpush.msra.mxu0 %v507
      %943 = vmatpush.msra.mxu0 %v506
      %944 = vmatpush.msra.mxu0 %v505
      %945 = vmatpush.msra.mxu0 %v504
      %946 = vmatpush.msra.mxu0 %v503
      %947 = vmatpush.msra.mxu0 %v502
      %948 = vmatpush.msra.mxu0 %v501
      %949 = vmatpush.msra.mxu0 %v500
      %950 = vmatpush.msra.mxu0 %v499
      %951 = vmatpush.msra.mxu0 %v498
      %952 = vmatpush.msra.mxu0 %v497
      %953 = vmatpush.msra.mxu0 %v496
      %954 = vmatpush.msra.mxu0 %v495
      %955 = vmatpush.msra.mxu0 %v494
      %956 = vmatpush.msra.mxu0 %v493
      %957 = vmatpush.msra.mxu0 %v492
      %958 = vmatmul.f32.gmra.mxu0 %v206
      %v959 = vpop.f32.mrf.mxu0
      %v960 = vadd.f32 %v751, %v959
      %961 = vmatmul.f32.gmra.mxu0 %v210
      %v962 = vpop.f32.mrf.mxu0
      %v963 = vadd.f32 %v754, %v962
      %964 = vmatmul.f32.gmra.mxu0 %v214
      %v965 = vpop.f32.mrf.mxu0
      %v966 = vadd.f32 %v757, %v965
      %967 = vmatmul.f32.gmra.mxu0 %v218
      %v968 = vpop.f32.mrf.mxu0
      %v969 = vadd.f32 %v760, %v968
      %970 = vmatmul.f32.gmra.mxu0 %v222
      %v971 = vpop.f32.mrf.mxu0
      %v972 = vadd.f32 %v763, %v971
      %973 = vmatmul.f32.gmra.mxu0 %v226
      %v974 = vpop.f32.mrf.mxu0
      %v975 = vadd.f32 %v766, %v974
      %976 = vmatmul.f32.gmra.mxu0 %v230
      %v977 = vpop.f32.mrf.mxu0
      %v978 = vadd.f32 %v769, %v977
      %979 = vmatmul.f32.gmra.mxu0 %v234
      %v980 = vpop.f32.mrf.mxu0
      %v981 = vadd.f32 %v772, %v980
      %982 = vmatmul.f32.gmra.mxu0 %v238
      %v983 = vpop.f32.mrf.mxu0
      %v984 = vadd.f32 %v775, %v983
      %985 = vmatmul.f32.gmra.mxu0 %v242
      %v986 = vpop.f32.mrf.mxu0
      %v987 = vadd.f32 %v778, %v986
      %988 = vmatmul.f32.gmra.mxu0 %v246
      %v989 = vpop.f32.mrf.mxu0
      %v990 = vadd.f32 %v781, %v989
      %991 = vmatmul.f32.gmra.mxu0 %v250
      %v992 = vpop.f32.mrf.mxu0
      %v993 = vadd.f32 %v784, %v992
      %994 = vmatmul.f32.gmra.mxu0 %v254
      %v995 = vpop.f32.mrf.mxu0
      %v996 = vadd.f32 %v787, %v995
      %997 = vmatmul.f32.gmra.mxu0 %v258
      %v998 = vpop.f32.mrf.mxu0
      %v999 = vadd.f32 %v790, %v998
      %1000 = vmatmul.f32.gmra.mxu0 %v262
      %v1001 = vpop.f32.mrf.mxu0
      %v1002 = vadd.f32 %v793, %v1001
      %1003 = vmatmul.f32.gmra.mxu0 %v266
      %v1004 = vpop.f32.mrf.mxu0
      %v1005 = vadd.f32 %v796, %v1004
      %1006 = vmatmul.f32.gmra.mxu0 %v270
      %v1007 = vpop.f32.mrf.mxu0
      %v1008 = vadd.f32 %v799, %v1007
      %1009 = vmatmul.f32.gmra.mxu0 %v274
      %v1010 = vpop.f32.mrf.mxu0
      %v1011 = vadd.f32 %v802, %v1010
      %1012 = vmatmul.f32.gmra.mxu0 %v278
      %v1013 = vpop.f32.mrf.mxu0
      %v1014 = vadd.f32 %v805, %v1013
      %1015 = vmatmul.f32.gmra.mxu0 %v282
      %v1016 = vpop.f32.mrf.mxu0
      %v1017 = vadd.f32 %v808, %v1016
      %1018 = vmatmul.f32.gmra.mxu0 %v286
      %v1019 = vpop.f32.mrf.mxu0
      %v1020 = vadd.f32 %v811, %v1019
      %1021 = vmatmul.f32.gmra.mxu0 %v290
      %v1022 = vpop.f32.mrf.mxu0
      %v1023 = vadd.f32 %v814, %v1022
      %1024 = vmatmul.f32.gmra.mxu0 %v294
      %v1025 = vpop.f32.mrf.mxu0
      %v1026 = vadd.f32 %v817, %v1025
      %1027 = vmatmul.f32.gmra.mxu0 %v298
      %v1028 = vpop.f32.mrf.mxu0
      %v1029 = vadd.f32 %v820, %v1028
      %1030 = vmatmul.f32.gmra.mxu0 %v302
      %v1031 = vpop.f32.mrf.mxu0
      %v1032 = vadd.f32 %v823, %v1031
      %1033 = vmatmul.f32.gmra.mxu0 %v306
      %v1034 = vpop.f32.mrf.mxu0
      %v1035 = vadd.f32 %v826, %v1034
      %1036 = vmatmul.f32.gmra.mxu0 %v310
      %v1037 = vpop.f32.mrf.mxu0
      %v1038 = vadd.f32 %v829, %v1037
      %1039 = vmatmul.f32.gmra.mxu0 %v314
      %v1040 = vpop.f32.mrf.mxu0
      %v1041 = vadd.f32 %v832, %v1040
      %1042 = vmatmul.f32.gmra.mxu0 %v318
      %v1043 = vpop.f32.mrf.mxu0
      %v1044 = vadd.f32 %v835, %v1043
      %1045 = vmatmul.f32.gmra.mxu0 %v322
      %v1046 = vpop.f32.mrf.mxu0
      %v1047 = vadd.f32 %v838, %v1046
      %1048 = vmatmul.f32.gmra.mxu0 %v326
      %v1049 = vpop.f32.mrf.mxu0
      %v1050 = vadd.f32 %v841, %v1049
      %1051 = vmatmul.f32.gmra.mxu0 %v330
      %v1052 = vpop.f32.mrf.mxu0
      %v1053 = vadd.f32 %v844, %v1052
      %1054 = vmatmul.f32.gmra.mxu0 %v334
      %v1055 = vpop.f32.mrf.mxu0
      %v1056 = vadd.f32 %v847, %v1055
      %1057 = vmatmul.f32.gmra.mxu0 %v338
      %v1058 = vpop.f32.mrf.mxu0
      %v1059 = vadd.f32 %v850, %v1058
      %1060 = vmatmul.f32.gmra.mxu0 %v342
      %v1061 = vpop.f32.mrf.mxu0
      %v1062 = vadd.f32 %v853, %v1061
      %1063 = vmatmul.f32.gmra.mxu0 %v346
      %v1064 = vpop.f32.mrf.mxu0
      %v1065 = vadd.f32 %v856, %v1064
      %1066 = vmatmul.f32.gmra.mxu0 %v350
      %v1067 = vpop.f32.mrf.mxu0
      %v1068 = vadd.f32 %v859, %v1067
      %1069 = vmatmul.f32.gmra.mxu0 %v354
      %v1070 = vpop.f32.mrf.mxu0
      %v1071 = vadd.f32 %v862, %v1070
      %1072 = vmatmul.f32.gmra.mxu0 %v358
      %v1073 = vpop.f32.mrf.mxu0
      %v1074 = vadd.f32 %v865, %v1073
      %1075 = vmatmul.f32.gmra.mxu0 %v362
      %v1076 = vpop.f32.mrf.mxu0
      %v1077 = vadd.f32 %v868, %v1076
      %1078 = vmatmul.f32.gmra.mxu0 %v366
      %v1079 = vpop.f32.mrf.mxu0
      %v1080 = vadd.f32 %v871, %v1079
      %1081 = vmatmul.f32.gmra.mxu0 %v370
      %v1082 = vpop.f32.mrf.mxu0
      %v1083 = vadd.f32 %v874, %v1082
      %1084 = vmatmul.f32.gmra.mxu0 %v374
      %v1085 = vpop.f32.mrf.mxu0
      %v1086 = vadd.f32 %v877, %v1085
      %1087 = vmatmul.f32.gmra.mxu0 %v378
      %v1088 = vpop.f32.mrf.mxu0
      %v1089 = vadd.f32 %v880, %v1088
      %1090 = vmatmul.f32.gmra.mxu0 %v382
      %v1091 = vpop.f32.mrf.mxu0
      %v1092 = vadd.f32 %v883, %v1091
      %1093 = vmatmul.f32.gmra.mxu0 %v386
      %v1094 = vpop.f32.mrf.mxu0
      %v1095 = vadd.f32 %v886, %v1094
      %1096 = vmatmul.f32.gmra.mxu0 %v390
      %v1097 = vpop.f32.mrf.mxu0
      %v1098 = vadd.f32 %v889, %v1097
      %1099 = vmatmul.f32.gmra.mxu0 %v394
      %v1100 = vpop.f32.mrf.mxu0
      %v1101 = vadd.f32 %v892, %v1100
      %1102 = vmatmul.f32.gmra.mxu0 %v398
      %v1103 = vpop.f32.mrf.mxu0
      %v1104 = vadd.f32 %v895, %v1103
      %1105 = vmatmul.f32.gmra.mxu0 %v402
      %v1106 = vpop.f32.mrf.mxu0
      %v1107 = vadd.f32 %v898, %v1106
      %1108 = vmatmul.f32.gmra.mxu0 %v406
      %v1109 = vpop.f32.mrf.mxu0
      %v1110 = vadd.f32 %v901, %v1109
      %1111 = vmatmul.f32.gmra.mxu0 %v410
      %v1112 = vpop.f32.mrf.mxu0
      %v1113 = vadd.f32 %v904, %v1112
      %1114 = vmatmul.f32.gmra.mxu0 %v414
      %v1115 = vpop.f32.mrf.mxu0
      %v1116 = vadd.f32 %v907, %v1115
      %1117 = vmatmul.f32.gmra.mxu0 %v418
      %v1118 = vpop.f32.mrf.mxu0
      %v1119 = vadd.f32 %v910, %v1118
      %1120 = vmatmul.f32.gmra.mxu0 %v422
      %v1121 = vpop.f32.mrf.mxu0
      %v1122 = vadd.f32 %v913, %v1121
      %1123 = vmatmul.f32.gmra.mxu0 %v426
      %v1124 = vpop.f32.mrf.mxu0
      %v1125 = vadd.f32 %v916, %v1124
      %1126 = vmatmul.f32.gmra.mxu0 %v430
      %v1127 = vpop.f32.mrf.mxu0
      %v1128 = vadd.f32 %v919, %v1127
      %1129 = vmatmul.f32.gmra.mxu0 %v434
      %v1130 = vpop.f32.mrf.mxu0
      %v1131 = vadd.f32 %v922, %v1130
      %1132 = vmatmul.f32.gmra.mxu0 %v438
      %v1133 = vpop.f32.mrf.mxu0
      %v1134 = vadd.f32 %v925, %v1133
      %1135 = vmatmul.f32.gmra.mxu0 %v442
      %v1136 = vpop.f32.mrf.mxu0
      %v1137 = vadd.f32 %v928, %v1136
      %1138 = vmatmul.f32.gmra.mxu0 %v446
      %v1139 = vpop.f32.mrf.mxu0
      %v1140 = vadd.f32 %v931, %v1139
      %1141 = vmatmul.f32.gmra.mxu0 %v450
      %v1142 = vpop.f32.mrf.mxu0
      %v1143 = vadd.f32 %v934, %v1142
      %1144 = vmatmul.f32.gmra.mxu0 %v454
      %v1145 = vpop.f32.mrf.mxu0
      %v1146 = vadd.f32 %v937, %v1145
      %1147 = vmatmul.f32.gmra.mxu0 %v458
      %v1148 = vpop.f32.mrf.mxu0
      %v1149 = vadd.f32 %v940, %v1148
      %1150 = vdwg.mxu0
      %1151 = vmatpush.msra.mxu0 %v523
      %1152 = vmatpush.msra.mxu0 %v522
      %1153 = vmatpush.msra.mxu0 %v521
      %1154 = vmatpush.msra.mxu0 %v520
      %1155 = vmatpush.msra.mxu0 %v519
      %1156 = vmatpush.msra.mxu0 %v518
      %1157 = vmatpush.msra.mxu0 %v517
      %1158 = vmatpush.msra.mxu0 %v516
      %1159 = vmatpush.msra.mxu0 %v515
      %1160 = vmatpush.msra.mxu0 %v514
      %1161 = vmatpush.msra.mxu0 %v513
      %1162 = vmatpush.msra.mxu0 %v512
      %1163 = vmatpush.msra.mxu0 %v511
      %1164 = vmatpush.msra.mxu0 %v510
      %1165 = vmatpush.msra.mxu0 %v509
      %1166 = vmatpush.msra.mxu0 %v508
      %1167 = vmatmul.f32.gmra.mxu0 %v207
      %v1168 = vpop.f32.mrf.mxu0
      %v1169 = vadd.f32 %v960, %v1168
      %1170 = vmatmul.f32.gmra.mxu0 %v211
      %v1171 = vpop.f32.mrf.mxu0
      %v1172 = vadd.f32 %v963, %v1171
      %1173 = vmatmul.f32.gmra.mxu0 %v215
      %v1174 = vpop.f32.mrf.mxu0
      %v1175 = vadd.f32 %v966, %v1174
      %1176 = vmatmul.f32.gmra.mxu0 %v219
      %v1177 = vpop.f32.mrf.mxu0
      %v1178 = vadd.f32 %v969, %v1177
      %1179 = vmatmul.f32.gmra.mxu0 %v223
      %v1180 = vpop.f32.mrf.mxu0
      %v1181 = vadd.f32 %v972, %v1180
      %1182 = vmatmul.f32.gmra.mxu0 %v227
      %v1183 = vpop.f32.mrf.mxu0
      %v1184 = vadd.f32 %v975, %v1183
      %1185 = vmatmul.f32.gmra.mxu0 %v231
      %v1186 = vpop.f32.mrf.mxu0
      %v1187 = vadd.f32 %v978, %v1186
      %1188 = vmatmul.f32.gmra.mxu0 %v235
      %v1189 = vpop.f32.mrf.mxu0
      %v1190 = vadd.f32 %v981, %v1189
      %1191 = vmatmul.f32.gmra.mxu0 %v239
      %v1192 = vpop.f32.mrf.mxu0
      %v1193 = vadd.f32 %v984, %v1192
      %1194 = vmatmul.f32.gmra.mxu0 %v243
      %v1195 = vpop.f32.mrf.mxu0
      %v1196 = vadd.f32 %v987, %v1195
      %1197 = vmatmul.f32.gmra.mxu0 %v247
      %v1198 = vpop.f32.mrf.mxu0
      %v1199 = vadd.f32 %v990, %v1198
      %1200 = vmatmul.f32.gmra.mxu0 %v251
      %v1201 = vpop.f32.mrf.mxu0
      %v1202 = vadd.f32 %v993, %v1201
      %1203 = vmatmul.f32.gmra.mxu0 %v255
      %v1204 = vpop.f32.mrf.mxu0
      %v1205 = vadd.f32 %v996, %v1204
      %1206 = vmatmul.f32.gmra.mxu0 %v259
      %v1207 = vpop.f32.mrf.mxu0
      %v1208 = vadd.f32 %v999, %v1207
      %1209 = vmatmul.f32.gmra.mxu0 %v263
      %v1210 = vpop.f32.mrf.mxu0
      %v1211 = vadd.f32 %v1002, %v1210
      %1212 = vmatmul.f32.gmra.mxu0 %v267
      %v1213 = vpop.f32.mrf.mxu0
      %v1214 = vadd.f32 %v1005, %v1213
      %1215 = vmatmul.f32.gmra.mxu0 %v271
      %v1216 = vpop.f32.mrf.mxu0
      %v1217 = vadd.f32 %v1008, %v1216
      %1218 = vmatmul.f32.gmra.mxu0 %v275
      %v1219 = vpop.f32.mrf.mxu0
      %v1220 = vadd.f32 %v1011, %v1219
      %1221 = vmatmul.f32.gmra.mxu0 %v279
      %v1222 = vpop.f32.mrf.mxu0
      %v1223 = vadd.f32 %v1014, %v1222
      %1224 = vmatmul.f32.gmra.mxu0 %v283
      %v1225 = vpop.f32.mrf.mxu0
      %v1226 = vadd.f32 %v1017, %v1225
      %1227 = vmatmul.f32.gmra.mxu0 %v287
      %v1228 = vpop.f32.mrf.mxu0
      %v1229 = vadd.f32 %v1020, %v1228
      %1230 = vmatmul.f32.gmra.mxu0 %v291
      %v1231 = vpop.f32.mrf.mxu0
      %v1232 = vadd.f32 %v1023, %v1231
      %1233 = vmatmul.f32.gmra.mxu0 %v295
      %v1234 = vpop.f32.mrf.mxu0
      %v1235 = vadd.f32 %v1026, %v1234
      %1236 = vmatmul.f32.gmra.mxu0 %v299
      %v1237 = vpop.f32.mrf.mxu0
      %v1238 = vadd.f32 %v1029, %v1237
      %1239 = vmatmul.f32.gmra.mxu0 %v303
      %v1240 = vpop.f32.mrf.mxu0
      %v1241 = vadd.f32 %v1032, %v1240
      %1242 = vmatmul.f32.gmra.mxu0 %v307
      %v1243 = vpop.f32.mrf.mxu0
      %v1244 = vadd.f32 %v1035, %v1243
      %1245 = vmatmul.f32.gmra.mxu0 %v311
      %v1246 = vpop.f32.mrf.mxu0
      %v1247 = vadd.f32 %v1038, %v1246
      %1248 = vmatmul.f32.gmra.mxu0 %v315
      %v1249 = vpop.f32.mrf.mxu0
      %v1250 = vadd.f32 %v1041, %v1249
      %1251 = vmatmul.f32.gmra.mxu0 %v319
      %v1252 = vpop.f32.mrf.mxu0
      %v1253 = vadd.f32 %v1044, %v1252
      %1254 = vmatmul.f32.gmra.mxu0 %v323
      %v1255 = vpop.f32.mrf.mxu0
      %v1256 = vadd.f32 %v1047, %v1255
      %1257 = vmatmul.f32.gmra.mxu0 %v327
      %v1258 = vpop.f32.mrf.mxu0
      %v1259 = vadd.f32 %v1050, %v1258
      %1260 = vmatmul.f32.gmra.mxu0 %v331
      %v1261 = vpop.f32.mrf.mxu0
      %v1262 = vadd.f32 %v1053, %v1261
      %1263 = vmatmul.f32.gmra.mxu0 %v335
      %v1264 = vpop.f32.mrf.mxu0
      %v1265 = vadd.f32 %v1056, %v1264
      %1266 = vmatmul.f32.gmra.mxu0 %v339
      %v1267 = vpop.f32.mrf.mxu0
      %v1268 = vadd.f32 %v1059, %v1267
      %1269 = vmatmul.f32.gmra.mxu0 %v343
      %v1270 = vpop.f32.mrf.mxu0
      %v1271 = vadd.f32 %v1062, %v1270
      %1272 = vmatmul.f32.gmra.mxu0 %v347
      %v1273 = vpop.f32.mrf.mxu0
      %v1274 = vadd.f32 %v1065, %v1273
      %1275 = vmatmul.f32.gmra.mxu0 %v351
      %v1276 = vpop.f32.mrf.mxu0
      %v1277 = vadd.f32 %v1068, %v1276
      %1278 = vmatmul.f32.gmra.mxu0 %v355
      %v1279 = vpop.f32.mrf.mxu0
      %v1280 = vadd.f32 %v1071, %v1279
      %1281 = vmatmul.f32.gmra.mxu0 %v359
      %v1282 = vpop.f32.mrf.mxu0
      %v1283 = vadd.f32 %v1074, %v1282
      %1284 = vmatmul.f32.gmra.mxu0 %v363
      %v1285 = vpop.f32.mrf.mxu0
      %v1286 = vadd.f32 %v1077, %v1285
      %1287 = vmatmul.f32.gmra.mxu0 %v367
      %v1288 = vpop.f32.mrf.mxu0
      %v1289 = vadd.f32 %v1080, %v1288
      %1290 = vmatmul.f32.gmra.mxu0 %v371
      %v1291 = vpop.f32.mrf.mxu0
      %v1292 = vadd.f32 %v1083, %v1291
      %1293 = vmatmul.f32.gmra.mxu0 %v375
      %v1294 = vpop.f32.mrf.mxu0
      %v1295 = vadd.f32 %v1086, %v1294
      %1296 = vmatmul.f32.gmra.mxu0 %v379
      %v1297 = vpop.f32.mrf.mxu0
      %v1298 = vadd.f32 %v1089, %v1297
      %1299 = vmatmul.f32.gmra.mxu0 %v383
      %v1300 = vpop.f32.mrf.mxu0
      %v1301 = vadd.f32 %v1092, %v1300
      %1302 = vmatmul.f32.gmra.mxu0 %v387
      %v1303 = vpop.f32.mrf.mxu0
      %v1304 = vadd.f32 %v1095, %v1303
      %1305 = vmatmul.f32.gmra.mxu0 %v391
      %v1306 = vpop.f32.mrf.mxu0
      %v1307 = vadd.f32 %v1098, %v1306
      %1308 = vmatmul.f32.gmra.mxu0 %v395
      %v1309 = vpop.f32.mrf.mxu0
      %v1310 = vadd.f32 %v1101, %v1309
      %1311 = vmatmul.f32.gmra.mxu0 %v399
      %v1312 = vpop.f32.mrf.mxu0
      %v1313 = vadd.f32 %v1104, %v1312
      %1314 = vmatmul.f32.gmra.mxu0 %v403
      %v1315 = vpop.f32.mrf.mxu0
      %v1316 = vadd.f32 %v1107, %v1315
      %1317 = vmatmul.f32.gmra.mxu0 %v407
      %v1318 = vpop.f32.mrf.mxu0
      %v1319 = vadd.f32 %v1110, %v1318
      %1320 = vmatmul.f32.gmra.mxu0 %v411
      %v1321 = vpop.f32.mrf.mxu0
      %v1322 = vadd.f32 %v1113, %v1321
      %1323 = vmatmul.f32.gmra.mxu0 %v415
      %v1324 = vpop.f32.mrf.mxu0
      %v1325 = vadd.f32 %v1116, %v1324
      %1326 = vmatmul.f32.gmra.mxu0 %v419
      %v1327 = vpop.f32.mrf.mxu0
      %v1328 = vadd.f32 %v1119, %v1327
      %1329 = vmatmul.f32.gmra.mxu0 %v423
      %v1330 = vpop.f32.mrf.mxu0
      %v1331 = vadd.f32 %v1122, %v1330
      %1332 = vmatmul.f32.gmra.mxu0 %v427
      %v1333 = vpop.f32.mrf.mxu0
      %v1334 = vadd.f32 %v1125, %v1333
      %1335 = vmatmul.f32.gmra.mxu0 %v431
      %v1336 = vpop.f32.mrf.mxu0
      %v1337 = vadd.f32 %v1128, %v1336
      %1338 = vmatmul.f32.gmra.mxu0 %v435
      %v1339 = vpop.f32.mrf.mxu0
      %v1340 = vadd.f32 %v1131, %v1339
      %1341 = vmatmul.f32.gmra.mxu0 %v439
      %v1342 = vpop.f32.mrf.mxu0
      %v1343 = vadd.f32 %v1134, %v1342
      %1344 = vmatmul.f32.gmra.mxu0 %v443
      %v1345 = vpop.f32.mrf.mxu0
      %v1346 = vadd.f32 %v1137, %v1345
      %1347 = vmatmul.f32.gmra.mxu0 %v447
      %v1348 = vpop.f32.mrf.mxu0
      %v1349 = vadd.f32 %v1140, %v1348
      %1350 = vmatmul.f32.gmra.mxu0 %v451
      %v1351 = vpop.f32.mrf.mxu0
      %v1352 = vadd.f32 %v1143, %v1351
      %1353 = vmatmul.f32.gmra.mxu0 %v455
      %v1354 = vpop.f32.mrf.mxu0
      %v1355 = vadd.f32 %v1146, %v1354
      %1356 = vmatmul.f32.gmra.mxu0 %v459
      %v1357 = vpop.f32.mrf.mxu0
      %v1358 = vadd.f32 %v1149, %v1357
      %1359 = vdwg.mxu0
      %v1360 = vld [vmem:[%s2] sm:$0x1]
      %v1362 = vperm.slane %v1360, 0
      %v1364 = vmul.f32 %v1169, %v1362
      %v1365 = vmul.f32 %v1172, %v1362
      %v1366 = vmul.f32 %v1175, %v1362
      %v1367 = vmul.f32 %v1178, %v1362
      %v1368 = vmul.f32 %v1181, %v1362
      %v1369 = vmul.f32 %v1184, %v1362
      %v1370 = vmul.f32 %v1187, %v1362
      %v1371 = vmul.f32 %v1190, %v1362
      %v1372 = vmul.f32 %v1193, %v1362
      %v1373 = vmul.f32 %v1196, %v1362
      %v1374 = vmul.f32 %v1199, %v1362
      %v1375 = vmul.f32 %v1202, %v1362
      %v1376 = vmul.f32 %v1205, %v1362
      %v1377 = vmul.f32 %v1208, %v1362
      %v1378 = vmul.f32 %v1211, %v1362
      %v1379 = vmul.f32 %v1214, %v1362
      %v1380 = vmul.f32 %v1217, %v1362
      %v1381 = vmul.f32 %v1220, %v1362
      %v1382 = vmul.f32 %v1223, %v1362
      %v1383 = vmul.f32 %v1226, %v1362
      %v1384 = vmul.f32 %v1229, %v1362
      %v1385 = vmul.f32 %v1232, %v1362
      %v1386 = vmul.f32 %v1235, %v1362
      %v1387 = vmul.f32 %v1238, %v1362
      %v1388 = vmul.f32 %v1241, %v1362
      %v1389 = vmul.f32 %v1244, %v1362
      %v1390 = vmul.f32 %v1247, %v1362
      %v1391 = vmul.f32 %v1250, %v1362
      %v1392 = vmul.f32 %v1253, %v1362
      %v1393 = vmul.f32 %v1256, %v1362
      %v1394 = vmul.f32 %v1259, %v1362
      %v1395 = vmul.f32 %v1262, %v1362
      %v1396 = vmul.f32 %v1265, %v1362
      %v1397 = vmul.f32 %v1268, %v1362
      %v1398 = vmul.f32 %v1271, %v1362
      %v1399 = vmul.f32 %v1274, %v1362
      %v1400 = vmul.f32 %v1277, %v1362
      %v1401 = vmul.f32 %v1280, %v1362
      %v1402 = vmul.f32 %v1283, %v1362
      %v1403 = vmul.f32 %v1286, %v1362
      %v1404 = vmul.f32 %v1289, %v1362
      %v1405 = vmul.f32 %v1292, %v1362
      %v1406 = vmul.f32 %v1295, %v1362
      %v1407 = vmul.f32 %v1298, %v1362
      %v1408 = vmul.f32 %v1301, %v1362
      %v1409 = vmul.f32 %v1304, %v1362
      %v1410 = vmul.f32 %v1307, %v1362
      %v1411 = vmul.f32 %v1310, %v1362
      %v1412 = vmul.f32 %v1313, %v1362
      %v1413 = vmul.f32 %v1316, %v1362
      %v1414 = vmul.f32 %v1319, %v1362
      %v1415 = vmul.f32 %v1322, %v1362
      %v1416 = vmul.f32 %v1325, %v1362
      %v1417 = vmul.f32 %v1328, %v1362
      %v1418 = vmul.f32 %v1331, %v1362
      %v1419 = vmul.f32 %v1334, %v1362
      %v1420 = vmul.f32 %v1337, %v1362
      %v1421 = vmul.f32 %v1340, %v1362
      %v1422 = vmul.f32 %v1343, %v1362
      %v1423 = vmul.f32 %v1346, %v1362
      %v1424 = vmul.f32 %v1349, %v1362
      %v1425 = vmul.f32 %v1352, %v1362
      %v1426 = vmul.f32 %v1355, %v1362
      %v1427 = vmul.f32 %v1358, %v1362
      %v1428 = vld [vmem:[%s3] sm:$0x1]
      %v1430 = vperm.slane %v1428, 0
      %v1432 = vadd.f32 %v1364, %v1430
      %v1433 = vadd.f32 %v1365, %v1430
      %v1434 = vadd.f32 %v1366, %v1430
      %v1435 = vadd.f32 %v1367, %v1430
      %v1436 = vadd.f32 %v1368, %v1430
      %v1437 = vadd.f32 %v1369, %v1430
      %v1438 = vadd.f32 %v1370, %v1430
      %v1439 = vadd.f32 %v1371, %v1430
      %v1440 = vadd.f32 %v1372, %v1430
      %v1441 = vadd.f32 %v1373, %v1430
      %v1442 = vadd.f32 %v1374, %v1430
      %v1443 = vadd.f32 %v1375, %v1430
      %v1444 = vadd.f32 %v1376, %v1430
      %v1445 = vadd.f32 %v1377, %v1430
      %v1446 = vadd.f32 %v1378, %v1430
      %v1447 = vadd.f32 %v1379, %v1430
      %v1448 = vadd.f32 %v1380, %v1430
      %v1449 = vadd.f32 %v1381, %v1430
      %v1450 = vadd.f32 %v1382, %v1430
      %v1451 = vadd.f32 %v1383, %v1430
      %v1452 = vadd.f32 %v1384, %v1430
      %v1453 = vadd.f32 %v1385, %v1430
      %v1454 = vadd.f32 %v1386, %v1430
      %v1455 = vadd.f32 %v1387, %v1430
      %v1456 = vadd.f32 %v1388, %v1430
      %v1457 = vadd.f32 %v1389, %v1430
      %v1458 = vadd.f32 %v1390, %v1430
      %v1459 = vadd.f32 %v1391, %v1430
      %v1460 = vadd.f32 %v1392, %v1430
      %v1461 = vadd.f32 %v1393, %v1430
      %v1462 = vadd.f32 %v1394, %v1430
      %v1463 = vadd.f32 %v1395, %v1430
      %v1464 = vadd.f32 %v1396, %v1430
      %v1465 = vadd.f32 %v1397, %v1430
      %v1466 = vadd.f32 %v1398, %v1430
      %v1467 = vadd.f32 %v1399, %v1430
      %v1468 = vadd.f32 %v1400, %v1430
      %v1469 = vadd.f32 %v1401, %v1430
      %v1470 = vadd.f32 %v1402, %v1430
      %v1471 = vadd.f32 %v1403, %v1430
      %v1472 = vadd.f32 %v1404, %v1430
      %v1473 = vadd.f32 %v1405, %v1430
      %v1474 = vadd.f32 %v1406, %v1430
      %v1475 = vadd.f32 %v1407, %v1430
      %v1476 = vadd.f32 %v1408, %v1430
      %v1477 = vadd.f32 %v1409, %v1430
      %v1478 = vadd.f32 %v1410, %v1430
      %v1479 = vadd.f32 %v1411, %v1430
      %v1480 = vadd.f32 %v1412, %v1430
      %v1481 = vadd.f32 %v1413, %v1430
      %v1482 = vadd.f32 %v1414, %v1430
      %v1483 = vadd.f32 %v1415, %v1430
      %v1484 = vadd.f32 %v1416, %v1430
      %v1485 = vadd.f32 %v1417, %v1430
      %v1486 = vadd.f32 %v1418, %v1430
      %v1487 = vadd.f32 %v1419, %v1430
      %v1488 = vadd.f32 %v1420, %v1430
      %v1489 = vadd.f32 %v1421, %v1430
      %v1490 = vadd.f32 %v1422, %v1430
      %v1491 = vadd.f32 %v1423, %v1430
      %v1492 = vadd.f32 %v1424, %v1430
      %v1493 = vadd.f32 %v1425, %v1430
      %v1494 = vadd.f32 %v1426, %v1430
      %v1495 = vadd.f32 %v1427, %v1430
      %vm1496 = vcmp.ge.f32.partialorder %v1432, 0.0
      %vm1497 = vcmp.ge.f32.partialorder %v1433, 0.0
      %vm1498 = vcmp.ge.f32.partialorder %v1434, 0.0
      %vm1499 = vcmp.ge.f32.partialorder %v1435, 0.0
      %vm1500 = vcmp.ge.f32.partialorder %v1436, 0.0
      %vm1501 = vcmp.ge.f32.partialorder %v1437, 0.0
      %vm1502 = vcmp.ge.f32.partialorder %v1438, 0.0
      %vm1503 = vcmp.ge.f32.partialorder %v1439, 0.0
      %vm1504 = vcmp.ge.f32.partialorder %v1440, 0.0
      %vm1505 = vcmp.ge.f32.partialorder %v1441, 0.0
      %vm1506 = vcmp.ge.f32.partialorder %v1442, 0.0
      %vm1507 = vcmp.ge.f32.partialorder %v1443, 0.0
      %vm1508 = vcmp.ge.f32.partialorder %v1444, 0.0
      %vm1509 = vcmp.ge.f32.partialorder %v1445, 0.0
      %vm1510 = vcmp.ge.f32.partialorder %v1446, 0.0
      %vm1511 = vcmp.ge.f32.partialorder %v1447, 0.0
      %vm1512 = vcmp.ge.f32.partialorder %v1448, 0.0
      %vm1513 = vcmp.ge.f32.partialorder %v1449, 0.0
      %vm1514 = vcmp.ge.f32.partialorder %v1450, 0.0
      %vm1515 = vcmp.ge.f32.partialorder %v1451, 0.0
      %vm1516 = vcmp.ge.f32.partialorder %v1452, 0.0
      %vm1517 = vcmp.ge.f32.partialorder %v1453, 0.0
      %vm1518 = vcmp.ge.f32.partialorder %v1454, 0.0
      %vm1519 = vcmp.ge.f32.partialorder %v1455, 0.0
      %vm1520 = vcmp.ge.f32.partialorder %v1456, 0.0
      %vm1521 = vcmp.ge.f32.partialorder %v1457, 0.0
      %vm1522 = vcmp.ge.f32.partialorder %v1458, 0.0
      %vm1523 = vcmp.ge.f32.partialorder %v1459, 0.0
      %vm1524 = vcmp.ge.f32.partialorder %v1460, 0.0
      %vm1525 = vcmp.ge.f32.partialorder %v1461, 0.0
      %vm1526 = vcmp.ge.f32.partialorder %v1462, 0.0
      %vm1527 = vcmp.ge.f32.partialorder %v1463, 0.0
      %vm1528 = vcmp.ge.f32.partialorder %v1464, 0.0
      %vm1529 = vcmp.ge.f32.partialorder %v1465, 0.0
      %vm1530 = vcmp.ge.f32.partialorder %v1466, 0.0
      %vm1531 = vcmp.ge.f32.partialorder %v1467, 0.0
      %vm1532 = vcmp.ge.f32.partialorder %v1468, 0.0
      %vm1533 = vcmp.ge.f32.partialorder %v1469, 0.0
      %vm1534 = vcmp.ge.f32.partialorder %v1470, 0.0
      %vm1535 = vcmp.ge.f32.partialorder %v1471, 0.0
      %vm1536 = vcmp.ge.f32.partialorder %v1472, 0.0
      %vm1537 = vcmp.ge.f32.partialorder %v1473, 0.0
      %vm1538 = vcmp.ge.f32.partialorder %v1474, 0.0
      %vm1539 = vcmp.ge.f32.partialorder %v1475, 0.0
      %vm1540 = vcmp.ge.f32.partialorder %v1476, 0.0
      %vm1541 = vcmp.ge.f32.partialorder %v1477, 0.0
      %vm1542 = vcmp.ge.f32.partialorder %v1478, 0.0
      %vm1543 = vcmp.ge.f32.partialorder %v1479, 0.0
      %vm1544 = vcmp.ge.f32.partialorder %v1480, 0.0
      %vm1545 = vcmp.ge.f32.partialorder %v1481, 0.0
      %vm1546 = vcmp.ge.f32.partialorder %v1482, 0.0
      %vm1547 = vcmp.ge.f32.partialorder %v1483, 0.0
      %vm1548 = vcmp.ge.f32.partialorder %v1484, 0.0
      %vm1549 = vcmp.ge.f32.partialorder %v1485, 0.0
      %vm1550 = vcmp.ge.f32.partialorder %v1486, 0.0
      %vm1551 = vcmp.ge.f32.partialorder %v1487, 0.0
      %vm1552 = vcmp.ge.f32.partialorder %v1488, 0.0
      %vm1553 = vcmp.ge.f32.partialorder %v1489, 0.0
      %vm1554 = vcmp.ge.f32.partialorder %v1490, 0.0
      %vm1555 = vcmp.ge.f32.partialorder %v1491, 0.0
      %vm1556 = vcmp.ge.f32.partialorder %v1492, 0.0
      %vm1557 = vcmp.ge.f32.partialorder %v1493, 0.0
      %vm1558 = vcmp.ge.f32.partialorder %v1494, 0.0
      %vm1559 = vcmp.ge.f32.partialorder %v1495, 0.0
      %v1560 = vmul.f32 %v1432, 0.2
      %v1561 = vmul.f32 %v1433, 0.2
      %v1562 = vmul.f32 %v1434, 0.2
      %v1563 = vmul.f32 %v1435, 0.2
      %v1564 = vmul.f32 %v1436, 0.2
      %v1565 = vmul.f32 %v1437, 0.2
      %v1566 = vmul.f32 %v1438, 0.2
      %v1567 = vmul.f32 %v1439, 0.2
      %v1568 = vmul.f32 %v1440, 0.2
      %v1569 = vmul.f32 %v1441, 0.2
      %v1570 = vmul.f32 %v1442, 0.2
      %v1571 = vmul.f32 %v1443, 0.2
      %v1572 = vmul.f32 %v1444, 0.2
      %v1573 = vmul.f32 %v1445, 0.2
      %v1574 = vmul.f32 %v1446, 0.2
      %v1575 = vmul.f32 %v1447, 0.2
      %v1576 = vmul.f32 %v1448, 0.2
      %v1577 = vmul.f32 %v1449, 0.2
      %v1578 = vmul.f32 %v1450, 0.2
      %v1579 = vmul.f32 %v1451, 0.2
      %v1580 = vmul.f32 %v1452, 0.2
      %v1581 = vmul.f32 %v1453, 0.2
      %v1582 = vmul.f32 %v1454, 0.2
      %v1583 = vmul.f32 %v1455, 0.2
      %v1584 = vmul.f32 %v1456, 0.2
      %v1585 = vmul.f32 %v1457, 0.2
      %v1586 = vmul.f32 %v1458, 0.2
      %v1587 = vmul.f32 %v1459, 0.2
      %v1588 = vmul.f32 %v1460, 0.2
      %v1589 = vmul.f32 %v1461, 0.2
      %v1590 = vmul.f32 %v1462, 0.2
      %v1591 = vmul.f32 %v1463, 0.2
      %v1592 = vmul.f32 %v1464, 0.2
      %v1593 = vmul.f32 %v1465, 0.2
      %v1594 = vmul.f32 %v1466, 0.2
      %v1595 = vmul.f32 %v1467, 0.2
      %v1596 = vmul.f32 %v1468, 0.2
      %v1597 = vmul.f32 %v1469, 0.2
      %v1598 = vmul.f32 %v1470, 0.2
      %v1599 = vmul.f32 %v1471, 0.2
      %v1600 = vmul.f32 %v1472, 0.2
      %v1601 = vmul.f32 %v1473, 0.2
      %v1602 = vmul.f32 %v1474, 0.2
      %v1603 = vmul.f32 %v1475, 0.2
      %v1604 = vmul.f32 %v1476, 0.2
      %v1605 = vmul.f32 %v1477, 0.2
      %v1606 = vmul.f32 %v1478, 0.2
      %v1607 = vmul.f32 %v1479, 0.2
      %v1608 = vmul.f32 %v1480, 0.2
      %v1609 = vmul.f32 %v1481, 0.2
      %v1610 = vmul.f32 %v1482, 0.2
      %v1611 = vmul.f32 %v1483, 0.2
      %v1612 = vmul.f32 %v1484, 0.2
      %v1613 = vmul.f32 %v1485, 0.2
      %v1614 = vmul.f32 %v1486, 0.2
      %v1615 = vmul.f32 %v1487, 0.2
      %v1616 = vmul.f32 %v1488, 0.2
      %v1617 = vmul.f32 %v1489, 0.2
      %v1618 = vmul.f32 %v1490, 0.2
      %v1619 = vmul.f32 %v1491, 0.2
      %v1620 = vmul.f32 %v1492, 0.2
      %v1621 = vmul.f32 %v1493, 0.2
      %v1622 = vmul.f32 %v1494, 0.2
      %v1623 = vmul.f32 %v1495, 0.2
      %v1624 = vsel %vm1496, %v1432, %v1560
      %v1625 = vsel %vm1497, %v1433, %v1561
      %v1626 = vsel %vm1498, %v1434, %v1562
      %v1627 = vsel %vm1499, %v1435, %v1563
      %v1628 = vsel %vm1500, %v1436, %v1564
      %v1629 = vsel %vm1501, %v1437, %v1565
      %v1630 = vsel %vm1502, %v1438, %v1566
      %v1631 = vsel %vm1503, %v1439, %v1567
      %v1632 = vsel %vm1504, %v1440, %v1568
      %v1633 = vsel %vm1505, %v1441, %v1569
      %v1634 = vsel %vm1506, %v1442, %v1570
      %v1635 = vsel %vm1507, %v1443, %v1571
      %v1636 = vsel %vm1508, %v1444, %v1572
      %v1637 = vsel %vm1509, %v1445, %v1573
      %v1638 = vsel %vm1510, %v1446, %v1574
      %v1639 = vsel %vm1511, %v1447, %v1575
      %v1640 = vsel %vm1512, %v1448, %v1576
      %v1641 = vsel %vm1513, %v1449, %v1577
      %v1642 = vsel %vm1514, %v1450, %v1578
      %v1643 = vsel %vm1515, %v1451, %v1579
      %v1644 = vsel %vm1516, %v1452, %v1580
      %v1645 = vsel %vm1517, %v1453, %v1581
      %v1646 = vsel %vm1518, %v1454, %v1582
      %v1647 = vsel %vm1519, %v1455, %v1583
      %v1648 = vsel %vm1520, %v1456, %v1584
      %v1649 = vsel %vm1521, %v1457, %v1585
      %v1650 = vsel %vm1522, %v1458, %v1586
      %v1651 = vsel %vm1523, %v1459, %v1587
      %v1652 = vsel %vm1524, %v1460, %v1588
      %v1653 = vsel %vm1525, %v1461, %v1589
      %v1654 = vsel %vm1526, %v1462, %v1590
      %v1655 = vsel %vm1527, %v1463, %v1591
      %v1656 = vsel %vm1528, %v1464, %v1592
      %v1657 = vsel %vm1529, %v1465, %v1593
      %v1658 = vsel %vm1530, %v1466, %v1594
      %v1659 = vsel %vm1531, %v1467, %v1595
      %v1660 = vsel %vm1532, %v1468, %v1596
      %v1661 = vsel %vm1533, %v1469, %v1597
      %v1662 = vsel %vm1534, %v1470, %v1598
      %v1663 = vsel %vm1535, %v1471, %v1599
      %v1664 = vsel %vm1536, %v1472, %v1600
      %v1665 = vsel %vm1537, %v1473, %v1601
      %v1666 = vsel %vm1538, %v1474, %v1602
      %v1667 = vsel %vm1539, %v1475, %v1603
      %v1668 = vsel %vm1540, %v1476, %v1604
      %v1669 = vsel %vm1541, %v1477, %v1605
      %v1670 = vsel %vm1542, %v1478, %v1606
      %v1671 = vsel %vm1543, %v1479, %v1607
      %v1672 = vsel %vm1544, %v1480, %v1608
      %v1673 = vsel %vm1545, %v1481, %v1609
      %v1674 = vsel %vm1546, %v1482, %v1610
      %v1675 = vsel %vm1547, %v1483, %v1611
      %v1676 = vsel %vm1548, %v1484, %v1612
      %v1677 = vsel %vm1549, %v1485, %v1613
      %v1678 = vsel %vm1550, %v1486, %v1614
      %v1679 = vsel %vm1551, %v1487, %v1615
      %v1680 = vsel %vm1552, %v1488, %v1616
      %v1681 = vsel %vm1553, %v1489, %v1617
      %v1682 = vsel %vm1554, %v1490, %v1618
      %v1683 = vsel %vm1555, %v1491, %v1619
      %v1684 = vsel %vm1556, %v1492, %v1620
      %v1685 = vsel %vm1557, %v1493, %v1621
      %v1686 = vsel %vm1558, %v1494, %v1622
      %v1687 = vsel %vm1559, %v1495, %v1623
      %1688 = vst [vmem:[%s202] sm:$0xff] %v1624
      %1689 = vst [vmem:[%s202 + $0x8] sm:$0xff] %v1625
      %1690 = vst [vmem:[%s202 + $0x10] sm:$0xff] %v1626
      %1691 = vst [vmem:[%s202 + $0x18] sm:$0xff] %v1627
      %1692 = vst [vmem:[%s202 + $0x20] sm:$0xff] %v1628
      %1693 = vst [vmem:[%s202 + $0x28] sm:$0xff] %v1629
      %1694 = vst [vmem:[%s202 + $0x30] sm:$0xff] %v1630
      %1695 = vst [vmem:[%s202 + $0x38] sm:$0xff] %v1631
      %1696 = vst [vmem:[%s202 + $0x40] sm:$0xff] %v1632
      %1697 = vst [vmem:[%s202 + $0x48] sm:$0xff] %v1633
      %1698 = vst [vmem:[%s202 + $0x50] sm:$0xff] %v1634
      %1699 = vst [vmem:[%s202 + $0x58] sm:$0xff] %v1635
      %1700 = vst [vmem:[%s202 + $0x60] sm:$0xff] %v1636
      %1701 = vst [vmem:[%s202 + $0x68] sm:$0xff] %v1637
      %1702 = vst [vmem:[%s202 + $0x70] sm:$0xff] %v1638
      %1703 = vst [vmem:[%s202 + $0x78] sm:$0xff] %v1639
      %1704 = vst [vmem:[%s202 + $0x80] sm:$0xff] %v1640
      %1705 = vst [vmem:[%s202 + $0x88] sm:$0xff] %v1641
      %1706 = vst [vmem:[%s202 + $0x90] sm:$0xff] %v1642
      %1707 = vst [vmem:[%s202 + $0x98] sm:$0xff] %v1643
      %1708 = vst [vmem:[%s202 + $0xa0] sm:$0xff] %v1644
      %1709 = vst [vmem:[%s202 + $0xa8] sm:$0xff] %v1645
      %1710 = vst [vmem:[%s202 + $0xb0] sm:$0xff] %v1646
      %1711 = vst [vmem:[%s202 + $0xb8] sm:$0xff] %v1647
      %1712 = vst [vmem:[%s202 + $0xc0] sm:$0xff] %v1648
      %1713 = vst [vmem:[%s202 + $0xc8] sm:$0xff] %v1649
      %1714 = vst [vmem:[%s202 + $0xd0] sm:$0xff] %v1650
      %1715 = vst [vmem:[%s202 + $0xd8] sm:$0xff] %v1651
      %1716 = vst [vmem:[%s202 + $0xe0] sm:$0xff] %v1652
      %1717 = vst [vmem:[%s202 + $0xe8] sm:$0xff] %v1653
      %1718 = vst [vmem:[%s202 + $0xf0] sm:$0xff] %v1654
      %1719 = vst [vmem:[%s202 + $0xf8] sm:$0xff] %v1655
      %1720 = vst [vmem:[%s202 + $0x100] sm:$0xff] %v1656
      %1721 = vst [vmem:[%s202 + $0x108] sm:$0xff] %v1657
      %1722 = vst [vmem:[%s202 + $0x110] sm:$0xff] %v1658
      %1723 = vst [vmem:[%s202 + $0x118] sm:$0xff] %v1659
      %1724 = vst [vmem:[%s202 + $0x120] sm:$0xff] %v1660
      %1725 = vst [vmem:[%s202 + $0x128] sm:$0xff] %v1661
      %1726 = vst [vmem:[%s202 + $0x130] sm:$0xff] %v1662
      %1727 = vst [vmem:[%s202 + $0x138] sm:$0xff] %v1663
      %1728 = vst [vmem:[%s202 + $0x140] sm:$0xff] %v1664
      %1729 = vst [vmem:[%s202 + $0x148] sm:$0xff] %v1665
      %1730 = vst [vmem:[%s202 + $0x150] sm:$0xff] %v1666
      %1731 = vst [vmem:[%s202 + $0x158] sm:$0xff] %v1667
      %1732 = vst [vmem:[%s202 + $0x160] sm:$0xff] %v1668
      %1733 = vst [vmem:[%s202 + $0x168] sm:$0xff] %v1669
      %1734 = vst [vmem:[%s202 + $0x170] sm:$0xff] %v1670
      %1735 = vst [vmem:[%s202 + $0x178] sm:$0xff] %v1671
      %1736 = vst [vmem:[%s202 + $0x180] sm:$0xff] %v1672
      %1737 = vst [vmem:[%s202 + $0x188] sm:$0xff] %v1673
      %1738 = vst [vmem:[%s202 + $0x190] sm:$0xff] %v1674
      %1739 = vst [vmem:[%s202 + $0x198] sm:$0xff] %v1675
      %1740 = vst [vmem:[%s202 + $0x1a0] sm:$0xff] %v1676
      %1741 = vst [vmem:[%s202 + $0x1a8] sm:$0xff] %v1677
      %1742 = vst [vmem:[%s202 + $0x1b0] sm:$0xff] %v1678
      %1743 = vst [vmem:[%s202 + $0x1b8] sm:$0xff] %v1679
      %1744 = vst [vmem:[%s202 + $0x1c0] sm:$0xff] %v1680
      %1745 = vst [vmem:[%s202 + $0x1c8] sm:$0xff] %v1681
      %1746 = vst [vmem:[%s202 + $0x1d0] sm:$0xff] %v1682
      %1747 = vst [vmem:[%s202 + $0x1d8] sm:$0xff] %v1683
      %1748 = vst [vmem:[%s202 + $0x1e0] sm:$0xff] %v1684
      %1749 = vst [vmem:[%s202 + $0x1e8] sm:$0xff] %v1685
      %1750 = vst [vmem:[%s202 + $0x1f0] sm:$0xff] %v1686
      %1751 = vst [vmem:[%s202 + $0x1f8] sm:$0xff] %v1687
      %s1752 = smul.u32 64, %s15
      %p1753 = scmp.lt.s32.totalorder %s1752, 255
      %s1754 = scalar_select %p1753, %s1752, 255
      %s1755 = smul.addr %s1754, 8
      %s1756 = scalar_lea.vmem %s4, %s1755
      // Predicated region
      $region37: #{_lambda_.5} parent=35 // pred_check
        %p1757 = pneg %p122
      $region38: #{_lambda_.5} parent=35 // pred_check_branch
        %1759 = sbr.rel (%p1757) target = $region40
      $region39: #{_lambda_.5} parent=35 // pred_region
        %s1760 = smul.u32 64, %s15
      $region40: #{_lambda_.5} parent=35 // pred_fallthru
        _
    $region36: #{_lambda_.5} parent=5 // pred_fallthru
      _
    %p1761 = scmp.le.s32.totalorder 2, %s10
    // Predicated region
    $region41: #{_lambda_.5} parent=5 // pred_check
      %p1762 = pneg %p1761
    $region42: #{_lambda_.5} parent=5 // pred_check_branch
      %1764 = sbr.rel (%p1762) target = $region44
    $region43: #{_lambda_.5} parent=5 // pred_region
      %s1765 = ssub.s32 %s10, 2
      // Predicated region
      $region45: #{_lambda_.5} parent=43 // pred_check
        %p1766 = pneg %p128
      $region46: #{_lambda_.5} parent=43 // pred_check_branch
        %1768 = sbr.rel (%p1766) target = $region48
      $region47: #{_lambda_.5} parent=43 // pred_region
        %s1769 = smul.u32 64, %s16
        %p1770 = scmp.lt.s32.totalorder %s1769, 255
        %s1771 = scalar_select %p1770, %s1769, 255
        %s1772 = smul.addr %s1771, 8
        %s1773 = scalar_lea.vmem %s4, %s1772
      $region48: #{_lambda_.5} parent=43 // pred_fallthru
        _
    $region44: #{_lambda_.5} parent=5 // pred_fallthru
      _
  $region6: #{_lambda_.5} parent=0 // loop_footer
    %s14 = sadd.s32 1, %s10
  $region7: #{_lambda_.5} parent=0 // loop_footer_branch
    %9 = sbr.rel target = $region3
  $region8: #{_lambda_.5} parent=0 // loop_exit
    _

// kernel: tile.46
$region0: #{tile.46}
  #allocation0 [shape = 's32[1]{0}', space=sflag, size = 0x4, scoped, tag = 'scoped memory for tile.46']
  %s0 = inlined_call_operand.vmem [shape: f32[16], index: 0, kind: input, shape index: {}]
  %s1 = inlined_call_operand.vmem [shape: f32[8,16], index: 1, kind: output, shape index: {}]
  // Predicated region
  $region2: #{tile.46} parent=0 // pred_check
    _
  $region3: #{tile.46} parent=0 // pred_check_branch
    %3 = sbr.rel (0) target = $region5
  $region4: #{tile.46} parent=0 // pred_region
    _
  $region5: #{tile.46} parent=0 // pred_fallthru
    _
  %v4 = vld [vmem:[%s0] ss:$0 sm:$0xff]
  %5 = vst [vmem:[%s1] sm:$0xff] %v4

// kernel: tile.47
$region0: #{tile.47}
  %s0 = inlined_call_operand.vmem [shape: f32[8,16], index: 0, kind: input, shape index: {}]
  %s1 = inlined_call_operand.vmem [shape: f32[1,128], index: 1, kind: output, shape index: {}]
  $region1: #{tile.47} parent=0
    #allocation0 [shape = 'u8[4096]{0}', space=vmem, size = 0x1000, scoped, tag = 'scoped mem for output reshape']
    %v2 = vld [vmem:[%s0] sm:$0x1]
    %vm3 = vcmask 130048
    %4 = vst.msk [vmem:[#allocation0] sm:$0x1] %vm3, %v2
    %s5 = scalar_lea.vmem %s0, 7
    %v6 = vld [vmem:[%s5] sm:$0x1]
    %7 = vrot.lane.b32.xlu0 %v6, 112
    %v8 = vpop.permute.xlu0 %7
    %vm9 = vcmask 1048448
    %10 = vst.msk [vmem:[#allocation0] sm:$0x1] %vm9, %v8
    %s11 = scalar_lea.vmem %s0, 6
    %v12 = vld [vmem:[%s11] sm:$0x1]
    %13 = vrot.lane.b32.xlu0 %v12, 96
    %v14 = vpop.permute.xlu0 %13
    %vm15 = vcmask 917248
    %16 = vst.msk [vmem:[#allocation0] sm:$0x1] %vm15, %v14
    %s17 = scalar_lea.vmem %s0, 5
    %v18 = vld [vmem:[%s17] sm:$0x1]
    %19 = vrot.lane.b32.xlu0 %v18, 80
    %v20 = vpop.permute.xlu0 %19
    %vm21 = vcmask 786048
    %22 = vst.msk [vmem:[#allocation0] sm:$0x1] %vm21, %v20
    %s23 = scalar_lea.vmem %s0, 4
    %v24 = vld [vmem:[%s23] sm:$0x1]
    %25 = vrot.lane.b32.xlu0 %v24, 64
    %v26 = vpop.permute.xlu0 %25
    %vm27 = vcmask 654848
    %28 = vst.msk [vmem:[#allocation0] sm:$0x1] %vm27, %v26
    %s29 = scalar_lea.vmem %s0, 3
    %v30 = vld [vmem:[%s29] sm:$0x1]
    %31 = vrot.lane.b32.xlu0 %v30, 48
    %v32 = vpop.permute.xlu0 %31
    %vm33 = vcmask 523648
    %34 = vst.msk [vmem:[#allocation0] sm:$0x1] %vm33, %v32
    %s35 = scalar_lea.vmem %s0, 2
    %v36 = vld [vmem:[%s35] sm:$0x1]
    %37 = vrot.lane.b32.xlu0 %v36, 32
    %v38 = vpop.permute.xlu0 %37
    %vm39 = vcmask 392448
    %40 = vst.msk [vmem:[#allocation0] sm:$0x1] %vm39, %v38
    %s41 = scalar_lea.vmem %s0, 1
    %v42 = vld [vmem:[%s41] sm:$0x1]
    %43 = vrot.lane.b32.xlu0 %v42, 16
    %v44 = vpop.permute.xlu0 %43
    %vm45 = vcmask 261248
    %46 = vst.msk [vmem:[#allocation0] sm:$0x1] %vm45, %v44
    %s48 = ssub.s32 2, 1
    %v49 = vld [vmem:[#allocation0] sm:%s48]
    %s51 = ssub.s32 2, 1
    %52 = vst [vmem:[%s1] sm:%s51] %v49

// kernel: _lambda_.6
$region0: #{_lambda_.6}
  #allocation0 [shape = 'u32[]', space=smem, size = 0x4, offset = 0x4, fixed_abs, tag = 'smem constant byte address 0x4 - core index']
  #allocation1 [shape = 'u32[72,128]{1,0:T(1,128)}', space=vmem, size = 0x9000, scoped, tag = 'internal scratch']
  %s0 = inlined_call_operand.vmem [shape: f32[1024,640], index: 0, kind: input, shape index: {}]
  %s1 = inlined_call_operand.vmem [shape: f32[640,128], index: 1, kind: input, shape index: {}]
  %s2 = inlined_call_operand.vmem [shape: f32[1,128], index: 2, kind: input, shape index: {}]
  %s3 = inlined_call_operand.vmem [shape: f32[1,128], index: 3, kind: input, shape index: {}]
  %s4 = inlined_call_operand.vmem [shape: f32[1024,128], index: 4, kind: output, shape index: {}]
  %s5 = sld [smem:[#allocation0]]
  $region49: #{_lambda_.6} parent=0
    _
  %s7 = ssub.s32 1, %s5
  %s8 = scalar_select 0, %s7, %s5
  loop: start=0, step=1, limit=4
  $region2: #{_lambda_.6} parent=0 // loop_pre_header
    _
  $region3: #{_lambda_.6} parent=0 // loop_header
    %s10 = sphi 0, %s14
    %p11 = scmp.ge.s32.totalorder %s10, 4
    %s20 = sphi 0, %s22
    %s23 = sphi 0, %s20
    %s24 = sphi 0, %s23
    %s40 = sphi 0, %s24
    %s44 = sphi 0, %s44
    %s46 = sphi 0, %s44
    %s47 = sphi 0, %s46
    %s61 = sphi 0, %s47
    %s65 = sphi 0, %s65
    %s67 = sphi 0, %s65
    %s68 = sphi 0, %s67
    %s82 = sphi 0, %s68
    %s86 = sphi 0, %s86
    %s88 = sphi 0, %s86
    %s89 = sphi 0, %s88
    %s103 = sphi 0, %s89
    %s109 = sphi 0, %s111
    %s112 = sphi 0, %s109
    %s113 = sphi 0, %s112
    %s129 = sphi 0, %s113
  $region4: #{_lambda_.6} parent=0 // loop_header_branch
    %13 = sbr.rel (%p11) target = $region8
  $region5: #{_lambda_.6} parent=0 // loop_body
    %s15 = ssub.s32 %s10, 1
    %s16 = ssub.s32 %s10, 2
    %s17 = sadd.s32 %s10, 1
    %s18 = ssub.s32 %s10, %s17
    %p19 = scmp.eq.s32.totalorder %s18, 0
    %s21 = sadd.s32 %s20, 1
    %s22 = scalar_select %p19, %s20, %s21
    %p25 = pneg %p19
    %p26 = scmp.eq.s32.totalorder %s10, 1
    %p27 = por %p25, %p26
    %p28 = scmp.ne.s32.totalorder %s20, %s23
    %p29 = scmp.eq.s32.totalorder %s10, 0
    %p30 = por %p28, %p29
    %p31 = scmp.ne.s32.totalorder %s20, %s23
    %p32 = scmp.eq.s32.totalorder %s15, 1
    %p33 = por %p31, %p32
    %p34 = scmp.ne.s32.totalorder %s23, %s24
    %p35 = scmp.eq.s32.totalorder %s15, 0
    %p36 = por %p34, %p35
    %p37 = scmp.ne.s32.totalorder %s23, %s24
    %p38 = scmp.eq.s32.totalorder %s16, 1
    %p39 = por %p37, %p38
    %p41 = scmp.ne.s32.totalorder %s24, %s40
    %p42 = scmp.eq.s32.totalorder %s16, 0
    %p43 = por %p41, %p42
    %s45 = sadd.s32 %s44, 1
    %p48 = scmp.eq.s32.totalorder %s10, 1
    %p49 = scmp.ne.s32.totalorder %s44, %s46
    %p50 = scmp.eq.s32.totalorder %s10, 0
    %p51 = por %p49, %p50
    %p52 = scmp.ne.s32.totalorder %s44, %s46
    %p53 = scmp.eq.s32.totalorder %s15, 1
    %p54 = por %p52, %p53
    %p55 = scmp.ne.s32.totalorder %s46, %s47
    %p56 = scmp.eq.s32.totalorder %s15, 0
    %p57 = por %p55, %p56
    %p58 = scmp.ne.s32.totalorder %s46, %s47
    %p59 = scmp.eq.s32.totalorder %s16, 1
    %p60 = por %p58, %p59
    %p62 = scmp.ne.s32.totalorder %s47, %s61
    %p63 = scmp.eq.s32.totalorder %s16, 0
    %p64 = por %p62, %p63
    %s66 = sadd.s32 %s65, 1
    %p69 = scmp.eq.s32.totalorder %s10, 1
    %p70 = scmp.ne.s32.totalorder %s65, %s67
    %p71 = scmp.eq.s32.totalorder %s10, 0
    %p72 = por %p70, %p71
    %p73 = scmp.ne.s32.totalorder %s65, %s67
    %p74 = scmp.eq.s32.totalorder %s15, 1
    %p75 = por %p73, %p74
    %p76 = scmp.ne.s32.totalorder %s67, %s68
    %p77 = scmp.eq.s32.totalorder %s15, 0
    %p78 = por %p76, %p77
    %p79 = scmp.ne.s32.totalorder %s67, %s68
    %p80 = scmp.eq.s32.totalorder %s16, 1
    %p81 = por %p79, %p80
    %p83 = scmp.ne.s32.totalorder %s68, %s82
    %p84 = scmp.eq.s32.totalorder %s16, 0
    %p85 = por %p83, %p84
    %s87 = sadd.s32 %s86, 1
    %p90 = scmp.eq.s32.totalorder %s10, 1
    %p91 = scmp.ne.s32.totalorder %s86, %s88
    %p92 = scmp.eq.s32.totalorder %s10, 0
    %p93 = por %p91, %p92
    %p94 = scmp.ne.s32.totalorder %s86, %s88
    %p95 = scmp.eq.s32.totalorder %s15, 1
    %p96 = por %p94, %p95
    %p97 = scmp.ne.s32.totalorder %s88, %s89
    %p98 = scmp.eq.s32.totalorder %s15, 0
    %p99 = por %p97, %p98
    %p100 = scmp.ne.s32.totalorder %s88, %s89
    %p101 = scmp.eq.s32.totalorder %s16, 1
    %p102 = por %p100, %p101
    %p104 = scmp.ne.s32.totalorder %s89, %s103
    %p105 = scmp.eq.s32.totalorder %s16, 0
    %p106 = por %p104, %p105
    %s107 = ssub.s32 %s10, %s17
    %p108 = scmp.eq.s32.totalorder %s107, 0
    %s110 = sadd.s32 %s109, 1
    %s111 = scalar_select %p108, %s109, %s110
    %p114 = pneg %p108
    %p115 = scmp.eq.s32.totalorder %s10, 1
    %p116 = por %p114, %p115
    %p117 = scmp.ne.s32.totalorder %s109, %s112
    %p118 = scmp.eq.s32.totalorder %s10, 0
    %p119 = por %p117, %p118
    %p120 = scmp.ne.s32.totalorder %s109, %s112
    %p121 = scmp.eq.s32.totalorder %s15, 1
    %p122 = por %p120, %p121
    %p123 = scmp.ne.s32.totalorder %s112, %s113
    %p124 = scmp.eq.s32.totalorder %s15, 0
    %p125 = por %p123, %p124
    %p126 = scmp.ne.s32.totalorder %s112, %s113
    %p127 = scmp.eq.s32.totalorder %s16, 1
    %p128 = por %p126, %p127
    %p130 = scmp.ne.s32.totalorder %s113, %s129
    %p131 = scmp.eq.s32.totalorder %s16, 0
    %p132 = por %p130, %p131
    %p133 = scmp.le.s32.totalorder 1, %s10
    %p134 = scmp.lt.s32.totalorder %s10, 3
    %p135 = pnand %p133, %p134
    %p136 = pneg %p135
    // Predicated region
    $region9: #{_lambda_.6} parent=5 // pred_check
      _
    $region10: #{_lambda_.6} parent=5 // pred_check_branch
      %138 = sbr.rel (%p135) target = $region12
    $region11: #{_lambda_.6} parent=5 // pred_region
      %s139 = ssub.s32 %s10, 1
      // Predicated region
      $region13: #{_lambda_.6} parent=11 // pred_check
        %p140 = pneg %p57
      $region14: #{_lambda_.6} parent=11 // pred_check_branch
        %142 = sbr.rel (%p140) target = $region16
      $region15: #{_lambda_.6} parent=11 // pred_region
        _
      $region16: #{_lambda_.6} parent=11 // pred_fallthru
        _
      // Predicated region
      $region17: #{_lambda_.6} parent=11 // pred_check
        %p143 = pneg %p78
      $region18: #{_lambda_.6} parent=11 // pred_check_branch
        %145 = sbr.rel (%p143) target = $region20
      $region19: #{_lambda_.6} parent=11 // pred_region
        _
      $region20: #{_lambda_.6} parent=11 // pred_fallthru
        _
      // Predicated region
      $region21: #{_lambda_.6} parent=11 // pred_check
        %p146 = pneg %p99
      $region22: #{_lambda_.6} parent=11 // pred_check_branch
        %148 = sbr.rel (%p146) target = $region24
      $region23: #{_lambda_.6} parent=11 // pred_region
        _
      $region24: #{_lambda_.6} parent=11 // pred_fallthru
        _
    $region12: #{_lambda_.6} parent=5 // pred_fallthru
      _
    %p149 = scmp.lt.s32.totalorder %s10, 2
    // Predicated region
    $region25: #{_lambda_.6} parent=5 // pred_check
      %p150 = pneg %p149
    $region26: #{_lambda_.6} parent=5 // pred_check_branch
      %152 = sbr.rel (%p150) target = $region28
    $region27: #{_lambda_.6} parent=5 // pred_region
      // Predicated region
      $region29: #{_lambda_.6} parent=27 // pred_check
        %p153 = pneg %p30
      $region30: #{_lambda_.6} parent=27 // pred_check_branch
        %155 = sbr.rel (%p153) target = $region32
      $region31: #{_lambda_.6} parent=27 // pred_region
        %s156 = smul.u32 64, %s10
        %p157 = scmp.lt.s32.totalorder %s156, 127
        %s158 = scalar_select %p157, %s156, 127
        %s159 = smul.addr %s158, 5
        %s160 = smul.addr %s159, 8
        %s161 = scalar_lea.vmem %s0, %s160
        %s162 = smul.u32 64, %s10
      $region32: #{_lambda_.6} parent=27 // pred_fallthru
        _
    $region28: #{_lambda_.6} parent=5 // pred_fallthru
      _
    %p163 = scmp.le.s32.totalorder 1, %s10
    %p164 = scmp.lt.s32.totalorder %s10, 3
    %p165 = pnand %p163, %p164
    %p166 = pneg %p165
    // Predicated region
    $region33: #{_lambda_.6} parent=5 // pred_check
      _
    $region34: #{_lambda_.6} parent=5 // pred_check_branch
      %168 = sbr.rel (%p165) target = $region36
    $region35: #{_lambda_.6} parent=5 // pred_region
      %s169 = ssub.s32 %s10, 1
      %s170 = smul.u32 64, %s15
      %p171 = scmp.lt.s32.totalorder %s170, 127
      %s172 = scalar_select %p171, %s170, 127
      %s173 = smul.addr %s172, 5
      %s174 = smul.addr %s173, 8
      %s175 = scalar_lea.vmem %s0, %s174
      %p176 = pneg %p36
      %p177 = pneg %p33
      %p178 = pneg %p57
      %p179 = pneg %p54
      %p180 = pneg %p78
      %p181 = pneg %p75
      %p182 = pneg %p99
      %p183 = pneg %p96
      %p184 = pneg %p125
      %p185 = pneg %p122
      %s186 = smul.u32 64, %s15
      %p187 = scmp.lt.s32.totalorder %s186, 127
      %s188 = scalar_select %p187, %s186, 127
      %s189 = smul.addr %s188, 8
      %s190 = scalar_lea.vmem %s4, %s189
      %s191 = smul.u32 64, %s15
      %p192 = scmp.lt.s32.totalorder %s191, 127
      %s193 = scalar_select %p192, %s191, 127
      %s194 = smul.addr %s193, 5
      %s195 = smul.addr %s194, 8
      %s196 = scalar_lea.vmem %s0, %s195
      %s197 = smul.u32 64, %s15
      %s198 = smul.u32 64, %s15
      %p199 = scmp.lt.s32.totalorder %s198, 127
      %s200 = scalar_select %p199, %s198, 127
      %s201 = smul.addr %s200, 8
      %s202 = scalar_lea.vmem %s4, %s201
      %s203 = smul.u32 64, %s15
      %v204 = vld [vmem:[%s196] sm:$0xff]
      %v205 = vld [vmem:[%s196 + $0x8] sm:$0xff]
      %v206 = vld [vmem:[%s196 + $0x10] sm:$0xff]
      %v207 = vld [vmem:[%s196 + $0x18] sm:$0xff]
      %v208 = vld [vmem:[%s196 + $0x20] sm:$0xff]
      %v209 = vld [vmem:[%s196 + $0x28] sm:$0xff]
      %v210 = vld [vmem:[%s196 + $0x30] sm:$0xff]
      %v211 = vld [vmem:[%s196 + $0x38] sm:$0xff]
      %v212 = vld [vmem:[%s196 + $0x40] sm:$0xff]
      %v213 = vld [vmem:[%s196 + $0x48] sm:$0xff]
      %v214 = vld [vmem:[%s196 + $0x50] sm:$0xff]
      %v215 = vld [vmem:[%s196 + $0x58] sm:$0xff]
      %v216 = vld [vmem:[%s196 + $0x60] sm:$0xff]
      %v217 = vld [vmem:[%s196 + $0x68] sm:$0xff]
      %v218 = vld [vmem:[%s196 + $0x70] sm:$0xff]
      %v219 = vld [vmem:[%s196 + $0x78] sm:$0xff]
      %v220 = vld [vmem:[%s196 + $0x80] sm:$0xff]
      %v221 = vld [vmem:[%s196 + $0x88] sm:$0xff]
      %v222 = vld [vmem:[%s196 + $0x90] sm:$0xff]
      %v223 = vld [vmem:[%s196 + $0x98] sm:$0xff]
      %v224 = vld [vmem:[%s196 + $0xa0] sm:$0xff]
      %v225 = vld [vmem:[%s196 + $0xa8] sm:$0xff]
      %v226 = vld [vmem:[%s196 + $0xb0] sm:$0xff]
      %v227 = vld [vmem:[%s196 + $0xb8] sm:$0xff]
      %v228 = vld [vmem:[%s196 + $0xc0] sm:$0xff]
      %v229 = vld [vmem:[%s196 + $0xc8] sm:$0xff]
      %v230 = vld [vmem:[%s196 + $0xd0] sm:$0xff]
      %v231 = vld [vmem:[%s196 + $0xd8] sm:$0xff]
      %v232 = vld [vmem:[%s196 + $0xe0] sm:$0xff]
      %v233 = vld [vmem:[%s196 + $0xe8] sm:$0xff]
      %v234 = vld [vmem:[%s196 + $0xf0] sm:$0xff]
      %v235 = vld [vmem:[%s196 + $0xf8] sm:$0xff]
      %v236 = vld [vmem:[%s196 + $0x100] sm:$0xff]
      %v237 = vld [vmem:[%s196 + $0x108] sm:$0xff]
      %v238 = vld [vmem:[%s196 + $0x110] sm:$0xff]
      %v239 = vld [vmem:[%s196 + $0x118] sm:$0xff]
      %v240 = vld [vmem:[%s196 + $0x120] sm:$0xff]
      %v241 = vld [vmem:[%s196 + $0x128] sm:$0xff]
      %v242 = vld [vmem:[%s196 + $0x130] sm:$0xff]
      %v243 = vld [vmem:[%s196 + $0x138] sm:$0xff]
      %v244 = vld [vmem:[%s196 + $0x140] sm:$0xff]
      %v245 = vld [vmem:[%s196 + $0x148] sm:$0xff]
      %v246 = vld [vmem:[%s196 + $0x150] sm:$0xff]
      %v247 = vld [vmem:[%s196 + $0x158] sm:$0xff]
      %v248 = vld [vmem:[%s196 + $0x160] sm:$0xff]
      %v249 = vld [vmem:[%s196 + $0x168] sm:$0xff]
      %v250 = vld [vmem:[%s196 + $0x170] sm:$0xff]
      %v251 = vld [vmem:[%s196 + $0x178] sm:$0xff]
      %v252 = vld [vmem:[%s196 + $0x180] sm:$0xff]
      %v253 = vld [vmem:[%s196 + $0x188] sm:$0xff]
      %v254 = vld [vmem:[%s196 + $0x190] sm:$0xff]
      %v255 = vld [vmem:[%s196 + $0x198] sm:$0xff]
      %v256 = vld [vmem:[%s196 + $0x1a0] sm:$0xff]
      %v257 = vld [vmem:[%s196 + $0x1a8] sm:$0xff]
      %v258 = vld [vmem:[%s196 + $0x1b0] sm:$0xff]
      %v259 = vld [vmem:[%s196 + $0x1b8] sm:$0xff]
      %v260 = vld [vmem:[%s196 + $0x1c0] sm:$0xff]
      %v261 = vld [vmem:[%s196 + $0x1c8] sm:$0xff]
      %v262 = vld [vmem:[%s196 + $0x1d0] sm:$0xff]
      %v263 = vld [vmem:[%s196 + $0x1d8] sm:$0xff]
      %v264 = vld [vmem:[%s196 + $0x1e0] sm:$0xff]
      %v265 = vld [vmem:[%s196 + $0x1e8] sm:$0xff]
      %v266 = vld [vmem:[%s196 + $0x1f0] sm:$0xff]
      %v267 = vld [vmem:[%s196 + $0x1f8] sm:$0xff]
      %v268 = vld [vmem:[%s196 + $0x200] sm:$0xff]
      %v269 = vld [vmem:[%s196 + $0x208] sm:$0xff]
      %v270 = vld [vmem:[%s196 + $0x210] sm:$0xff]
      %v271 = vld [vmem:[%s196 + $0x218] sm:$0xff]
      %v272 = vld [vmem:[%s196 + $0x220] sm:$0xff]
      %v273 = vld [vmem:[%s196 + $0x228] sm:$0xff]
      %v274 = vld [vmem:[%s196 + $0x230] sm:$0xff]
      %v275 = vld [vmem:[%s196 + $0x238] sm:$0xff]
      %v276 = vld [vmem:[%s196 + $0x240] sm:$0xff]
      %v277 = vld [vmem:[%s196 + $0x248] sm:$0xff]
      %v278 = vld [vmem:[%s196 + $0x250] sm:$0xff]
      %v279 = vld [vmem:[%s196 + $0x258] sm:$0xff]
      %v280 = vld [vmem:[%s196 + $0x260] sm:$0xff]
      %v281 = vld [vmem:[%s196 + $0x268] sm:$0xff]
      %v282 = vld [vmem:[%s196 + $0x270] sm:$0xff]
      %v283 = vld [vmem:[%s196 + $0x278] sm:$0xff]
      %v284 = vld [vmem:[%s196 + $0x280] sm:$0xff]
      %v285 = vld [vmem:[%s196 + $0x288] sm:$0xff]
      %v286 = vld [vmem:[%s196 + $0x290] sm:$0xff]
      %v287 = vld [vmem:[%s196 + $0x298] sm:$0xff]
      %v288 = vld [vmem:[%s196 + $0x2a0] sm:$0xff]
      %v289 = vld [vmem:[%s196 + $0x2a8] sm:$0xff]
      %v290 = vld [vmem:[%s196 + $0x2b0] sm:$0xff]
      %v291 = vld [vmem:[%s196 + $0x2b8] sm:$0xff]
      %v292 = vld [vmem:[%s196 + $0x2c0] sm:$0xff]
      %v293 = vld [vmem:[%s196 + $0x2c8] sm:$0xff]
      %v294 = vld [vmem:[%s196 + $0x2d0] sm:$0xff]
      %v295 = vld [vmem:[%s196 + $0x2d8] sm:$0xff]
      %v296 = vld [vmem:[%s196 + $0x2e0] sm:$0xff]
      %v297 = vld [vmem:[%s196 + $0x2e8] sm:$0xff]
      %v298 = vld [vmem:[%s196 + $0x2f0] sm:$0xff]
      %v299 = vld [vmem:[%s196 + $0x2f8] sm:$0xff]
      %v300 = vld [vmem:[%s196 + $0x300] sm:$0xff]
      %v301 = vld [vmem:[%s196 + $0x308] sm:$0xff]
      %v302 = vld [vmem:[%s196 + $0x310] sm:$0xff]
      %v303 = vld [vmem:[%s196 + $0x318] sm:$0xff]
      %v304 = vld [vmem:[%s196 + $0x320] sm:$0xff]
      %v305 = vld [vmem:[%s196 + $0x328] sm:$0xff]
      %v306 = vld [vmem:[%s196 + $0x330] sm:$0xff]
      %v307 = vld [vmem:[%s196 + $0x338] sm:$0xff]
      %v308 = vld [vmem:[%s196 + $0x340] sm:$0xff]
      %v309 = vld [vmem:[%s196 + $0x348] sm:$0xff]
      %v310 = vld [vmem:[%s196 + $0x350] sm:$0xff]
      %v311 = vld [vmem:[%s196 + $0x358] sm:$0xff]
      %v312 = vld [vmem:[%s196 + $0x360] sm:$0xff]
      %v313 = vld [vmem:[%s196 + $0x368] sm:$0xff]
      %v314 = vld [vmem:[%s196 + $0x370] sm:$0xff]
      %v315 = vld [vmem:[%s196 + $0x378] sm:$0xff]
      %v316 = vld [vmem:[%s196 + $0x380] sm:$0xff]
      %v317 = vld [vmem:[%s196 + $0x388] sm:$0xff]
      %v318 = vld [vmem:[%s196 + $0x390] sm:$0xff]
      %v319 = vld [vmem:[%s196 + $0x398] sm:$0xff]
      %v320 = vld [vmem:[%s196 + $0x3a0] sm:$0xff]
      %v321 = vld [vmem:[%s196 + $0x3a8] sm:$0xff]
      %v322 = vld [vmem:[%s196 + $0x3b0] sm:$0xff]
      %v323 = vld [vmem:[%s196 + $0x3b8] sm:$0xff]
      %v324 = vld [vmem:[%s196 + $0x3c0] sm:$0xff]
      %v325 = vld [vmem:[%s196 + $0x3c8] sm:$0xff]
      %v326 = vld [vmem:[%s196 + $0x3d0] sm:$0xff]
      %v327 = vld [vmem:[%s196 + $0x3d8] sm:$0xff]
      %v328 = vld [vmem:[%s196 + $0x3e0] sm:$0xff]
      %v329 = vld [vmem:[%s196 + $0x3e8] sm:$0xff]
      %v330 = vld [vmem:[%s196 + $0x3f0] sm:$0xff]
      %v331 = vld [vmem:[%s196 + $0x3f8] sm:$0xff]
      %v332 = vld [vmem:[%s196 + $0x400] sm:$0xff]
      %v333 = vld [vmem:[%s196 + $0x408] sm:$0xff]
      %v334 = vld [vmem:[%s196 + $0x410] sm:$0xff]
      %v335 = vld [vmem:[%s196 + $0x418] sm:$0xff]
      %v336 = vld [vmem:[%s196 + $0x420] sm:$0xff]
      %v337 = vld [vmem:[%s196 + $0x428] sm:$0xff]
      %v338 = vld [vmem:[%s196 + $0x430] sm:$0xff]
      %v339 = vld [vmem:[%s196 + $0x438] sm:$0xff]
      %v340 = vld [vmem:[%s196 + $0x440] sm:$0xff]
      %v341 = vld [vmem:[%s196 + $0x448] sm:$0xff]
      %v342 = vld [vmem:[%s196 + $0x450] sm:$0xff]
      %v343 = vld [vmem:[%s196 + $0x458] sm:$0xff]
      %v344 = vld [vmem:[%s196 + $0x460] sm:$0xff]
      %v345 = vld [vmem:[%s196 + $0x468] sm:$0xff]
      %v346 = vld [vmem:[%s196 + $0x470] sm:$0xff]
      %v347 = vld [vmem:[%s196 + $0x478] sm:$0xff]
      %v348 = vld [vmem:[%s196 + $0x480] sm:$0xff]
      %v349 = vld [vmem:[%s196 + $0x488] sm:$0xff]
      %v350 = vld [vmem:[%s196 + $0x490] sm:$0xff]
      %v351 = vld [vmem:[%s196 + $0x498] sm:$0xff]
      %v352 = vld [vmem:[%s196 + $0x4a0] sm:$0xff]
      %v353 = vld [vmem:[%s196 + $0x4a8] sm:$0xff]
      %v354 = vld [vmem:[%s196 + $0x4b0] sm:$0xff]
      %v355 = vld [vmem:[%s196 + $0x4b8] sm:$0xff]
      %v356 = vld [vmem:[%s196 + $0x4c0] sm:$0xff]
      %v357 = vld [vmem:[%s196 + $0x4c8] sm:$0xff]
      %v358 = vld [vmem:[%s196 + $0x4d0] sm:$0xff]
      %v359 = vld [vmem:[%s196 + $0x4d8] sm:$0xff]
      %v360 = vld [vmem:[%s196 + $0x4e0] sm:$0xff]
      %v361 = vld [vmem:[%s196 + $0x4e8] sm:$0xff]
      %v362 = vld [vmem:[%s196 + $0x4f0] sm:$0xff]
      %v363 = vld [vmem:[%s196 + $0x4f8] sm:$0xff]
      %v364 = vld [vmem:[%s196 + $0x500] sm:$0xff]
      %v365 = vld [vmem:[%s196 + $0x508] sm:$0xff]
      %v366 = vld [vmem:[%s196 + $0x510] sm:$0xff]
      %v367 = vld [vmem:[%s196 + $0x518] sm:$0xff]
      %v368 = vld [vmem:[%s196 + $0x520] sm:$0xff]
      %v369 = vld [vmem:[%s196 + $0x528] sm:$0xff]
      %v370 = vld [vmem:[%s196 + $0x530] sm:$0xff]
      %v371 = vld [vmem:[%s196 + $0x538] sm:$0xff]
      %v372 = vld [vmem:[%s196 + $0x540] sm:$0xff]
      %v373 = vld [vmem:[%s196 + $0x548] sm:$0xff]
      %v374 = vld [vmem:[%s196 + $0x550] sm:$0xff]
      %v375 = vld [vmem:[%s196 + $0x558] sm:$0xff]
      %v376 = vld [vmem:[%s196 + $0x560] sm:$0xff]
      %v377 = vld [vmem:[%s196 + $0x568] sm:$0xff]
      %v378 = vld [vmem:[%s196 + $0x570] sm:$0xff]
      %v379 = vld [vmem:[%s196 + $0x578] sm:$0xff]
      %v380 = vld [vmem:[%s196 + $0x580] sm:$0xff]
      %v381 = vld [vmem:[%s196 + $0x588] sm:$0xff]
      %v382 = vld [vmem:[%s196 + $0x590] sm:$0xff]
      %v383 = vld [vmem:[%s196 + $0x598] sm:$0xff]
      %v384 = vld [vmem:[%s196 + $0x5a0] sm:$0xff]
      %v385 = vld [vmem:[%s196 + $0x5a8] sm:$0xff]
      %v386 = vld [vmem:[%s196 + $0x5b0] sm:$0xff]
      %v387 = vld [vmem:[%s196 + $0x5b8] sm:$0xff]
      %v388 = vld [vmem:[%s196 + $0x5c0] sm:$0xff]
      %v389 = vld [vmem:[%s196 + $0x5c8] sm:$0xff]
      %v390 = vld [vmem:[%s196 + $0x5d0] sm:$0xff]
      %v391 = vld [vmem:[%s196 + $0x5d8] sm:$0xff]
      %v392 = vld [vmem:[%s196 + $0x5e0] sm:$0xff]
      %v393 = vld [vmem:[%s196 + $0x5e8] sm:$0xff]
      %v394 = vld [vmem:[%s196 + $0x5f0] sm:$0xff]
      %v395 = vld [vmem:[%s196 + $0x5f8] sm:$0xff]
      %v396 = vld [vmem:[%s196 + $0x600] sm:$0xff]
      %v397 = vld [vmem:[%s196 + $0x608] sm:$0xff]
      %v398 = vld [vmem:[%s196 + $0x610] sm:$0xff]
      %v399 = vld [vmem:[%s196 + $0x618] sm:$0xff]
      %v400 = vld [vmem:[%s196 + $0x620] sm:$0xff]
      %v401 = vld [vmem:[%s196 + $0x628] sm:$0xff]
      %v402 = vld [vmem:[%s196 + $0x630] sm:$0xff]
      %v403 = vld [vmem:[%s196 + $0x638] sm:$0xff]
      %v404 = vld [vmem:[%s196 + $0x640] sm:$0xff]
      %v405 = vld [vmem:[%s196 + $0x648] sm:$0xff]
      %v406 = vld [vmem:[%s196 + $0x650] sm:$0xff]
      %v407 = vld [vmem:[%s196 + $0x658] sm:$0xff]
      %v408 = vld [vmem:[%s196 + $0x660] sm:$0xff]
      %v409 = vld [vmem:[%s196 + $0x668] sm:$0xff]
      %v410 = vld [vmem:[%s196 + $0x670] sm:$0xff]
      %v411 = vld [vmem:[%s196 + $0x678] sm:$0xff]
      %v412 = vld [vmem:[%s196 + $0x680] sm:$0xff]
      %v413 = vld [vmem:[%s196 + $0x688] sm:$0xff]
      %v414 = vld [vmem:[%s196 + $0x690] sm:$0xff]
      %v415 = vld [vmem:[%s196 + $0x698] sm:$0xff]
      %v416 = vld [vmem:[%s196 + $0x6a0] sm:$0xff]
      %v417 = vld [vmem:[%s196 + $0x6a8] sm:$0xff]
      %v418 = vld [vmem:[%s196 + $0x6b0] sm:$0xff]
      %v419 = vld [vmem:[%s196 + $0x6b8] sm:$0xff]
      %v420 = vld [vmem:[%s196 + $0x6c0] sm:$0xff]
      %v421 = vld [vmem:[%s196 + $0x6c8] sm:$0xff]
      %v422 = vld [vmem:[%s196 + $0x6d0] sm:$0xff]
      %v423 = vld [vmem:[%s196 + $0x6d8] sm:$0xff]
      %v424 = vld [vmem:[%s196 + $0x6e0] sm:$0xff]
      %v425 = vld [vmem:[%s196 + $0x6e8] sm:$0xff]
      %v426 = vld [vmem:[%s196 + $0x6f0] sm:$0xff]
      %v427 = vld [vmem:[%s196 + $0x6f8] sm:$0xff]
      %v428 = vld [vmem:[%s196 + $0x700] sm:$0xff]
      %v429 = vld [vmem:[%s196 + $0x708] sm:$0xff]
      %v430 = vld [vmem:[%s196 + $0x710] sm:$0xff]
      %v431 = vld [vmem:[%s196 + $0x718] sm:$0xff]
      %v432 = vld [vmem:[%s196 + $0x720] sm:$0xff]
      %v433 = vld [vmem:[%s196 + $0x728] sm:$0xff]
      %v434 = vld [vmem:[%s196 + $0x730] sm:$0xff]
      %v435 = vld [vmem:[%s196 + $0x738] sm:$0xff]
      %v436 = vld [vmem:[%s196 + $0x740] sm:$0xff]
      %v437 = vld [vmem:[%s196 + $0x748] sm:$0xff]
      %v438 = vld [vmem:[%s196 + $0x750] sm:$0xff]
      %v439 = vld [vmem:[%s196 + $0x758] sm:$0xff]
      %v440 = vld [vmem:[%s196 + $0x760] sm:$0xff]
      %v441 = vld [vmem:[%s196 + $0x768] sm:$0xff]
      %v442 = vld [vmem:[%s196 + $0x770] sm:$0xff]
      %v443 = vld [vmem:[%s196 + $0x778] sm:$0xff]
      %v444 = vld [vmem:[%s196 + $0x780] sm:$0xff]
      %v445 = vld [vmem:[%s196 + $0x788] sm:$0xff]
      %v446 = vld [vmem:[%s196 + $0x790] sm:$0xff]
      %v447 = vld [vmem:[%s196 + $0x798] sm:$0xff]
      %v448 = vld [vmem:[%s196 + $0x7a0] sm:$0xff]
      %v449 = vld [vmem:[%s196 + $0x7a8] sm:$0xff]
      %v450 = vld [vmem:[%s196 + $0x7b0] sm:$0xff]
      %v451 = vld [vmem:[%s196 + $0x7b8] sm:$0xff]
      %v452 = vld [vmem:[%s196 + $0x7c0] sm:$0xff]
      %v453 = vld [vmem:[%s196 + $0x7c8] sm:$0xff]
      %v454 = vld [vmem:[%s196 + $0x7d0] sm:$0xff]
      %v455 = vld [vmem:[%s196 + $0x7d8] sm:$0xff]
      %v456 = vld [vmem:[%s196 + $0x7e0] sm:$0xff]
      %v457 = vld [vmem:[%s196 + $0x7e8] sm:$0xff]
      %v458 = vld [vmem:[%s196 + $0x7f0] sm:$0xff]
      %v459 = vld [vmem:[%s196 + $0x7f8] sm:$0xff]
      %v460 = vld [vmem:[%s196 + $0x800] sm:$0xff]
      %v461 = vld [vmem:[%s196 + $0x808] sm:$0xff]
      %v462 = vld [vmem:[%s196 + $0x810] sm:$0xff]
      %v463 = vld [vmem:[%s196 + $0x818] sm:$0xff]
      %v464 = vld [vmem:[%s196 + $0x820] sm:$0xff]
      %v465 = vld [vmem:[%s196 + $0x828] sm:$0xff]
      %v466 = vld [vmem:[%s196 + $0x830] sm:$0xff]
      %v467 = vld [vmem:[%s196 + $0x838] sm:$0xff]
      %v468 = vld [vmem:[%s196 + $0x840] sm:$0xff]
      %v469 = vld [vmem:[%s196 + $0x848] sm:$0xff]
      %v470 = vld [vmem:[%s196 + $0x850] sm:$0xff]
      %v471 = vld [vmem:[%s196 + $0x858] sm:$0xff]
      %v472 = vld [vmem:[%s196 + $0x860] sm:$0xff]
      %v473 = vld [vmem:[%s196 + $0x868] sm:$0xff]
      %v474 = vld [vmem:[%s196 + $0x870] sm:$0xff]
      %v475 = vld [vmem:[%s196 + $0x878] sm:$0xff]
      %v476 = vld [vmem:[%s196 + $0x880] sm:$0xff]
      %v477 = vld [vmem:[%s196 + $0x888] sm:$0xff]
      %v478 = vld [vmem:[%s196 + $0x890] sm:$0xff]
      %v479 = vld [vmem:[%s196 + $0x898] sm:$0xff]
      %v480 = vld [vmem:[%s196 + $0x8a0] sm:$0xff]
      %v481 = vld [vmem:[%s196 + $0x8a8] sm:$0xff]
      %v482 = vld [vmem:[%s196 + $0x8b0] sm:$0xff]
      %v483 = vld [vmem:[%s196 + $0x8b8] sm:$0xff]
      %v484 = vld [vmem:[%s196 + $0x8c0] sm:$0xff]
      %v485 = vld [vmem:[%s196 + $0x8c8] sm:$0xff]
      %v486 = vld [vmem:[%s196 + $0x8d0] sm:$0xff]
      %v487 = vld [vmem:[%s196 + $0x8d8] sm:$0xff]
      %v488 = vld [vmem:[%s196 + $0x8e0] sm:$0xff]
      %v489 = vld [vmem:[%s196 + $0x8e8] sm:$0xff]
      %v490 = vld [vmem:[%s196 + $0x8f0] sm:$0xff]
      %v491 = vld [vmem:[%s196 + $0x8f8] sm:$0xff]
      %v492 = vld [vmem:[%s196 + $0x900] sm:$0xff]
      %v493 = vld [vmem:[%s196 + $0x908] sm:$0xff]
      %v494 = vld [vmem:[%s196 + $0x910] sm:$0xff]
      %v495 = vld [vmem:[%s196 + $0x918] sm:$0xff]
      %v496 = vld [vmem:[%s196 + $0x920] sm:$0xff]
      %v497 = vld [vmem:[%s196 + $0x928] sm:$0xff]
      %v498 = vld [vmem:[%s196 + $0x930] sm:$0xff]
      %v499 = vld [vmem:[%s196 + $0x938] sm:$0xff]
      %v500 = vld [vmem:[%s196 + $0x940] sm:$0xff]
      %v501 = vld [vmem:[%s196 + $0x948] sm:$0xff]
      %v502 = vld [vmem:[%s196 + $0x950] sm:$0xff]
      %v503 = vld [vmem:[%s196 + $0x958] sm:$0xff]
      %v504 = vld [vmem:[%s196 + $0x960] sm:$0xff]
      %v505 = vld [vmem:[%s196 + $0x968] sm:$0xff]
      %v506 = vld [vmem:[%s196 + $0x970] sm:$0xff]
      %v507 = vld [vmem:[%s196 + $0x978] sm:$0xff]
      %v508 = vld [vmem:[%s196 + $0x980] sm:$0xff]
      %v509 = vld [vmem:[%s196 + $0x988] sm:$0xff]
      %v510 = vld [vmem:[%s196 + $0x990] sm:$0xff]
      %v511 = vld [vmem:[%s196 + $0x998] sm:$0xff]
      %v512 = vld [vmem:[%s196 + $0x9a0] sm:$0xff]
      %v513 = vld [vmem:[%s196 + $0x9a8] sm:$0xff]
      %v514 = vld [vmem:[%s196 + $0x9b0] sm:$0xff]
      %v515 = vld [vmem:[%s196 + $0x9b8] sm:$0xff]
      %v516 = vld [vmem:[%s196 + $0x9c0] sm:$0xff]
      %v517 = vld [vmem:[%s196 + $0x9c8] sm:$0xff]
      %v518 = vld [vmem:[%s196 + $0x9d0] sm:$0xff]
      %v519 = vld [vmem:[%s196 + $0x9d8] sm:$0xff]
      %v520 = vld [vmem:[%s196 + $0x9e0] sm:$0xff]
      %v521 = vld [vmem:[%s196 + $0x9e8] sm:$0xff]
      %v522 = vld [vmem:[%s196 + $0x9f0] sm:$0xff]
      %v523 = vld [vmem:[%s196 + $0x9f8] sm:$0xff]
      %v524 = vld [vmem:[%s1] sm:$0xff]
      %v525 = vld [vmem:[%s1 + $0x8] sm:$0xff]
      %v526 = vld [vmem:[%s1 + $0x10] sm:$0xff]
      %v527 = vld [vmem:[%s1 + $0x18] sm:$0xff]
      %v528 = vld [vmem:[%s1 + $0x20] sm:$0xff]
      %v529 = vld [vmem:[%s1 + $0x28] sm:$0xff]
      %v530 = vld [vmem:[%s1 + $0x30] sm:$0xff]
      %v531 = vld [vmem:[%s1 + $0x38] sm:$0xff]
      %v532 = vld [vmem:[%s1 + $0x40] sm:$0xff]
      %v533 = vld [vmem:[%s1 + $0x48] sm:$0xff]
      %v534 = vld [vmem:[%s1 + $0x50] sm:$0xff]
      %v535 = vld [vmem:[%s1 + $0x58] sm:$0xff]
      %v536 = vld [vmem:[%s1 + $0x60] sm:$0xff]
      %v537 = vld [vmem:[%s1 + $0x68] sm:$0xff]
      %v538 = vld [vmem:[%s1 + $0x70] sm:$0xff]
      %v539 = vld [vmem:[%s1 + $0x78] sm:$0xff]
      %v540 = vld [vmem:[%s1 + $0x80] sm:$0xff]
      %v541 = vld [vmem:[%s1 + $0x88] sm:$0xff]
      %v542 = vld [vmem:[%s1 + $0x90] sm:$0xff]
      %v543 = vld [vmem:[%s1 + $0x98] sm:$0xff]
      %v544 = vld [vmem:[%s1 + $0xa0] sm:$0xff]
      %v545 = vld [vmem:[%s1 + $0xa8] sm:$0xff]
      %v546 = vld [vmem:[%s1 + $0xb0] sm:$0xff]
      %v547 = vld [vmem:[%s1 + $0xb8] sm:$0xff]
      %v548 = vld [vmem:[%s1 + $0xc0] sm:$0xff]
      %v549 = vld [vmem:[%s1 + $0xc8] sm:$0xff]
      %v550 = vld [vmem:[%s1 + $0xd0] sm:$0xff]
      %v551 = vld [vmem:[%s1 + $0xd8] sm:$0xff]
      %v552 = vld [vmem:[%s1 + $0xe0] sm:$0xff]
      %v553 = vld [vmem:[%s1 + $0xe8] sm:$0xff]
      %v554 = vld [vmem:[%s1 + $0xf0] sm:$0xff]
      %v555 = vld [vmem:[%s1 + $0xf8] sm:$0xff]
      %v556 = vld [vmem:[%s1 + $0x100] sm:$0xff]
      %v557 = vld [vmem:[%s1 + $0x108] sm:$0xff]
      %v558 = vld [vmem:[%s1 + $0x110] sm:$0xff]
      %v559 = vld [vmem:[%s1 + $0x118] sm:$0xff]
      %v560 = vld [vmem:[%s1 + $0x120] sm:$0xff]
      %v561 = vld [vmem:[%s1 + $0x128] sm:$0xff]
      %v562 = vld [vmem:[%s1 + $0x130] sm:$0xff]
      %v563 = vld [vmem:[%s1 + $0x138] sm:$0xff]
      %v564 = vld [vmem:[%s1 + $0x140] sm:$0xff]
      %v565 = vld [vmem:[%s1 + $0x148] sm:$0xff]
      %v566 = vld [vmem:[%s1 + $0x150] sm:$0xff]
      %v567 = vld [vmem:[%s1 + $0x158] sm:$0xff]
      %v568 = vld [vmem:[%s1 + $0x160] sm:$0xff]
      %v569 = vld [vmem:[%s1 + $0x168] sm:$0xff]
      %v570 = vld [vmem:[%s1 + $0x170] sm:$0xff]
      %v571 = vld [vmem:[%s1 + $0x178] sm:$0xff]
      %v572 = vld [vmem:[%s1 + $0x180] sm:$0xff]
      %v573 = vld [vmem:[%s1 + $0x188] sm:$0xff]
      %v574 = vld [vmem:[%s1 + $0x190] sm:$0xff]
      %v575 = vld [vmem:[%s1 + $0x198] sm:$0xff]
      %v576 = vld [vmem:[%s1 + $0x1a0] sm:$0xff]
      %v577 = vld [vmem:[%s1 + $0x1a8] sm:$0xff]
      %v578 = vld [vmem:[%s1 + $0x1b0] sm:$0xff]
      %v579 = vld [vmem:[%s1 + $0x1b8] sm:$0xff]
      %v580 = vld [vmem:[%s1 + $0x1c0] sm:$0xff]
      %v581 = vld [vmem:[%s1 + $0x1c8] sm:$0xff]
      %v582 = vld [vmem:[%s1 + $0x1d0] sm:$0xff]
      %v583 = vld [vmem:[%s1 + $0x1d8] sm:$0xff]
      %v584 = vld [vmem:[%s1 + $0x1e0] sm:$0xff]
      %v585 = vld [vmem:[%s1 + $0x1e8] sm:$0xff]
      %v586 = vld [vmem:[%s1 + $0x1f0] sm:$0xff]
      %v587 = vld [vmem:[%s1 + $0x1f8] sm:$0xff]
      %v588 = vld [vmem:[%s1 + $0x200] sm:$0xff]
      %v589 = vld [vmem:[%s1 + $0x208] sm:$0xff]
      %v590 = vld [vmem:[%s1 + $0x210] sm:$0xff]
      %v591 = vld [vmem:[%s1 + $0x218] sm:$0xff]
      %v592 = vld [vmem:[%s1 + $0x220] sm:$0xff]
      %v593 = vld [vmem:[%s1 + $0x228] sm:$0xff]
      %v594 = vld [vmem:[%s1 + $0x230] sm:$0xff]
      %v595 = vld [vmem:[%s1 + $0x238] sm:$0xff]
      %v596 = vld [vmem:[%s1 + $0x240] sm:$0xff]
      %v597 = vld [vmem:[%s1 + $0x248] sm:$0xff]
      %v598 = vld [vmem:[%s1 + $0x250] sm:$0xff]
      %v599 = vld [vmem:[%s1 + $0x258] sm:$0xff]
      %v600 = vld [vmem:[%s1 + $0x260] sm:$0xff]
      %v601 = vld [vmem:[%s1 + $0x268] sm:$0xff]
      %v602 = vld [vmem:[%s1 + $0x270] sm:$0xff]
      %v603 = vld [vmem:[%s1 + $0x278] sm:$0xff]
      %604 = vmatpush.msra.mxu0 %v539
      %605 = vmatpush.msra.mxu0 %v538
      %606 = vmatpush.msra.mxu0 %v537
      %607 = vmatpush.msra.mxu0 %v536
      %608 = vmatpush.msra.mxu0 %v535
      %609 = vmatpush.msra.mxu0 %v534
      %610 = vmatpush.msra.mxu0 %v533
      %611 = vmatpush.msra.mxu0 %v532
      %612 = vmatpush.msra.mxu0 %v531
      %613 = vmatpush.msra.mxu0 %v530
      %614 = vmatpush.msra.mxu0 %v529
      %615 = vmatpush.msra.mxu0 %v528
      %616 = vmatpush.msra.mxu0 %v527
      %617 = vmatpush.msra.mxu0 %v526
      %618 = vmatpush.msra.mxu0 %v525
      %619 = vmatpush.msra.mxu0 %v524
      %620 = vmatmul.f32.gmra.mxu0 %v204
      %v621 = vpop.f32.mrf.mxu0
      %v622 = vadd.f32 0.0, %v621
      %623 = vmatmul.f32.gmra.mxu0 %v209
      %v624 = vpop.f32.mrf.mxu0
      %v625 = vadd.f32 0.0, %v624
      %626 = vmatmul.f32.gmra.mxu0 %v214
      %v627 = vpop.f32.mrf.mxu0
      %v628 = vadd.f32 0.0, %v627
      %629 = vmatmul.f32.gmra.mxu0 %v219
      %v630 = vpop.f32.mrf.mxu0
      %v631 = vadd.f32 0.0, %v630
      %632 = vmatmul.f32.gmra.mxu0 %v224
      %v633 = vpop.f32.mrf.mxu0
      %v634 = vadd.f32 0.0, %v633
      %635 = vmatmul.f32.gmra.mxu0 %v229
      %v636 = vpop.f32.mrf.mxu0
      %v637 = vadd.f32 0.0, %v636
      %638 = vmatmul.f32.gmra.mxu0 %v234
      %v639 = vpop.f32.mrf.mxu0
      %v640 = vadd.f32 0.0, %v639
      %641 = vmatmul.f32.gmra.mxu0 %v239
      %v642 = vpop.f32.mrf.mxu0
      %v643 = vadd.f32 0.0, %v642
      %644 = vmatmul.f32.gmra.mxu0 %v244
      %v645 = vpop.f32.mrf.mxu0
      %v646 = vadd.f32 0.0, %v645
      %647 = vmatmul.f32.gmra.mxu0 %v249
      %v648 = vpop.f32.mrf.mxu0
      %v649 = vadd.f32 0.0, %v648
      %650 = vmatmul.f32.gmra.mxu0 %v254
      %v651 = vpop.f32.mrf.mxu0
      %v652 = vadd.f32 0.0, %v651
      %653 = vmatmul.f32.gmra.mxu0 %v259
      %v654 = vpop.f32.mrf.mxu0
      %v655 = vadd.f32 0.0, %v654
      %656 = vmatmul.f32.gmra.mxu0 %v264
      %v657 = vpop.f32.mrf.mxu0
      %v658 = vadd.f32 0.0, %v657
      %659 = vmatmul.f32.gmra.mxu0 %v269
      %v660 = vpop.f32.mrf.mxu0
      %v661 = vadd.f32 0.0, %v660
      %662 = vmatmul.f32.gmra.mxu0 %v274
      %v663 = vpop.f32.mrf.mxu0
      %v664 = vadd.f32 0.0, %v663
      %665 = vmatmul.f32.gmra.mxu0 %v279
      %v666 = vpop.f32.mrf.mxu0
      %v667 = vadd.f32 0.0, %v666
      %668 = vmatmul.f32.gmra.mxu0 %v284
      %v669 = vpop.f32.mrf.mxu0
      %v670 = vadd.f32 0.0, %v669
      %671 = vmatmul.f32.gmra.mxu0 %v289
      %v672 = vpop.f32.mrf.mxu0
      %v673 = vadd.f32 0.0, %v672
      %674 = vmatmul.f32.gmra.mxu0 %v294
      %v675 = vpop.f32.mrf.mxu0
      %v676 = vadd.f32 0.0, %v675
      %677 = vmatmul.f32.gmra.mxu0 %v299
      %v678 = vpop.f32.mrf.mxu0
      %v679 = vadd.f32 0.0, %v678
      %680 = vmatmul.f32.gmra.mxu0 %v304
      %v681 = vpop.f32.mrf.mxu0
      %v682 = vadd.f32 0.0, %v681
      %683 = vmatmul.f32.gmra.mxu0 %v309
      %v684 = vpop.f32.mrf.mxu0
      %v685 = vadd.f32 0.0, %v684
      %686 = vmatmul.f32.gmra.mxu0 %v314
      %v687 = vpop.f32.mrf.mxu0
      %v688 = vadd.f32 0.0, %v687
      %689 = vmatmul.f32.gmra.mxu0 %v319
      %v690 = vpop.f32.mrf.mxu0
      %v691 = vadd.f32 0.0, %v690
      %692 = vmatmul.f32.gmra.mxu0 %v324
      %v693 = vpop.f32.mrf.mxu0
      %v694 = vadd.f32 0.0, %v693
      %695 = vmatmul.f32.gmra.mxu0 %v329
      %v696 = vpop.f32.mrf.mxu0
      %v697 = vadd.f32 0.0, %v696
      %698 = vmatmul.f32.gmra.mxu0 %v334
      %v699 = vpop.f32.mrf.mxu0
      %v700 = vadd.f32 0.0, %v699
      %701 = vmatmul.f32.gmra.mxu0 %v339
      %v702 = vpop.f32.mrf.mxu0
      %v703 = vadd.f32 0.0, %v702
      %704 = vmatmul.f32.gmra.mxu0 %v344
      %v705 = vpop.f32.mrf.mxu0
      %v706 = vadd.f32 0.0, %v705
      %707 = vmatmul.f32.gmra.mxu0 %v349
      %v708 = vpop.f32.mrf.mxu0
      %v709 = vadd.f32 0.0, %v708
      %710 = vmatmul.f32.gmra.mxu0 %v354
      %v711 = vpop.f32.mrf.mxu0
      %v712 = vadd.f32 0.0, %v711
      %713 = vmatmul.f32.gmra.mxu0 %v359
      %v714 = vpop.f32.mrf.mxu0
      %v715 = vadd.f32 0.0, %v714
      %716 = vmatmul.f32.gmra.mxu0 %v364
      %v717 = vpop.f32.mrf.mxu0
      %v718 = vadd.f32 0.0, %v717
      %719 = vmatmul.f32.gmra.mxu0 %v369
      %v720 = vpop.f32.mrf.mxu0
      %v721 = vadd.f32 0.0, %v720
      %722 = vmatmul.f32.gmra.mxu0 %v374
      %v723 = vpop.f32.mrf.mxu0
      %v724 = vadd.f32 0.0, %v723
      %725 = vmatmul.f32.gmra.mxu0 %v379
      %v726 = vpop.f32.mrf.mxu0
      %v727 = vadd.f32 0.0, %v726
      %728 = vmatmul.f32.gmra.mxu0 %v384
      %v729 = vpop.f32.mrf.mxu0
      %v730 = vadd.f32 0.0, %v729
      %731 = vmatmul.f32.gmra.mxu0 %v389
      %v732 = vpop.f32.mrf.mxu0
      %v733 = vadd.f32 0.0, %v732
      %734 = vmatmul.f32.gmra.mxu0 %v394
      %v735 = vpop.f32.mrf.mxu0
      %v736 = vadd.f32 0.0, %v735
      %737 = vmatmul.f32.gmra.mxu0 %v399
      %v738 = vpop.f32.mrf.mxu0
      %v739 = vadd.f32 0.0, %v738
      %740 = vmatmul.f32.gmra.mxu0 %v404
      %v741 = vpop.f32.mrf.mxu0
      %v742 = vadd.f32 0.0, %v741
      %743 = vmatmul.f32.gmra.mxu0 %v409
      %v744 = vpop.f32.mrf.mxu0
      %v745 = vadd.f32 0.0, %v744
      %746 = vmatmul.f32.gmra.mxu0 %v414
      %v747 = vpop.f32.mrf.mxu0
      %v748 = vadd.f32 0.0, %v747
      %749 = vmatmul.f32.gmra.mxu0 %v419
      %v750 = vpop.f32.mrf.mxu0
      %v751 = vadd.f32 0.0, %v750
      %752 = vmatmul.f32.gmra.mxu0 %v424
      %v753 = vpop.f32.mrf.mxu0
      %v754 = vadd.f32 0.0, %v753
      %755 = vmatmul.f32.gmra.mxu0 %v429
      %v756 = vpop.f32.mrf.mxu0
      %v757 = vadd.f32 0.0, %v756
      %758 = vmatmul.f32.gmra.mxu0 %v434
      %v759 = vpop.f32.mrf.mxu0
      %v760 = vadd.f32 0.0, %v759
      %761 = vmatmul.f32.gmra.mxu0 %v439
      %v762 = vpop.f32.mrf.mxu0
      %v763 = vadd.f32 0.0, %v762
      %764 = vmatmul.f32.gmra.mxu0 %v444
      %v765 = vpop.f32.mrf.mxu0
      %v766 = vadd.f32 0.0, %v765
      %767 = vmatmul.f32.gmra.mxu0 %v449
      %v768 = vpop.f32.mrf.mxu0
      %v769 = vadd.f32 0.0, %v768
      %770 = vmatmul.f32.gmra.mxu0 %v454
      %v771 = vpop.f32.mrf.mxu0
      %v772 = vadd.f32 0.0, %v771
      %773 = vmatmul.f32.gmra.mxu0 %v459
      %v774 = vpop.f32.mrf.mxu0
      %v775 = vadd.f32 0.0, %v774
      %776 = vmatmul.f32.gmra.mxu0 %v464
      %v777 = vpop.f32.mrf.mxu0
      %v778 = vadd.f32 0.0, %v777
      %779 = vmatmul.f32.gmra.mxu0 %v469
      %v780 = vpop.f32.mrf.mxu0
      %v781 = vadd.f32 0.0, %v780
      %782 = vmatmul.f32.gmra.mxu0 %v474
      %v783 = vpop.f32.mrf.mxu0
      %v784 = vadd.f32 0.0, %v783
      %785 = vmatmul.f32.gmra.mxu0 %v479
      %v786 = vpop.f32.mrf.mxu0
      %v787 = vadd.f32 0.0, %v786
      %788 = vmatmul.f32.gmra.mxu0 %v484
      %v789 = vpop.f32.mrf.mxu0
      %v790 = vadd.f32 0.0, %v789
      %791 = vmatmul.f32.gmra.mxu0 %v489
      %v792 = vpop.f32.mrf.mxu0
      %v793 = vadd.f32 0.0, %v792
      %794 = vmatmul.f32.gmra.mxu0 %v494
      %v795 = vpop.f32.mrf.mxu0
      %v796 = vadd.f32 0.0, %v795
      %797 = vmatmul.f32.gmra.mxu0 %v499
      %v798 = vpop.f32.mrf.mxu0
      %v799 = vadd.f32 0.0, %v798
      %800 = vmatmul.f32.gmra.mxu0 %v504
      %v801 = vpop.f32.mrf.mxu0
      %v802 = vadd.f32 0.0, %v801
      %803 = vmatmul.f32.gmra.mxu0 %v509
      %v804 = vpop.f32.mrf.mxu0
      %v805 = vadd.f32 0.0, %v804
      %806 = vmatmul.f32.gmra.mxu0 %v514
      %v807 = vpop.f32.mrf.mxu0
      %v808 = vadd.f32 0.0, %v807
      %809 = vmatmul.f32.gmra.mxu0 %v519
      %v810 = vpop.f32.mrf.mxu0
      %v811 = vadd.f32 0.0, %v810
      %812 = vdwg.mxu0
      %813 = vmatpush.msra.mxu0 %v555
      %814 = vmatpush.msra.mxu0 %v554
      %815 = vmatpush.msra.mxu0 %v553
      %816 = vmatpush.msra.mxu0 %v552
      %817 = vmatpush.msra.mxu0 %v551
      %818 = vmatpush.msra.mxu0 %v550
      %819 = vmatpush.msra.mxu0 %v549
      %820 = vmatpush.msra.mxu0 %v548
      %821 = vmatpush.msra.mxu0 %v547
      %822 = vmatpush.msra.mxu0 %v546
      %823 = vmatpush.msra.mxu0 %v545
      %824 = vmatpush.msra.mxu0 %v544
      %825 = vmatpush.msra.mxu0 %v543
      %826 = vmatpush.msra.mxu0 %v542
      %827 = vmatpush.msra.mxu0 %v541
      %828 = vmatpush.msra.mxu0 %v540
      %829 = vmatmul.f32.gmra.mxu0 %v205
      %v830 = vpop.f32.mrf.mxu0
      %v831 = vadd.f32 %v622, %v830
      %832 = vmatmul.f32.gmra.mxu0 %v210
      %v833 = vpop.f32.mrf.mxu0
      %v834 = vadd.f32 %v625, %v833
      %835 = vmatmul.f32.gmra.mxu0 %v215
      %v836 = vpop.f32.mrf.mxu0
      %v837 = vadd.f32 %v628, %v836
      %838 = vmatmul.f32.gmra.mxu0 %v220
      %v839 = vpop.f32.mrf.mxu0
      %v840 = vadd.f32 %v631, %v839
      %841 = vmatmul.f32.gmra.mxu0 %v225
      %v842 = vpop.f32.mrf.mxu0
      %v843 = vadd.f32 %v634, %v842
      %844 = vmatmul.f32.gmra.mxu0 %v230
      %v845 = vpop.f32.mrf.mxu0
      %v846 = vadd.f32 %v637, %v845
      %847 = vmatmul.f32.gmra.mxu0 %v235
      %v848 = vpop.f32.mrf.mxu0
      %v849 = vadd.f32 %v640, %v848
      %850 = vmatmul.f32.gmra.mxu0 %v240
      %v851 = vpop.f32.mrf.mxu0
      %v852 = vadd.f32 %v643, %v851
      %853 = vmatmul.f32.gmra.mxu0 %v245
      %v854 = vpop.f32.mrf.mxu0
      %v855 = vadd.f32 %v646, %v854
      %856 = vmatmul.f32.gmra.mxu0 %v250
      %v857 = vpop.f32.mrf.mxu0
      %v858 = vadd.f32 %v649, %v857
      %859 = vmatmul.f32.gmra.mxu0 %v255
      %v860 = vpop.f32.mrf.mxu0
      %v861 = vadd.f32 %v652, %v860
      %862 = vmatmul.f32.gmra.mxu0 %v260
      %v863 = vpop.f32.mrf.mxu0
      %v864 = vadd.f32 %v655, %v863
      %865 = vmatmul.f32.gmra.mxu0 %v265
      %v866 = vpop.f32.mrf.mxu0
      %v867 = vadd.f32 %v658, %v866
      %868 = vmatmul.f32.gmra.mxu0 %v270
      %v869 = vpop.f32.mrf.mxu0
      %v870 = vadd.f32 %v661, %v869
      %871 = vmatmul.f32.gmra.mxu0 %v275
      %v872 = vpop.f32.mrf.mxu0
      %v873 = vadd.f32 %v664, %v872
      %874 = vmatmul.f32.gmra.mxu0 %v280
      %v875 = vpop.f32.mrf.mxu0
      %v876 = vadd.f32 %v667, %v875
      %877 = vmatmul.f32.gmra.mxu0 %v285
      %v878 = vpop.f32.mrf.mxu0
      %v879 = vadd.f32 %v670, %v878
      %880 = vmatmul.f32.gmra.mxu0 %v290
      %v881 = vpop.f32.mrf.mxu0
      %v882 = vadd.f32 %v673, %v881
      %883 = vmatmul.f32.gmra.mxu0 %v295
      %v884 = vpop.f32.mrf.mxu0
      %v885 = vadd.f32 %v676, %v884
      %886 = vmatmul.f32.gmra.mxu0 %v300
      %v887 = vpop.f32.mrf.mxu0
      %v888 = vadd.f32 %v679, %v887
      %889 = vmatmul.f32.gmra.mxu0 %v305
      %v890 = vpop.f32.mrf.mxu0
      %v891 = vadd.f32 %v682, %v890
      %892 = vmatmul.f32.gmra.mxu0 %v310
      %v893 = vpop.f32.mrf.mxu0
      %v894 = vadd.f32 %v685, %v893
      %895 = vmatmul.f32.gmra.mxu0 %v315
      %v896 = vpop.f32.mrf.mxu0
      %v897 = vadd.f32 %v688, %v896
      %898 = vmatmul.f32.gmra.mxu0 %v320
      %v899 = vpop.f32.mrf.mxu0
      %v900 = vadd.f32 %v691, %v899
      %901 = vmatmul.f32.gmra.mxu0 %v325
      %v902 = vpop.f32.mrf.mxu0
      %v903 = vadd.f32 %v694, %v902
      %904 = vmatmul.f32.gmra.mxu0 %v330
      %v905 = vpop.f32.mrf.mxu0
      %v906 = vadd.f32 %v697, %v905
      %907 = vmatmul.f32.gmra.mxu0 %v335
      %v908 = vpop.f32.mrf.mxu0
      %v909 = vadd.f32 %v700, %v908
      %910 = vmatmul.f32.gmra.mxu0 %v340
      %v911 = vpop.f32.mrf.mxu0
      %v912 = vadd.f32 %v703, %v911
      %913 = vmatmul.f32.gmra.mxu0 %v345
      %v914 = vpop.f32.mrf.mxu0
      %v915 = vadd.f32 %v706, %v914
      %916 = vmatmul.f32.gmra.mxu0 %v350
      %v917 = vpop.f32.mrf.mxu0
      %v918 = vadd.f32 %v709, %v917
      %919 = vmatmul.f32.gmra.mxu0 %v355
      %v920 = vpop.f32.mrf.mxu0
      %v921 = vadd.f32 %v712, %v920
      %922 = vmatmul.f32.gmra.mxu0 %v360
      %v923 = vpop.f32.mrf.mxu0
      %v924 = vadd.f32 %v715, %v923
      %925 = vmatmul.f32.gmra.mxu0 %v365
      %v926 = vpop.f32.mrf.mxu0
      %v927 = vadd.f32 %v718, %v926
      %928 = vmatmul.f32.gmra.mxu0 %v370
      %v929 = vpop.f32.mrf.mxu0
      %v930 = vadd.f32 %v721, %v929
      %931 = vmatmul.f32.gmra.mxu0 %v375
      %v932 = vpop.f32.mrf.mxu0
      %v933 = vadd.f32 %v724, %v932
      %934 = vmatmul.f32.gmra.mxu0 %v380
      %v935 = vpop.f32.mrf.mxu0
      %v936 = vadd.f32 %v727, %v935
      %937 = vmatmul.f32.gmra.mxu0 %v385
      %v938 = vpop.f32.mrf.mxu0
      %v939 = vadd.f32 %v730, %v938
      %940 = vmatmul.f32.gmra.mxu0 %v390
      %v941 = vpop.f32.mrf.mxu0
      %v942 = vadd.f32 %v733, %v941
      %943 = vmatmul.f32.gmra.mxu0 %v395
      %v944 = vpop.f32.mrf.mxu0
      %v945 = vadd.f32 %v736, %v944
      %946 = vmatmul.f32.gmra.mxu0 %v400
      %v947 = vpop.f32.mrf.mxu0
      %v948 = vadd.f32 %v739, %v947
      %949 = vmatmul.f32.gmra.mxu0 %v405
      %v950 = vpop.f32.mrf.mxu0
      %v951 = vadd.f32 %v742, %v950
      %952 = vmatmul.f32.gmra.mxu0 %v410
      %v953 = vpop.f32.mrf.mxu0
      %v954 = vadd.f32 %v745, %v953
      %955 = vmatmul.f32.gmra.mxu0 %v415
      %v956 = vpop.f32.mrf.mxu0
      %v957 = vadd.f32 %v748, %v956
      %958 = vmatmul.f32.gmra.mxu0 %v420
      %v959 = vpop.f32.mrf.mxu0
      %v960 = vadd.f32 %v751, %v959
      %961 = vmatmul.f32.gmra.mxu0 %v425
      %v962 = vpop.f32.mrf.mxu0
      %v963 = vadd.f32 %v754, %v962
      %964 = vmatmul.f32.gmra.mxu0 %v430
      %v965 = vpop.f32.mrf.mxu0
      %v966 = vadd.f32 %v757, %v965
      %967 = vmatmul.f32.gmra.mxu0 %v435
      %v968 = vpop.f32.mrf.mxu0
      %v969 = vadd.f32 %v760, %v968
      %970 = vmatmul.f32.gmra.mxu0 %v440
      %v971 = vpop.f32.mrf.mxu0
      %v972 = vadd.f32 %v763, %v971
      %973 = vmatmul.f32.gmra.mxu0 %v445
      %v974 = vpop.f32.mrf.mxu0
      %v975 = vadd.f32 %v766, %v974
      %976 = vmatmul.f32.gmra.mxu0 %v450
      %v977 = vpop.f32.mrf.mxu0
      %v978 = vadd.f32 %v769, %v977
      %979 = vmatmul.f32.gmra.mxu0 %v455
      %v980 = vpop.f32.mrf.mxu0
      %v981 = vadd.f32 %v772, %v980
      %982 = vmatmul.f32.gmra.mxu0 %v460
      %v983 = vpop.f32.mrf.mxu0
      %v984 = vadd.f32 %v775, %v983
      %985 = vmatmul.f32.gmra.mxu0 %v465
      %v986 = vpop.f32.mrf.mxu0
      %v987 = vadd.f32 %v778, %v986
      %988 = vmatmul.f32.gmra.mxu0 %v470
      %v989 = vpop.f32.mrf.mxu0
      %v990 = vadd.f32 %v781, %v989
      %991 = vmatmul.f32.gmra.mxu0 %v475
      %v992 = vpop.f32.mrf.mxu0
      %v993 = vadd.f32 %v784, %v992
      %994 = vmatmul.f32.gmra.mxu0 %v480
      %v995 = vpop.f32.mrf.mxu0
      %v996 = vadd.f32 %v787, %v995
      %997 = vmatmul.f32.gmra.mxu0 %v485
      %v998 = vpop.f32.mrf.mxu0
      %v999 = vadd.f32 %v790, %v998
      %1000 = vmatmul.f32.gmra.mxu0 %v490
      %v1001 = vpop.f32.mrf.mxu0
      %v1002 = vadd.f32 %v793, %v1001
      %1003 = vmatmul.f32.gmra.mxu0 %v495
      %v1004 = vpop.f32.mrf.mxu0
      %v1005 = vadd.f32 %v796, %v1004
      %1006 = vmatmul.f32.gmra.mxu0 %v500
      %v1007 = vpop.f32.mrf.mxu0
      %v1008 = vadd.f32 %v799, %v1007
      %1009 = vmatmul.f32.gmra.mxu0 %v505
      %v1010 = vpop.f32.mrf.mxu0
      %v1011 = vadd.f32 %v802, %v1010
      %1012 = vmatmul.f32.gmra.mxu0 %v510
      %v1013 = vpop.f32.mrf.mxu0
      %v1014 = vadd.f32 %v805, %v1013
      %1015 = vmatmul.f32.gmra.mxu0 %v515
      %v1016 = vpop.f32.mrf.mxu0
      %v1017 = vadd.f32 %v808, %v1016
      %1018 = vmatmul.f32.gmra.mxu0 %v520
      %v1019 = vpop.f32.mrf.mxu0
      %v1020 = vadd.f32 %v811, %v1019
      %1021 = vdwg.mxu0
      %1022 = vmatpush.msra.mxu0 %v571
      %1023 = vmatpush.msra.mxu0 %v570
      %1024 = vmatpush.msra.mxu0 %v569
      %1025 = vmatpush.msra.mxu0 %v568
      %1026 = vmatpush.msra.mxu0 %v567
      %1027 = vmatpush.msra.mxu0 %v566
      %1028 = vmatpush.msra.mxu0 %v565
      %1029 = vmatpush.msra.mxu0 %v564
      %1030 = vmatpush.msra.mxu0 %v563
      %1031 = vmatpush.msra.mxu0 %v562
      %1032 = vmatpush.msra.mxu0 %v561
      %1033 = vmatpush.msra.mxu0 %v560
      %1034 = vmatpush.msra.mxu0 %v559
      %1035 = vmatpush.msra.mxu0 %v558
      %1036 = vmatpush.msra.mxu0 %v557
      %1037 = vmatpush.msra.mxu0 %v556
      %1038 = vmatmul.f32.gmra.mxu0 %v206
      %v1039 = vpop.f32.mrf.mxu0
      %v1040 = vadd.f32 %v831, %v1039
      %1041 = vmatmul.f32.gmra.mxu0 %v211
      %v1042 = vpop.f32.mrf.mxu0
      %v1043 = vadd.f32 %v834, %v1042
      %1044 = vmatmul.f32.gmra.mxu0 %v216
      %v1045 = vpop.f32.mrf.mxu0
      %v1046 = vadd.f32 %v837, %v1045
      %1047 = vmatmul.f32.gmra.mxu0 %v221
      %v1048 = vpop.f32.mrf.mxu0
      %v1049 = vadd.f32 %v840, %v1048
      %1050 = vmatmul.f32.gmra.mxu0 %v226
      %v1051 = vpop.f32.mrf.mxu0
      %v1052 = vadd.f32 %v843, %v1051
      %1053 = vmatmul.f32.gmra.mxu0 %v231
      %v1054 = vpop.f32.mrf.mxu0
      %v1055 = vadd.f32 %v846, %v1054
      %1056 = vmatmul.f32.gmra.mxu0 %v236
      %v1057 = vpop.f32.mrf.mxu0
      %v1058 = vadd.f32 %v849, %v1057
      %1059 = vmatmul.f32.gmra.mxu0 %v241
      %v1060 = vpop.f32.mrf.mxu0
      %v1061 = vadd.f32 %v852, %v1060
      %1062 = vmatmul.f32.gmra.mxu0 %v246
      %v1063 = vpop.f32.mrf.mxu0
      %v1064 = vadd.f32 %v855, %v1063
      %1065 = vmatmul.f32.gmra.mxu0 %v251
      %v1066 = vpop.f32.mrf.mxu0
      %v1067 = vadd.f32 %v858, %v1066
      %1068 = vmatmul.f32.gmra.mxu0 %v256
      %v1069 = vpop.f32.mrf.mxu0
      %v1070 = vadd.f32 %v861, %v1069
      %1071 = vmatmul.f32.gmra.mxu0 %v261
      %v1072 = vpop.f32.mrf.mxu0
      %v1073 = vadd.f32 %v864, %v1072
      %1074 = vmatmul.f32.gmra.mxu0 %v266
      %v1075 = vpop.f32.mrf.mxu0
      %v1076 = vadd.f32 %v867, %v1075
      %1077 = vmatmul.f32.gmra.mxu0 %v271
      %v1078 = vpop.f32.mrf.mxu0
      %v1079 = vadd.f32 %v870, %v1078
      %1080 = vmatmul.f32.gmra.mxu0 %v276
      %v1081 = vpop.f32.mrf.mxu0
      %v1082 = vadd.f32 %v873, %v1081
      %1083 = vmatmul.f32.gmra.mxu0 %v281
      %v1084 = vpop.f32.mrf.mxu0
      %v1085 = vadd.f32 %v876, %v1084
      %1086 = vmatmul.f32.gmra.mxu0 %v286
      %v1087 = vpop.f32.mrf.mxu0
      %v1088 = vadd.f32 %v879, %v1087
      %1089 = vmatmul.f32.gmra.mxu0 %v291
      %v1090 = vpop.f32.mrf.mxu0
      %v1091 = vadd.f32 %v882, %v1090
      %1092 = vmatmul.f32.gmra.mxu0 %v296
      %v1093 = vpop.f32.mrf.mxu0
      %v1094 = vadd.f32 %v885, %v1093
      %1095 = vmatmul.f32.gmra.mxu0 %v301
      %v1096 = vpop.f32.mrf.mxu0
      %v1097 = vadd.f32 %v888, %v1096
      %1098 = vmatmul.f32.gmra.mxu0 %v306
      %v1099 = vpop.f32.mrf.mxu0
      %v1100 = vadd.f32 %v891, %v1099
      %1101 = vmatmul.f32.gmra.mxu0 %v311
      %v1102 = vpop.f32.mrf.mxu0
      %v1103 = vadd.f32 %v894, %v1102
      %1104 = vmatmul.f32.gmra.mxu0 %v316
      %v1105 = vpop.f32.mrf.mxu0
      %v1106 = vadd.f32 %v897, %v1105
      %1107 = vmatmul.f32.gmra.mxu0 %v321
      %v1108 = vpop.f32.mrf.mxu0
      %v1109 = vadd.f32 %v900, %v1108
      %1110 = vmatmul.f32.gmra.mxu0 %v326
      %v1111 = vpop.f32.mrf.mxu0
      %v1112 = vadd.f32 %v903, %v1111
      %1113 = vmatmul.f32.gmra.mxu0 %v331
      %v1114 = vpop.f32.mrf.mxu0
      %v1115 = vadd.f32 %v906, %v1114
      %1116 = vmatmul.f32.gmra.mxu0 %v336
      %v1117 = vpop.f32.mrf.mxu0
      %v1118 = vadd.f32 %v909, %v1117
      %1119 = vmatmul.f32.gmra.mxu0 %v341
      %v1120 = vpop.f32.mrf.mxu0
      %v1121 = vadd.f32 %v912, %v1120
      %1122 = vmatmul.f32.gmra.mxu0 %v346
      %v1123 = vpop.f32.mrf.mxu0
      %v1124 = vadd.f32 %v915, %v1123
      %1125 = vmatmul.f32.gmra.mxu0 %v351
      %v1126 = vpop.f32.mrf.mxu0
      %v1127 = vadd.f32 %v918, %v1126
      %1128 = vmatmul.f32.gmra.mxu0 %v356
      %v1129 = vpop.f32.mrf.mxu0
      %v1130 = vadd.f32 %v921, %v1129
      %1131 = vmatmul.f32.gmra.mxu0 %v361
      %v1132 = vpop.f32.mrf.mxu0
      %v1133 = vadd.f32 %v924, %v1132
      %1134 = vmatmul.f32.gmra.mxu0 %v366
      %v1135 = vpop.f32.mrf.mxu0
      %v1136 = vadd.f32 %v927, %v1135
      %1137 = vmatmul.f32.gmra.mxu0 %v371
      %v1138 = vpop.f32.mrf.mxu0
      %v1139 = vadd.f32 %v930, %v1138
      %1140 = vmatmul.f32.gmra.mxu0 %v376
      %v1141 = vpop.f32.mrf.mxu0
      %v1142 = vadd.f32 %v933, %v1141
      %1143 = vmatmul.f32.gmra.mxu0 %v381
      %v1144 = vpop.f32.mrf.mxu0
      %v1145 = vadd.f32 %v936, %v1144
      %1146 = vmatmul.f32.gmra.mxu0 %v386
      %v1147 = vpop.f32.mrf.mxu0
      %v1148 = vadd.f32 %v939, %v1147
      %1149 = vmatmul.f32.gmra.mxu0 %v391
      %v1150 = vpop.f32.mrf.mxu0
      %v1151 = vadd.f32 %v942, %v1150
      %1152 = vmatmul.f32.gmra.mxu0 %v396
      %v1153 = vpop.f32.mrf.mxu0
      %v1154 = vadd.f32 %v945, %v1153
      %1155 = vmatmul.f32.gmra.mxu0 %v401
      %v1156 = vpop.f32.mrf.mxu0
      %v1157 = vadd.f32 %v948, %v1156
      %1158 = vmatmul.f32.gmra.mxu0 %v406
      %v1159 = vpop.f32.mrf.mxu0
      %v1160 = vadd.f32 %v951, %v1159
      %1161 = vmatmul.f32.gmra.mxu0 %v411
      %v1162 = vpop.f32.mrf.mxu0
      %v1163 = vadd.f32 %v954, %v1162
      %1164 = vmatmul.f32.gmra.mxu0 %v416
      %v1165 = vpop.f32.mrf.mxu0
      %v1166 = vadd.f32 %v957, %v1165
      %1167 = vmatmul.f32.gmra.mxu0 %v421
      %v1168 = vpop.f32.mrf.mxu0
      %v1169 = vadd.f32 %v960, %v1168
      %1170 = vmatmul.f32.gmra.mxu0 %v426
      %v1171 = vpop.f32.mrf.mxu0
      %v1172 = vadd.f32 %v963, %v1171
      %1173 = vmatmul.f32.gmra.mxu0 %v431
      %v1174 = vpop.f32.mrf.mxu0
      %v1175 = vadd.f32 %v966, %v1174
      %1176 = vmatmul.f32.gmra.mxu0 %v436
      %v1177 = vpop.f32.mrf.mxu0
      %v1178 = vadd.f32 %v969, %v1177
      %1179 = vmatmul.f32.gmra.mxu0 %v441
      %v1180 = vpop.f32.mrf.mxu0
      %v1181 = vadd.f32 %v972, %v1180
      %1182 = vmatmul.f32.gmra.mxu0 %v446
      %v1183 = vpop.f32.mrf.mxu0
      %v1184 = vadd.f32 %v975, %v1183
      %1185 = vmatmul.f32.gmra.mxu0 %v451
      %v1186 = vpop.f32.mrf.mxu0
      %v1187 = vadd.f32 %v978, %v1186
      %1188 = vmatmul.f32.gmra.mxu0 %v456
      %v1189 = vpop.f32.mrf.mxu0
      %v1190 = vadd.f32 %v981, %v1189
      %1191 = vmatmul.f32.gmra.mxu0 %v461
      %v1192 = vpop.f32.mrf.mxu0
      %v1193 = vadd.f32 %v984, %v1192
      %1194 = vmatmul.f32.gmra.mxu0 %v466
      %v1195 = vpop.f32.mrf.mxu0
      %v1196 = vadd.f32 %v987, %v1195
      %1197 = vmatmul.f32.gmra.mxu0 %v471
      %v1198 = vpop.f32.mrf.mxu0
      %v1199 = vadd.f32 %v990, %v1198
      %1200 = vmatmul.f32.gmra.mxu0 %v476
      %v1201 = vpop.f32.mrf.mxu0
      %v1202 = vadd.f32 %v993, %v1201
      %1203 = vmatmul.f32.gmra.mxu0 %v481
      %v1204 = vpop.f32.mrf.mxu0
      %v1205 = vadd.f32 %v996, %v1204
      %1206 = vmatmul.f32.gmra.mxu0 %v486
      %v1207 = vpop.f32.mrf.mxu0
      %v1208 = vadd.f32 %v999, %v1207
      %1209 = vmatmul.f32.gmra.mxu0 %v491
      %v1210 = vpop.f32.mrf.mxu0
      %v1211 = vadd.f32 %v1002, %v1210
      %1212 = vmatmul.f32.gmra.mxu0 %v496
      %v1213 = vpop.f32.mrf.mxu0
      %v1214 = vadd.f32 %v1005, %v1213
      %1215 = vmatmul.f32.gmra.mxu0 %v501
      %v1216 = vpop.f32.mrf.mxu0
      %v1217 = vadd.f32 %v1008, %v1216
      %1218 = vmatmul.f32.gmra.mxu0 %v506
      %v1219 = vpop.f32.mrf.mxu0
      %v1220 = vadd.f32 %v1011, %v1219
      %1221 = vmatmul.f32.gmra.mxu0 %v511
      %v1222 = vpop.f32.mrf.mxu0
      %v1223 = vadd.f32 %v1014, %v1222
      %1224 = vmatmul.f32.gmra.mxu0 %v516
      %v1225 = vpop.f32.mrf.mxu0
      %v1226 = vadd.f32 %v1017, %v1225
      %1227 = vmatmul.f32.gmra.mxu0 %v521
      %v1228 = vpop.f32.mrf.mxu0
      %v1229 = vadd.f32 %v1020, %v1228
      %1230 = vdwg.mxu0
      %1231 = vmatpush.msra.mxu0 %v587
      %1232 = vmatpush.msra.mxu0 %v586
      %1233 = vmatpush.msra.mxu0 %v585
      %1234 = vmatpush.msra.mxu0 %v584
      %1235 = vmatpush.msra.mxu0 %v583
      %1236 = vmatpush.msra.mxu0 %v582
      %1237 = vmatpush.msra.mxu0 %v581
      %1238 = vmatpush.msra.mxu0 %v580
      %1239 = vmatpush.msra.mxu0 %v579
      %1240 = vmatpush.msra.mxu0 %v578
      %1241 = vmatpush.msra.mxu0 %v577
      %1242 = vmatpush.msra.mxu0 %v576
      %1243 = vmatpush.msra.mxu0 %v575
      %1244 = vmatpush.msra.mxu0 %v574
      %1245 = vmatpush.msra.mxu0 %v573
      %1246 = vmatpush.msra.mxu0 %v572
      %1247 = vmatmul.f32.gmra.mxu0 %v207
      %v1248 = vpop.f32.mrf.mxu0
      %v1249 = vadd.f32 %v1040, %v1248
      %1250 = vmatmul.f32.gmra.mxu0 %v212
      %v1251 = vpop.f32.mrf.mxu0
      %v1252 = vadd.f32 %v1043, %v1251
      %1253 = vmatmul.f32.gmra.mxu0 %v217
      %v1254 = vpop.f32.mrf.mxu0
      %v1255 = vadd.f32 %v1046, %v1254
      %1256 = vmatmul.f32.gmra.mxu0 %v222
      %v1257 = vpop.f32.mrf.mxu0
      %v1258 = vadd.f32 %v1049, %v1257
      %1259 = vmatmul.f32.gmra.mxu0 %v227
      %v1260 = vpop.f32.mrf.mxu0
      %v1261 = vadd.f32 %v1052, %v1260
      %1262 = vmatmul.f32.gmra.mxu0 %v232
      %v1263 = vpop.f32.mrf.mxu0
      %v1264 = vadd.f32 %v1055, %v1263
      %1265 = vmatmul.f32.gmra.mxu0 %v237
      %v1266 = vpop.f32.mrf.mxu0
      %v1267 = vadd.f32 %v1058, %v1266
      %1268 = vmatmul.f32.gmra.mxu0 %v242
      %v1269 = vpop.f32.mrf.mxu0
      %v1270 = vadd.f32 %v1061, %v1269
      %1271 = vmatmul.f32.gmra.mxu0 %v247
      %v1272 = vpop.f32.mrf.mxu0
      %v1273 = vadd.f32 %v1064, %v1272
      %1274 = vmatmul.f32.gmra.mxu0 %v252
      %v1275 = vpop.f32.mrf.mxu0
      %v1276 = vadd.f32 %v1067, %v1275
      %1277 = vmatmul.f32.gmra.mxu0 %v257
      %v1278 = vpop.f32.mrf.mxu0
      %v1279 = vadd.f32 %v1070, %v1278
      %1280 = vmatmul.f32.gmra.mxu0 %v262
      %v1281 = vpop.f32.mrf.mxu0
      %v1282 = vadd.f32 %v1073, %v1281
      %1283 = vmatmul.f32.gmra.mxu0 %v267
      %v1284 = vpop.f32.mrf.mxu0
      %v1285 = vadd.f32 %v1076, %v1284
      %1286 = vmatmul.f32.gmra.mxu0 %v272
      %v1287 = vpop.f32.mrf.mxu0
      %v1288 = vadd.f32 %v1079, %v1287
      %1289 = vmatmul.f32.gmra.mxu0 %v277
      %v1290 = vpop.f32.mrf.mxu0
      %v1291 = vadd.f32 %v1082, %v1290
      %1292 = vmatmul.f32.gmra.mxu0 %v282
      %v1293 = vpop.f32.mrf.mxu0
      %v1294 = vadd.f32 %v1085, %v1293
      %1295 = vmatmul.f32.gmra.mxu0 %v287
      %v1296 = vpop.f32.mrf.mxu0
      %v1297 = vadd.f32 %v1088, %v1296
      %1298 = vmatmul.f32.gmra.mxu0 %v292
      %v1299 = vpop.f32.mrf.mxu0
      %v1300 = vadd.f32 %v1091, %v1299
      %1301 = vmatmul.f32.gmra.mxu0 %v297
      %v1302 = vpop.f32.mrf.mxu0
      %v1303 = vadd.f32 %v1094, %v1302
      %1304 = vmatmul.f32.gmra.mxu0 %v302
      %v1305 = vpop.f32.mrf.mxu0
      %v1306 = vadd.f32 %v1097, %v1305
      %1307 = vmatmul.f32.gmra.mxu0 %v307
      %v1308 = vpop.f32.mrf.mxu0
      %v1309 = vadd.f32 %v1100, %v1308
      %1310 = vmatmul.f32.gmra.mxu0 %v312
      %v1311 = vpop.f32.mrf.mxu0
      %v1312 = vadd.f32 %v1103, %v1311
      %1313 = vmatmul.f32.gmra.mxu0 %v317
      %v1314 = vpop.f32.mrf.mxu0
      %v1315 = vadd.f32 %v1106, %v1314
      %1316 = vmatmul.f32.gmra.mxu0 %v322
      %v1317 = vpop.f32.mrf.mxu0
      %v1318 = vadd.f32 %v1109, %v1317
      %1319 = vmatmul.f32.gmra.mxu0 %v327
      %v1320 = vpop.f32.mrf.mxu0
      %v1321 = vadd.f32 %v1112, %v1320
      %1322 = vmatmul.f32.gmra.mxu0 %v332
      %v1323 = vpop.f32.mrf.mxu0
      %v1324 = vadd.f32 %v1115, %v1323
      %1325 = vmatmul.f32.gmra.mxu0 %v337
      %v1326 = vpop.f32.mrf.mxu0
      %v1327 = vadd.f32 %v1118, %v1326
      %1328 = vmatmul.f32.gmra.mxu0 %v342
      %v1329 = vpop.f32.mrf.mxu0
      %v1330 = vadd.f32 %v1121, %v1329
      %1331 = vmatmul.f32.gmra.mxu0 %v347
      %v1332 = vpop.f32.mrf.mxu0
      %v1333 = vadd.f32 %v1124, %v1332
      %1334 = vmatmul.f32.gmra.mxu0 %v352
      %v1335 = vpop.f32.mrf.mxu0
      %v1336 = vadd.f32 %v1127, %v1335
      %1337 = vmatmul.f32.gmra.mxu0 %v357
      %v1338 = vpop.f32.mrf.mxu0
      %v1339 = vadd.f32 %v1130, %v1338
      %1340 = vmatmul.f32.gmra.mxu0 %v362
      %v1341 = vpop.f32.mrf.mxu0
      %v1342 = vadd.f32 %v1133, %v1341
      %1343 = vmatmul.f32.gmra.mxu0 %v367
      %v1344 = vpop.f32.mrf.mxu0
      %v1345 = vadd.f32 %v1136, %v1344
      %1346 = vmatmul.f32.gmra.mxu0 %v372
      %v1347 = vpop.f32.mrf.mxu0
      %v1348 = vadd.f32 %v1139, %v1347
      %1349 = vmatmul.f32.gmra.mxu0 %v377
      %v1350 = vpop.f32.mrf.mxu0
      %v1351 = vadd.f32 %v1142, %v1350
      %1352 = vmatmul.f32.gmra.mxu0 %v382
      %v1353 = vpop.f32.mrf.mxu0
      %v1354 = vadd.f32 %v1145, %v1353
      %1355 = vmatmul.f32.gmra.mxu0 %v387
      %v1356 = vpop.f32.mrf.mxu0
      %v1357 = vadd.f32 %v1148, %v1356
      %1358 = vmatmul.f32.gmra.mxu0 %v392
      %v1359 = vpop.f32.mrf.mxu0
      %v1360 = vadd.f32 %v1151, %v1359
      %1361 = vmatmul.f32.gmra.mxu0 %v397
      %v1362 = vpop.f32.mrf.mxu0
      %v1363 = vadd.f32 %v1154, %v1362
      %1364 = vmatmul.f32.gmra.mxu0 %v402
      %v1365 = vpop.f32.mrf.mxu0
      %v1366 = vadd.f32 %v1157, %v1365
      %1367 = vmatmul.f32.gmra.mxu0 %v407
      %v1368 = vpop.f32.mrf.mxu0
      %v1369 = vadd.f32 %v1160, %v1368
      %1370 = vmatmul.f32.gmra.mxu0 %v412
      %v1371 = vpop.f32.mrf.mxu0
      %v1372 = vadd.f32 %v1163, %v1371
      %1373 = vmatmul.f32.gmra.mxu0 %v417
      %v1374 = vpop.f32.mrf.mxu0
      %v1375 = vadd.f32 %v1166, %v1374
      %1376 = vmatmul.f32.gmra.mxu0 %v422
      %v1377 = vpop.f32.mrf.mxu0
      %v1378 = vadd.f32 %v1169, %v1377
      %1379 = vmatmul.f32.gmra.mxu0 %v427
      %v1380 = vpop.f32.mrf.mxu0
      %v1381 = vadd.f32 %v1172, %v1380
      %1382 = vmatmul.f32.gmra.mxu0 %v432
      %v1383 = vpop.f32.mrf.mxu0
      %v1384 = vadd.f32 %v1175, %v1383
      %1385 = vmatmul.f32.gmra.mxu0 %v437
      %v1386 = vpop.f32.mrf.mxu0
      %v1387 = vadd.f32 %v1178, %v1386
      %1388 = vmatmul.f32.gmra.mxu0 %v442
      %v1389 = vpop.f32.mrf.mxu0
      %v1390 = vadd.f32 %v1181, %v1389
      %1391 = vmatmul.f32.gmra.mxu0 %v447
      %v1392 = vpop.f32.mrf.mxu0
      %v1393 = vadd.f32 %v1184, %v1392
      %1394 = vmatmul.f32.gmra.mxu0 %v452
      %v1395 = vpop.f32.mrf.mxu0
      %v1396 = vadd.f32 %v1187, %v1395
      %1397 = vmatmul.f32.gmra.mxu0 %v457
      %v1398 = vpop.f32.mrf.mxu0
      %v1399 = vadd.f32 %v1190, %v1398
      %1400 = vmatmul.f32.gmra.mxu0 %v462
      %v1401 = vpop.f32.mrf.mxu0
      %v1402 = vadd.f32 %v1193, %v1401
      %1403 = vmatmul.f32.gmra.mxu0 %v467
      %v1404 = vpop.f32.mrf.mxu0
      %v1405 = vadd.f32 %v1196, %v1404
      %1406 = vmatmul.f32.gmra.mxu0 %v472
      %v1407 = vpop.f32.mrf.mxu0
      %v1408 = vadd.f32 %v1199, %v1407
      %1409 = vmatmul.f32.gmra.mxu0 %v477
      %v1410 = vpop.f32.mrf.mxu0
      %v1411 = vadd.f32 %v1202, %v1410
      %1412 = vmatmul.f32.gmra.mxu0 %v482
      %v1413 = vpop.f32.mrf.mxu0
      %v1414 = vadd.f32 %v1205, %v1413
      %1415 = vmatmul.f32.gmra.mxu0 %v487
      %v1416 = vpop.f32.mrf.mxu0
      %v1417 = vadd.f32 %v1208, %v1416
      %1418 = vmatmul.f32.gmra.mxu0 %v492
      %v1419 = vpop.f32.mrf.mxu0
      %v1420 = vadd.f32 %v1211, %v1419
      %1421 = vmatmul.f32.gmra.mxu0 %v497
      %v1422 = vpop.f32.mrf.mxu0
      %v1423 = vadd.f32 %v1214, %v1422
      %1424 = vmatmul.f32.gmra.mxu0 %v502
      %v1425 = vpop.f32.mrf.mxu0
      %v1426 = vadd.f32 %v1217, %v1425
      %1427 = vmatmul.f32.gmra.mxu0 %v507
      %v1428 = vpop.f32.mrf.mxu0
      %v1429 = vadd.f32 %v1220, %v1428
      %1430 = vmatmul.f32.gmra.mxu0 %v512
      %v1431 = vpop.f32.mrf.mxu0
      %v1432 = vadd.f32 %v1223, %v1431
      %1433 = vmatmul.f32.gmra.mxu0 %v517
      %v1434 = vpop.f32.mrf.mxu0
      %v1435 = vadd.f32 %v1226, %v1434
      %1436 = vmatmul.f32.gmra.mxu0 %v522
      %v1437 = vpop.f32.mrf.mxu0
      %v1438 = vadd.f32 %v1229, %v1437
      %1439 = vdwg.mxu0
      %1440 = vmatpush.msra.mxu0 %v603
      %1441 = vmatpush.msra.mxu0 %v602
      %1442 = vmatpush.msra.mxu0 %v601
      %1443 = vmatpush.msra.mxu0 %v600
      %1444 = vmatpush.msra.mxu0 %v599
      %1445 = vmatpush.msra.mxu0 %v598
      %1446 = vmatpush.msra.mxu0 %v597
      %1447 = vmatpush.msra.mxu0 %v596
      %1448 = vmatpush.msra.mxu0 %v595
      %1449 = vmatpush.msra.mxu0 %v594
      %1450 = vmatpush.msra.mxu0 %v593
      %1451 = vmatpush.msra.mxu0 %v592
      %1452 = vmatpush.msra.mxu0 %v591
      %1453 = vmatpush.msra.mxu0 %v590
      %1454 = vmatpush.msra.mxu0 %v589
      %1455 = vmatpush.msra.mxu0 %v588
      %1456 = vmatmul.f32.gmra.mxu0 %v208
      %v1457 = vpop.f32.mrf.mxu0
      %v1458 = vadd.f32 %v1249, %v1457
      %1459 = vmatmul.f32.gmra.mxu0 %v213
      %v1460 = vpop.f32.mrf.mxu0
      %v1461 = vadd.f32 %v1252, %v1460
      %1462 = vmatmul.f32.gmra.mxu0 %v218
      %v1463 = vpop.f32.mrf.mxu0
      %v1464 = vadd.f32 %v1255, %v1463
      %1465 = vmatmul.f32.gmra.mxu0 %v223
      %v1466 = vpop.f32.mrf.mxu0
      %v1467 = vadd.f32 %v1258, %v1466
      %1468 = vmatmul.f32.gmra.mxu0 %v228
      %v1469 = vpop.f32.mrf.mxu0
      %v1470 = vadd.f32 %v1261, %v1469
      %1471 = vmatmul.f32.gmra.mxu0 %v233
      %v1472 = vpop.f32.mrf.mxu0
      %v1473 = vadd.f32 %v1264, %v1472
      %1474 = vmatmul.f32.gmra.mxu0 %v238
      %v1475 = vpop.f32.mrf.mxu0
      %v1476 = vadd.f32 %v1267, %v1475
      %1477 = vmatmul.f32.gmra.mxu0 %v243
      %v1478 = vpop.f32.mrf.mxu0
      %v1479 = vadd.f32 %v1270, %v1478
      %1480 = vmatmul.f32.gmra.mxu0 %v248
      %v1481 = vpop.f32.mrf.mxu0
      %v1482 = vadd.f32 %v1273, %v1481
      %1483 = vmatmul.f32.gmra.mxu0 %v253
      %v1484 = vpop.f32.mrf.mxu0
      %v1485 = vadd.f32 %v1276, %v1484
      %1486 = vmatmul.f32.gmra.mxu0 %v258
      %v1487 = vpop.f32.mrf.mxu0
      %v1488 = vadd.f32 %v1279, %v1487
      %1489 = vmatmul.f32.gmra.mxu0 %v263
      %v1490 = vpop.f32.mrf.mxu0
      %v1491 = vadd.f32 %v1282, %v1490
      %1492 = vmatmul.f32.gmra.mxu0 %v268
      %v1493 = vpop.f32.mrf.mxu0
      %v1494 = vadd.f32 %v1285, %v1493
      %1495 = vmatmul.f32.gmra.mxu0 %v273
      %v1496 = vpop.f32.mrf.mxu0
      %v1497 = vadd.f32 %v1288, %v1496
      %1498 = vmatmul.f32.gmra.mxu0 %v278
      %v1499 = vpop.f32.mrf.mxu0
      %v1500 = vadd.f32 %v1291, %v1499
      %1501 = vmatmul.f32.gmra.mxu0 %v283
      %v1502 = vpop.f32.mrf.mxu0
      %v1503 = vadd.f32 %v1294, %v1502
      %1504 = vmatmul.f32.gmra.mxu0 %v288
      %v1505 = vpop.f32.mrf.mxu0
      %v1506 = vadd.f32 %v1297, %v1505
      %1507 = vmatmul.f32.gmra.mxu0 %v293
      %v1508 = vpop.f32.mrf.mxu0
      %v1509 = vadd.f32 %v1300, %v1508
      %1510 = vmatmul.f32.gmra.mxu0 %v298
      %v1511 = vpop.f32.mrf.mxu0
      %v1512 = vadd.f32 %v1303, %v1511
      %1513 = vmatmul.f32.gmra.mxu0 %v303
      %v1514 = vpop.f32.mrf.mxu0
      %v1515 = vadd.f32 %v1306, %v1514
      %1516 = vmatmul.f32.gmra.mxu0 %v308
      %v1517 = vpop.f32.mrf.mxu0
      %v1518 = vadd.f32 %v1309, %v1517
      %1519 = vmatmul.f32.gmra.mxu0 %v313
      %v1520 = vpop.f32.mrf.mxu0
      %v1521 = vadd.f32 %v1312, %v1520
      %1522 = vmatmul.f32.gmra.mxu0 %v318
      %v1523 = vpop.f32.mrf.mxu0
      %v1524 = vadd.f32 %v1315, %v1523
      %1525 = vmatmul.f32.gmra.mxu0 %v323
      %v1526 = vpop.f32.mrf.mxu0
      %v1527 = vadd.f32 %v1318, %v1526
      %1528 = vmatmul.f32.gmra.mxu0 %v328
      %v1529 = vpop.f32.mrf.mxu0
      %v1530 = vadd.f32 %v1321, %v1529
      %1531 = vmatmul.f32.gmra.mxu0 %v333
      %v1532 = vpop.f32.mrf.mxu0
      %v1533 = vadd.f32 %v1324, %v1532
      %1534 = vmatmul.f32.gmra.mxu0 %v338
      %v1535 = vpop.f32.mrf.mxu0
      %v1536 = vadd.f32 %v1327, %v1535
      %1537 = vmatmul.f32.gmra.mxu0 %v343
      %v1538 = vpop.f32.mrf.mxu0
      %v1539 = vadd.f32 %v1330, %v1538
      %1540 = vmatmul.f32.gmra.mxu0 %v348
      %v1541 = vpop.f32.mrf.mxu0
      %v1542 = vadd.f32 %v1333, %v1541
      %1543 = vmatmul.f32.gmra.mxu0 %v353
      %v1544 = vpop.f32.mrf.mxu0
      %v1545 = vadd.f32 %v1336, %v1544
      %1546 = vmatmul.f32.gmra.mxu0 %v358
      %v1547 = vpop.f32.mrf.mxu0
      %v1548 = vadd.f32 %v1339, %v1547
      %1549 = vmatmul.f32.gmra.mxu0 %v363
      %v1550 = vpop.f32.mrf.mxu0
      %v1551 = vadd.f32 %v1342, %v1550
      %1552 = vmatmul.f32.gmra.mxu0 %v368
      %v1553 = vpop.f32.mrf.mxu0
      %v1554 = vadd.f32 %v1345, %v1553
      %1555 = vmatmul.f32.gmra.mxu0 %v373
      %v1556 = vpop.f32.mrf.mxu0
      %v1557 = vadd.f32 %v1348, %v1556
      %1558 = vmatmul.f32.gmra.mxu0 %v378
      %v1559 = vpop.f32.mrf.mxu0
      %v1560 = vadd.f32 %v1351, %v1559
      %1561 = vmatmul.f32.gmra.mxu0 %v383
      %v1562 = vpop.f32.mrf.mxu0
      %v1563 = vadd.f32 %v1354, %v1562
      %1564 = vmatmul.f32.gmra.mxu0 %v388
      %v1565 = vpop.f32.mrf.mxu0
      %v1566 = vadd.f32 %v1357, %v1565
      %1567 = vmatmul.f32.gmra.mxu0 %v393
      %v1568 = vpop.f32.mrf.mxu0
      %v1569 = vadd.f32 %v1360, %v1568
      %1570 = vmatmul.f32.gmra.mxu0 %v398
      %v1571 = vpop.f32.mrf.mxu0
      %v1572 = vadd.f32 %v1363, %v1571
      %1573 = vmatmul.f32.gmra.mxu0 %v403
      %v1574 = vpop.f32.mrf.mxu0
      %v1575 = vadd.f32 %v1366, %v1574
      %1576 = vmatmul.f32.gmra.mxu0 %v408
      %v1577 = vpop.f32.mrf.mxu0
      %v1578 = vadd.f32 %v1369, %v1577
      %1579 = vmatmul.f32.gmra.mxu0 %v413
      %v1580 = vpop.f32.mrf.mxu0
      %v1581 = vadd.f32 %v1372, %v1580
      %1582 = vmatmul.f32.gmra.mxu0 %v418
      %v1583 = vpop.f32.mrf.mxu0
      %v1584 = vadd.f32 %v1375, %v1583
      %1585 = vmatmul.f32.gmra.mxu0 %v423
      %v1586 = vpop.f32.mrf.mxu0
      %v1587 = vadd.f32 %v1378, %v1586
      %1588 = vmatmul.f32.gmra.mxu0 %v428
      %v1589 = vpop.f32.mrf.mxu0
      %v1590 = vadd.f32 %v1381, %v1589
      %1591 = vmatmul.f32.gmra.mxu0 %v433
      %v1592 = vpop.f32.mrf.mxu0
      %v1593 = vadd.f32 %v1384, %v1592
      %1594 = vmatmul.f32.gmra.mxu0 %v438
      %v1595 = vpop.f32.mrf.mxu0
      %v1596 = vadd.f32 %v1387, %v1595
      %1597 = vmatmul.f32.gmra.mxu0 %v443
      %v1598 = vpop.f32.mrf.mxu0
      %v1599 = vadd.f32 %v1390, %v1598
      %1600 = vmatmul.f32.gmra.mxu0 %v448
      %v1601 = vpop.f32.mrf.mxu0
      %v1602 = vadd.f32 %v1393, %v1601
      %1603 = vmatmul.f32.gmra.mxu0 %v453
      %v1604 = vpop.f32.mrf.mxu0
      %v1605 = vadd.f32 %v1396, %v1604
      %1606 = vmatmul.f32.gmra.mxu0 %v458
      %v1607 = vpop.f32.mrf.mxu0
      %v1608 = vadd.f32 %v1399, %v1607
      %1609 = vmatmul.f32.gmra.mxu0 %v463
      %v1610 = vpop.f32.mrf.mxu0
      %v1611 = vadd.f32 %v1402, %v1610
      %1612 = vmatmul.f32.gmra.mxu0 %v468
      %v1613 = vpop.f32.mrf.mxu0
      %v1614 = vadd.f32 %v1405, %v1613
      %1615 = vmatmul.f32.gmra.mxu0 %v473
      %v1616 = vpop.f32.mrf.mxu0
      %v1617 = vadd.f32 %v1408, %v1616
      %1618 = vmatmul.f32.gmra.mxu0 %v478
      %v1619 = vpop.f32.mrf.mxu0
      %v1620 = vadd.f32 %v1411, %v1619
      %1621 = vmatmul.f32.gmra.mxu0 %v483
      %v1622 = vpop.f32.mrf.mxu0
      %v1623 = vadd.f32 %v1414, %v1622
      %1624 = vmatmul.f32.gmra.mxu0 %v488
      %v1625 = vpop.f32.mrf.mxu0
      %v1626 = vadd.f32 %v1417, %v1625
      %1627 = vmatmul.f32.gmra.mxu0 %v493
      %v1628 = vpop.f32.mrf.mxu0
      %v1629 = vadd.f32 %v1420, %v1628
      %1630 = vmatmul.f32.gmra.mxu0 %v498
      %v1631 = vpop.f32.mrf.mxu0
      %v1632 = vadd.f32 %v1423, %v1631
      %1633 = vmatmul.f32.gmra.mxu0 %v503
      %v1634 = vpop.f32.mrf.mxu0
      %v1635 = vadd.f32 %v1426, %v1634
      %1636 = vmatmul.f32.gmra.mxu0 %v508
      %v1637 = vpop.f32.mrf.mxu0
      %v1638 = vadd.f32 %v1429, %v1637
      %1639 = vmatmul.f32.gmra.mxu0 %v513
      %v1640 = vpop.f32.mrf.mxu0
      %v1641 = vadd.f32 %v1432, %v1640
      %1642 = vmatmul.f32.gmra.mxu0 %v518
      %v1643 = vpop.f32.mrf.mxu0
      %v1644 = vadd.f32 %v1435, %v1643
      %1645 = vmatmul.f32.gmra.mxu0 %v523
      %v1646 = vpop.f32.mrf.mxu0
      %v1647 = vadd.f32 %v1438, %v1646
      %1648 = vdwg.mxu0
      %v1649 = vld [vmem:[%s2] sm:$0x1]
      %v1651 = vperm.slane %v1649, 0
      %v1653 = vmul.f32 %v1458, %v1651
      %v1654 = vmul.f32 %v1461, %v1651
      %v1655 = vmul.f32 %v1464, %v1651
      %v1656 = vmul.f32 %v1467, %v1651
      %v1657 = vmul.f32 %v1470, %v1651
      %v1658 = vmul.f32 %v1473, %v1651
      %v1659 = vmul.f32 %v1476, %v1651
      %v1660 = vmul.f32 %v1479, %v1651
      %v1661 = vmul.f32 %v1482, %v1651
      %v1662 = vmul.f32 %v1485, %v1651
      %v1663 = vmul.f32 %v1488, %v1651
      %v1664 = vmul.f32 %v1491, %v1651
      %v1665 = vmul.f32 %v1494, %v1651
      %v1666 = vmul.f32 %v1497, %v1651
      %v1667 = vmul.f32 %v1500, %v1651
      %v1668 = vmul.f32 %v1503, %v1651
      %v1669 = vmul.f32 %v1506, %v1651
      %v1670 = vmul.f32 %v1509, %v1651
      %v1671 = vmul.f32 %v1512, %v1651
      %v1672 = vmul.f32 %v1515, %v1651
      %v1673 = vmul.f32 %v1518, %v1651
      %v1674 = vmul.f32 %v1521, %v1651
      %v1675 = vmul.f32 %v1524, %v1651
      %v1676 = vmul.f32 %v1527, %v1651
      %v1677 = vmul.f32 %v1530, %v1651
      %v1678 = vmul.f32 %v1533, %v1651
      %v1679 = vmul.f32 %v1536, %v1651
      %v1680 = vmul.f32 %v1539, %v1651
      %v1681 = vmul.f32 %v1542, %v1651
      %v1682 = vmul.f32 %v1545, %v1651
      %v1683 = vmul.f32 %v1548, %v1651
      %v1684 = vmul.f32 %v1551, %v1651
      %v1685 = vmul.f32 %v1554, %v1651
      %v1686 = vmul.f32 %v1557, %v1651
      %v1687 = vmul.f32 %v1560, %v1651
      %v1688 = vmul.f32 %v1563, %v1651
      %v1689 = vmul.f32 %v1566, %v1651
      %v1690 = vmul.f32 %v1569, %v1651
      %v1691 = vmul.f32 %v1572, %v1651
      %v1692 = vmul.f32 %v1575, %v1651
      %v1693 = vmul.f32 %v1578, %v1651
      %v1694 = vmul.f32 %v1581, %v1651
      %v1695 = vmul.f32 %v1584, %v1651
      %v1696 = vmul.f32 %v1587, %v1651
      %v1697 = vmul.f32 %v1590, %v1651
      %v1698 = vmul.f32 %v1593, %v1651
      %v1699 = vmul.f32 %v1596, %v1651
      %v1700 = vmul.f32 %v1599, %v1651
      %v1701 = vmul.f32 %v1602, %v1651
      %v1702 = vmul.f32 %v1605, %v1651
      %v1703 = vmul.f32 %v1608, %v1651
      %v1704 = vmul.f32 %v1611, %v1651
      %v1705 = vmul.f32 %v1614, %v1651
      %v1706 = vmul.f32 %v1617, %v1651
      %v1707 = vmul.f32 %v1620, %v1651
      %v1708 = vmul.f32 %v1623, %v1651
      %v1709 = vmul.f32 %v1626, %v1651
      %v1710 = vmul.f32 %v1629, %v1651
      %v1711 = vmul.f32 %v1632, %v1651
      %v1712 = vmul.f32 %v1635, %v1651
      %v1713 = vmul.f32 %v1638, %v1651
      %v1714 = vmul.f32 %v1641, %v1651
      %v1715 = vmul.f32 %v1644, %v1651
      %v1716 = vmul.f32 %v1647, %v1651
      %v1717 = vld [vmem:[%s3] sm:$0x1]
      %v1719 = vperm.slane %v1717, 0
      %v1721 = vadd.f32 %v1653, %v1719
      %v1722 = vadd.f32 %v1654, %v1719
      %v1723 = vadd.f32 %v1655, %v1719
      %v1724 = vadd.f32 %v1656, %v1719
      %v1725 = vadd.f32 %v1657, %v1719
      %v1726 = vadd.f32 %v1658, %v1719
      %v1727 = vadd.f32 %v1659, %v1719
      %v1728 = vadd.f32 %v1660, %v1719
      %v1729 = vadd.f32 %v1661, %v1719
      %v1730 = vadd.f32 %v1662, %v1719
      %v1731 = vadd.f32 %v1663, %v1719
      %v1732 = vadd.f32 %v1664, %v1719
      %v1733 = vadd.f32 %v1665, %v1719
      %v1734 = vadd.f32 %v1666, %v1719
      %v1735 = vadd.f32 %v1667, %v1719
      %v1736 = vadd.f32 %v1668, %v1719
      %v1737 = vadd.f32 %v1669, %v1719
      %v1738 = vadd.f32 %v1670, %v1719
      %v1739 = vadd.f32 %v1671, %v1719
      %v1740 = vadd.f32 %v1672, %v1719
      %v1741 = vadd.f32 %v1673, %v1719
      %v1742 = vadd.f32 %v1674, %v1719
      %v1743 = vadd.f32 %v1675, %v1719
      %v1744 = vadd.f32 %v1676, %v1719
      %v1745 = vadd.f32 %v1677, %v1719
      %v1746 = vadd.f32 %v1678, %v1719
      %v1747 = vadd.f32 %v1679, %v1719
      %v1748 = vadd.f32 %v1680, %v1719
      %v1749 = vadd.f32 %v1681, %v1719
      %v1750 = vadd.f32 %v1682, %v1719
      %v1751 = vadd.f32 %v1683, %v1719
      %v1752 = vadd.f32 %v1684, %v1719
      %v1753 = vadd.f32 %v1685, %v1719
      %v1754 = vadd.f32 %v1686, %v1719
      %v1755 = vadd.f32 %v1687, %v1719
      %v1756 = vadd.f32 %v1688, %v1719
      %v1757 = vadd.f32 %v1689, %v1719
      %v1758 = vadd.f32 %v1690, %v1719
      %v1759 = vadd.f32 %v1691, %v1719
      %v1760 = vadd.f32 %v1692, %v1719
      %v1761 = vadd.f32 %v1693, %v1719
      %v1762 = vadd.f32 %v1694, %v1719
      %v1763 = vadd.f32 %v1695, %v1719
      %v1764 = vadd.f32 %v1696, %v1719
      %v1765 = vadd.f32 %v1697, %v1719
      %v1766 = vadd.f32 %v1698, %v1719
      %v1767 = vadd.f32 %v1699, %v1719
      %v1768 = vadd.f32 %v1700, %v1719
      %v1769 = vadd.f32 %v1701, %v1719
      %v1770 = vadd.f32 %v1702, %v1719
      %v1771 = vadd.f32 %v1703, %v1719
      %v1772 = vadd.f32 %v1704, %v1719
      %v1773 = vadd.f32 %v1705, %v1719
      %v1774 = vadd.f32 %v1706, %v1719
      %v1775 = vadd.f32 %v1707, %v1719
      %v1776 = vadd.f32 %v1708, %v1719
      %v1777 = vadd.f32 %v1709, %v1719
      %v1778 = vadd.f32 %v1710, %v1719
      %v1779 = vadd.f32 %v1711, %v1719
      %v1780 = vadd.f32 %v1712, %v1719
      %v1781 = vadd.f32 %v1713, %v1719
      %v1782 = vadd.f32 %v1714, %v1719
      %v1783 = vadd.f32 %v1715, %v1719
      %v1784 = vadd.f32 %v1716, %v1719
      %vm1785 = vcmp.ge.f32.partialorder %v1721, 0.0
      %vm1786 = vcmp.ge.f32.partialorder %v1722, 0.0
      %vm1787 = vcmp.ge.f32.partialorder %v1723, 0.0
      %vm1788 = vcmp.ge.f32.partialorder %v1724, 0.0
      %vm1789 = vcmp.ge.f32.partialorder %v1725, 0.0
      %vm1790 = vcmp.ge.f32.partialorder %v1726, 0.0
      %vm1791 = vcmp.ge.f32.partialorder %v1727, 0.0
      %vm1792 = vcmp.ge.f32.partialorder %v1728, 0.0
      %vm1793 = vcmp.ge.f32.partialorder %v1729, 0.0
      %vm1794 = vcmp.ge.f32.partialorder %v1730, 0.0
      %vm1795 = vcmp.ge.f32.partialorder %v1731, 0.0
      %vm1796 = vcmp.ge.f32.partialorder %v1732, 0.0
      %vm1797 = vcmp.ge.f32.partialorder %v1733, 0.0
      %vm1798 = vcmp.ge.f32.partialorder %v1734, 0.0
      %vm1799 = vcmp.ge.f32.partialorder %v1735, 0.0
      %vm1800 = vcmp.ge.f32.partialorder %v1736, 0.0
      %vm1801 = vcmp.ge.f32.partialorder %v1737, 0.0
      %vm1802 = vcmp.ge.f32.partialorder %v1738, 0.0
      %vm1803 = vcmp.ge.f32.partialorder %v1739, 0.0
      %vm1804 = vcmp.ge.f32.partialorder %v1740, 0.0
      %vm1805 = vcmp.ge.f32.partialorder %v1741, 0.0
      %vm1806 = vcmp.ge.f32.partialorder %v1742, 0.0
      %vm1807 = vcmp.ge.f32.partialorder %v1743, 0.0
      %vm1808 = vcmp.ge.f32.partialorder %v1744, 0.0
      %vm1809 = vcmp.ge.f32.partialorder %v1745, 0.0
      %vm1810 = vcmp.ge.f32.partialorder %v1746, 0.0
      %vm1811 = vcmp.ge.f32.partialorder %v1747, 0.0
      %vm1812 = vcmp.ge.f32.partialorder %v1748, 0.0
      %vm1813 = vcmp.ge.f32.partialorder %v1749, 0.0
      %vm1814 = vcmp.ge.f32.partialorder %v1750, 0.0
      %vm1815 = vcmp.ge.f32.partialorder %v1751, 0.0
      %vm1816 = vcmp.ge.f32.partialorder %v1752, 0.0
      %vm1817 = vcmp.ge.f32.partialorder %v1753, 0.0
      %vm1818 = vcmp.ge.f32.partialorder %v1754, 0.0
      %vm1819 = vcmp.ge.f32.partialorder %v1755, 0.0
      %vm1820 = vcmp.ge.f32.partialorder %v1756, 0.0
      %vm1821 = vcmp.ge.f32.partialorder %v1757, 0.0
      %vm1822 = vcmp.ge.f32.partialorder %v1758, 0.0
      %vm1823 = vcmp.ge.f32.partialorder %v1759, 0.0
      %vm1824 = vcmp.ge.f32.partialorder %v1760, 0.0
      %vm1825 = vcmp.ge.f32.partialorder %v1761, 0.0
      %vm1826 = vcmp.ge.f32.partialorder %v1762, 0.0
      %vm1827 = vcmp.ge.f32.partialorder %v1763, 0.0
      %vm1828 = vcmp.ge.f32.partialorder %v1764, 0.0
      %vm1829 = vcmp.ge.f32.partialorder %v1765, 0.0
      %vm1830 = vcmp.ge.f32.partialorder %v1766, 0.0
      %vm1831 = vcmp.ge.f32.partialorder %v1767, 0.0
      %vm1832 = vcmp.ge.f32.partialorder %v1768, 0.0
      %vm1833 = vcmp.ge.f32.partialorder %v1769, 0.0
      %vm1834 = vcmp.ge.f32.partialorder %v1770, 0.0
      %vm1835 = vcmp.ge.f32.partialorder %v1771, 0.0
      %vm1836 = vcmp.ge.f32.partialorder %v1772, 0.0
      %vm1837 = vcmp.ge.f32.partialorder %v1773, 0.0
      %vm1838 = vcmp.ge.f32.partialorder %v1774, 0.0
      %vm1839 = vcmp.ge.f32.partialorder %v1775, 0.0
      %vm1840 = vcmp.ge.f32.partialorder %v1776, 0.0
      %vm1841 = vcmp.ge.f32.partialorder %v1777, 0.0
      %vm1842 = vcmp.ge.f32.partialorder %v1778, 0.0
      %vm1843 = vcmp.ge.f32.partialorder %v1779, 0.0
      %vm1844 = vcmp.ge.f32.partialorder %v1780, 0.0
      %vm1845 = vcmp.ge.f32.partialorder %v1781, 0.0
      %vm1846 = vcmp.ge.f32.partialorder %v1782, 0.0
      %vm1847 = vcmp.ge.f32.partialorder %v1783, 0.0
      %vm1848 = vcmp.ge.f32.partialorder %v1784, 0.0
      %v1849 = vmul.f32 %v1721, 0.2
      %v1850 = vmul.f32 %v1722, 0.2
      %v1851 = vmul.f32 %v1723, 0.2
      %v1852 = vmul.f32 %v1724, 0.2
      %v1853 = vmul.f32 %v1725, 0.2
      %v1854 = vmul.f32 %v1726, 0.2
      %v1855 = vmul.f32 %v1727, 0.2
      %v1856 = vmul.f32 %v1728, 0.2
      %v1857 = vmul.f32 %v1729, 0.2
      %v1858 = vmul.f32 %v1730, 0.2
      %v1859 = vmul.f32 %v1731, 0.2
      %v1860 = vmul.f32 %v1732, 0.2
      %v1861 = vmul.f32 %v1733, 0.2
      %v1862 = vmul.f32 %v1734, 0.2
      %v1863 = vmul.f32 %v1735, 0.2
      %v1864 = vmul.f32 %v1736, 0.2
      %v1865 = vmul.f32 %v1737, 0.2
      %v1866 = vmul.f32 %v1738, 0.2
      %v1867 = vmul.f32 %v1739, 0.2
      %v1868 = vmul.f32 %v1740, 0.2
      %v1869 = vmul.f32 %v1741, 0.2
      %v1870 = vmul.f32 %v1742, 0.2
      %v1871 = vmul.f32 %v1743, 0.2
      %v1872 = vmul.f32 %v1744, 0.2
      %v1873 = vmul.f32 %v1745, 0.2
      %v1874 = vmul.f32 %v1746, 0.2
      %v1875 = vmul.f32 %v1747, 0.2
      %v1876 = vmul.f32 %v1748, 0.2
      %v1877 = vmul.f32 %v1749, 0.2
      %v1878 = vmul.f32 %v1750, 0.2
      %v1879 = vmul.f32 %v1751, 0.2
      %v1880 = vmul.f32 %v1752, 0.2
      %v1881 = vmul.f32 %v1753, 0.2
      %v1882 = vmul.f32 %v1754, 0.2
      %v1883 = vmul.f32 %v1755, 0.2
      %v1884 = vmul.f32 %v1756, 0.2
      %v1885 = vmul.f32 %v1757, 0.2
      %v1886 = vmul.f32 %v1758, 0.2
      %v1887 = vmul.f32 %v1759, 0.2
      %v1888 = vmul.f32 %v1760, 0.2
      %v1889 = vmul.f32 %v1761, 0.2
      %v1890 = vmul.f32 %v1762, 0.2
      %v1891 = vmul.f32 %v1763, 0.2
      %v1892 = vmul.f32 %v1764, 0.2
      %v1893 = vmul.f32 %v1765, 0.2
      %v1894 = vmul.f32 %v1766, 0.2
      %v1895 = vmul.f32 %v1767, 0.2
      %v1896 = vmul.f32 %v1768, 0.2
      %v1897 = vmul.f32 %v1769, 0.2
      %v1898 = vmul.f32 %v1770, 0.2
      %v1899 = vmul.f32 %v1771, 0.2
      %v1900 = vmul.f32 %v1772, 0.2
      %v1901 = vmul.f32 %v1773, 0.2
      %v1902 = vmul.f32 %v1774, 0.2
      %v1903 = vmul.f32 %v1775, 0.2
      %v1904 = vmul.f32 %v1776, 0.2
      %v1905 = vmul.f32 %v1777, 0.2
      %v1906 = vmul.f32 %v1778, 0.2
      %v1907 = vmul.f32 %v1779, 0.2
      %v1908 = vmul.f32 %v1780, 0.2
      %v1909 = vmul.f32 %v1781, 0.2
      %v1910 = vmul.f32 %v1782, 0.2
      %v1911 = vmul.f32 %v1783, 0.2
      %v1912 = vmul.f32 %v1784, 0.2
      %v1913 = vsel %vm1785, %v1721, %v1849
      %v1914 = vsel %vm1786, %v1722, %v1850
      %v1915 = vsel %vm1787, %v1723, %v1851
      %v1916 = vsel %vm1788, %v1724, %v1852
      %v1917 = vsel %vm1789, %v1725, %v1853
      %v1918 = vsel %vm1790, %v1726, %v1854
      %v1919 = vsel %vm1791, %v1727, %v1855
      %v1920 = vsel %vm1792, %v1728, %v1856
      %v1921 = vsel %vm1793, %v1729, %v1857
      %v1922 = vsel %vm1794, %v1730, %v1858
      %v1923 = vsel %vm1795, %v1731, %v1859
      %v1924 = vsel %vm1796, %v1732, %v1860
      %v1925 = vsel %vm1797, %v1733, %v1861
      %v1926 = vsel %vm1798, %v1734, %v1862
      %v1927 = vsel %vm1799, %v1735, %v1863
      %v1928 = vsel %vm1800, %v1736, %v1864
      %v1929 = vsel %vm1801, %v1737, %v1865
      %v1930 = vsel %vm1802, %v1738, %v1866
      %v1931 = vsel %vm1803, %v1739, %v1867
      %v1932 = vsel %vm1804, %v1740, %v1868
      %v1933 = vsel %vm1805, %v1741, %v1869
      %v1934 = vsel %vm1806, %v1742, %v1870
      %v1935 = vsel %vm1807, %v1743, %v1871
      %v1936 = vsel %vm1808, %v1744, %v1872
      %v1937 = vsel %vm1809, %v1745, %v1873
      %v1938 = vsel %vm1810, %v1746, %v1874
      %v1939 = vsel %vm1811, %v1747, %v1875
      %v1940 = vsel %vm1812, %v1748, %v1876
      %v1941 = vsel %vm1813, %v1749, %v1877
      %v1942 = vsel %vm1814, %v1750, %v1878
      %v1943 = vsel %vm1815, %v1751, %v1879
      %v1944 = vsel %vm1816, %v1752, %v1880
      %v1945 = vsel %vm1817, %v1753, %v1881
      %v1946 = vsel %vm1818, %v1754, %v1882
      %v1947 = vsel %vm1819, %v1755, %v1883
      %v1948 = vsel %vm1820, %v1756, %v1884
      %v1949 = vsel %vm1821, %v1757, %v1885
      %v1950 = vsel %vm1822, %v1758, %v1886
      %v1951 = vsel %vm1823, %v1759, %v1887
      %v1952 = vsel %vm1824, %v1760, %v1888
      %v1953 = vsel %vm1825, %v1761, %v1889
      %v1954 = vsel %vm1826, %v1762, %v1890
      %v1955 = vsel %vm1827, %v1763, %v1891
      %v1956 = vsel %vm1828, %v1764, %v1892
      %v1957 = vsel %vm1829, %v1765, %v1893
      %v1958 = vsel %vm1830, %v1766, %v1894
      %v1959 = vsel %vm1831, %v1767, %v1895
      %v1960 = vsel %vm1832, %v1768, %v1896
      %v1961 = vsel %vm1833, %v1769, %v1897
      %v1962 = vsel %vm1834, %v1770, %v1898
      %v1963 = vsel %vm1835, %v1771, %v1899
      %v1964 = vsel %vm1836, %v1772, %v1900
      %v1965 = vsel %vm1837, %v1773, %v1901
      %v1966 = vsel %vm1838, %v1774, %v1902
      %v1967 = vsel %vm1839, %v1775, %v1903
      %v1968 = vsel %vm1840, %v1776, %v1904
      %v1969 = vsel %vm1841, %v1777, %v1905
      %v1970 = vsel %vm1842, %v1778, %v1906
      %v1971 = vsel %vm1843, %v1779, %v1907
      %v1972 = vsel %vm1844, %v1780, %v1908
      %v1973 = vsel %vm1845, %v1781, %v1909
      %v1974 = vsel %vm1846, %v1782, %v1910
      %v1975 = vsel %vm1847, %v1783, %v1911
      %v1976 = vsel %vm1848, %v1784, %v1912
      %1977 = vst [vmem:[%s202] sm:$0xff] %v1913
      %1978 = vst [vmem:[%s202 + $0x8] sm:$0xff] %v1914
      %1979 = vst [vmem:[%s202 + $0x10] sm:$0xff] %v1915
      %1980 = vst [vmem:[%s202 + $0x18] sm:$0xff] %v1916
      %1981 = vst [vmem:[%s202 + $0x20] sm:$0xff] %v1917
      %1982 = vst [vmem:[%s202 + $0x28] sm:$0xff] %v1918
      %1983 = vst [vmem:[%s202 + $0x30] sm:$0xff] %v1919
      %1984 = vst [vmem:[%s202 + $0x38] sm:$0xff] %v1920
      %1985 = vst [vmem:[%s202 + $0x40] sm:$0xff] %v1921
      %1986 = vst [vmem:[%s202 + $0x48] sm:$0xff] %v1922
      %1987 = vst [vmem:[%s202 + $0x50] sm:$0xff] %v1923
      %1988 = vst [vmem:[%s202 + $0x58] sm:$0xff] %v1924
      %1989 = vst [vmem:[%s202 + $0x60] sm:$0xff] %v1925
      %1990 = vst [vmem:[%s202 + $0x68] sm:$0xff] %v1926
      %1991 = vst [vmem:[%s202 + $0x70] sm:$0xff] %v1927
      %1992 = vst [vmem:[%s202 + $0x78] sm:$0xff] %v1928
      %1993 = vst [vmem:[%s202 + $0x80] sm:$0xff] %v1929
      %1994 = vst [vmem:[%s202 + $0x88] sm:$0xff] %v1930
      %1995 = vst [vmem:[%s202 + $0x90] sm:$0xff] %v1931
      %1996 = vst [vmem:[%s202 + $0x98] sm:$0xff] %v1932
      %1997 = vst [vmem:[%s202 + $0xa0] sm:$0xff] %v1933
      %1998 = vst [vmem:[%s202 + $0xa8] sm:$0xff] %v1934
      %1999 = vst [vmem:[%s202 + $0xb0] sm:$0xff] %v1935
      %2000 = vst [vmem:[%s202 + $0xb8] sm:$0xff] %v1936
      %2001 = vst [vmem:[%s202 + $0xc0] sm:$0xff] %v1937
      %2002 = vst [vmem:[%s202 + $0xc8] sm:$0xff] %v1938
      %2003 = vst [vmem:[%s202 + $0xd0] sm:$0xff] %v1939
      %2004 = vst [vmem:[%s202 + $0xd8] sm:$0xff] %v1940
      %2005 = vst [vmem:[%s202 + $0xe0] sm:$0xff] %v1941
      %2006 = vst [vmem:[%s202 + $0xe8] sm:$0xff] %v1942
      %2007 = vst [vmem:[%s202 + $0xf0] sm:$0xff] %v1943
      %2008 = vst [vmem:[%s202 + $0xf8] sm:$0xff] %v1944
      %2009 = vst [vmem:[%s202 + $0x100] sm:$0xff] %v1945
      %2010 = vst [vmem:[%s202 + $0x108] sm:$0xff] %v1946
      %2011 = vst [vmem:[%s202 + $0x110] sm:$0xff] %v1947
      %2012 = vst [vmem:[%s202 + $0x118] sm:$0xff] %v1948
      %2013 = vst [vmem:[%s202 + $0x120] sm:$0xff] %v1949
      %2014 = vst [vmem:[%s202 + $0x128] sm:$0xff] %v1950
      %2015 = vst [vmem:[%s202 + $0x130] sm:$0xff] %v1951
      %2016 = vst [vmem:[%s202 + $0x138] sm:$0xff] %v1952
      %2017 = vst [vmem:[%s202 + $0x140] sm:$0xff] %v1953
      %2018 = vst [vmem:[%s202 + $0x148] sm:$0xff] %v1954
      %2019 = vst [vmem:[%s202 + $0x150] sm:$0xff] %v1955
      %2020 = vst [vmem:[%s202 + $0x158] sm:$0xff] %v1956
      %2021 = vst [vmem:[%s202 + $0x160] sm:$0xff] %v1957
      %2022 = vst [vmem:[%s202 + $0x168] sm:$0xff] %v1958
      %2023 = vst [vmem:[%s202 + $0x170] sm:$0xff] %v1959
      %2024 = vst [vmem:[%s202 + $0x178] sm:$0xff] %v1960
      %2025 = vst [vmem:[%s202 + $0x180] sm:$0xff] %v1961
      %2026 = vst [vmem:[%s202 + $0x188] sm:$0xff] %v1962
      %2027 = vst [vmem:[%s202 + $0x190] sm:$0xff] %v1963
      %2028 = vst [vmem:[%s202 + $0x198] sm:$0xff] %v1964
      %2029 = vst [vmem:[%s202 + $0x1a0] sm:$0xff] %v1965
      %2030 = vst [vmem:[%s202 + $0x1a8] sm:$0xff] %v1966
      %2031 = vst [vmem:[%s202 + $0x1b0] sm:$0xff] %v1967
      %2032 = vst [vmem:[%s202 + $0x1b8] sm:$0xff] %v1968
      %2033 = vst [vmem:[%s202 + $0x1c0] sm:$0xff] %v1969
      %2034 = vst [vmem:[%s202 + $0x1c8] sm:$0xff] %v1970
      %2035 = vst [vmem:[%s202 + $0x1d0] sm:$0xff] %v1971
      %2036 = vst [vmem:[%s202 + $0x1d8] sm:$0xff] %v1972
      %2037 = vst [vmem:[%s202 + $0x1e0] sm:$0xff] %v1973
      %2038 = vst [vmem:[%s202 + $0x1e8] sm:$0xff] %v1974
      %2039 = vst [vmem:[%s202 + $0x1f0] sm:$0xff] %v1975
      %2040 = vst [vmem:[%s202 + $0x1f8] sm:$0xff] %v1976
      %s2041 = smul.u32 64, %s15
      %p2042 = scmp.lt.s32.totalorder %s2041, 127
      %s2043 = scalar_select %p2042, %s2041, 127
      %s2044 = smul.addr %s2043, 8
      %s2045 = scalar_lea.vmem %s4, %s2044
      // Predicated region
      $region37: #{_lambda_.6} parent=35 // pred_check
        %p2046 = pneg %p122
      $region38: #{_lambda_.6} parent=35 // pred_check_branch
        %2048 = sbr.rel (%p2046) target = $region40
      $region39: #{_lambda_.6} parent=35 // pred_region
        %s2049 = smul.u32 64, %s15
      $region40: #{_lambda_.6} parent=35 // pred_fallthru
        _
    $region36: #{_lambda_.6} parent=5 // pred_fallthru
      _
    %p2050 = scmp.le.s32.totalorder 2, %s10
    // Predicated region
    $region41: #{_lambda_.6} parent=5 // pred_check
      %p2051 = pneg %p2050
    $region42: #{_lambda_.6} parent=5 // pred_check_branch
      %2053 = sbr.rel (%p2051) target = $region44
    $region43: #{_lambda_.6} parent=5 // pred_region
      %s2054 = ssub.s32 %s10, 2
      // Predicated region
      $region45: #{_lambda_.6} parent=43 // pred_check
        %p2055 = pneg %p128
      $region46: #{_lambda_.6} parent=43 // pred_check_branch
        %2057 = sbr.rel (%p2055) target = $region48
      $region47: #{_lambda_.6} parent=43 // pred_region
        %s2058 = smul.u32 64, %s16
        %p2059 = scmp.lt.s32.totalorder %s2058, 127
        %s2060 = scalar_select %p2059, %s2058, 127
        %s2061 = smul.addr %s2060, 8
        %s2062 = scalar_lea.vmem %s4, %s2061
      $region48: #{_lambda_.6} parent=43 // pred_fallthru
        _
    $region44: #{_lambda_.6} parent=5 // pred_fallthru
      _
  $region6: #{_lambda_.6} parent=0 // loop_footer
    %s14 = sadd.s32 1, %s10
  $region7: #{_lambda_.6} parent=0 // loop_footer_branch
    %9 = sbr.rel target = $region3
  $region8: #{_lambda_.6} parent=0 // loop_exit
    _

// kernel: tile.54
$region0: #{tile.54}
  #allocation0 [shape = 's32[1]{0}', space=sflag, size = 0x4, scoped, tag = 'scoped memory for tile.54']
  %s0 = inlined_call_operand.vmem [shape: f32[32], index: 0, kind: input, shape index: {}]
  %s1 = inlined_call_operand.vmem [shape: f32[4,32], index: 1, kind: output, shape index: {}]
  // Predicated region
  $region2: #{tile.54} parent=0 // pred_check
    _
  $region3: #{tile.54} parent=0 // pred_check_branch
    %3 = sbr.rel (0) target = $region5
  $region4: #{tile.54} parent=0 // pred_region
    _
  $region5: #{tile.54} parent=0 // pred_fallthru
    _
  %v4 = vld [vmem:[%s0] ss:$0 sm:$0xff]
  %5 = vst [vmem:[%s1] sm:$0xf] %v4

// kernel: tile.55
$region0: #{tile.55}
  %s0 = inlined_call_operand.vmem [shape: f32[4,32], index: 0, kind: input, shape index: {}]
  %s1 = inlined_call_operand.vmem [shape: f32[1,128], index: 1, kind: output, shape index: {}]
  $region1: #{tile.55} parent=0
    #allocation0 [shape = 'u8[4096]{0}', space=vmem, size = 0x1000, scoped, tag = 'scoped mem for output reshape']
    #allocation1 [shape = 'u8[4096]{0}', space=vmem, size = 0x1000, scoped, tag = 'scoped mem for input reshape']
    %s3 = ssub.s32 16, 1
    %v4 = vld [vmem:[%s0] sm:%s3]
    %5 = vst [vmem:[#allocation1] sm:%s3] %v4
    %v6 = vld [vmem:[#allocation1] sm:$0x1]
    %vm7 = vcmask 261120
    %8 = vst.msk [vmem:[#allocation0] sm:$0x1] %vm7, %v6
    %s9 = scalar_lea.vmem [#allocation1], 3
    %v10 = vld [vmem:[%s9] sm:$0x1]
    %11 = vrot.lane.b32.xlu0 %v10, 96
    %v12 = vpop.permute.xlu0 %11
    %vm13 = vcmask 1048320
    %14 = vst.msk [vmem:[#allocation0] sm:$0x1] %vm13, %v12
    %s15 = scalar_lea.vmem [#allocation1], 2
    %v16 = vld [vmem:[%s15] sm:$0x1]
    %17 = vrot.lane.b32.xlu0 %v16, 64
    %v18 = vpop.permute.xlu0 %17
    %vm19 = vcmask 785920
    %20 = vst.msk [vmem:[#allocation0] sm:$0x1] %vm19, %v18
    %s21 = scalar_lea.vmem [#allocation1], 1
    %v22 = vld [vmem:[%s21] sm:$0x1]
    %23 = vrot.lane.b32.xlu0 %v22, 32
    %v24 = vpop.permute.xlu0 %23
    %vm25 = vcmask 523520
    %26 = vst.msk [vmem:[#allocation0] sm:$0x1] %vm25, %v24
    %s28 = ssub.s32 2, 1
    %v29 = vld [vmem:[#allocation0] sm:%s28]
    %s31 = ssub.s32 2, 1
    %32 = vst [vmem:[%s1] sm:%s31] %v29

// kernel: _lambda_.7
$region0: #{_lambda_.7}
  #allocation0 [shape = 'u32[]', space=smem, size = 0x4, offset = 0x4, fixed_abs, tag = 'smem constant byte address 0x4 - core index']
  #allocation1 [shape = 'u32[72,128]{1,0:T(1,128)}', space=vmem, size = 0x9000, scoped, tag = 'internal scratch']
  %s0 = inlined_call_operand.vmem [shape: f32[512,640], index: 0, kind: input, shape index: {}]
  %s1 = inlined_call_operand.vmem [shape: f32[640,128], index: 1, kind: input, shape index: {}]
  %s2 = inlined_call_operand.vmem [shape: f32[1,128], index: 2, kind: input, shape index: {}]
  %s3 = inlined_call_operand.vmem [shape: f32[1,128], index: 3, kind: input, shape index: {}]
  %s4 = inlined_call_operand.vmem [shape: f32[512,128], index: 4, kind: output, shape index: {}]
  %s5 = sld [smem:[#allocation0]]
  $region26: #{_lambda_.7} parent=0
    _
  %s7 = ssub.s32 1, %s5
  %s8 = scalar_select 0, %s7, %s5
  // Predicated region
  $region2: #{_lambda_.7} parent=0 // pred_check
    _
  $region3: #{_lambda_.7} parent=0 // pred_check_branch
    %10 = sbr.rel (0) target = $region5
  $region4: #{_lambda_.7} parent=0 // pred_region
    _
  $region5: #{_lambda_.7} parent=0 // pred_fallthru
    _
  // Predicated region
  $region6: #{_lambda_.7} parent=0 // pred_check
    _
  $region7: #{_lambda_.7} parent=0 // pred_check_branch
    %12 = sbr.rel (0) target = $region9
  $region8: #{_lambda_.7} parent=0 // pred_region
    _
  $region9: #{_lambda_.7} parent=0 // pred_fallthru
    _
  // Predicated region
  $region10: #{_lambda_.7} parent=0 // pred_check
    _
  $region11: #{_lambda_.7} parent=0 // pred_check_branch
    %14 = sbr.rel (0) target = $region13
  $region12: #{_lambda_.7} parent=0 // pred_region
    _
  $region13: #{_lambda_.7} parent=0 // pred_fallthru
    _
  // Predicated region
  $region14: #{_lambda_.7} parent=0 // pred_check
    _
  $region15: #{_lambda_.7} parent=0 // pred_check_branch
    %16 = sbr.rel (0) target = $region17
  $region16: #{_lambda_.7} parent=0 // pred_region
    _
  $region17: #{_lambda_.7} parent=0 // pred_fallthru
    _
  %v17 = vld [vmem:[%s0] sm:$0xff]
  %v18 = vld [vmem:[%s0 + $0x8] sm:$0xff]
  %v19 = vld [vmem:[%s0 + $0x10] sm:$0xff]
  %v20 = vld [vmem:[%s0 + $0x18] sm:$0xff]
  %v21 = vld [vmem:[%s0 + $0x20] sm:$0xff]
  %v22 = vld [vmem:[%s0 + $0x28] sm:$0xff]
  %v23 = vld [vmem:[%s0 + $0x30] sm:$0xff]
  %v24 = vld [vmem:[%s0 + $0x38] sm:$0xff]
  %v25 = vld [vmem:[%s0 + $0x40] sm:$0xff]
  %v26 = vld [vmem:[%s0 + $0x48] sm:$0xff]
  %v27 = vld [vmem:[%s0 + $0x50] sm:$0xff]
  %v28 = vld [vmem:[%s0 + $0x58] sm:$0xff]
  %v29 = vld [vmem:[%s0 + $0x60] sm:$0xff]
  %v30 = vld [vmem:[%s0 + $0x68] sm:$0xff]
  %v31 = vld [vmem:[%s0 + $0x70] sm:$0xff]
  %v32 = vld [vmem:[%s0 + $0x78] sm:$0xff]
  %v33 = vld [vmem:[%s0 + $0x80] sm:$0xff]
  %v34 = vld [vmem:[%s0 + $0x88] sm:$0xff]
  %v35 = vld [vmem:[%s0 + $0x90] sm:$0xff]
  %v36 = vld [vmem:[%s0 + $0x98] sm:$0xff]
  %v37 = vld [vmem:[%s0 + $0xa0] sm:$0xff]
  %v38 = vld [vmem:[%s0 + $0xa8] sm:$0xff]
  %v39 = vld [vmem:[%s0 + $0xb0] sm:$0xff]
  %v40 = vld [vmem:[%s0 + $0xb8] sm:$0xff]
  %v41 = vld [vmem:[%s0 + $0xc0] sm:$0xff]
  %v42 = vld [vmem:[%s0 + $0xc8] sm:$0xff]
  %v43 = vld [vmem:[%s0 + $0xd0] sm:$0xff]
  %v44 = vld [vmem:[%s0 + $0xd8] sm:$0xff]
  %v45 = vld [vmem:[%s0 + $0xe0] sm:$0xff]
  %v46 = vld [vmem:[%s0 + $0xe8] sm:$0xff]
  %v47 = vld [vmem:[%s0 + $0xf0] sm:$0xff]
  %v48 = vld [vmem:[%s0 + $0xf8] sm:$0xff]
  %v49 = vld [vmem:[%s0 + $0x100] sm:$0xff]
  %v50 = vld [vmem:[%s0 + $0x108] sm:$0xff]
  %v51 = vld [vmem:[%s0 + $0x110] sm:$0xff]
  %v52 = vld [vmem:[%s0 + $0x118] sm:$0xff]
  %v53 = vld [vmem:[%s0 + $0x120] sm:$0xff]
  %v54 = vld [vmem:[%s0 + $0x128] sm:$0xff]
  %v55 = vld [vmem:[%s0 + $0x130] sm:$0xff]
  %v56 = vld [vmem:[%s0 + $0x138] sm:$0xff]
  %v57 = vld [vmem:[%s0 + $0x140] sm:$0xff]
  %v58 = vld [vmem:[%s0 + $0x148] sm:$0xff]
  %v59 = vld [vmem:[%s0 + $0x150] sm:$0xff]
  %v60 = vld [vmem:[%s0 + $0x158] sm:$0xff]
  %v61 = vld [vmem:[%s0 + $0x160] sm:$0xff]
  %v62 = vld [vmem:[%s0 + $0x168] sm:$0xff]
  %v63 = vld [vmem:[%s0 + $0x170] sm:$0xff]
  %v64 = vld [vmem:[%s0 + $0x178] sm:$0xff]
  %v65 = vld [vmem:[%s0 + $0x180] sm:$0xff]
  %v66 = vld [vmem:[%s0 + $0x188] sm:$0xff]
  %v67 = vld [vmem:[%s0 + $0x190] sm:$0xff]
  %v68 = vld [vmem:[%s0 + $0x198] sm:$0xff]
  %v69 = vld [vmem:[%s0 + $0x1a0] sm:$0xff]
  %v70 = vld [vmem:[%s0 + $0x1a8] sm:$0xff]
  %v71 = vld [vmem:[%s0 + $0x1b0] sm:$0xff]
  %v72 = vld [vmem:[%s0 + $0x1b8] sm:$0xff]
  %v73 = vld [vmem:[%s0 + $0x1c0] sm:$0xff]
  %v74 = vld [vmem:[%s0 + $0x1c8] sm:$0xff]
  %v75 = vld [vmem:[%s0 + $0x1d0] sm:$0xff]
  %v76 = vld [vmem:[%s0 + $0x1d8] sm:$0xff]
  %v77 = vld [vmem:[%s0 + $0x1e0] sm:$0xff]
  %v78 = vld [vmem:[%s0 + $0x1e8] sm:$0xff]
  %v79 = vld [vmem:[%s0 + $0x1f0] sm:$0xff]
  %v80 = vld [vmem:[%s0 + $0x1f8] sm:$0xff]
  %v81 = vld [vmem:[%s0 + $0x200] sm:$0xff]
  %v82 = vld [vmem:[%s0 + $0x208] sm:$0xff]
  %v83 = vld [vmem:[%s0 + $0x210] sm:$0xff]
  %v84 = vld [vmem:[%s0 + $0x218] sm:$0xff]
  %v85 = vld [vmem:[%s0 + $0x220] sm:$0xff]
  %v86 = vld [vmem:[%s0 + $0x228] sm:$0xff]
  %v87 = vld [vmem:[%s0 + $0x230] sm:$0xff]
  %v88 = vld [vmem:[%s0 + $0x238] sm:$0xff]
  %v89 = vld [vmem:[%s0 + $0x240] sm:$0xff]
  %v90 = vld [vmem:[%s0 + $0x248] sm:$0xff]
  %v91 = vld [vmem:[%s0 + $0x250] sm:$0xff]
  %v92 = vld [vmem:[%s0 + $0x258] sm:$0xff]
  %v93 = vld [vmem:[%s0 + $0x260] sm:$0xff]
  %v94 = vld [vmem:[%s0 + $0x268] sm:$0xff]
  %v95 = vld [vmem:[%s0 + $0x270] sm:$0xff]
  %v96 = vld [vmem:[%s0 + $0x278] sm:$0xff]
  %v97 = vld [vmem:[%s0 + $0x280] sm:$0xff]
  %v98 = vld [vmem:[%s0 + $0x288] sm:$0xff]
  %v99 = vld [vmem:[%s0 + $0x290] sm:$0xff]
  %v100 = vld [vmem:[%s0 + $0x298] sm:$0xff]
  %v101 = vld [vmem:[%s0 + $0x2a0] sm:$0xff]
  %v102 = vld [vmem:[%s0 + $0x2a8] sm:$0xff]
  %v103 = vld [vmem:[%s0 + $0x2b0] sm:$0xff]
  %v104 = vld [vmem:[%s0 + $0x2b8] sm:$0xff]
  %v105 = vld [vmem:[%s0 + $0x2c0] sm:$0xff]
  %v106 = vld [vmem:[%s0 + $0x2c8] sm:$0xff]
  %v107 = vld [vmem:[%s0 + $0x2d0] sm:$0xff]
  %v108 = vld [vmem:[%s0 + $0x2d8] sm:$0xff]
  %v109 = vld [vmem:[%s0 + $0x2e0] sm:$0xff]
  %v110 = vld [vmem:[%s0 + $0x2e8] sm:$0xff]
  %v111 = vld [vmem:[%s0 + $0x2f0] sm:$0xff]
  %v112 = vld [vmem:[%s0 + $0x2f8] sm:$0xff]
  %v113 = vld [vmem:[%s0 + $0x300] sm:$0xff]
  %v114 = vld [vmem:[%s0 + $0x308] sm:$0xff]
  %v115 = vld [vmem:[%s0 + $0x310] sm:$0xff]
  %v116 = vld [vmem:[%s0 + $0x318] sm:$0xff]
  %v117 = vld [vmem:[%s0 + $0x320] sm:$0xff]
  %v118 = vld [vmem:[%s0 + $0x328] sm:$0xff]
  %v119 = vld [vmem:[%s0 + $0x330] sm:$0xff]
  %v120 = vld [vmem:[%s0 + $0x338] sm:$0xff]
  %v121 = vld [vmem:[%s0 + $0x340] sm:$0xff]
  %v122 = vld [vmem:[%s0 + $0x348] sm:$0xff]
  %v123 = vld [vmem:[%s0 + $0x350] sm:$0xff]
  %v124 = vld [vmem:[%s0 + $0x358] sm:$0xff]
  %v125 = vld [vmem:[%s0 + $0x360] sm:$0xff]
  %v126 = vld [vmem:[%s0 + $0x368] sm:$0xff]
  %v127 = vld [vmem:[%s0 + $0x370] sm:$0xff]
  %v128 = vld [vmem:[%s0 + $0x378] sm:$0xff]
  %v129 = vld [vmem:[%s0 + $0x380] sm:$0xff]
  %v130 = vld [vmem:[%s0 + $0x388] sm:$0xff]
  %v131 = vld [vmem:[%s0 + $0x390] sm:$0xff]
  %v132 = vld [vmem:[%s0 + $0x398] sm:$0xff]
  %v133 = vld [vmem:[%s0 + $0x3a0] sm:$0xff]
  %v134 = vld [vmem:[%s0 + $0x3a8] sm:$0xff]
  %v135 = vld [vmem:[%s0 + $0x3b0] sm:$0xff]
  %v136 = vld [vmem:[%s0 + $0x3b8] sm:$0xff]
  %v137 = vld [vmem:[%s0 + $0x3c0] sm:$0xff]
  %v138 = vld [vmem:[%s0 + $0x3c8] sm:$0xff]
  %v139 = vld [vmem:[%s0 + $0x3d0] sm:$0xff]
  %v140 = vld [vmem:[%s0 + $0x3d8] sm:$0xff]
  %v141 = vld [vmem:[%s0 + $0x3e0] sm:$0xff]
  %v142 = vld [vmem:[%s0 + $0x3e8] sm:$0xff]
  %v143 = vld [vmem:[%s0 + $0x3f0] sm:$0xff]
  %v144 = vld [vmem:[%s0 + $0x3f8] sm:$0xff]
  %v145 = vld [vmem:[%s0 + $0x400] sm:$0xff]
  %v146 = vld [vmem:[%s0 + $0x408] sm:$0xff]
  %v147 = vld [vmem:[%s0 + $0x410] sm:$0xff]
  %v148 = vld [vmem:[%s0 + $0x418] sm:$0xff]
  %v149 = vld [vmem:[%s0 + $0x420] sm:$0xff]
  %v150 = vld [vmem:[%s0 + $0x428] sm:$0xff]
  %v151 = vld [vmem:[%s0 + $0x430] sm:$0xff]
  %v152 = vld [vmem:[%s0 + $0x438] sm:$0xff]
  %v153 = vld [vmem:[%s0 + $0x440] sm:$0xff]
  %v154 = vld [vmem:[%s0 + $0x448] sm:$0xff]
  %v155 = vld [vmem:[%s0 + $0x450] sm:$0xff]
  %v156 = vld [vmem:[%s0 + $0x458] sm:$0xff]
  %v157 = vld [vmem:[%s0 + $0x460] sm:$0xff]
  %v158 = vld [vmem:[%s0 + $0x468] sm:$0xff]
  %v159 = vld [vmem:[%s0 + $0x470] sm:$0xff]
  %v160 = vld [vmem:[%s0 + $0x478] sm:$0xff]
  %v161 = vld [vmem:[%s0 + $0x480] sm:$0xff]
  %v162 = vld [vmem:[%s0 + $0x488] sm:$0xff]
  %v163 = vld [vmem:[%s0 + $0x490] sm:$0xff]
  %v164 = vld [vmem:[%s0 + $0x498] sm:$0xff]
  %v165 = vld [vmem:[%s0 + $0x4a0] sm:$0xff]
  %v166 = vld [vmem:[%s0 + $0x4a8] sm:$0xff]
  %v167 = vld [vmem:[%s0 + $0x4b0] sm:$0xff]
  %v168 = vld [vmem:[%s0 + $0x4b8] sm:$0xff]
  %v169 = vld [vmem:[%s0 + $0x4c0] sm:$0xff]
  %v170 = vld [vmem:[%s0 + $0x4c8] sm:$0xff]
  %v171 = vld [vmem:[%s0 + $0x4d0] sm:$0xff]
  %v172 = vld [vmem:[%s0 + $0x4d8] sm:$0xff]
  %v173 = vld [vmem:[%s0 + $0x4e0] sm:$0xff]
  %v174 = vld [vmem:[%s0 + $0x4e8] sm:$0xff]
  %v175 = vld [vmem:[%s0 + $0x4f0] sm:$0xff]
  %v176 = vld [vmem:[%s0 + $0x4f8] sm:$0xff]
  %v177 = vld [vmem:[%s0 + $0x500] sm:$0xff]
  %v178 = vld [vmem:[%s0 + $0x508] sm:$0xff]
  %v179 = vld [vmem:[%s0 + $0x510] sm:$0xff]
  %v180 = vld [vmem:[%s0 + $0x518] sm:$0xff]
  %v181 = vld [vmem:[%s0 + $0x520] sm:$0xff]
  %v182 = vld [vmem:[%s0 + $0x528] sm:$0xff]
  %v183 = vld [vmem:[%s0 + $0x530] sm:$0xff]
  %v184 = vld [vmem:[%s0 + $0x538] sm:$0xff]
  %v185 = vld [vmem:[%s0 + $0x540] sm:$0xff]
  %v186 = vld [vmem:[%s0 + $0x548] sm:$0xff]
  %v187 = vld [vmem:[%s0 + $0x550] sm:$0xff]
  %v188 = vld [vmem:[%s0 + $0x558] sm:$0xff]
  %v189 = vld [vmem:[%s0 + $0x560] sm:$0xff]
  %v190 = vld [vmem:[%s0 + $0x568] sm:$0xff]
  %v191 = vld [vmem:[%s0 + $0x570] sm:$0xff]
  %v192 = vld [vmem:[%s0 + $0x578] sm:$0xff]
  %v193 = vld [vmem:[%s0 + $0x580] sm:$0xff]
  %v194 = vld [vmem:[%s0 + $0x588] sm:$0xff]
  %v195 = vld [vmem:[%s0 + $0x590] sm:$0xff]
  %v196 = vld [vmem:[%s0 + $0x598] sm:$0xff]
  %v197 = vld [vmem:[%s0 + $0x5a0] sm:$0xff]
  %v198 = vld [vmem:[%s0 + $0x5a8] sm:$0xff]
  %v199 = vld [vmem:[%s0 + $0x5b0] sm:$0xff]
  %v200 = vld [vmem:[%s0 + $0x5b8] sm:$0xff]
  %v201 = vld [vmem:[%s0 + $0x5c0] sm:$0xff]
  %v202 = vld [vmem:[%s0 + $0x5c8] sm:$0xff]
  %v203 = vld [vmem:[%s0 + $0x5d0] sm:$0xff]
  %v204 = vld [vmem:[%s0 + $0x5d8] sm:$0xff]
  %v205 = vld [vmem:[%s0 + $0x5e0] sm:$0xff]
  %v206 = vld [vmem:[%s0 + $0x5e8] sm:$0xff]
  %v207 = vld [vmem:[%s0 + $0x5f0] sm:$0xff]
  %v208 = vld [vmem:[%s0 + $0x5f8] sm:$0xff]
  %v209 = vld [vmem:[%s0 + $0x600] sm:$0xff]
  %v210 = vld [vmem:[%s0 + $0x608] sm:$0xff]
  %v211 = vld [vmem:[%s0 + $0x610] sm:$0xff]
  %v212 = vld [vmem:[%s0 + $0x618] sm:$0xff]
  %v213 = vld [vmem:[%s0 + $0x620] sm:$0xff]
  %v214 = vld [vmem:[%s0 + $0x628] sm:$0xff]
  %v215 = vld [vmem:[%s0 + $0x630] sm:$0xff]
  %v216 = vld [vmem:[%s0 + $0x638] sm:$0xff]
  %v217 = vld [vmem:[%s0 + $0x640] sm:$0xff]
  %v218 = vld [vmem:[%s0 + $0x648] sm:$0xff]
  %v219 = vld [vmem:[%s0 + $0x650] sm:$0xff]
  %v220 = vld [vmem:[%s0 + $0x658] sm:$0xff]
  %v221 = vld [vmem:[%s0 + $0x660] sm:$0xff]
  %v222 = vld [vmem:[%s0 + $0x668] sm:$0xff]
  %v223 = vld [vmem:[%s0 + $0x670] sm:$0xff]
  %v224 = vld [vmem:[%s0 + $0x678] sm:$0xff]
  %v225 = vld [vmem:[%s0 + $0x680] sm:$0xff]
  %v226 = vld [vmem:[%s0 + $0x688] sm:$0xff]
  %v227 = vld [vmem:[%s0 + $0x690] sm:$0xff]
  %v228 = vld [vmem:[%s0 + $0x698] sm:$0xff]
  %v229 = vld [vmem:[%s0 + $0x6a0] sm:$0xff]
  %v230 = vld [vmem:[%s0 + $0x6a8] sm:$0xff]
  %v231 = vld [vmem:[%s0 + $0x6b0] sm:$0xff]
  %v232 = vld [vmem:[%s0 + $0x6b8] sm:$0xff]
  %v233 = vld [vmem:[%s0 + $0x6c0] sm:$0xff]
  %v234 = vld [vmem:[%s0 + $0x6c8] sm:$0xff]
  %v235 = vld [vmem:[%s0 + $0x6d0] sm:$0xff]
  %v236 = vld [vmem:[%s0 + $0x6d8] sm:$0xff]
  %v237 = vld [vmem:[%s0 + $0x6e0] sm:$0xff]
  %v238 = vld [vmem:[%s0 + $0x6e8] sm:$0xff]
  %v239 = vld [vmem:[%s0 + $0x6f0] sm:$0xff]
  %v240 = vld [vmem:[%s0 + $0x6f8] sm:$0xff]
  %v241 = vld [vmem:[%s0 + $0x700] sm:$0xff]
  %v242 = vld [vmem:[%s0 + $0x708] sm:$0xff]
  %v243 = vld [vmem:[%s0 + $0x710] sm:$0xff]
  %v244 = vld [vmem:[%s0 + $0x718] sm:$0xff]
  %v245 = vld [vmem:[%s0 + $0x720] sm:$0xff]
  %v246 = vld [vmem:[%s0 + $0x728] sm:$0xff]
  %v247 = vld [vmem:[%s0 + $0x730] sm:$0xff]
  %v248 = vld [vmem:[%s0 + $0x738] sm:$0xff]
  %v249 = vld [vmem:[%s0 + $0x740] sm:$0xff]
  %v250 = vld [vmem:[%s0 + $0x748] sm:$0xff]
  %v251 = vld [vmem:[%s0 + $0x750] sm:$0xff]
  %v252 = vld [vmem:[%s0 + $0x758] sm:$0xff]
  %v253 = vld [vmem:[%s0 + $0x760] sm:$0xff]
  %v254 = vld [vmem:[%s0 + $0x768] sm:$0xff]
  %v255 = vld [vmem:[%s0 + $0x770] sm:$0xff]
  %v256 = vld [vmem:[%s0 + $0x778] sm:$0xff]
  %v257 = vld [vmem:[%s0 + $0x780] sm:$0xff]
  %v258 = vld [vmem:[%s0 + $0x788] sm:$0xff]
  %v259 = vld [vmem:[%s0 + $0x790] sm:$0xff]
  %v260 = vld [vmem:[%s0 + $0x798] sm:$0xff]
  %v261 = vld [vmem:[%s0 + $0x7a0] sm:$0xff]
  %v262 = vld [vmem:[%s0 + $0x7a8] sm:$0xff]
  %v263 = vld [vmem:[%s0 + $0x7b0] sm:$0xff]
  %v264 = vld [vmem:[%s0 + $0x7b8] sm:$0xff]
  %v265 = vld [vmem:[%s0 + $0x7c0] sm:$0xff]
  %v266 = vld [vmem:[%s0 + $0x7c8] sm:$0xff]
  %v267 = vld [vmem:[%s0 + $0x7d0] sm:$0xff]
  %v268 = vld [vmem:[%s0 + $0x7d8] sm:$0xff]
  %v269 = vld [vmem:[%s0 + $0x7e0] sm:$0xff]
  %v270 = vld [vmem:[%s0 + $0x7e8] sm:$0xff]
  %v271 = vld [vmem:[%s0 + $0x7f0] sm:$0xff]
  %v272 = vld [vmem:[%s0 + $0x7f8] sm:$0xff]
  %v273 = vld [vmem:[%s0 + $0x800] sm:$0xff]
  %v274 = vld [vmem:[%s0 + $0x808] sm:$0xff]
  %v275 = vld [vmem:[%s0 + $0x810] sm:$0xff]
  %v276 = vld [vmem:[%s0 + $0x818] sm:$0xff]
  %v277 = vld [vmem:[%s0 + $0x820] sm:$0xff]
  %v278 = vld [vmem:[%s0 + $0x828] sm:$0xff]
  %v279 = vld [vmem:[%s0 + $0x830] sm:$0xff]
  %v280 = vld [vmem:[%s0 + $0x838] sm:$0xff]
  %v281 = vld [vmem:[%s0 + $0x840] sm:$0xff]
  %v282 = vld [vmem:[%s0 + $0x848] sm:$0xff]
  %v283 = vld [vmem:[%s0 + $0x850] sm:$0xff]
  %v284 = vld [vmem:[%s0 + $0x858] sm:$0xff]
  %v285 = vld [vmem:[%s0 + $0x860] sm:$0xff]
  %v286 = vld [vmem:[%s0 + $0x868] sm:$0xff]
  %v287 = vld [vmem:[%s0 + $0x870] sm:$0xff]
  %v288 = vld [vmem:[%s0 + $0x878] sm:$0xff]
  %v289 = vld [vmem:[%s0 + $0x880] sm:$0xff]
  %v290 = vld [vmem:[%s0 + $0x888] sm:$0xff]
  %v291 = vld [vmem:[%s0 + $0x890] sm:$0xff]
  %v292 = vld [vmem:[%s0 + $0x898] sm:$0xff]
  %v293 = vld [vmem:[%s0 + $0x8a0] sm:$0xff]
  %v294 = vld [vmem:[%s0 + $0x8a8] sm:$0xff]
  %v295 = vld [vmem:[%s0 + $0x8b0] sm:$0xff]
  %v296 = vld [vmem:[%s0 + $0x8b8] sm:$0xff]
  %v297 = vld [vmem:[%s0 + $0x8c0] sm:$0xff]
  %v298 = vld [vmem:[%s0 + $0x8c8] sm:$0xff]
  %v299 = vld [vmem:[%s0 + $0x8d0] sm:$0xff]
  %v300 = vld [vmem:[%s0 + $0x8d8] sm:$0xff]
  %v301 = vld [vmem:[%s0 + $0x8e0] sm:$0xff]
  %v302 = vld [vmem:[%s0 + $0x8e8] sm:$0xff]
  %v303 = vld [vmem:[%s0 + $0x8f0] sm:$0xff]
  %v304 = vld [vmem:[%s0 + $0x8f8] sm:$0xff]
  %v305 = vld [vmem:[%s0 + $0x900] sm:$0xff]
  %v306 = vld [vmem:[%s0 + $0x908] sm:$0xff]
  %v307 = vld [vmem:[%s0 + $0x910] sm:$0xff]
  %v308 = vld [vmem:[%s0 + $0x918] sm:$0xff]
  %v309 = vld [vmem:[%s0 + $0x920] sm:$0xff]
  %v310 = vld [vmem:[%s0 + $0x928] sm:$0xff]
  %v311 = vld [vmem:[%s0 + $0x930] sm:$0xff]
  %v312 = vld [vmem:[%s0 + $0x938] sm:$0xff]
  %v313 = vld [vmem:[%s0 + $0x940] sm:$0xff]
  %v314 = vld [vmem:[%s0 + $0x948] sm:$0xff]
  %v315 = vld [vmem:[%s0 + $0x950] sm:$0xff]
  %v316 = vld [vmem:[%s0 + $0x958] sm:$0xff]
  %v317 = vld [vmem:[%s0 + $0x960] sm:$0xff]
  %v318 = vld [vmem:[%s0 + $0x968] sm:$0xff]
  %v319 = vld [vmem:[%s0 + $0x970] sm:$0xff]
  %v320 = vld [vmem:[%s0 + $0x978] sm:$0xff]
  %v321 = vld [vmem:[%s0 + $0x980] sm:$0xff]
  %v322 = vld [vmem:[%s0 + $0x988] sm:$0xff]
  %v323 = vld [vmem:[%s0 + $0x990] sm:$0xff]
  %v324 = vld [vmem:[%s0 + $0x998] sm:$0xff]
  %v325 = vld [vmem:[%s0 + $0x9a0] sm:$0xff]
  %v326 = vld [vmem:[%s0 + $0x9a8] sm:$0xff]
  %v327 = vld [vmem:[%s0 + $0x9b0] sm:$0xff]
  %v328 = vld [vmem:[%s0 + $0x9b8] sm:$0xff]
  %v329 = vld [vmem:[%s0 + $0x9c0] sm:$0xff]
  %v330 = vld [vmem:[%s0 + $0x9c8] sm:$0xff]
  %v331 = vld [vmem:[%s0 + $0x9d0] sm:$0xff]
  %v332 = vld [vmem:[%s0 + $0x9d8] sm:$0xff]
  %v333 = vld [vmem:[%s0 + $0x9e0] sm:$0xff]
  %v334 = vld [vmem:[%s0 + $0x9e8] sm:$0xff]
  %v335 = vld [vmem:[%s0 + $0x9f0] sm:$0xff]
  %v336 = vld [vmem:[%s0 + $0x9f8] sm:$0xff]
  %v337 = vld [vmem:[%s1] sm:$0xff]
  %v338 = vld [vmem:[%s1 + $0x8] sm:$0xff]
  %v339 = vld [vmem:[%s1 + $0x10] sm:$0xff]
  %v340 = vld [vmem:[%s1 + $0x18] sm:$0xff]
  %v341 = vld [vmem:[%s1 + $0x20] sm:$0xff]
  %v342 = vld [vmem:[%s1 + $0x28] sm:$0xff]
  %v343 = vld [vmem:[%s1 + $0x30] sm:$0xff]
  %v344 = vld [vmem:[%s1 + $0x38] sm:$0xff]
  %v345 = vld [vmem:[%s1 + $0x40] sm:$0xff]
  %v346 = vld [vmem:[%s1 + $0x48] sm:$0xff]
  %v347 = vld [vmem:[%s1 + $0x50] sm:$0xff]
  %v348 = vld [vmem:[%s1 + $0x58] sm:$0xff]
  %v349 = vld [vmem:[%s1 + $0x60] sm:$0xff]
  %v350 = vld [vmem:[%s1 + $0x68] sm:$0xff]
  %v351 = vld [vmem:[%s1 + $0x70] sm:$0xff]
  %v352 = vld [vmem:[%s1 + $0x78] sm:$0xff]
  %v353 = vld [vmem:[%s1 + $0x80] sm:$0xff]
  %v354 = vld [vmem:[%s1 + $0x88] sm:$0xff]
  %v355 = vld [vmem:[%s1 + $0x90] sm:$0xff]
  %v356 = vld [vmem:[%s1 + $0x98] sm:$0xff]
  %v357 = vld [vmem:[%s1 + $0xa0] sm:$0xff]
  %v358 = vld [vmem:[%s1 + $0xa8] sm:$0xff]
  %v359 = vld [vmem:[%s1 + $0xb0] sm:$0xff]
  %v360 = vld [vmem:[%s1 + $0xb8] sm:$0xff]
  %v361 = vld [vmem:[%s1 + $0xc0] sm:$0xff]
  %v362 = vld [vmem:[%s1 + $0xc8] sm:$0xff]
  %v363 = vld [vmem:[%s1 + $0xd0] sm:$0xff]
  %v364 = vld [vmem:[%s1 + $0xd8] sm:$0xff]
  %v365 = vld [vmem:[%s1 + $0xe0] sm:$0xff]
  %v366 = vld [vmem:[%s1 + $0xe8] sm:$0xff]
  %v367 = vld [vmem:[%s1 + $0xf0] sm:$0xff]
  %v368 = vld [vmem:[%s1 + $0xf8] sm:$0xff]
  %v369 = vld [vmem:[%s1 + $0x100] sm:$0xff]
  %v370 = vld [vmem:[%s1 + $0x108] sm:$0xff]
  %v371 = vld [vmem:[%s1 + $0x110] sm:$0xff]
  %v372 = vld [vmem:[%s1 + $0x118] sm:$0xff]
  %v373 = vld [vmem:[%s1 + $0x120] sm:$0xff]
  %v374 = vld [vmem:[%s1 + $0x128] sm:$0xff]
  %v375 = vld [vmem:[%s1 + $0x130] sm:$0xff]
  %v376 = vld [vmem:[%s1 + $0x138] sm:$0xff]
  %v377 = vld [vmem:[%s1 + $0x140] sm:$0xff]
  %v378 = vld [vmem:[%s1 + $0x148] sm:$0xff]
  %v379 = vld [vmem:[%s1 + $0x150] sm:$0xff]
  %v380 = vld [vmem:[%s1 + $0x158] sm:$0xff]
  %v381 = vld [vmem:[%s1 + $0x160] sm:$0xff]
  %v382 = vld [vmem:[%s1 + $0x168] sm:$0xff]
  %v383 = vld [vmem:[%s1 + $0x170] sm:$0xff]
  %v384 = vld [vmem:[%s1 + $0x178] sm:$0xff]
  %v385 = vld [vmem:[%s1 + $0x180] sm:$0xff]
  %v386 = vld [vmem:[%s1 + $0x188] sm:$0xff]
  %v387 = vld [vmem:[%s1 + $0x190] sm:$0xff]
  %v388 = vld [vmem:[%s1 + $0x198] sm:$0xff]
  %v389 = vld [vmem:[%s1 + $0x1a0] sm:$0xff]
  %v390 = vld [vmem:[%s1 + $0x1a8] sm:$0xff]
  %v391 = vld [vmem:[%s1 + $0x1b0] sm:$0xff]
  %v392 = vld [vmem:[%s1 + $0x1b8] sm:$0xff]
  %v393 = vld [vmem:[%s1 + $0x1c0] sm:$0xff]
  %v394 = vld [vmem:[%s1 + $0x1c8] sm:$0xff]
  %v395 = vld [vmem:[%s1 + $0x1d0] sm:$0xff]
  %v396 = vld [vmem:[%s1 + $0x1d8] sm:$0xff]
  %v397 = vld [vmem:[%s1 + $0x1e0] sm:$0xff]
  %v398 = vld [vmem:[%s1 + $0x1e8] sm:$0xff]
  %v399 = vld [vmem:[%s1 + $0x1f0] sm:$0xff]
  %v400 = vld [vmem:[%s1 + $0x1f8] sm:$0xff]
  %v401 = vld [vmem:[%s1 + $0x200] sm:$0xff]
  %v402 = vld [vmem:[%s1 + $0x208] sm:$0xff]
  %v403 = vld [vmem:[%s1 + $0x210] sm:$0xff]
  %v404 = vld [vmem:[%s1 + $0x218] sm:$0xff]
  %v405 = vld [vmem:[%s1 + $0x220] sm:$0xff]
  %v406 = vld [vmem:[%s1 + $0x228] sm:$0xff]
  %v407 = vld [vmem:[%s1 + $0x230] sm:$0xff]
  %v408 = vld [vmem:[%s1 + $0x238] sm:$0xff]
  %v409 = vld [vmem:[%s1 + $0x240] sm:$0xff]
  %v410 = vld [vmem:[%s1 + $0x248] sm:$0xff]
  %v411 = vld [vmem:[%s1 + $0x250] sm:$0xff]
  %v412 = vld [vmem:[%s1 + $0x258] sm:$0xff]
  %v413 = vld [vmem:[%s1 + $0x260] sm:$0xff]
  %v414 = vld [vmem:[%s1 + $0x268] sm:$0xff]
  %v415 = vld [vmem:[%s1 + $0x270] sm:$0xff]
  %v416 = vld [vmem:[%s1 + $0x278] sm:$0xff]
  %417 = vmatpush.msra.mxu0 %v352
  %418 = vmatpush.msra.mxu0 %v351
  %419 = vmatpush.msra.mxu0 %v350
  %420 = vmatpush.msra.mxu0 %v349
  %421 = vmatpush.msra.mxu0 %v348
  %422 = vmatpush.msra.mxu0 %v347
  %423 = vmatpush.msra.mxu0 %v346
  %424 = vmatpush.msra.mxu0 %v345
  %425 = vmatpush.msra.mxu0 %v344
  %426 = vmatpush.msra.mxu0 %v343
  %427 = vmatpush.msra.mxu0 %v342
  %428 = vmatpush.msra.mxu0 %v341
  %429 = vmatpush.msra.mxu0 %v340
  %430 = vmatpush.msra.mxu0 %v339
  %431 = vmatpush.msra.mxu0 %v338
  %432 = vmatpush.msra.mxu0 %v337
  %433 = vmatmul.f32.gmra.mxu0 %v17
  %v434 = vpop.f32.mrf.mxu0
  %v435 = vadd.f32 0.0, %v434
  %436 = vmatmul.f32.gmra.mxu0 %v22
  %v437 = vpop.f32.mrf.mxu0
  %v438 = vadd.f32 0.0, %v437
  %439 = vmatmul.f32.gmra.mxu0 %v27
  %v440 = vpop.f32.mrf.mxu0
  %v441 = vadd.f32 0.0, %v440
  %442 = vmatmul.f32.gmra.mxu0 %v32
  %v443 = vpop.f32.mrf.mxu0
  %v444 = vadd.f32 0.0, %v443
  %445 = vmatmul.f32.gmra.mxu0 %v37
  %v446 = vpop.f32.mrf.mxu0
  %v447 = vadd.f32 0.0, %v446
  %448 = vmatmul.f32.gmra.mxu0 %v42
  %v449 = vpop.f32.mrf.mxu0
  %v450 = vadd.f32 0.0, %v449
  %451 = vmatmul.f32.gmra.mxu0 %v47
  %v452 = vpop.f32.mrf.mxu0
  %v453 = vadd.f32 0.0, %v452
  %454 = vmatmul.f32.gmra.mxu0 %v52
  %v455 = vpop.f32.mrf.mxu0
  %v456 = vadd.f32 0.0, %v455
  %457 = vmatmul.f32.gmra.mxu0 %v57
  %v458 = vpop.f32.mrf.mxu0
  %v459 = vadd.f32 0.0, %v458
  %460 = vmatmul.f32.gmra.mxu0 %v62
  %v461 = vpop.f32.mrf.mxu0
  %v462 = vadd.f32 0.0, %v461
  %463 = vmatmul.f32.gmra.mxu0 %v67
  %v464 = vpop.f32.mrf.mxu0
  %v465 = vadd.f32 0.0, %v464
  %466 = vmatmul.f32.gmra.mxu0 %v72
  %v467 = vpop.f32.mrf.mxu0
  %v468 = vadd.f32 0.0, %v467
  %469 = vmatmul.f32.gmra.mxu0 %v77
  %v470 = vpop.f32.mrf.mxu0
  %v471 = vadd.f32 0.0, %v470
  %472 = vmatmul.f32.gmra.mxu0 %v82
  %v473 = vpop.f32.mrf.mxu0
  %v474 = vadd.f32 0.0, %v473
  %475 = vmatmul.f32.gmra.mxu0 %v87
  %v476 = vpop.f32.mrf.mxu0
  %v477 = vadd.f32 0.0, %v476
  %478 = vmatmul.f32.gmra.mxu0 %v92
  %v479 = vpop.f32.mrf.mxu0
  %v480 = vadd.f32 0.0, %v479
  %481 = vmatmul.f32.gmra.mxu0 %v97
  %v482 = vpop.f32.mrf.mxu0
  %v483 = vadd.f32 0.0, %v482
  %484 = vmatmul.f32.gmra.mxu0 %v102
  %v485 = vpop.f32.mrf.mxu0
  %v486 = vadd.f32 0.0, %v485
  %487 = vmatmul.f32.gmra.mxu0 %v107
  %v488 = vpop.f32.mrf.mxu0
  %v489 = vadd.f32 0.0, %v488
  %490 = vmatmul.f32.gmra.mxu0 %v112
  %v491 = vpop.f32.mrf.mxu0
  %v492 = vadd.f32 0.0, %v491
  %493 = vmatmul.f32.gmra.mxu0 %v117
  %v494 = vpop.f32.mrf.mxu0
  %v495 = vadd.f32 0.0, %v494
  %496 = vmatmul.f32.gmra.mxu0 %v122
  %v497 = vpop.f32.mrf.mxu0
  %v498 = vadd.f32 0.0, %v497
  %499 = vmatmul.f32.gmra.mxu0 %v127
  %v500 = vpop.f32.mrf.mxu0
  %v501 = vadd.f32 0.0, %v500
  %502 = vmatmul.f32.gmra.mxu0 %v132
  %v503 = vpop.f32.mrf.mxu0
  %v504 = vadd.f32 0.0, %v503
  %505 = vmatmul.f32.gmra.mxu0 %v137
  %v506 = vpop.f32.mrf.mxu0
  %v507 = vadd.f32 0.0, %v506
  %508 = vmatmul.f32.gmra.mxu0 %v142
  %v509 = vpop.f32.mrf.mxu0
  %v510 = vadd.f32 0.0, %v509
  %511 = vmatmul.f32.gmra.mxu0 %v147
  %v512 = vpop.f32.mrf.mxu0
  %v513 = vadd.f32 0.0, %v512
  %514 = vmatmul.f32.gmra.mxu0 %v152
  %v515 = vpop.f32.mrf.mxu0
  %v516 = vadd.f32 0.0, %v515
  %517 = vmatmul.f32.gmra.mxu0 %v157
  %v518 = vpop.f32.mrf.mxu0
  %v519 = vadd.f32 0.0, %v518
  %520 = vmatmul.f32.gmra.mxu0 %v162
  %v521 = vpop.f32.mrf.mxu0
  %v522 = vadd.f32 0.0, %v521
  %523 = vmatmul.f32.gmra.mxu0 %v167
  %v524 = vpop.f32.mrf.mxu0
  %v525 = vadd.f32 0.0, %v524
  %526 = vmatmul.f32.gmra.mxu0 %v172
  %v527 = vpop.f32.mrf.mxu0
  %v528 = vadd.f32 0.0, %v527
  %529 = vmatmul.f32.gmra.mxu0 %v177
  %v530 = vpop.f32.mrf.mxu0
  %v531 = vadd.f32 0.0, %v530
  %532 = vmatmul.f32.gmra.mxu0 %v182
  %v533 = vpop.f32.mrf.mxu0
  %v534 = vadd.f32 0.0, %v533
  %535 = vmatmul.f32.gmra.mxu0 %v187
  %v536 = vpop.f32.mrf.mxu0
  %v537 = vadd.f32 0.0, %v536
  %538 = vmatmul.f32.gmra.mxu0 %v192
  %v539 = vpop.f32.mrf.mxu0
  %v540 = vadd.f32 0.0, %v539
  %541 = vmatmul.f32.gmra.mxu0 %v197
  %v542 = vpop.f32.mrf.mxu0
  %v543 = vadd.f32 0.0, %v542
  %544 = vmatmul.f32.gmra.mxu0 %v202
  %v545 = vpop.f32.mrf.mxu0
  %v546 = vadd.f32 0.0, %v545
  %547 = vmatmul.f32.gmra.mxu0 %v207
  %v548 = vpop.f32.mrf.mxu0
  %v549 = vadd.f32 0.0, %v548
  %550 = vmatmul.f32.gmra.mxu0 %v212
  %v551 = vpop.f32.mrf.mxu0
  %v552 = vadd.f32 0.0, %v551
  %553 = vmatmul.f32.gmra.mxu0 %v217
  %v554 = vpop.f32.mrf.mxu0
  %v555 = vadd.f32 0.0, %v554
  %556 = vmatmul.f32.gmra.mxu0 %v222
  %v557 = vpop.f32.mrf.mxu0
  %v558 = vadd.f32 0.0, %v557
  %559 = vmatmul.f32.gmra.mxu0 %v227
  %v560 = vpop.f32.mrf.mxu0
  %v561 = vadd.f32 0.0, %v560
  %562 = vmatmul.f32.gmra.mxu0 %v232
  %v563 = vpop.f32.mrf.mxu0
  %v564 = vadd.f32 0.0, %v563
  %565 = vmatmul.f32.gmra.mxu0 %v237
  %v566 = vpop.f32.mrf.mxu0
  %v567 = vadd.f32 0.0, %v566
  %568 = vmatmul.f32.gmra.mxu0 %v242
  %v569 = vpop.f32.mrf.mxu0
  %v570 = vadd.f32 0.0, %v569
  %571 = vmatmul.f32.gmra.mxu0 %v247
  %v572 = vpop.f32.mrf.mxu0
  %v573 = vadd.f32 0.0, %v572
  %574 = vmatmul.f32.gmra.mxu0 %v252
  %v575 = vpop.f32.mrf.mxu0
  %v576 = vadd.f32 0.0, %v575
  %577 = vmatmul.f32.gmra.mxu0 %v257
  %v578 = vpop.f32.mrf.mxu0
  %v579 = vadd.f32 0.0, %v578
  %580 = vmatmul.f32.gmra.mxu0 %v262
  %v581 = vpop.f32.mrf.mxu0
  %v582 = vadd.f32 0.0, %v581
  %583 = vmatmul.f32.gmra.mxu0 %v267
  %v584 = vpop.f32.mrf.mxu0
  %v585 = vadd.f32 0.0, %v584
  %586 = vmatmul.f32.gmra.mxu0 %v272
  %v587 = vpop.f32.mrf.mxu0
  %v588 = vadd.f32 0.0, %v587
  %589 = vmatmul.f32.gmra.mxu0 %v277
  %v590 = vpop.f32.mrf.mxu0
  %v591 = vadd.f32 0.0, %v590
  %592 = vmatmul.f32.gmra.mxu0 %v282
  %v593 = vpop.f32.mrf.mxu0
  %v594 = vadd.f32 0.0, %v593
  %595 = vmatmul.f32.gmra.mxu0 %v287
  %v596 = vpop.f32.mrf.mxu0
  %v597 = vadd.f32 0.0, %v596
  %598 = vmatmul.f32.gmra.mxu0 %v292
  %v599 = vpop.f32.mrf.mxu0
  %v600 = vadd.f32 0.0, %v599
  %601 = vmatmul.f32.gmra.mxu0 %v297
  %v602 = vpop.f32.mrf.mxu0
  %v603 = vadd.f32 0.0, %v602
  %604 = vmatmul.f32.gmra.mxu0 %v302
  %v605 = vpop.f32.mrf.mxu0
  %v606 = vadd.f32 0.0, %v605
  %607 = vmatmul.f32.gmra.mxu0 %v307
  %v608 = vpop.f32.mrf.mxu0
  %v609 = vadd.f32 0.0, %v608
  %610 = vmatmul.f32.gmra.mxu0 %v312
  %v611 = vpop.f32.mrf.mxu0
  %v612 = vadd.f32 0.0, %v611
  %613 = vmatmul.f32.gmra.mxu0 %v317
  %v614 = vpop.f32.mrf.mxu0
  %v615 = vadd.f32 0.0, %v614
  %616 = vmatmul.f32.gmra.mxu0 %v322
  %v617 = vpop.f32.mrf.mxu0
  %v618 = vadd.f32 0.0, %v617
  %619 = vmatmul.f32.gmra.mxu0 %v327
  %v620 = vpop.f32.mrf.mxu0
  %v621 = vadd.f32 0.0, %v620
  %622 = vmatmul.f32.gmra.mxu0 %v332
  %v623 = vpop.f32.mrf.mxu0
  %v624 = vadd.f32 0.0, %v623
  %625 = vdwg.mxu0
  %626 = vmatpush.msra.mxu0 %v368
  %627 = vmatpush.msra.mxu0 %v367
  %628 = vmatpush.msra.mxu0 %v366
  %629 = vmatpush.msra.mxu0 %v365
  %630 = vmatpush.msra.mxu0 %v364
  %631 = vmatpush.msra.mxu0 %v363
  %632 = vmatpush.msra.mxu0 %v362
  %633 = vmatpush.msra.mxu0 %v361
  %634 = vmatpush.msra.mxu0 %v360
  %635 = vmatpush.msra.mxu0 %v359
  %636 = vmatpush.msra.mxu0 %v358
  %637 = vmatpush.msra.mxu0 %v357
  %638 = vmatpush.msra.mxu0 %v356
  %639 = vmatpush.msra.mxu0 %v355
  %640 = vmatpush.msra.mxu0 %v354
  %641 = vmatpush.msra.mxu0 %v353
  %642 = vmatmul.f32.gmra.mxu0 %v18
  %v643 = vpop.f32.mrf.mxu0
  %v644 = vadd.f32 %v435, %v643
  %645 = vmatmul.f32.gmra.mxu0 %v23
  %v646 = vpop.f32.mrf.mxu0
  %v647 = vadd.f32 %v438, %v646
  %648 = vmatmul.f32.gmra.mxu0 %v28
  %v649 = vpop.f32.mrf.mxu0
  %v650 = vadd.f32 %v441, %v649
  %651 = vmatmul.f32.gmra.mxu0 %v33
  %v652 = vpop.f32.mrf.mxu0
  %v653 = vadd.f32 %v444, %v652
  %654 = vmatmul.f32.gmra.mxu0 %v38
  %v655 = vpop.f32.mrf.mxu0
  %v656 = vadd.f32 %v447, %v655
  %657 = vmatmul.f32.gmra.mxu0 %v43
  %v658 = vpop.f32.mrf.mxu0
  %v659 = vadd.f32 %v450, %v658
  %660 = vmatmul.f32.gmra.mxu0 %v48
  %v661 = vpop.f32.mrf.mxu0
  %v662 = vadd.f32 %v453, %v661
  %663 = vmatmul.f32.gmra.mxu0 %v53
  %v664 = vpop.f32.mrf.mxu0
  %v665 = vadd.f32 %v456, %v664
  %666 = vmatmul.f32.gmra.mxu0 %v58
  %v667 = vpop.f32.mrf.mxu0
  %v668 = vadd.f32 %v459, %v667
  %669 = vmatmul.f32.gmra.mxu0 %v63
  %v670 = vpop.f32.mrf.mxu0
  %v671 = vadd.f32 %v462, %v670
  %672 = vmatmul.f32.gmra.mxu0 %v68
  %v673 = vpop.f32.mrf.mxu0
  %v674 = vadd.f32 %v465, %v673
  %675 = vmatmul.f32.gmra.mxu0 %v73
  %v676 = vpop.f32.mrf.mxu0
  %v677 = vadd.f32 %v468, %v676
  %678 = vmatmul.f32.gmra.mxu0 %v78
  %v679 = vpop.f32.mrf.mxu0
  %v680 = vadd.f32 %v471, %v679
  %681 = vmatmul.f32.gmra.mxu0 %v83
  %v682 = vpop.f32.mrf.mxu0
  %v683 = vadd.f32 %v474, %v682
  %684 = vmatmul.f32.gmra.mxu0 %v88
  %v685 = vpop.f32.mrf.mxu0
  %v686 = vadd.f32 %v477, %v685
  %687 = vmatmul.f32.gmra.mxu0 %v93
  %v688 = vpop.f32.mrf.mxu0
  %v689 = vadd.f32 %v480, %v688
  %690 = vmatmul.f32.gmra.mxu0 %v98
  %v691 = vpop.f32.mrf.mxu0
  %v692 = vadd.f32 %v483, %v691
  %693 = vmatmul.f32.gmra.mxu0 %v103
  %v694 = vpop.f32.mrf.mxu0
  %v695 = vadd.f32 %v486, %v694
  %696 = vmatmul.f32.gmra.mxu0 %v108
  %v697 = vpop.f32.mrf.mxu0
  %v698 = vadd.f32 %v489, %v697
  %699 = vmatmul.f32.gmra.mxu0 %v113
  %v700 = vpop.f32.mrf.mxu0
  %v701 = vadd.f32 %v492, %v700
  %702 = vmatmul.f32.gmra.mxu0 %v118
  %v703 = vpop.f32.mrf.mxu0
  %v704 = vadd.f32 %v495, %v703
  %705 = vmatmul.f32.gmra.mxu0 %v123
  %v706 = vpop.f32.mrf.mxu0
  %v707 = vadd.f32 %v498, %v706
  %708 = vmatmul.f32.gmra.mxu0 %v128
  %v709 = vpop.f32.mrf.mxu0
  %v710 = vadd.f32 %v501, %v709
  %711 = vmatmul.f32.gmra.mxu0 %v133
  %v712 = vpop.f32.mrf.mxu0
  %v713 = vadd.f32 %v504, %v712
  %714 = vmatmul.f32.gmra.mxu0 %v138
  %v715 = vpop.f32.mrf.mxu0
  %v716 = vadd.f32 %v507, %v715
  %717 = vmatmul.f32.gmra.mxu0 %v143
  %v718 = vpop.f32.mrf.mxu0
  %v719 = vadd.f32 %v510, %v718
  %720 = vmatmul.f32.gmra.mxu0 %v148
  %v721 = vpop.f32.mrf.mxu0
  %v722 = vadd.f32 %v513, %v721
  %723 = vmatmul.f32.gmra.mxu0 %v153
  %v724 = vpop.f32.mrf.mxu0
  %v725 = vadd.f32 %v516, %v724
  %726 = vmatmul.f32.gmra.mxu0 %v158
  %v727 = vpop.f32.mrf.mxu0
  %v728 = vadd.f32 %v519, %v727
  %729 = vmatmul.f32.gmra.mxu0 %v163
  %v730 = vpop.f32.mrf.mxu0
  %v731 = vadd.f32 %v522, %v730
  %732 = vmatmul.f32.gmra.mxu0 %v168
  %v733 = vpop.f32.mrf.mxu0
  %v734 = vadd.f32 %v525, %v733
  %735 = vmatmul.f32.gmra.mxu0 %v173
  %v736 = vpop.f32.mrf.mxu0
  %v737 = vadd.f32 %v528, %v736
  %738 = vmatmul.f32.gmra.mxu0 %v178
  %v739 = vpop.f32.mrf.mxu0
  %v740 = vadd.f32 %v531, %v739
  %741 = vmatmul.f32.gmra.mxu0 %v183
  %v742 = vpop.f32.mrf.mxu0
  %v743 = vadd.f32 %v534, %v742
  %744 = vmatmul.f32.gmra.mxu0 %v188
  %v745 = vpop.f32.mrf.mxu0
  %v746 = vadd.f32 %v537, %v745
  %747 = vmatmul.f32.gmra.mxu0 %v193
  %v748 = vpop.f32.mrf.mxu0
  %v749 = vadd.f32 %v540, %v748
  %750 = vmatmul.f32.gmra.mxu0 %v198
  %v751 = vpop.f32.mrf.mxu0
  %v752 = vadd.f32 %v543, %v751
  %753 = vmatmul.f32.gmra.mxu0 %v203
  %v754 = vpop.f32.mrf.mxu0
  %v755 = vadd.f32 %v546, %v754
  %756 = vmatmul.f32.gmra.mxu0 %v208
  %v757 = vpop.f32.mrf.mxu0
  %v758 = vadd.f32 %v549, %v757
  %759 = vmatmul.f32.gmra.mxu0 %v213
  %v760 = vpop.f32.mrf.mxu0
  %v761 = vadd.f32 %v552, %v760
  %762 = vmatmul.f32.gmra.mxu0 %v218
  %v763 = vpop.f32.mrf.mxu0
  %v764 = vadd.f32 %v555, %v763
  %765 = vmatmul.f32.gmra.mxu0 %v223
  %v766 = vpop.f32.mrf.mxu0
  %v767 = vadd.f32 %v558, %v766
  %768 = vmatmul.f32.gmra.mxu0 %v228
  %v769 = vpop.f32.mrf.mxu0
  %v770 = vadd.f32 %v561, %v769
  %771 = vmatmul.f32.gmra.mxu0 %v233
  %v772 = vpop.f32.mrf.mxu0
  %v773 = vadd.f32 %v564, %v772
  %774 = vmatmul.f32.gmra.mxu0 %v238
  %v775 = vpop.f32.mrf.mxu0
  %v776 = vadd.f32 %v567, %v775
  %777 = vmatmul.f32.gmra.mxu0 %v243
  %v778 = vpop.f32.mrf.mxu0
  %v779 = vadd.f32 %v570, %v778
  %780 = vmatmul.f32.gmra.mxu0 %v248
  %v781 = vpop.f32.mrf.mxu0
  %v782 = vadd.f32 %v573, %v781
  %783 = vmatmul.f32.gmra.mxu0 %v253
  %v784 = vpop.f32.mrf.mxu0
  %v785 = vadd.f32 %v576, %v784
  %786 = vmatmul.f32.gmra.mxu0 %v258
  %v787 = vpop.f32.mrf.mxu0
  %v788 = vadd.f32 %v579, %v787
  %789 = vmatmul.f32.gmra.mxu0 %v263
  %v790 = vpop.f32.mrf.mxu0
  %v791 = vadd.f32 %v582, %v790
  %792 = vmatmul.f32.gmra.mxu0 %v268
  %v793 = vpop.f32.mrf.mxu0
  %v794 = vadd.f32 %v585, %v793
  %795 = vmatmul.f32.gmra.mxu0 %v273
  %v796 = vpop.f32.mrf.mxu0
  %v797 = vadd.f32 %v588, %v796
  %798 = vmatmul.f32.gmra.mxu0 %v278
  %v799 = vpop.f32.mrf.mxu0
  %v800 = vadd.f32 %v591, %v799
  %801 = vmatmul.f32.gmra.mxu0 %v283
  %v802 = vpop.f32.mrf.mxu0
  %v803 = vadd.f32 %v594, %v802
  %804 = vmatmul.f32.gmra.mxu0 %v288
  %v805 = vpop.f32.mrf.mxu0
  %v806 = vadd.f32 %v597, %v805
  %807 = vmatmul.f32.gmra.mxu0 %v293
  %v808 = vpop.f32.mrf.mxu0
  %v809 = vadd.f32 %v600, %v808
  %810 = vmatmul.f32.gmra.mxu0 %v298
  %v811 = vpop.f32.mrf.mxu0
  %v812 = vadd.f32 %v603, %v811
  %813 = vmatmul.f32.gmra.mxu0 %v303
  %v814 = vpop.f32.mrf.mxu0
  %v815 = vadd.f32 %v606, %v814
  %816 = vmatmul.f32.gmra.mxu0 %v308
  %v817 = vpop.f32.mrf.mxu0
  %v818 = vadd.f32 %v609, %v817
  %819 = vmatmul.f32.gmra.mxu0 %v313
  %v820 = vpop.f32.mrf.mxu0
  %v821 = vadd.f32 %v612, %v820
  %822 = vmatmul.f32.gmra.mxu0 %v318
  %v823 = vpop.f32.mrf.mxu0
  %v824 = vadd.f32 %v615, %v823
  %825 = vmatmul.f32.gmra.mxu0 %v323
  %v826 = vpop.f32.mrf.mxu0
  %v827 = vadd.f32 %v618, %v826
  %828 = vmatmul.f32.gmra.mxu0 %v328
  %v829 = vpop.f32.mrf.mxu0
  %v830 = vadd.f32 %v621, %v829
  %831 = vmatmul.f32.gmra.mxu0 %v333
  %v832 = vpop.f32.mrf.mxu0
  %v833 = vadd.f32 %v624, %v832
  %834 = vdwg.mxu0
  %835 = vmatpush.msra.mxu0 %v384
  %836 = vmatpush.msra.mxu0 %v383
  %837 = vmatpush.msra.mxu0 %v382
  %838 = vmatpush.msra.mxu0 %v381
  %839 = vmatpush.msra.mxu0 %v380
  %840 = vmatpush.msra.mxu0 %v379
  %841 = vmatpush.msra.mxu0 %v378
  %842 = vmatpush.msra.mxu0 %v377
  %843 = vmatpush.msra.mxu0 %v376
  %844 = vmatpush.msra.mxu0 %v375
  %845 = vmatpush.msra.mxu0 %v374
  %846 = vmatpush.msra.mxu0 %v373
  %847 = vmatpush.msra.mxu0 %v372
  %848 = vmatpush.msra.mxu0 %v371
  %849 = vmatpush.msra.mxu0 %v370
  %850 = vmatpush.msra.mxu0 %v369
  %851 = vmatmul.f32.gmra.mxu0 %v19
  %v852 = vpop.f32.mrf.mxu0
  %v853 = vadd.f32 %v644, %v852
  %854 = vmatmul.f32.gmra.mxu0 %v24
  %v855 = vpop.f32.mrf.mxu0
  %v856 = vadd.f32 %v647, %v855
  %857 = vmatmul.f32.gmra.mxu0 %v29
  %v858 = vpop.f32.mrf.mxu0
  %v859 = vadd.f32 %v650, %v858
  %860 = vmatmul.f32.gmra.mxu0 %v34
  %v861 = vpop.f32.mrf.mxu0
  %v862 = vadd.f32 %v653, %v861
  %863 = vmatmul.f32.gmra.mxu0 %v39
  %v864 = vpop.f32.mrf.mxu0
  %v865 = vadd.f32 %v656, %v864
  %866 = vmatmul.f32.gmra.mxu0 %v44
  %v867 = vpop.f32.mrf.mxu0
  %v868 = vadd.f32 %v659, %v867
  %869 = vmatmul.f32.gmra.mxu0 %v49
  %v870 = vpop.f32.mrf.mxu0
  %v871 = vadd.f32 %v662, %v870
  %872 = vmatmul.f32.gmra.mxu0 %v54
  %v873 = vpop.f32.mrf.mxu0
  %v874 = vadd.f32 %v665, %v873
  %875 = vmatmul.f32.gmra.mxu0 %v59
  %v876 = vpop.f32.mrf.mxu0
  %v877 = vadd.f32 %v668, %v876
  %878 = vmatmul.f32.gmra.mxu0 %v64
  %v879 = vpop.f32.mrf.mxu0
  %v880 = vadd.f32 %v671, %v879
  %881 = vmatmul.f32.gmra.mxu0 %v69
  %v882 = vpop.f32.mrf.mxu0
  %v883 = vadd.f32 %v674, %v882
  %884 = vmatmul.f32.gmra.mxu0 %v74
  %v885 = vpop.f32.mrf.mxu0
  %v886 = vadd.f32 %v677, %v885
  %887 = vmatmul.f32.gmra.mxu0 %v79
  %v888 = vpop.f32.mrf.mxu0
  %v889 = vadd.f32 %v680, %v888
  %890 = vmatmul.f32.gmra.mxu0 %v84
  %v891 = vpop.f32.mrf.mxu0
  %v892 = vadd.f32 %v683, %v891
  %893 = vmatmul.f32.gmra.mxu0 %v89
  %v894 = vpop.f32.mrf.mxu0
  %v895 = vadd.f32 %v686, %v894
  %896 = vmatmul.f32.gmra.mxu0 %v94
  %v897 = vpop.f32.mrf.mxu0
  %v898 = vadd.f32 %v689, %v897
  %899 = vmatmul.f32.gmra.mxu0 %v99
  %v900 = vpop.f32.mrf.mxu0
  %v901 = vadd.f32 %v692, %v900
  %902 = vmatmul.f32.gmra.mxu0 %v104
  %v903 = vpop.f32.mrf.mxu0
  %v904 = vadd.f32 %v695, %v903
  %905 = vmatmul.f32.gmra.mxu0 %v109
  %v906 = vpop.f32.mrf.mxu0
  %v907 = vadd.f32 %v698, %v906
  %908 = vmatmul.f32.gmra.mxu0 %v114
  %v909 = vpop.f32.mrf.mxu0
  %v910 = vadd.f32 %v701, %v909
  %911 = vmatmul.f32.gmra.mxu0 %v119
  %v912 = vpop.f32.mrf.mxu0
  %v913 = vadd.f32 %v704, %v912
  %914 = vmatmul.f32.gmra.mxu0 %v124
  %v915 = vpop.f32.mrf.mxu0
  %v916 = vadd.f32 %v707, %v915
  %917 = vmatmul.f32.gmra.mxu0 %v129
  %v918 = vpop.f32.mrf.mxu0
  %v919 = vadd.f32 %v710, %v918
  %920 = vmatmul.f32.gmra.mxu0 %v134
  %v921 = vpop.f32.mrf.mxu0
  %v922 = vadd.f32 %v713, %v921
  %923 = vmatmul.f32.gmra.mxu0 %v139
  %v924 = vpop.f32.mrf.mxu0
  %v925 = vadd.f32 %v716, %v924
  %926 = vmatmul.f32.gmra.mxu0 %v144
  %v927 = vpop.f32.mrf.mxu0
  %v928 = vadd.f32 %v719, %v927
  %929 = vmatmul.f32.gmra.mxu0 %v149
  %v930 = vpop.f32.mrf.mxu0
  %v931 = vadd.f32 %v722, %v930
  %932 = vmatmul.f32.gmra.mxu0 %v154
  %v933 = vpop.f32.mrf.mxu0
  %v934 = vadd.f32 %v725, %v933
  %935 = vmatmul.f32.gmra.mxu0 %v159
  %v936 = vpop.f32.mrf.mxu0
  %v937 = vadd.f32 %v728, %v936
  %938 = vmatmul.f32.gmra.mxu0 %v164
  %v939 = vpop.f32.mrf.mxu0
  %v940 = vadd.f32 %v731, %v939
  %941 = vmatmul.f32.gmra.mxu0 %v169
  %v942 = vpop.f32.mrf.mxu0
  %v943 = vadd.f32 %v734, %v942
  %944 = vmatmul.f32.gmra.mxu0 %v174
  %v945 = vpop.f32.mrf.mxu0
  %v946 = vadd.f32 %v737, %v945
  %947 = vmatmul.f32.gmra.mxu0 %v179
  %v948 = vpop.f32.mrf.mxu0
  %v949 = vadd.f32 %v740, %v948
  %950 = vmatmul.f32.gmra.mxu0 %v184
  %v951 = vpop.f32.mrf.mxu0
  %v952 = vadd.f32 %v743, %v951
  %953 = vmatmul.f32.gmra.mxu0 %v189
  %v954 = vpop.f32.mrf.mxu0
  %v955 = vadd.f32 %v746, %v954
  %956 = vmatmul.f32.gmra.mxu0 %v194
  %v957 = vpop.f32.mrf.mxu0
  %v958 = vadd.f32 %v749, %v957
  %959 = vmatmul.f32.gmra.mxu0 %v199
  %v960 = vpop.f32.mrf.mxu0
  %v961 = vadd.f32 %v752, %v960
  %962 = vmatmul.f32.gmra.mxu0 %v204
  %v963 = vpop.f32.mrf.mxu0
  %v964 = vadd.f32 %v755, %v963
  %965 = vmatmul.f32.gmra.mxu0 %v209
  %v966 = vpop.f32.mrf.mxu0
  %v967 = vadd.f32 %v758, %v966
  %968 = vmatmul.f32.gmra.mxu0 %v214
  %v969 = vpop.f32.mrf.mxu0
  %v970 = vadd.f32 %v761, %v969
  %971 = vmatmul.f32.gmra.mxu0 %v219
  %v972 = vpop.f32.mrf.mxu0
  %v973 = vadd.f32 %v764, %v972
  %974 = vmatmul.f32.gmra.mxu0 %v224
  %v975 = vpop.f32.mrf.mxu0
  %v976 = vadd.f32 %v767, %v975
  %977 = vmatmul.f32.gmra.mxu0 %v229
  %v978 = vpop.f32.mrf.mxu0
  %v979 = vadd.f32 %v770, %v978
  %980 = vmatmul.f32.gmra.mxu0 %v234
  %v981 = vpop.f32.mrf.mxu0
  %v982 = vadd.f32 %v773, %v981
  %983 = vmatmul.f32.gmra.mxu0 %v239
  %v984 = vpop.f32.mrf.mxu0
  %v985 = vadd.f32 %v776, %v984
  %986 = vmatmul.f32.gmra.mxu0 %v244
  %v987 = vpop.f32.mrf.mxu0
  %v988 = vadd.f32 %v779, %v987
  %989 = vmatmul.f32.gmra.mxu0 %v249
  %v990 = vpop.f32.mrf.mxu0
  %v991 = vadd.f32 %v782, %v990
  %992 = vmatmul.f32.gmra.mxu0 %v254
  %v993 = vpop.f32.mrf.mxu0
  %v994 = vadd.f32 %v785, %v993
  %995 = vmatmul.f32.gmra.mxu0 %v259
  %v996 = vpop.f32.mrf.mxu0
  %v997 = vadd.f32 %v788, %v996
  %998 = vmatmul.f32.gmra.mxu0 %v264
  %v999 = vpop.f32.mrf.mxu0
  %v1000 = vadd.f32 %v791, %v999
  %1001 = vmatmul.f32.gmra.mxu0 %v269
  %v1002 = vpop.f32.mrf.mxu0
  %v1003 = vadd.f32 %v794, %v1002
  %1004 = vmatmul.f32.gmra.mxu0 %v274
  %v1005 = vpop.f32.mrf.mxu0
  %v1006 = vadd.f32 %v797, %v1005
  %1007 = vmatmul.f32.gmra.mxu0 %v279
  %v1008 = vpop.f32.mrf.mxu0
  %v1009 = vadd.f32 %v800, %v1008
  %1010 = vmatmul.f32.gmra.mxu0 %v284
  %v1011 = vpop.f32.mrf.mxu0
  %v1012 = vadd.f32 %v803, %v1011
  %1013 = vmatmul.f32.gmra.mxu0 %v289
  %v1014 = vpop.f32.mrf.mxu0
  %v1015 = vadd.f32 %v806, %v1014
  %1016 = vmatmul.f32.gmra.mxu0 %v294
  %v1017 = vpop.f32.mrf.mxu0
  %v1018 = vadd.f32 %v809, %v1017
  %1019 = vmatmul.f32.gmra.mxu0 %v299
  %v1020 = vpop.f32.mrf.mxu0
  %v1021 = vadd.f32 %v812, %v1020
  %1022 = vmatmul.f32.gmra.mxu0 %v304
  %v1023 = vpop.f32.mrf.mxu0
  %v1024 = vadd.f32 %v815, %v1023
  %1025 = vmatmul.f32.gmra.mxu0 %v309
  %v1026 = vpop.f32.mrf.mxu0
  %v1027 = vadd.f32 %v818, %v1026
  %1028 = vmatmul.f32.gmra.mxu0 %v314
  %v1029 = vpop.f32.mrf.mxu0
  %v1030 = vadd.f32 %v821, %v1029
  %1031 = vmatmul.f32.gmra.mxu0 %v319
  %v1032 = vpop.f32.mrf.mxu0
  %v1033 = vadd.f32 %v824, %v1032
  %1034 = vmatmul.f32.gmra.mxu0 %v324
  %v1035 = vpop.f32.mrf.mxu0
  %v1036 = vadd.f32 %v827, %v1035
  %1037 = vmatmul.f32.gmra.mxu0 %v329
  %v1038 = vpop.f32.mrf.mxu0
  %v1039 = vadd.f32 %v830, %v1038
  %1040 = vmatmul.f32.gmra.mxu0 %v334
  %v1041 = vpop.f32.mrf.mxu0
  %v1042 = vadd.f32 %v833, %v1041
  %1043 = vdwg.mxu0
  %1044 = vmatpush.msra.mxu0 %v400
  %1045 = vmatpush.msra.mxu0 %v399
  %1046 = vmatpush.msra.mxu0 %v398
  %1047 = vmatpush.msra.mxu0 %v397
  %1048 = vmatpush.msra.mxu0 %v396
  %1049 = vmatpush.msra.mxu0 %v395
  %1050 = vmatpush.msra.mxu0 %v394
  %1051 = vmatpush.msra.mxu0 %v393
  %1052 = vmatpush.msra.mxu0 %v392
  %1053 = vmatpush.msra.mxu0 %v391
  %1054 = vmatpush.msra.mxu0 %v390
  %1055 = vmatpush.msra.mxu0 %v389
  %1056 = vmatpush.msra.mxu0 %v388
  %1057 = vmatpush.msra.mxu0 %v387
  %1058 = vmatpush.msra.mxu0 %v386
  %1059 = vmatpush.msra.mxu0 %v385
  %1060 = vmatmul.f32.gmra.mxu0 %v20
  %v1061 = vpop.f32.mrf.mxu0
  %v1062 = vadd.f32 %v853, %v1061
  %1063 = vmatmul.f32.gmra.mxu0 %v25
  %v1064 = vpop.f32.mrf.mxu0
  %v1065 = vadd.f32 %v856, %v1064
  %1066 = vmatmul.f32.gmra.mxu0 %v30
  %v1067 = vpop.f32.mrf.mxu0
  %v1068 = vadd.f32 %v859, %v1067
  %1069 = vmatmul.f32.gmra.mxu0 %v35
  %v1070 = vpop.f32.mrf.mxu0
  %v1071 = vadd.f32 %v862, %v1070
  %1072 = vmatmul.f32.gmra.mxu0 %v40
  %v1073 = vpop.f32.mrf.mxu0
  %v1074 = vadd.f32 %v865, %v1073
  %1075 = vmatmul.f32.gmra.mxu0 %v45
  %v1076 = vpop.f32.mrf.mxu0
  %v1077 = vadd.f32 %v868, %v1076
  %1078 = vmatmul.f32.gmra.mxu0 %v50
  %v1079 = vpop.f32.mrf.mxu0
  %v1080 = vadd.f32 %v871, %v1079
  %1081 = vmatmul.f32.gmra.mxu0 %v55
  %v1082 = vpop.f32.mrf.mxu0
  %v1083 = vadd.f32 %v874, %v1082
  %1084 = vmatmul.f32.gmra.mxu0 %v60
  %v1085 = vpop.f32.mrf.mxu0
  %v1086 = vadd.f32 %v877, %v1085
  %1087 = vmatmul.f32.gmra.mxu0 %v65
  %v1088 = vpop.f32.mrf.mxu0
  %v1089 = vadd.f32 %v880, %v1088
  %1090 = vmatmul.f32.gmra.mxu0 %v70
  %v1091 = vpop.f32.mrf.mxu0
  %v1092 = vadd.f32 %v883, %v1091
  %1093 = vmatmul.f32.gmra.mxu0 %v75
  %v1094 = vpop.f32.mrf.mxu0
  %v1095 = vadd.f32 %v886, %v1094
  %1096 = vmatmul.f32.gmra.mxu0 %v80
  %v1097 = vpop.f32.mrf.mxu0
  %v1098 = vadd.f32 %v889, %v1097
  %1099 = vmatmul.f32.gmra.mxu0 %v85
  %v1100 = vpop.f32.mrf.mxu0
  %v1101 = vadd.f32 %v892, %v1100
  %1102 = vmatmul.f32.gmra.mxu0 %v90
  %v1103 = vpop.f32.mrf.mxu0
  %v1104 = vadd.f32 %v895, %v1103
  %1105 = vmatmul.f32.gmra.mxu0 %v95
  %v1106 = vpop.f32.mrf.mxu0
  %v1107 = vadd.f32 %v898, %v1106
  %1108 = vmatmul.f32.gmra.mxu0 %v100
  %v1109 = vpop.f32.mrf.mxu0
  %v1110 = vadd.f32 %v901, %v1109
  %1111 = vmatmul.f32.gmra.mxu0 %v105
  %v1112 = vpop.f32.mrf.mxu0
  %v1113 = vadd.f32 %v904, %v1112
  %1114 = vmatmul.f32.gmra.mxu0 %v110
  %v1115 = vpop.f32.mrf.mxu0
  %v1116 = vadd.f32 %v907, %v1115
  %1117 = vmatmul.f32.gmra.mxu0 %v115
  %v1118 = vpop.f32.mrf.mxu0
  %v1119 = vadd.f32 %v910, %v1118
  %1120 = vmatmul.f32.gmra.mxu0 %v120
  %v1121 = vpop.f32.mrf.mxu0
  %v1122 = vadd.f32 %v913, %v1121
  %1123 = vmatmul.f32.gmra.mxu0 %v125
  %v1124 = vpop.f32.mrf.mxu0
  %v1125 = vadd.f32 %v916, %v1124
  %1126 = vmatmul.f32.gmra.mxu0 %v130
  %v1127 = vpop.f32.mrf.mxu0
  %v1128 = vadd.f32 %v919, %v1127
  %1129 = vmatmul.f32.gmra.mxu0 %v135
  %v1130 = vpop.f32.mrf.mxu0
  %v1131 = vadd.f32 %v922, %v1130
  %1132 = vmatmul.f32.gmra.mxu0 %v140
  %v1133 = vpop.f32.mrf.mxu0
  %v1134 = vadd.f32 %v925, %v1133
  %1135 = vmatmul.f32.gmra.mxu0 %v145
  %v1136 = vpop.f32.mrf.mxu0
  %v1137 = vadd.f32 %v928, %v1136
  %1138 = vmatmul.f32.gmra.mxu0 %v150
  %v1139 = vpop.f32.mrf.mxu0
  %v1140 = vadd.f32 %v931, %v1139
  %1141 = vmatmul.f32.gmra.mxu0 %v155
  %v1142 = vpop.f32.mrf.mxu0
  %v1143 = vadd.f32 %v934, %v1142
  %1144 = vmatmul.f32.gmra.mxu0 %v160
  %v1145 = vpop.f32.mrf.mxu0
  %v1146 = vadd.f32 %v937, %v1145
  %1147 = vmatmul.f32.gmra.mxu0 %v165
  %v1148 = vpop.f32.mrf.mxu0
  %v1149 = vadd.f32 %v940, %v1148
  %1150 = vmatmul.f32.gmra.mxu0 %v170
  %v1151 = vpop.f32.mrf.mxu0
  %v1152 = vadd.f32 %v943, %v1151
  %1153 = vmatmul.f32.gmra.mxu0 %v175
  %v1154 = vpop.f32.mrf.mxu0
  %v1155 = vadd.f32 %v946, %v1154
  %1156 = vmatmul.f32.gmra.mxu0 %v180
  %v1157 = vpop.f32.mrf.mxu0
  %v1158 = vadd.f32 %v949, %v1157
  %1159 = vmatmul.f32.gmra.mxu0 %v185
  %v1160 = vpop.f32.mrf.mxu0
  %v1161 = vadd.f32 %v952, %v1160
  %1162 = vmatmul.f32.gmra.mxu0 %v190
  %v1163 = vpop.f32.mrf.mxu0
  %v1164 = vadd.f32 %v955, %v1163
  %1165 = vmatmul.f32.gmra.mxu0 %v195
  %v1166 = vpop.f32.mrf.mxu0
  %v1167 = vadd.f32 %v958, %v1166
  %1168 = vmatmul.f32.gmra.mxu0 %v200
  %v1169 = vpop.f32.mrf.mxu0
  %v1170 = vadd.f32 %v961, %v1169
  %1171 = vmatmul.f32.gmra.mxu0 %v205
  %v1172 = vpop.f32.mrf.mxu0
  %v1173 = vadd.f32 %v964, %v1172
  %1174 = vmatmul.f32.gmra.mxu0 %v210
  %v1175 = vpop.f32.mrf.mxu0
  %v1176 = vadd.f32 %v967, %v1175
  %1177 = vmatmul.f32.gmra.mxu0 %v215
  %v1178 = vpop.f32.mrf.mxu0
  %v1179 = vadd.f32 %v970, %v1178
  %1180 = vmatmul.f32.gmra.mxu0 %v220
  %v1181 = vpop.f32.mrf.mxu0
  %v1182 = vadd.f32 %v973, %v1181
  %1183 = vmatmul.f32.gmra.mxu0 %v225
  %v1184 = vpop.f32.mrf.mxu0
  %v1185 = vadd.f32 %v976, %v1184
  %1186 = vmatmul.f32.gmra.mxu0 %v230
  %v1187 = vpop.f32.mrf.mxu0
  %v1188 = vadd.f32 %v979, %v1187
  %1189 = vmatmul.f32.gmra.mxu0 %v235
  %v1190 = vpop.f32.mrf.mxu0
  %v1191 = vadd.f32 %v982, %v1190
  %1192 = vmatmul.f32.gmra.mxu0 %v240
  %v1193 = vpop.f32.mrf.mxu0
  %v1194 = vadd.f32 %v985, %v1193
  %1195 = vmatmul.f32.gmra.mxu0 %v245
  %v1196 = vpop.f32.mrf.mxu0
  %v1197 = vadd.f32 %v988, %v1196
  %1198 = vmatmul.f32.gmra.mxu0 %v250
  %v1199 = vpop.f32.mrf.mxu0
  %v1200 = vadd.f32 %v991, %v1199
  %1201 = vmatmul.f32.gmra.mxu0 %v255
  %v1202 = vpop.f32.mrf.mxu0
  %v1203 = vadd.f32 %v994, %v1202
  %1204 = vmatmul.f32.gmra.mxu0 %v260
  %v1205 = vpop.f32.mrf.mxu0
  %v1206 = vadd.f32 %v997, %v1205
  %1207 = vmatmul.f32.gmra.mxu0 %v265
  %v1208 = vpop.f32.mrf.mxu0
  %v1209 = vadd.f32 %v1000, %v1208
  %1210 = vmatmul.f32.gmra.mxu0 %v270
  %v1211 = vpop.f32.mrf.mxu0
  %v1212 = vadd.f32 %v1003, %v1211
  %1213 = vmatmul.f32.gmra.mxu0 %v275
  %v1214 = vpop.f32.mrf.mxu0
  %v1215 = vadd.f32 %v1006, %v1214
  %1216 = vmatmul.f32.gmra.mxu0 %v280
  %v1217 = vpop.f32.mrf.mxu0
  %v1218 = vadd.f32 %v1009, %v1217
  %1219 = vmatmul.f32.gmra.mxu0 %v285
  %v1220 = vpop.f32.mrf.mxu0
  %v1221 = vadd.f32 %v1012, %v1220
  %1222 = vmatmul.f32.gmra.mxu0 %v290
  %v1223 = vpop.f32.mrf.mxu0
  %v1224 = vadd.f32 %v1015, %v1223
  %1225 = vmatmul.f32.gmra.mxu0 %v295
  %v1226 = vpop.f32.mrf.mxu0
  %v1227 = vadd.f32 %v1018, %v1226
  %1228 = vmatmul.f32.gmra.mxu0 %v300
  %v1229 = vpop.f32.mrf.mxu0
  %v1230 = vadd.f32 %v1021, %v1229
  %1231 = vmatmul.f32.gmra.mxu0 %v305
  %v1232 = vpop.f32.mrf.mxu0
  %v1233 = vadd.f32 %v1024, %v1232
  %1234 = vmatmul.f32.gmra.mxu0 %v310
  %v1235 = vpop.f32.mrf.mxu0
  %v1236 = vadd.f32 %v1027, %v1235
  %1237 = vmatmul.f32.gmra.mxu0 %v315
  %v1238 = vpop.f32.mrf.mxu0
  %v1239 = vadd.f32 %v1030, %v1238
  %1240 = vmatmul.f32.gmra.mxu0 %v320
  %v1241 = vpop.f32.mrf.mxu0
  %v1242 = vadd.f32 %v1033, %v1241
  %1243 = vmatmul.f32.gmra.mxu0 %v325
  %v1244 = vpop.f32.mrf.mxu0
  %v1245 = vadd.f32 %v1036, %v1244
  %1246 = vmatmul.f32.gmra.mxu0 %v330
  %v1247 = vpop.f32.mrf.mxu0
  %v1248 = vadd.f32 %v1039, %v1247
  %1249 = vmatmul.f32.gmra.mxu0 %v335
  %v1250 = vpop.f32.mrf.mxu0
  %v1251 = vadd.f32 %v1042, %v1250
  %1252 = vdwg.mxu0
  %1253 = vmatpush.msra.mxu0 %v416
  %1254 = vmatpush.msra.mxu0 %v415
  %1255 = vmatpush.msra.mxu0 %v414
  %1256 = vmatpush.msra.mxu0 %v413
  %1257 = vmatpush.msra.mxu0 %v412
  %1258 = vmatpush.msra.mxu0 %v411
  %1259 = vmatpush.msra.mxu0 %v410
  %1260 = vmatpush.msra.mxu0 %v409
  %1261 = vmatpush.msra.mxu0 %v408
  %1262 = vmatpush.msra.mxu0 %v407
  %1263 = vmatpush.msra.mxu0 %v406
  %1264 = vmatpush.msra.mxu0 %v405
  %1265 = vmatpush.msra.mxu0 %v404
  %1266 = vmatpush.msra.mxu0 %v403
  %1267 = vmatpush.msra.mxu0 %v402
  %1268 = vmatpush.msra.mxu0 %v401
  %1269 = vmatmul.f32.gmra.mxu0 %v21
  %v1270 = vpop.f32.mrf.mxu0
  %v1271 = vadd.f32 %v1062, %v1270
  %1272 = vmatmul.f32.gmra.mxu0 %v26
  %v1273 = vpop.f32.mrf.mxu0
  %v1274 = vadd.f32 %v1065, %v1273
  %1275 = vmatmul.f32.gmra.mxu0 %v31
  %v1276 = vpop.f32.mrf.mxu0
  %v1277 = vadd.f32 %v1068, %v1276
  %1278 = vmatmul.f32.gmra.mxu0 %v36
  %v1279 = vpop.f32.mrf.mxu0
  %v1280 = vadd.f32 %v1071, %v1279
  %1281 = vmatmul.f32.gmra.mxu0 %v41
  %v1282 = vpop.f32.mrf.mxu0
  %v1283 = vadd.f32 %v1074, %v1282
  %1284 = vmatmul.f32.gmra.mxu0 %v46
  %v1285 = vpop.f32.mrf.mxu0
  %v1286 = vadd.f32 %v1077, %v1285
  %1287 = vmatmul.f32.gmra.mxu0 %v51
  %v1288 = vpop.f32.mrf.mxu0
  %v1289 = vadd.f32 %v1080, %v1288
  %1290 = vmatmul.f32.gmra.mxu0 %v56
  %v1291 = vpop.f32.mrf.mxu0
  %v1292 = vadd.f32 %v1083, %v1291
  %1293 = vmatmul.f32.gmra.mxu0 %v61
  %v1294 = vpop.f32.mrf.mxu0
  %v1295 = vadd.f32 %v1086, %v1294
  %1296 = vmatmul.f32.gmra.mxu0 %v66
  %v1297 = vpop.f32.mrf.mxu0
  %v1298 = vadd.f32 %v1089, %v1297
  %1299 = vmatmul.f32.gmra.mxu0 %v71
  %v1300 = vpop.f32.mrf.mxu0
  %v1301 = vadd.f32 %v1092, %v1300
  %1302 = vmatmul.f32.gmra.mxu0 %v76
  %v1303 = vpop.f32.mrf.mxu0
  %v1304 = vadd.f32 %v1095, %v1303
  %1305 = vmatmul.f32.gmra.mxu0 %v81
  %v1306 = vpop.f32.mrf.mxu0
  %v1307 = vadd.f32 %v1098, %v1306
  %1308 = vmatmul.f32.gmra.mxu0 %v86
  %v1309 = vpop.f32.mrf.mxu0
  %v1310 = vadd.f32 %v1101, %v1309
  %1311 = vmatmul.f32.gmra.mxu0 %v91
  %v1312 = vpop.f32.mrf.mxu0
  %v1313 = vadd.f32 %v1104, %v1312
  %1314 = vmatmul.f32.gmra.mxu0 %v96
  %v1315 = vpop.f32.mrf.mxu0
  %v1316 = vadd.f32 %v1107, %v1315
  %1317 = vmatmul.f32.gmra.mxu0 %v101
  %v1318 = vpop.f32.mrf.mxu0
  %v1319 = vadd.f32 %v1110, %v1318
  %1320 = vmatmul.f32.gmra.mxu0 %v106
  %v1321 = vpop.f32.mrf.mxu0
  %v1322 = vadd.f32 %v1113, %v1321
  %1323 = vmatmul.f32.gmra.mxu0 %v111
  %v1324 = vpop.f32.mrf.mxu0
  %v1325 = vadd.f32 %v1116, %v1324
  %1326 = vmatmul.f32.gmra.mxu0 %v116
  %v1327 = vpop.f32.mrf.mxu0
  %v1328 = vadd.f32 %v1119, %v1327
  %1329 = vmatmul.f32.gmra.mxu0 %v121
  %v1330 = vpop.f32.mrf.mxu0
  %v1331 = vadd.f32 %v1122, %v1330
  %1332 = vmatmul.f32.gmra.mxu0 %v126
  %v1333 = vpop.f32.mrf.mxu0
  %v1334 = vadd.f32 %v1125, %v1333
  %1335 = vmatmul.f32.gmra.mxu0 %v131
  %v1336 = vpop.f32.mrf.mxu0
  %v1337 = vadd.f32 %v1128, %v1336
  %1338 = vmatmul.f32.gmra.mxu0 %v136
  %v1339 = vpop.f32.mrf.mxu0
  %v1340 = vadd.f32 %v1131, %v1339
  %1341 = vmatmul.f32.gmra.mxu0 %v141
  %v1342 = vpop.f32.mrf.mxu0
  %v1343 = vadd.f32 %v1134, %v1342
  %1344 = vmatmul.f32.gmra.mxu0 %v146
  %v1345 = vpop.f32.mrf.mxu0
  %v1346 = vadd.f32 %v1137, %v1345
  %1347 = vmatmul.f32.gmra.mxu0 %v151
  %v1348 = vpop.f32.mrf.mxu0
  %v1349 = vadd.f32 %v1140, %v1348
  %1350 = vmatmul.f32.gmra.mxu0 %v156
  %v1351 = vpop.f32.mrf.mxu0
  %v1352 = vadd.f32 %v1143, %v1351
  %1353 = vmatmul.f32.gmra.mxu0 %v161
  %v1354 = vpop.f32.mrf.mxu0
  %v1355 = vadd.f32 %v1146, %v1354
  %1356 = vmatmul.f32.gmra.mxu0 %v166
  %v1357 = vpop.f32.mrf.mxu0
  %v1358 = vadd.f32 %v1149, %v1357
  %1359 = vmatmul.f32.gmra.mxu0 %v171
  %v1360 = vpop.f32.mrf.mxu0
  %v1361 = vadd.f32 %v1152, %v1360
  %1362 = vmatmul.f32.gmra.mxu0 %v176
  %v1363 = vpop.f32.mrf.mxu0
  %v1364 = vadd.f32 %v1155, %v1363
  %1365 = vmatmul.f32.gmra.mxu0 %v181
  %v1366 = vpop.f32.mrf.mxu0
  %v1367 = vadd.f32 %v1158, %v1366
  %1368 = vmatmul.f32.gmra.mxu0 %v186
  %v1369 = vpop.f32.mrf.mxu0
  %v1370 = vadd.f32 %v1161, %v1369
  %1371 = vmatmul.f32.gmra.mxu0 %v191
  %v1372 = vpop.f32.mrf.mxu0
  %v1373 = vadd.f32 %v1164, %v1372
  %1374 = vmatmul.f32.gmra.mxu0 %v196
  %v1375 = vpop.f32.mrf.mxu0
  %v1376 = vadd.f32 %v1167, %v1375
  %1377 = vmatmul.f32.gmra.mxu0 %v201
  %v1378 = vpop.f32.mrf.mxu0
  %v1379 = vadd.f32 %v1170, %v1378
  %1380 = vmatmul.f32.gmra.mxu0 %v206
  %v1381 = vpop.f32.mrf.mxu0
  %v1382 = vadd.f32 %v1173, %v1381
  %1383 = vmatmul.f32.gmra.mxu0 %v211
  %v1384 = vpop.f32.mrf.mxu0
  %v1385 = vadd.f32 %v1176, %v1384
  %1386 = vmatmul.f32.gmra.mxu0 %v216
  %v1387 = vpop.f32.mrf.mxu0
  %v1388 = vadd.f32 %v1179, %v1387
  %1389 = vmatmul.f32.gmra.mxu0 %v221
  %v1390 = vpop.f32.mrf.mxu0
  %v1391 = vadd.f32 %v1182, %v1390
  %1392 = vmatmul.f32.gmra.mxu0 %v226
  %v1393 = vpop.f32.mrf.mxu0
  %v1394 = vadd.f32 %v1185, %v1393
  %1395 = vmatmul.f32.gmra.mxu0 %v231
  %v1396 = vpop.f32.mrf.mxu0
  %v1397 = vadd.f32 %v1188, %v1396
  %1398 = vmatmul.f32.gmra.mxu0 %v236
  %v1399 = vpop.f32.mrf.mxu0
  %v1400 = vadd.f32 %v1191, %v1399
  %1401 = vmatmul.f32.gmra.mxu0 %v241
  %v1402 = vpop.f32.mrf.mxu0
  %v1403 = vadd.f32 %v1194, %v1402
  %1404 = vmatmul.f32.gmra.mxu0 %v246
  %v1405 = vpop.f32.mrf.mxu0
  %v1406 = vadd.f32 %v1197, %v1405
  %1407 = vmatmul.f32.gmra.mxu0 %v251
  %v1408 = vpop.f32.mrf.mxu0
  %v1409 = vadd.f32 %v1200, %v1408
  %1410 = vmatmul.f32.gmra.mxu0 %v256
  %v1411 = vpop.f32.mrf.mxu0
  %v1412 = vadd.f32 %v1203, %v1411
  %1413 = vmatmul.f32.gmra.mxu0 %v261
  %v1414 = vpop.f32.mrf.mxu0
  %v1415 = vadd.f32 %v1206, %v1414
  %1416 = vmatmul.f32.gmra.mxu0 %v266
  %v1417 = vpop.f32.mrf.mxu0
  %v1418 = vadd.f32 %v1209, %v1417
  %1419 = vmatmul.f32.gmra.mxu0 %v271
  %v1420 = vpop.f32.mrf.mxu0
  %v1421 = vadd.f32 %v1212, %v1420
  %1422 = vmatmul.f32.gmra.mxu0 %v276
  %v1423 = vpop.f32.mrf.mxu0
  %v1424 = vadd.f32 %v1215, %v1423
  %1425 = vmatmul.f32.gmra.mxu0 %v281
  %v1426 = vpop.f32.mrf.mxu0
  %v1427 = vadd.f32 %v1218, %v1426
  %1428 = vmatmul.f32.gmra.mxu0 %v286
  %v1429 = vpop.f32.mrf.mxu0
  %v1430 = vadd.f32 %v1221, %v1429
  %1431 = vmatmul.f32.gmra.mxu0 %v291
  %v1432 = vpop.f32.mrf.mxu0
  %v1433 = vadd.f32 %v1224, %v1432
  %1434 = vmatmul.f32.gmra.mxu0 %v296
  %v1435 = vpop.f32.mrf.mxu0
  %v1436 = vadd.f32 %v1227, %v1435
  %1437 = vmatmul.f32.gmra.mxu0 %v301
  %v1438 = vpop.f32.mrf.mxu0
  %v1439 = vadd.f32 %v1230, %v1438
  %1440 = vmatmul.f32.gmra.mxu0 %v306
  %v1441 = vpop.f32.mrf.mxu0
  %v1442 = vadd.f32 %v1233, %v1441
  %1443 = vmatmul.f32.gmra.mxu0 %v311
  %v1444 = vpop.f32.mrf.mxu0
  %v1445 = vadd.f32 %v1236, %v1444
  %1446 = vmatmul.f32.gmra.mxu0 %v316
  %v1447 = vpop.f32.mrf.mxu0
  %v1448 = vadd.f32 %v1239, %v1447
  %1449 = vmatmul.f32.gmra.mxu0 %v321
  %v1450 = vpop.f32.mrf.mxu0
  %v1451 = vadd.f32 %v1242, %v1450
  %1452 = vmatmul.f32.gmra.mxu0 %v326
  %v1453 = vpop.f32.mrf.mxu0
  %v1454 = vadd.f32 %v1245, %v1453
  %1455 = vmatmul.f32.gmra.mxu0 %v331
  %v1456 = vpop.f32.mrf.mxu0
  %v1457 = vadd.f32 %v1248, %v1456
  %1458 = vmatmul.f32.gmra.mxu0 %v336
  %v1459 = vpop.f32.mrf.mxu0
  %v1460 = vadd.f32 %v1251, %v1459
  %1461 = vdwg.mxu0
  %v1462 = vld [vmem:[%s2] sm:$0x1]
  %v1464 = vperm.slane %v1462, 0
  %v1466 = vmul.f32 %v1271, %v1464
  %v1467 = vmul.f32 %v1274, %v1464
  %v1468 = vmul.f32 %v1277, %v1464
  %v1469 = vmul.f32 %v1280, %v1464
  %v1470 = vmul.f32 %v1283, %v1464
  %v1471 = vmul.f32 %v1286, %v1464
  %v1472 = vmul.f32 %v1289, %v1464
  %v1473 = vmul.f32 %v1292, %v1464
  %v1474 = vmul.f32 %v1295, %v1464
  %v1475 = vmul.f32 %v1298, %v1464
  %v1476 = vmul.f32 %v1301, %v1464
  %v1477 = vmul.f32 %v1304, %v1464
  %v1478 = vmul.f32 %v1307, %v1464
  %v1479 = vmul.f32 %v1310, %v1464
  %v1480 = vmul.f32 %v1313, %v1464
  %v1481 = vmul.f32 %v1316, %v1464
  %v1482 = vmul.f32 %v1319, %v1464
  %v1483 = vmul.f32 %v1322, %v1464
  %v1484 = vmul.f32 %v1325, %v1464
  %v1485 = vmul.f32 %v1328, %v1464
  %v1486 = vmul.f32 %v1331, %v1464
  %v1487 = vmul.f32 %v1334, %v1464
  %v1488 = vmul.f32 %v1337, %v1464
  %v1489 = vmul.f32 %v1340, %v1464
  %v1490 = vmul.f32 %v1343, %v1464
  %v1491 = vmul.f32 %v1346, %v1464
  %v1492 = vmul.f32 %v1349, %v1464
  %v1493 = vmul.f32 %v1352, %v1464
  %v1494 = vmul.f32 %v1355, %v1464
  %v1495 = vmul.f32 %v1358, %v1464
  %v1496 = vmul.f32 %v1361, %v1464
  %v1497 = vmul.f32 %v1364, %v1464
  %v1498 = vmul.f32 %v1367, %v1464
  %v1499 = vmul.f32 %v1370, %v1464
  %v1500 = vmul.f32 %v1373, %v1464
  %v1501 = vmul.f32 %v1376, %v1464
  %v1502 = vmul.f32 %v1379, %v1464
  %v1503 = vmul.f32 %v1382, %v1464
  %v1504 = vmul.f32 %v1385, %v1464
  %v1505 = vmul.f32 %v1388, %v1464
  %v1506 = vmul.f32 %v1391, %v1464
  %v1507 = vmul.f32 %v1394, %v1464
  %v1508 = vmul.f32 %v1397, %v1464
  %v1509 = vmul.f32 %v1400, %v1464
  %v1510 = vmul.f32 %v1403, %v1464
  %v1511 = vmul.f32 %v1406, %v1464
  %v1512 = vmul.f32 %v1409, %v1464
  %v1513 = vmul.f32 %v1412, %v1464
  %v1514 = vmul.f32 %v1415, %v1464
  %v1515 = vmul.f32 %v1418, %v1464
  %v1516 = vmul.f32 %v1421, %v1464
  %v1517 = vmul.f32 %v1424, %v1464
  %v1518 = vmul.f32 %v1427, %v1464
  %v1519 = vmul.f32 %v1430, %v1464
  %v1520 = vmul.f32 %v1433, %v1464
  %v1521 = vmul.f32 %v1436, %v1464
  %v1522 = vmul.f32 %v1439, %v1464
  %v1523 = vmul.f32 %v1442, %v1464
  %v1524 = vmul.f32 %v1445, %v1464
  %v1525 = vmul.f32 %v1448, %v1464
  %v1526 = vmul.f32 %v1451, %v1464
  %v1527 = vmul.f32 %v1454, %v1464
  %v1528 = vmul.f32 %v1457, %v1464
  %v1529 = vmul.f32 %v1460, %v1464
  %v1530 = vld [vmem:[%s3] sm:$0x1]
  %v1532 = vperm.slane %v1530, 0
  %v1534 = vadd.f32 %v1466, %v1532
  %v1535 = vadd.f32 %v1467, %v1532
  %v1536 = vadd.f32 %v1468, %v1532
  %v1537 = vadd.f32 %v1469, %v1532
  %v1538 = vadd.f32 %v1470, %v1532
  %v1539 = vadd.f32 %v1471, %v1532
  %v1540 = vadd.f32 %v1472, %v1532
  %v1541 = vadd.f32 %v1473, %v1532
  %v1542 = vadd.f32 %v1474, %v1532
  %v1543 = vadd.f32 %v1475, %v1532
  %v1544 = vadd.f32 %v1476, %v1532
  %v1545 = vadd.f32 %v1477, %v1532
  %v1546 = vadd.f32 %v1478, %v1532
  %v1547 = vadd.f32 %v1479, %v1532
  %v1548 = vadd.f32 %v1480, %v1532
  %v1549 = vadd.f32 %v1481, %v1532
  %v1550 = vadd.f32 %v1482, %v1532
  %v1551 = vadd.f32 %v1483, %v1532
  %v1552 = vadd.f32 %v1484, %v1532
  %v1553 = vadd.f32 %v1485, %v1532
  %v1554 = vadd.f32 %v1486, %v1532
  %v1555 = vadd.f32 %v1487, %v1532
  %v1556 = vadd.f32 %v1488, %v1532
  %v1557 = vadd.f32 %v1489, %v1532
  %v1558 = vadd.f32 %v1490, %v1532
  %v1559 = vadd.f32 %v1491, %v1532
  %v1560 = vadd.f32 %v1492, %v1532
  %v1561 = vadd.f32 %v1493, %v1532
  %v1562 = vadd.f32 %v1494, %v1532
  %v1563 = vadd.f32 %v1495, %v1532
  %v1564 = vadd.f32 %v1496, %v1532
  %v1565 = vadd.f32 %v1497, %v1532
  %v1566 = vadd.f32 %v1498, %v1532
  %v1567 = vadd.f32 %v1499, %v1532
  %v1568 = vadd.f32 %v1500, %v1532
  %v1569 = vadd.f32 %v1501, %v1532
  %v1570 = vadd.f32 %v1502, %v1532
  %v1571 = vadd.f32 %v1503, %v1532
  %v1572 = vadd.f32 %v1504, %v1532
  %v1573 = vadd.f32 %v1505, %v1532
  %v1574 = vadd.f32 %v1506, %v1532
  %v1575 = vadd.f32 %v1507, %v1532
  %v1576 = vadd.f32 %v1508, %v1532
  %v1577 = vadd.f32 %v1509, %v1532
  %v1578 = vadd.f32 %v1510, %v1532
  %v1579 = vadd.f32 %v1511, %v1532
  %v1580 = vadd.f32 %v1512, %v1532
  %v1581 = vadd.f32 %v1513, %v1532
  %v1582 = vadd.f32 %v1514, %v1532
  %v1583 = vadd.f32 %v1515, %v1532
  %v1584 = vadd.f32 %v1516, %v1532
  %v1585 = vadd.f32 %v1517, %v1532
  %v1586 = vadd.f32 %v1518, %v1532
  %v1587 = vadd.f32 %v1519, %v1532
  %v1588 = vadd.f32 %v1520, %v1532
  %v1589 = vadd.f32 %v1521, %v1532
  %v1590 = vadd.f32 %v1522, %v1532
  %v1591 = vadd.f32 %v1523, %v1532
  %v1592 = vadd.f32 %v1524, %v1532
  %v1593 = vadd.f32 %v1525, %v1532
  %v1594 = vadd.f32 %v1526, %v1532
  %v1595 = vadd.f32 %v1527, %v1532
  %v1596 = vadd.f32 %v1528, %v1532
  %v1597 = vadd.f32 %v1529, %v1532
  %vm1598 = vcmp.ge.f32.partialorder %v1534, 0.0
  %vm1599 = vcmp.ge.f32.partialorder %v1535, 0.0
  %vm1600 = vcmp.ge.f32.partialorder %v1536, 0.0
  %vm1601 = vcmp.ge.f32.partialorder %v1537, 0.0
  %vm1602 = vcmp.ge.f32.partialorder %v1538, 0.0
  %vm1603 = vcmp.ge.f32.partialorder %v1539, 0.0
  %vm1604 = vcmp.ge.f32.partialorder %v1540, 0.0
  %vm1605 = vcmp.ge.f32.partialorder %v1541, 0.0
  %vm1606 = vcmp.ge.f32.partialorder %v1542, 0.0
  %vm1607 = vcmp.ge.f32.partialorder %v1543, 0.0
  %vm1608 = vcmp.ge.f32.partialorder %v1544, 0.0
  %vm1609 = vcmp.ge.f32.partialorder %v1545, 0.0
  %vm1610 = vcmp.ge.f32.partialorder %v1546, 0.0
  %vm1611 = vcmp.ge.f32.partialorder %v1547, 0.0
  %vm1612 = vcmp.ge.f32.partialorder %v1548, 0.0
  %vm1613 = vcmp.ge.f32.partialorder %v1549, 0.0
  %vm1614 = vcmp.ge.f32.partialorder %v1550, 0.0
  %vm1615 = vcmp.ge.f32.partialorder %v1551, 0.0
  %vm1616 = vcmp.ge.f32.partialorder %v1552, 0.0
  %vm1617 = vcmp.ge.f32.partialorder %v1553, 0.0
  %vm1618 = vcmp.ge.f32.partialorder %v1554, 0.0
  %vm1619 = vcmp.ge.f32.partialorder %v1555, 0.0
  %vm1620 = vcmp.ge.f32.partialorder %v1556, 0.0
  %vm1621 = vcmp.ge.f32.partialorder %v1557, 0.0
  %vm1622 = vcmp.ge.f32.partialorder %v1558, 0.0
  %vm1623 = vcmp.ge.f32.partialorder %v1559, 0.0
  %vm1624 = vcmp.ge.f32.partialorder %v1560, 0.0
  %vm1625 = vcmp.ge.f32.partialorder %v1561, 0.0
  %vm1626 = vcmp.ge.f32.partialorder %v1562, 0.0
  %vm1627 = vcmp.ge.f32.partialorder %v1563, 0.0
  %vm1628 = vcmp.ge.f32.partialorder %v1564, 0.0
  %vm1629 = vcmp.ge.f32.partialorder %v1565, 0.0
  %vm1630 = vcmp.ge.f32.partialorder %v1566, 0.0
  %vm1631 = vcmp.ge.f32.partialorder %v1567, 0.0
  %vm1632 = vcmp.ge.f32.partialorder %v1568, 0.0
  %vm1633 = vcmp.ge.f32.partialorder %v1569, 0.0
  %vm1634 = vcmp.ge.f32.partialorder %v1570, 0.0
  %vm1635 = vcmp.ge.f32.partialorder %v1571, 0.0
  %vm1636 = vcmp.ge.f32.partialorder %v1572, 0.0
  %vm1637 = vcmp.ge.f32.partialorder %v1573, 0.0
  %vm1638 = vcmp.ge.f32.partialorder %v1574, 0.0
  %vm1639 = vcmp.ge.f32.partialorder %v1575, 0.0
  %vm1640 = vcmp.ge.f32.partialorder %v1576, 0.0
  %vm1641 = vcmp.ge.f32.partialorder %v1577, 0.0
  %vm1642 = vcmp.ge.f32.partialorder %v1578, 0.0
  %vm1643 = vcmp.ge.f32.partialorder %v1579, 0.0
  %vm1644 = vcmp.ge.f32.partialorder %v1580, 0.0
  %vm1645 = vcmp.ge.f32.partialorder %v1581, 0.0
  %vm1646 = vcmp.ge.f32.partialorder %v1582, 0.0
  %vm1647 = vcmp.ge.f32.partialorder %v1583, 0.0
  %vm1648 = vcmp.ge.f32.partialorder %v1584, 0.0
  %vm1649 = vcmp.ge.f32.partialorder %v1585, 0.0
  %vm1650 = vcmp.ge.f32.partialorder %v1586, 0.0
  %vm1651 = vcmp.ge.f32.partialorder %v1587, 0.0
  %vm1652 = vcmp.ge.f32.partialorder %v1588, 0.0
  %vm1653 = vcmp.ge.f32.partialorder %v1589, 0.0
  %vm1654 = vcmp.ge.f32.partialorder %v1590, 0.0
  %vm1655 = vcmp.ge.f32.partialorder %v1591, 0.0
  %vm1656 = vcmp.ge.f32.partialorder %v1592, 0.0
  %vm1657 = vcmp.ge.f32.partialorder %v1593, 0.0
  %vm1658 = vcmp.ge.f32.partialorder %v1594, 0.0
  %vm1659 = vcmp.ge.f32.partialorder %v1595, 0.0
  %vm1660 = vcmp.ge.f32.partialorder %v1596, 0.0
  %vm1661 = vcmp.ge.f32.partialorder %v1597, 0.0
  %v1662 = vmul.f32 %v1534, 0.2
  %v1663 = vmul.f32 %v1535, 0.2
  %v1664 = vmul.f32 %v1536, 0.2
  %v1665 = vmul.f32 %v1537, 0.2
  %v1666 = vmul.f32 %v1538, 0.2
  %v1667 = vmul.f32 %v1539, 0.2
  %v1668 = vmul.f32 %v1540, 0.2
  %v1669 = vmul.f32 %v1541, 0.2
  %v1670 = vmul.f32 %v1542, 0.2
  %v1671 = vmul.f32 %v1543, 0.2
  %v1672 = vmul.f32 %v1544, 0.2
  %v1673 = vmul.f32 %v1545, 0.2
  %v1674 = vmul.f32 %v1546, 0.2
  %v1675 = vmul.f32 %v1547, 0.2
  %v1676 = vmul.f32 %v1548, 0.2
  %v1677 = vmul.f32 %v1549, 0.2
  %v1678 = vmul.f32 %v1550, 0.2
  %v1679 = vmul.f32 %v1551, 0.2
  %v1680 = vmul.f32 %v1552, 0.2
  %v1681 = vmul.f32 %v1553, 0.2
  %v1682 = vmul.f32 %v1554, 0.2
  %v1683 = vmul.f32 %v1555, 0.2
  %v1684 = vmul.f32 %v1556, 0.2
  %v1685 = vmul.f32 %v1557, 0.2
  %v1686 = vmul.f32 %v1558, 0.2
  %v1687 = vmul.f32 %v1559, 0.2
  %v1688 = vmul.f32 %v1560, 0.2
  %v1689 = vmul.f32 %v1561, 0.2
  %v1690 = vmul.f32 %v1562, 0.2
  %v1691 = vmul.f32 %v1563, 0.2
  %v1692 = vmul.f32 %v1564, 0.2
  %v1693 = vmul.f32 %v1565, 0.2
  %v1694 = vmul.f32 %v1566, 0.2
  %v1695 = vmul.f32 %v1567, 0.2
  %v1696 = vmul.f32 %v1568, 0.2
  %v1697 = vmul.f32 %v1569, 0.2
  %v1698 = vmul.f32 %v1570, 0.2
  %v1699 = vmul.f32 %v1571, 0.2
  %v1700 = vmul.f32 %v1572, 0.2
  %v1701 = vmul.f32 %v1573, 0.2
  %v1702 = vmul.f32 %v1574, 0.2
  %v1703 = vmul.f32 %v1575, 0.2
  %v1704 = vmul.f32 %v1576, 0.2
  %v1705 = vmul.f32 %v1577, 0.2
  %v1706 = vmul.f32 %v1578, 0.2
  %v1707 = vmul.f32 %v1579, 0.2
  %v1708 = vmul.f32 %v1580, 0.2
  %v1709 = vmul.f32 %v1581, 0.2
  %v1710 = vmul.f32 %v1582, 0.2
  %v1711 = vmul.f32 %v1583, 0.2
  %v1712 = vmul.f32 %v1584, 0.2
  %v1713 = vmul.f32 %v1585, 0.2
  %v1714 = vmul.f32 %v1586, 0.2
  %v1715 = vmul.f32 %v1587, 0.2
  %v1716 = vmul.f32 %v1588, 0.2
  %v1717 = vmul.f32 %v1589, 0.2
  %v1718 = vmul.f32 %v1590, 0.2
  %v1719 = vmul.f32 %v1591, 0.2
  %v1720 = vmul.f32 %v1592, 0.2
  %v1721 = vmul.f32 %v1593, 0.2
  %v1722 = vmul.f32 %v1594, 0.2
  %v1723 = vmul.f32 %v1595, 0.2
  %v1724 = vmul.f32 %v1596, 0.2
  %v1725 = vmul.f32 %v1597, 0.2
  %v1726 = vsel %vm1598, %v1534, %v1662
  %v1727 = vsel %vm1599, %v1535, %v1663
  %v1728 = vsel %vm1600, %v1536, %v1664
  %v1729 = vsel %vm1601, %v1537, %v1665
  %v1730 = vsel %vm1602, %v1538, %v1666
  %v1731 = vsel %vm1603, %v1539, %v1667
  %v1732 = vsel %vm1604, %v1540, %v1668
  %v1733 = vsel %vm1605, %v1541, %v1669
  %v1734 = vsel %vm1606, %v1542, %v1670
  %v1735 = vsel %vm1607, %v1543, %v1671
  %v1736 = vsel %vm1608, %v1544, %v1672
  %v1737 = vsel %vm1609, %v1545, %v1673
  %v1738 = vsel %vm1610, %v1546, %v1674
  %v1739 = vsel %vm1611, %v1547, %v1675
  %v1740 = vsel %vm1612, %v1548, %v1676
  %v1741 = vsel %vm1613, %v1549, %v1677
  %v1742 = vsel %vm1614, %v1550, %v1678
  %v1743 = vsel %vm1615, %v1551, %v1679
  %v1744 = vsel %vm1616, %v1552, %v1680
  %v1745 = vsel %vm1617, %v1553, %v1681
  %v1746 = vsel %vm1618, %v1554, %v1682
  %v1747 = vsel %vm1619, %v1555, %v1683
  %v1748 = vsel %vm1620, %v1556, %v1684
  %v1749 = vsel %vm1621, %v1557, %v1685
  %v1750 = vsel %vm1622, %v1558, %v1686
  %v1751 = vsel %vm1623, %v1559, %v1687
  %v1752 = vsel %vm1624, %v1560, %v1688
  %v1753 = vsel %vm1625, %v1561, %v1689
  %v1754 = vsel %vm1626, %v1562, %v1690
  %v1755 = vsel %vm1627, %v1563, %v1691
  %v1756 = vsel %vm1628, %v1564, %v1692
  %v1757 = vsel %vm1629, %v1565, %v1693
  %v1758 = vsel %vm1630, %v1566, %v1694
  %v1759 = vsel %vm1631, %v1567, %v1695
  %v1760 = vsel %vm1632, %v1568, %v1696
  %v1761 = vsel %vm1633, %v1569, %v1697
  %v1762 = vsel %vm1634, %v1570, %v1698
  %v1763 = vsel %vm1635, %v1571, %v1699
  %v1764 = vsel %vm1636, %v1572, %v1700
  %v1765 = vsel %vm1637, %v1573, %v1701
  %v1766 = vsel %vm1638, %v1574, %v1702
  %v1767 = vsel %vm1639, %v1575, %v1703
  %v1768 = vsel %vm1640, %v1576, %v1704
  %v1769 = vsel %vm1641, %v1577, %v1705
  %v1770 = vsel %vm1642, %v1578, %v1706
  %v1771 = vsel %vm1643, %v1579, %v1707
  %v1772 = vsel %vm1644, %v1580, %v1708
  %v1773 = vsel %vm1645, %v1581, %v1709
  %v1774 = vsel %vm1646, %v1582, %v1710
  %v1775 = vsel %vm1647, %v1583, %v1711
  %v1776 = vsel %vm1648, %v1584, %v1712
  %v1777 = vsel %vm1649, %v1585, %v1713
  %v1778 = vsel %vm1650, %v1586, %v1714
  %v1779 = vsel %vm1651, %v1587, %v1715
  %v1780 = vsel %vm1652, %v1588, %v1716
  %v1781 = vsel %vm1653, %v1589, %v1717
  %v1782 = vsel %vm1654, %v1590, %v1718
  %v1783 = vsel %vm1655, %v1591, %v1719
  %v1784 = vsel %vm1656, %v1592, %v1720
  %v1785 = vsel %vm1657, %v1593, %v1721
  %v1786 = vsel %vm1658, %v1594, %v1722
  %v1787 = vsel %vm1659, %v1595, %v1723
  %v1788 = vsel %vm1660, %v1596, %v1724
  %v1789 = vsel %vm1661, %v1597, %v1725
  %1790 = vst [vmem:[%s4] sm:$0xff] %v1726
  %1791 = vst [vmem:[%s4 + $0x8] sm:$0xff] %v1727
  %1792 = vst [vmem:[%s4 + $0x10] sm:$0xff] %v1728
  %1793 = vst [vmem:[%s4 + $0x18] sm:$0xff] %v1729
  %1794 = vst [vmem:[%s4 + $0x20] sm:$0xff] %v1730
  %1795 = vst [vmem:[%s4 + $0x28] sm:$0xff] %v1731
  %1796 = vst [vmem:[%s4 + $0x30] sm:$0xff] %v1732
  %1797 = vst [vmem:[%s4 + $0x38] sm:$0xff] %v1733
  %1798 = vst [vmem:[%s4 + $0x40] sm:$0xff] %v1734
  %1799 = vst [vmem:[%s4 + $0x48] sm:$0xff] %v1735
  %1800 = vst [vmem:[%s4 + $0x50] sm:$0xff] %v1736
  %1801 = vst [vmem:[%s4 + $0x58] sm:$0xff] %v1737
  %1802 = vst [vmem:[%s4 + $0x60] sm:$0xff] %v1738
  %1803 = vst [vmem:[%s4 + $0x68] sm:$0xff] %v1739
  %1804 = vst [vmem:[%s4 + $0x70] sm:$0xff] %v1740
  %1805 = vst [vmem:[%s4 + $0x78] sm:$0xff] %v1741
  %1806 = vst [vmem:[%s4 + $0x80] sm:$0xff] %v1742
  %1807 = vst [vmem:[%s4 + $0x88] sm:$0xff] %v1743
  %1808 = vst [vmem:[%s4 + $0x90] sm:$0xff] %v1744
  %1809 = vst [vmem:[%s4 + $0x98] sm:$0xff] %v1745
  %1810 = vst [vmem:[%s4 + $0xa0] sm:$0xff] %v1746
  %1811 = vst [vmem:[%s4 + $0xa8] sm:$0xff] %v1747
  %1812 = vst [vmem:[%s4 + $0xb0] sm:$0xff] %v1748
  %1813 = vst [vmem:[%s4 + $0xb8] sm:$0xff] %v1749
  %1814 = vst [vmem:[%s4 + $0xc0] sm:$0xff] %v1750
  %1815 = vst [vmem:[%s4 + $0xc8] sm:$0xff] %v1751
  %1816 = vst [vmem:[%s4 + $0xd0] sm:$0xff] %v1752
  %1817 = vst [vmem:[%s4 + $0xd8] sm:$0xff] %v1753
  %1818 = vst [vmem:[%s4 + $0xe0] sm:$0xff] %v1754
  %1819 = vst [vmem:[%s4 + $0xe8] sm:$0xff] %v1755
  %1820 = vst [vmem:[%s4 + $0xf0] sm:$0xff] %v1756
  %1821 = vst [vmem:[%s4 + $0xf8] sm:$0xff] %v1757
  %1822 = vst [vmem:[%s4 + $0x100] sm:$0xff] %v1758
  %1823 = vst [vmem:[%s4 + $0x108] sm:$0xff] %v1759
  %1824 = vst [vmem:[%s4 + $0x110] sm:$0xff] %v1760
  %1825 = vst [vmem:[%s4 + $0x118] sm:$0xff] %v1761
  %1826 = vst [vmem:[%s4 + $0x120] sm:$0xff] %v1762
  %1827 = vst [vmem:[%s4 + $0x128] sm:$0xff] %v1763
  %1828 = vst [vmem:[%s4 + $0x130] sm:$0xff] %v1764
  %1829 = vst [vmem:[%s4 + $0x138] sm:$0xff] %v1765
  %1830 = vst [vmem:[%s4 + $0x140] sm:$0xff] %v1766
  %1831 = vst [vmem:[%s4 + $0x148] sm:$0xff] %v1767
  %1832 = vst [vmem:[%s4 + $0x150] sm:$0xff] %v1768
  %1833 = vst [vmem:[%s4 + $0x158] sm:$0xff] %v1769
  %1834 = vst [vmem:[%s4 + $0x160] sm:$0xff] %v1770
  %1835 = vst [vmem:[%s4 + $0x168] sm:$0xff] %v1771
  %1836 = vst [vmem:[%s4 + $0x170] sm:$0xff] %v1772
  %1837 = vst [vmem:[%s4 + $0x178] sm:$0xff] %v1773
  %1838 = vst [vmem:[%s4 + $0x180] sm:$0xff] %v1774
  %1839 = vst [vmem:[%s4 + $0x188] sm:$0xff] %v1775
  %1840 = vst [vmem:[%s4 + $0x190] sm:$0xff] %v1776
  %1841 = vst [vmem:[%s4 + $0x198] sm:$0xff] %v1777
  %1842 = vst [vmem:[%s4 + $0x1a0] sm:$0xff] %v1778
  %1843 = vst [vmem:[%s4 + $0x1a8] sm:$0xff] %v1779
  %1844 = vst [vmem:[%s4 + $0x1b0] sm:$0xff] %v1780
  %1845 = vst [vmem:[%s4 + $0x1b8] sm:$0xff] %v1781
  %1846 = vst [vmem:[%s4 + $0x1c0] sm:$0xff] %v1782
  %1847 = vst [vmem:[%s4 + $0x1c8] sm:$0xff] %v1783
  %1848 = vst [vmem:[%s4 + $0x1d0] sm:$0xff] %v1784
  %1849 = vst [vmem:[%s4 + $0x1d8] sm:$0xff] %v1785
  %1850 = vst [vmem:[%s4 + $0x1e0] sm:$0xff] %v1786
  %1851 = vst [vmem:[%s4 + $0x1e8] sm:$0xff] %v1787
  %1852 = vst [vmem:[%s4 + $0x1f0] sm:$0xff] %v1788
  %1853 = vst [vmem:[%s4 + $0x1f8] sm:$0xff] %v1789
  // Predicated region
  $region18: #{_lambda_.7} parent=0 // pred_check
    _
  $region19: #{_lambda_.7} parent=0 // pred_check_branch
    %1855 = sbr.rel (0) target = $region21
  $region20: #{_lambda_.7} parent=0 // pred_region
    _
  $region21: #{_lambda_.7} parent=0 // pred_fallthru
    _
  // Predicated region
  $region22: #{_lambda_.7} parent=0 // pred_check
    _
  $region23: #{_lambda_.7} parent=0 // pred_check_branch
    %1857 = sbr.rel (0) target = $region25
  $region24: #{_lambda_.7} parent=0 // pred_region
    _
  $region25: #{_lambda_.7} parent=0 // pred_fallthru
    _

// kernel: tile.62
$region0: #{tile.62}
  #allocation0 [shape = 's32[1]{0}', space=sflag, size = 0x4, scoped, tag = 'scoped memory for tile.62']
  %s0 = inlined_call_operand.vmem [shape: f32[64], index: 0, kind: input, shape index: {}]
  %s1 = inlined_call_operand.vmem [shape: f32[2,64], index: 1, kind: output, shape index: {}]
  // Predicated region
  $region2: #{tile.62} parent=0 // pred_check
    _
  $region3: #{tile.62} parent=0 // pred_check_branch
    %3 = sbr.rel (0) target = $region5
  $region4: #{tile.62} parent=0 // pred_region
    _
  $region5: #{tile.62} parent=0 // pred_fallthru
    _
  %v4 = vld [vmem:[%s0] ss:$0 sm:$0xff]
  %5 = vst [vmem:[%s1] sm:$0x3] %v4

// kernel: tile.63
$region0: #{tile.63}
  %s0 = inlined_call_operand.vmem [shape: f32[2,64], index: 0, kind: input, shape index: {}]
  %s1 = inlined_call_operand.vmem [shape: f32[1,128], index: 1, kind: output, shape index: {}]
  $region1: #{tile.63} parent=0
    #allocation0 [shape = 'u8[4096]{0}', space=vmem, size = 0x1000, scoped, tag = 'scoped mem for output reshape']
    #allocation1 [shape = 'u8[4096]{0}', space=vmem, size = 0x1000, scoped, tag = 'scoped mem for input reshape']
    %s3 = ssub.s32 4, 1
    %v4 = vld [vmem:[%s0] sm:%s3]
    %5 = vst [vmem:[#allocation1] sm:%s3] %v4
    %v6 = vld [vmem:[#allocation1] sm:$0x1]
    %vm7 = vcmask 523264
    %8 = vst.msk [vmem:[#allocation0] sm:$0x1] %vm7, %v6
    %s9 = scalar_lea.vmem [#allocation1], 1
    %v10 = vld [vmem:[%s9] sm:$0x1]
    %11 = vrot.lane.b32.xlu0 %v10, 64
    %v12 = vpop.permute.xlu0 %11
    %vm13 = vcmask 1048064
    %14 = vst.msk [vmem:[#allocation0] sm:$0x1] %vm13, %v12
    %s16 = ssub.s32 2, 1
    %v17 = vld [vmem:[#allocation0] sm:%s16]
    %s19 = ssub.s32 2, 1
    %20 = vst [vmem:[%s1] sm:%s19] %v17

// kernel: _lambda_.8
$region0: #{_lambda_.8}
  #allocation0 [shape = 'u32[]', space=smem, size = 0x4, offset = 0x4, fixed_abs, tag = 'smem constant byte address 0x4 - core index']
  #allocation1 [shape = 'u32[72,128]{1,0:T(1,128)}', space=vmem, size = 0x9000, scoped, tag = 'internal scratch']
  %s0 = inlined_call_operand.vmem [shape: f32[256,640], index: 0, kind: input, shape index: {}]
  %s1 = inlined_call_operand.vmem [shape: f32[640,128], index: 1, kind: input, shape index: {}]
  %s2 = inlined_call_operand.vmem [shape: f32[1,128], index: 2, kind: input, shape index: {}]
  %s3 = inlined_call_operand.vmem [shape: f32[1,128], index: 3, kind: input, shape index: {}]
  %s4 = inlined_call_operand.vmem [shape: f32[256,128], index: 4, kind: output, shape index: {}]
  %s5 = sld [smem:[#allocation0]]
  $region26: #{_lambda_.8} parent=0
    _
  %s7 = ssub.s32 1, %s5
  %s8 = scalar_select 0, %s7, %s5
  // Predicated region
  $region2: #{_lambda_.8} parent=0 // pred_check
    _
  $region3: #{_lambda_.8} parent=0 // pred_check_branch
    %10 = sbr.rel (0) target = $region5
  $region4: #{_lambda_.8} parent=0 // pred_region
    _
  $region5: #{_lambda_.8} parent=0 // pred_fallthru
    _
  // Predicated region
  $region6: #{_lambda_.8} parent=0 // pred_check
    _
  $region7: #{_lambda_.8} parent=0 // pred_check_branch
    %12 = sbr.rel (0) target = $region9
  $region8: #{_lambda_.8} parent=0 // pred_region
    _
  $region9: #{_lambda_.8} parent=0 // pred_fallthru
    _
  // Predicated region
  $region10: #{_lambda_.8} parent=0 // pred_check
    _
  $region11: #{_lambda_.8} parent=0 // pred_check_branch
    %14 = sbr.rel (0) target = $region13
  $region12: #{_lambda_.8} parent=0 // pred_region
    _
  $region13: #{_lambda_.8} parent=0 // pred_fallthru
    _
  // Predicated region
  $region14: #{_lambda_.8} parent=0 // pred_check
    _
  $region15: #{_lambda_.8} parent=0 // pred_check_branch
    %16 = sbr.rel (0) target = $region17
  $region16: #{_lambda_.8} parent=0 // pred_region
    _
  $region17: #{_lambda_.8} parent=0 // pred_fallthru
    _
  %v17 = vld [vmem:[%s0] sm:$0xff]
  %v18 = vld [vmem:[%s0 + $0x8] sm:$0xff]
  %v19 = vld [vmem:[%s0 + $0x10] sm:$0xff]
  %v20 = vld [vmem:[%s0 + $0x18] sm:$0xff]
  %v21 = vld [vmem:[%s0 + $0x20] sm:$0xff]
  %v22 = vld [vmem:[%s0 + $0x28] sm:$0xff]
  %v23 = vld [vmem:[%s0 + $0x30] sm:$0xff]
  %v24 = vld [vmem:[%s0 + $0x38] sm:$0xff]
  %v25 = vld [vmem:[%s0 + $0x40] sm:$0xff]
  %v26 = vld [vmem:[%s0 + $0x48] sm:$0xff]
  %v27 = vld [vmem:[%s0 + $0x50] sm:$0xff]
  %v28 = vld [vmem:[%s0 + $0x58] sm:$0xff]
  %v29 = vld [vmem:[%s0 + $0x60] sm:$0xff]
  %v30 = vld [vmem:[%s0 + $0x68] sm:$0xff]
  %v31 = vld [vmem:[%s0 + $0x70] sm:$0xff]
  %v32 = vld [vmem:[%s0 + $0x78] sm:$0xff]
  %v33 = vld [vmem:[%s0 + $0x80] sm:$0xff]
  %v34 = vld [vmem:[%s0 + $0x88] sm:$0xff]
  %v35 = vld [vmem:[%s0 + $0x90] sm:$0xff]
  %v36 = vld [vmem:[%s0 + $0x98] sm:$0xff]
  %v37 = vld [vmem:[%s0 + $0xa0] sm:$0xff]
  %v38 = vld [vmem:[%s0 + $0xa8] sm:$0xff]
  %v39 = vld [vmem:[%s0 + $0xb0] sm:$0xff]
  %v40 = vld [vmem:[%s0 + $0xb8] sm:$0xff]
  %v41 = vld [vmem:[%s0 + $0xc0] sm:$0xff]
  %v42 = vld [vmem:[%s0 + $0xc8] sm:$0xff]
  %v43 = vld [vmem:[%s0 + $0xd0] sm:$0xff]
  %v44 = vld [vmem:[%s0 + $0xd8] sm:$0xff]
  %v45 = vld [vmem:[%s0 + $0xe0] sm:$0xff]
  %v46 = vld [vmem:[%s0 + $0xe8] sm:$0xff]
  %v47 = vld [vmem:[%s0 + $0xf0] sm:$0xff]
  %v48 = vld [vmem:[%s0 + $0xf8] sm:$0xff]
  %v49 = vld [vmem:[%s0 + $0x100] sm:$0xff]
  %v50 = vld [vmem:[%s0 + $0x108] sm:$0xff]
  %v51 = vld [vmem:[%s0 + $0x110] sm:$0xff]
  %v52 = vld [vmem:[%s0 + $0x118] sm:$0xff]
  %v53 = vld [vmem:[%s0 + $0x120] sm:$0xff]
  %v54 = vld [vmem:[%s0 + $0x128] sm:$0xff]
  %v55 = vld [vmem:[%s0 + $0x130] sm:$0xff]
  %v56 = vld [vmem:[%s0 + $0x138] sm:$0xff]
  %v57 = vld [vmem:[%s0 + $0x140] sm:$0xff]
  %v58 = vld [vmem:[%s0 + $0x148] sm:$0xff]
  %v59 = vld [vmem:[%s0 + $0x150] sm:$0xff]
  %v60 = vld [vmem:[%s0 + $0x158] sm:$0xff]
  %v61 = vld [vmem:[%s0 + $0x160] sm:$0xff]
  %v62 = vld [vmem:[%s0 + $0x168] sm:$0xff]
  %v63 = vld [vmem:[%s0 + $0x170] sm:$0xff]
  %v64 = vld [vmem:[%s0 + $0x178] sm:$0xff]
  %v65 = vld [vmem:[%s0 + $0x180] sm:$0xff]
  %v66 = vld [vmem:[%s0 + $0x188] sm:$0xff]
  %v67 = vld [vmem:[%s0 + $0x190] sm:$0xff]
  %v68 = vld [vmem:[%s0 + $0x198] sm:$0xff]
  %v69 = vld [vmem:[%s0 + $0x1a0] sm:$0xff]
  %v70 = vld [vmem:[%s0 + $0x1a8] sm:$0xff]
  %v71 = vld [vmem:[%s0 + $0x1b0] sm:$0xff]
  %v72 = vld [vmem:[%s0 + $0x1b8] sm:$0xff]
  %v73 = vld [vmem:[%s0 + $0x1c0] sm:$0xff]
  %v74 = vld [vmem:[%s0 + $0x1c8] sm:$0xff]
  %v75 = vld [vmem:[%s0 + $0x1d0] sm:$0xff]
  %v76 = vld [vmem:[%s0 + $0x1d8] sm:$0xff]
  %v77 = vld [vmem:[%s0 + $0x1e0] sm:$0xff]
  %v78 = vld [vmem:[%s0 + $0x1e8] sm:$0xff]
  %v79 = vld [vmem:[%s0 + $0x1f0] sm:$0xff]
  %v80 = vld [vmem:[%s0 + $0x1f8] sm:$0xff]
  %v81 = vld [vmem:[%s0 + $0x200] sm:$0xff]
  %v82 = vld [vmem:[%s0 + $0x208] sm:$0xff]
  %v83 = vld [vmem:[%s0 + $0x210] sm:$0xff]
  %v84 = vld [vmem:[%s0 + $0x218] sm:$0xff]
  %v85 = vld [vmem:[%s0 + $0x220] sm:$0xff]
  %v86 = vld [vmem:[%s0 + $0x228] sm:$0xff]
  %v87 = vld [vmem:[%s0 + $0x230] sm:$0xff]
  %v88 = vld [vmem:[%s0 + $0x238] sm:$0xff]
  %v89 = vld [vmem:[%s0 + $0x240] sm:$0xff]
  %v90 = vld [vmem:[%s0 + $0x248] sm:$0xff]
  %v91 = vld [vmem:[%s0 + $0x250] sm:$0xff]
  %v92 = vld [vmem:[%s0 + $0x258] sm:$0xff]
  %v93 = vld [vmem:[%s0 + $0x260] sm:$0xff]
  %v94 = vld [vmem:[%s0 + $0x268] sm:$0xff]
  %v95 = vld [vmem:[%s0 + $0x270] sm:$0xff]
  %v96 = vld [vmem:[%s0 + $0x278] sm:$0xff]
  %v97 = vld [vmem:[%s0 + $0x280] sm:$0xff]
  %v98 = vld [vmem:[%s0 + $0x288] sm:$0xff]
  %v99 = vld [vmem:[%s0 + $0x290] sm:$0xff]
  %v100 = vld [vmem:[%s0 + $0x298] sm:$0xff]
  %v101 = vld [vmem:[%s0 + $0x2a0] sm:$0xff]
  %v102 = vld [vmem:[%s0 + $0x2a8] sm:$0xff]
  %v103 = vld [vmem:[%s0 + $0x2b0] sm:$0xff]
  %v104 = vld [vmem:[%s0 + $0x2b8] sm:$0xff]
  %v105 = vld [vmem:[%s0 + $0x2c0] sm:$0xff]
  %v106 = vld [vmem:[%s0 + $0x2c8] sm:$0xff]
  %v107 = vld [vmem:[%s0 + $0x2d0] sm:$0xff]
  %v108 = vld [vmem:[%s0 + $0x2d8] sm:$0xff]
  %v109 = vld [vmem:[%s0 + $0x2e0] sm:$0xff]
  %v110 = vld [vmem:[%s0 + $0x2e8] sm:$0xff]
  %v111 = vld [vmem:[%s0 + $0x2f0] sm:$0xff]
  %v112 = vld [vmem:[%s0 + $0x2f8] sm:$0xff]
  %v113 = vld [vmem:[%s0 + $0x300] sm:$0xff]
  %v114 = vld [vmem:[%s0 + $0x308] sm:$0xff]
  %v115 = vld [vmem:[%s0 + $0x310] sm:$0xff]
  %v116 = vld [vmem:[%s0 + $0x318] sm:$0xff]
  %v117 = vld [vmem:[%s0 + $0x320] sm:$0xff]
  %v118 = vld [vmem:[%s0 + $0x328] sm:$0xff]
  %v119 = vld [vmem:[%s0 + $0x330] sm:$0xff]
  %v120 = vld [vmem:[%s0 + $0x338] sm:$0xff]
  %v121 = vld [vmem:[%s0 + $0x340] sm:$0xff]
  %v122 = vld [vmem:[%s0 + $0x348] sm:$0xff]
  %v123 = vld [vmem:[%s0 + $0x350] sm:$0xff]
  %v124 = vld [vmem:[%s0 + $0x358] sm:$0xff]
  %v125 = vld [vmem:[%s0 + $0x360] sm:$0xff]
  %v126 = vld [vmem:[%s0 + $0x368] sm:$0xff]
  %v127 = vld [vmem:[%s0 + $0x370] sm:$0xff]
  %v128 = vld [vmem:[%s0 + $0x378] sm:$0xff]
  %v129 = vld [vmem:[%s0 + $0x380] sm:$0xff]
  %v130 = vld [vmem:[%s0 + $0x388] sm:$0xff]
  %v131 = vld [vmem:[%s0 + $0x390] sm:$0xff]
  %v132 = vld [vmem:[%s0 + $0x398] sm:$0xff]
  %v133 = vld [vmem:[%s0 + $0x3a0] sm:$0xff]
  %v134 = vld [vmem:[%s0 + $0x3a8] sm:$0xff]
  %v135 = vld [vmem:[%s0 + $0x3b0] sm:$0xff]
  %v136 = vld [vmem:[%s0 + $0x3b8] sm:$0xff]
  %v137 = vld [vmem:[%s0 + $0x3c0] sm:$0xff]
  %v138 = vld [vmem:[%s0 + $0x3c8] sm:$0xff]
  %v139 = vld [vmem:[%s0 + $0x3d0] sm:$0xff]
  %v140 = vld [vmem:[%s0 + $0x3d8] sm:$0xff]
  %v141 = vld [vmem:[%s0 + $0x3e0] sm:$0xff]
  %v142 = vld [vmem:[%s0 + $0x3e8] sm:$0xff]
  %v143 = vld [vmem:[%s0 + $0x3f0] sm:$0xff]
  %v144 = vld [vmem:[%s0 + $0x3f8] sm:$0xff]
  %v145 = vld [vmem:[%s0 + $0x400] sm:$0xff]
  %v146 = vld [vmem:[%s0 + $0x408] sm:$0xff]
  %v147 = vld [vmem:[%s0 + $0x410] sm:$0xff]
  %v148 = vld [vmem:[%s0 + $0x418] sm:$0xff]
  %v149 = vld [vmem:[%s0 + $0x420] sm:$0xff]
  %v150 = vld [vmem:[%s0 + $0x428] sm:$0xff]
  %v151 = vld [vmem:[%s0 + $0x430] sm:$0xff]
  %v152 = vld [vmem:[%s0 + $0x438] sm:$0xff]
  %v153 = vld [vmem:[%s0 + $0x440] sm:$0xff]
  %v154 = vld [vmem:[%s0 + $0x448] sm:$0xff]
  %v155 = vld [vmem:[%s0 + $0x450] sm:$0xff]
  %v156 = vld [vmem:[%s0 + $0x458] sm:$0xff]
  %v157 = vld [vmem:[%s0 + $0x460] sm:$0xff]
  %v158 = vld [vmem:[%s0 + $0x468] sm:$0xff]
  %v159 = vld [vmem:[%s0 + $0x470] sm:$0xff]
  %v160 = vld [vmem:[%s0 + $0x478] sm:$0xff]
  %v161 = vld [vmem:[%s0 + $0x480] sm:$0xff]
  %v162 = vld [vmem:[%s0 + $0x488] sm:$0xff]
  %v163 = vld [vmem:[%s0 + $0x490] sm:$0xff]
  %v164 = vld [vmem:[%s0 + $0x498] sm:$0xff]
  %v165 = vld [vmem:[%s0 + $0x4a0] sm:$0xff]
  %v166 = vld [vmem:[%s0 + $0x4a8] sm:$0xff]
  %v167 = vld [vmem:[%s0 + $0x4b0] sm:$0xff]
  %v168 = vld [vmem:[%s0 + $0x4b8] sm:$0xff]
  %v169 = vld [vmem:[%s0 + $0x4c0] sm:$0xff]
  %v170 = vld [vmem:[%s0 + $0x4c8] sm:$0xff]
  %v171 = vld [vmem:[%s0 + $0x4d0] sm:$0xff]
  %v172 = vld [vmem:[%s0 + $0x4d8] sm:$0xff]
  %v173 = vld [vmem:[%s0 + $0x4e0] sm:$0xff]
  %v174 = vld [vmem:[%s0 + $0x4e8] sm:$0xff]
  %v175 = vld [vmem:[%s0 + $0x4f0] sm:$0xff]
  %v176 = vld [vmem:[%s0 + $0x4f8] sm:$0xff]
  %v177 = vld [vmem:[%s1] sm:$0xff]
  %v178 = vld [vmem:[%s1 + $0x8] sm:$0xff]
  %v179 = vld [vmem:[%s1 + $0x10] sm:$0xff]
  %v180 = vld [vmem:[%s1 + $0x18] sm:$0xff]
  %v181 = vld [vmem:[%s1 + $0x20] sm:$0xff]
  %v182 = vld [vmem:[%s1 + $0x28] sm:$0xff]
  %v183 = vld [vmem:[%s1 + $0x30] sm:$0xff]
  %v184 = vld [vmem:[%s1 + $0x38] sm:$0xff]
  %v185 = vld [vmem:[%s1 + $0x40] sm:$0xff]
  %v186 = vld [vmem:[%s1 + $0x48] sm:$0xff]
  %v187 = vld [vmem:[%s1 + $0x50] sm:$0xff]
  %v188 = vld [vmem:[%s1 + $0x58] sm:$0xff]
  %v189 = vld [vmem:[%s1 + $0x60] sm:$0xff]
  %v190 = vld [vmem:[%s1 + $0x68] sm:$0xff]
  %v191 = vld [vmem:[%s1 + $0x70] sm:$0xff]
  %v192 = vld [vmem:[%s1 + $0x78] sm:$0xff]
  %v193 = vld [vmem:[%s1 + $0x80] sm:$0xff]
  %v194 = vld [vmem:[%s1 + $0x88] sm:$0xff]
  %v195 = vld [vmem:[%s1 + $0x90] sm:$0xff]
  %v196 = vld [vmem:[%s1 + $0x98] sm:$0xff]
  %v197 = vld [vmem:[%s1 + $0xa0] sm:$0xff]
  %v198 = vld [vmem:[%s1 + $0xa8] sm:$0xff]
  %v199 = vld [vmem:[%s1 + $0xb0] sm:$0xff]
  %v200 = vld [vmem:[%s1 + $0xb8] sm:$0xff]
  %v201 = vld [vmem:[%s1 + $0xc0] sm:$0xff]
  %v202 = vld [vmem:[%s1 + $0xc8] sm:$0xff]
  %v203 = vld [vmem:[%s1 + $0xd0] sm:$0xff]
  %v204 = vld [vmem:[%s1 + $0xd8] sm:$0xff]
  %v205 = vld [vmem:[%s1 + $0xe0] sm:$0xff]
  %v206 = vld [vmem:[%s1 + $0xe8] sm:$0xff]
  %v207 = vld [vmem:[%s1 + $0xf0] sm:$0xff]
  %v208 = vld [vmem:[%s1 + $0xf8] sm:$0xff]
  %v209 = vld [vmem:[%s1 + $0x100] sm:$0xff]
  %v210 = vld [vmem:[%s1 + $0x108] sm:$0xff]
  %v211 = vld [vmem:[%s1 + $0x110] sm:$0xff]
  %v212 = vld [vmem:[%s1 + $0x118] sm:$0xff]
  %v213 = vld [vmem:[%s1 + $0x120] sm:$0xff]
  %v214 = vld [vmem:[%s1 + $0x128] sm:$0xff]
  %v215 = vld [vmem:[%s1 + $0x130] sm:$0xff]
  %v216 = vld [vmem:[%s1 + $0x138] sm:$0xff]
  %v217 = vld [vmem:[%s1 + $0x140] sm:$0xff]
  %v218 = vld [vmem:[%s1 + $0x148] sm:$0xff]
  %v219 = vld [vmem:[%s1 + $0x150] sm:$0xff]
  %v220 = vld [vmem:[%s1 + $0x158] sm:$0xff]
  %v221 = vld [vmem:[%s1 + $0x160] sm:$0xff]
  %v222 = vld [vmem:[%s1 + $0x168] sm:$0xff]
  %v223 = vld [vmem:[%s1 + $0x170] sm:$0xff]
  %v224 = vld [vmem:[%s1 + $0x178] sm:$0xff]
  %v225 = vld [vmem:[%s1 + $0x180] sm:$0xff]
  %v226 = vld [vmem:[%s1 + $0x188] sm:$0xff]
  %v227 = vld [vmem:[%s1 + $0x190] sm:$0xff]
  %v228 = vld [vmem:[%s1 + $0x198] sm:$0xff]
  %v229 = vld [vmem:[%s1 + $0x1a0] sm:$0xff]
  %v230 = vld [vmem:[%s1 + $0x1a8] sm:$0xff]
  %v231 = vld [vmem:[%s1 + $0x1b0] sm:$0xff]
  %v232 = vld [vmem:[%s1 + $0x1b8] sm:$0xff]
  %v233 = vld [vmem:[%s1 + $0x1c0] sm:$0xff]
  %v234 = vld [vmem:[%s1 + $0x1c8] sm:$0xff]
  %v235 = vld [vmem:[%s1 + $0x1d0] sm:$0xff]
  %v236 = vld [vmem:[%s1 + $0x1d8] sm:$0xff]
  %v237 = vld [vmem:[%s1 + $0x1e0] sm:$0xff]
  %v238 = vld [vmem:[%s1 + $0x1e8] sm:$0xff]
  %v239 = vld [vmem:[%s1 + $0x1f0] sm:$0xff]
  %v240 = vld [vmem:[%s1 + $0x1f8] sm:$0xff]
  %v241 = vld [vmem:[%s1 + $0x200] sm:$0xff]
  %v242 = vld [vmem:[%s1 + $0x208] sm:$0xff]
  %v243 = vld [vmem:[%s1 + $0x210] sm:$0xff]
  %v244 = vld [vmem:[%s1 + $0x218] sm:$0xff]
  %v245 = vld [vmem:[%s1 + $0x220] sm:$0xff]
  %v246 = vld [vmem:[%s1 + $0x228] sm:$0xff]
  %v247 = vld [vmem:[%s1 + $0x230] sm:$0xff]
  %v248 = vld [vmem:[%s1 + $0x238] sm:$0xff]
  %v249 = vld [vmem:[%s1 + $0x240] sm:$0xff]
  %v250 = vld [vmem:[%s1 + $0x248] sm:$0xff]
  %v251 = vld [vmem:[%s1 + $0x250] sm:$0xff]
  %v252 = vld [vmem:[%s1 + $0x258] sm:$0xff]
  %v253 = vld [vmem:[%s1 + $0x260] sm:$0xff]
  %v254 = vld [vmem:[%s1 + $0x268] sm:$0xff]
  %v255 = vld [vmem:[%s1 + $0x270] sm:$0xff]
  %v256 = vld [vmem:[%s1 + $0x278] sm:$0xff]
  %257 = vmatpush.msra.mxu0 %v192
  %258 = vmatpush.msra.mxu0 %v191
  %259 = vmatpush.msra.mxu0 %v190
  %260 = vmatpush.msra.mxu0 %v189
  %261 = vmatpush.msra.mxu0 %v188
  %262 = vmatpush.msra.mxu0 %v187
  %263 = vmatpush.msra.mxu0 %v186
  %264 = vmatpush.msra.mxu0 %v185
  %265 = vmatpush.msra.mxu0 %v184
  %266 = vmatpush.msra.mxu0 %v183
  %267 = vmatpush.msra.mxu0 %v182
  %268 = vmatpush.msra.mxu0 %v181
  %269 = vmatpush.msra.mxu0 %v180
  %270 = vmatpush.msra.mxu0 %v179
  %271 = vmatpush.msra.mxu0 %v178
  %272 = vmatpush.msra.mxu0 %v177
  %273 = vmatmul.f32.gmra.mxu0 %v17
  %v274 = vpop.f32.mrf.mxu0
  %v275 = vadd.f32 0.0, %v274
  %276 = vmatmul.f32.gmra.mxu0 %v22
  %v277 = vpop.f32.mrf.mxu0
  %v278 = vadd.f32 0.0, %v277
  %279 = vmatmul.f32.gmra.mxu0 %v27
  %v280 = vpop.f32.mrf.mxu0
  %v281 = vadd.f32 0.0, %v280
  %282 = vmatmul.f32.gmra.mxu0 %v32
  %v283 = vpop.f32.mrf.mxu0
  %v284 = vadd.f32 0.0, %v283
  %285 = vmatmul.f32.gmra.mxu0 %v37
  %v286 = vpop.f32.mrf.mxu0
  %v287 = vadd.f32 0.0, %v286
  %288 = vmatmul.f32.gmra.mxu0 %v42
  %v289 = vpop.f32.mrf.mxu0
  %v290 = vadd.f32 0.0, %v289
  %291 = vmatmul.f32.gmra.mxu0 %v47
  %v292 = vpop.f32.mrf.mxu0
  %v293 = vadd.f32 0.0, %v292
  %294 = vmatmul.f32.gmra.mxu0 %v52
  %v295 = vpop.f32.mrf.mxu0
  %v296 = vadd.f32 0.0, %v295
  %297 = vmatmul.f32.gmra.mxu0 %v57
  %v298 = vpop.f32.mrf.mxu0
  %v299 = vadd.f32 0.0, %v298
  %300 = vmatmul.f32.gmra.mxu0 %v62
  %v301 = vpop.f32.mrf.mxu0
  %v302 = vadd.f32 0.0, %v301
  %303 = vmatmul.f32.gmra.mxu0 %v67
  %v304 = vpop.f32.mrf.mxu0
  %v305 = vadd.f32 0.0, %v304
  %306 = vmatmul.f32.gmra.mxu0 %v72
  %v307 = vpop.f32.mrf.mxu0
  %v308 = vadd.f32 0.0, %v307
  %309 = vmatmul.f32.gmra.mxu0 %v77
  %v310 = vpop.f32.mrf.mxu0
  %v311 = vadd.f32 0.0, %v310
  %312 = vmatmul.f32.gmra.mxu0 %v82
  %v313 = vpop.f32.mrf.mxu0
  %v314 = vadd.f32 0.0, %v313
  %315 = vmatmul.f32.gmra.mxu0 %v87
  %v316 = vpop.f32.mrf.mxu0
  %v317 = vadd.f32 0.0, %v316
  %318 = vmatmul.f32.gmra.mxu0 %v92
  %v319 = vpop.f32.mrf.mxu0
  %v320 = vadd.f32 0.0, %v319
  %321 = vmatmul.f32.gmra.mxu0 %v97
  %v322 = vpop.f32.mrf.mxu0
  %v323 = vadd.f32 0.0, %v322
  %324 = vmatmul.f32.gmra.mxu0 %v102
  %v325 = vpop.f32.mrf.mxu0
  %v326 = vadd.f32 0.0, %v325
  %327 = vmatmul.f32.gmra.mxu0 %v107
  %v328 = vpop.f32.mrf.mxu0
  %v329 = vadd.f32 0.0, %v328
  %330 = vmatmul.f32.gmra.mxu0 %v112
  %v331 = vpop.f32.mrf.mxu0
  %v332 = vadd.f32 0.0, %v331
  %333 = vmatmul.f32.gmra.mxu0 %v117
  %v334 = vpop.f32.mrf.mxu0
  %v335 = vadd.f32 0.0, %v334
  %336 = vmatmul.f32.gmra.mxu0 %v122
  %v337 = vpop.f32.mrf.mxu0
  %v338 = vadd.f32 0.0, %v337
  %339 = vmatmul.f32.gmra.mxu0 %v127
  %v340 = vpop.f32.mrf.mxu0
  %v341 = vadd.f32 0.0, %v340
  %342 = vmatmul.f32.gmra.mxu0 %v132
  %v343 = vpop.f32.mrf.mxu0
  %v344 = vadd.f32 0.0, %v343
  %345 = vmatmul.f32.gmra.mxu0 %v137
  %v346 = vpop.f32.mrf.mxu0
  %v347 = vadd.f32 0.0, %v346
  %348 = vmatmul.f32.gmra.mxu0 %v142
  %v349 = vpop.f32.mrf.mxu0
  %v350 = vadd.f32 0.0, %v349
  %351 = vmatmul.f32.gmra.mxu0 %v147
  %v352 = vpop.f32.mrf.mxu0
  %v353 = vadd.f32 0.0, %v352
  %354 = vmatmul.f32.gmra.mxu0 %v152
  %v355 = vpop.f32.mrf.mxu0
  %v356 = vadd.f32 0.0, %v355
  %357 = vmatmul.f32.gmra.mxu0 %v157
  %v358 = vpop.f32.mrf.mxu0
  %v359 = vadd.f32 0.0, %v358
  %360 = vmatmul.f32.gmra.mxu0 %v162
  %v361 = vpop.f32.mrf.mxu0
  %v362 = vadd.f32 0.0, %v361
  %363 = vmatmul.f32.gmra.mxu0 %v167
  %v364 = vpop.f32.mrf.mxu0
  %v365 = vadd.f32 0.0, %v364
  %366 = vmatmul.f32.gmra.mxu0 %v172
  %v367 = vpop.f32.mrf.mxu0
  %v368 = vadd.f32 0.0, %v367
  %369 = vdwg.mxu0
  %370 = vmatpush.msra.mxu0 %v208
  %371 = vmatpush.msra.mxu0 %v207
  %372 = vmatpush.msra.mxu0 %v206
  %373 = vmatpush.msra.mxu0 %v205
  %374 = vmatpush.msra.mxu0 %v204
  %375 = vmatpush.msra.mxu0 %v203
  %376 = vmatpush.msra.mxu0 %v202
  %377 = vmatpush.msra.mxu0 %v201
  %378 = vmatpush.msra.mxu0 %v200
  %379 = vmatpush.msra.mxu0 %v199
  %380 = vmatpush.msra.mxu0 %v198
  %381 = vmatpush.msra.mxu0 %v197
  %382 = vmatpush.msra.mxu0 %v196
  %383 = vmatpush.msra.mxu0 %v195
  %384 = vmatpush.msra.mxu0 %v194
  %385 = vmatpush.msra.mxu0 %v193
  %386 = vmatmul.f32.gmra.mxu0 %v18
  %v387 = vpop.f32.mrf.mxu0
  %v388 = vadd.f32 %v275, %v387
  %389 = vmatmul.f32.gmra.mxu0 %v23
  %v390 = vpop.f32.mrf.mxu0
  %v391 = vadd.f32 %v278, %v390
  %392 = vmatmul.f32.gmra.mxu0 %v28
  %v393 = vpop.f32.mrf.mxu0
  %v394 = vadd.f32 %v281, %v393
  %395 = vmatmul.f32.gmra.mxu0 %v33
  %v396 = vpop.f32.mrf.mxu0
  %v397 = vadd.f32 %v284, %v396
  %398 = vmatmul.f32.gmra.mxu0 %v38
  %v399 = vpop.f32.mrf.mxu0
  %v400 = vadd.f32 %v287, %v399
  %401 = vmatmul.f32.gmra.mxu0 %v43
  %v402 = vpop.f32.mrf.mxu0
  %v403 = vadd.f32 %v290, %v402
  %404 = vmatmul.f32.gmra.mxu0 %v48
  %v405 = vpop.f32.mrf.mxu0
  %v406 = vadd.f32 %v293, %v405
  %407 = vmatmul.f32.gmra.mxu0 %v53
  %v408 = vpop.f32.mrf.mxu0
  %v409 = vadd.f32 %v296, %v408
  %410 = vmatmul.f32.gmra.mxu0 %v58
  %v411 = vpop.f32.mrf.mxu0
  %v412 = vadd.f32 %v299, %v411
  %413 = vmatmul.f32.gmra.mxu0 %v63
  %v414 = vpop.f32.mrf.mxu0
  %v415 = vadd.f32 %v302, %v414
  %416 = vmatmul.f32.gmra.mxu0 %v68
  %v417 = vpop.f32.mrf.mxu0
  %v418 = vadd.f32 %v305, %v417
  %419 = vmatmul.f32.gmra.mxu0 %v73
  %v420 = vpop.f32.mrf.mxu0
  %v421 = vadd.f32 %v308, %v420
  %422 = vmatmul.f32.gmra.mxu0 %v78
  %v423 = vpop.f32.mrf.mxu0
  %v424 = vadd.f32 %v311, %v423
  %425 = vmatmul.f32.gmra.mxu0 %v83
  %v426 = vpop.f32.mrf.mxu0
  %v427 = vadd.f32 %v314, %v426
  %428 = vmatmul.f32.gmra.mxu0 %v88
  %v429 = vpop.f32.mrf.mxu0
  %v430 = vadd.f32 %v317, %v429
  %431 = vmatmul.f32.gmra.mxu0 %v93
  %v432 = vpop.f32.mrf.mxu0
  %v433 = vadd.f32 %v320, %v432
  %434 = vmatmul.f32.gmra.mxu0 %v98
  %v435 = vpop.f32.mrf.mxu0
  %v436 = vadd.f32 %v323, %v435
  %437 = vmatmul.f32.gmra.mxu0 %v103
  %v438 = vpop.f32.mrf.mxu0
  %v439 = vadd.f32 %v326, %v438
  %440 = vmatmul.f32.gmra.mxu0 %v108
  %v441 = vpop.f32.mrf.mxu0
  %v442 = vadd.f32 %v329, %v441
  %443 = vmatmul.f32.gmra.mxu0 %v113
  %v444 = vpop.f32.mrf.mxu0
  %v445 = vadd.f32 %v332, %v444
  %446 = vmatmul.f32.gmra.mxu0 %v118
  %v447 = vpop.f32.mrf.mxu0
  %v448 = vadd.f32 %v335, %v447
  %449 = vmatmul.f32.gmra.mxu0 %v123
  %v450 = vpop.f32.mrf.mxu0
  %v451 = vadd.f32 %v338, %v450
  %452 = vmatmul.f32.gmra.mxu0 %v128
  %v453 = vpop.f32.mrf.mxu0
  %v454 = vadd.f32 %v341, %v453
  %455 = vmatmul.f32.gmra.mxu0 %v133
  %v456 = vpop.f32.mrf.mxu0
  %v457 = vadd.f32 %v344, %v456
  %458 = vmatmul.f32.gmra.mxu0 %v138
  %v459 = vpop.f32.mrf.mxu0
  %v460 = vadd.f32 %v347, %v459
  %461 = vmatmul.f32.gmra.mxu0 %v143
  %v462 = vpop.f32.mrf.mxu0
  %v463 = vadd.f32 %v350, %v462
  %464 = vmatmul.f32.gmra.mxu0 %v148
  %v465 = vpop.f32.mrf.mxu0
  %v466 = vadd.f32 %v353, %v465
  %467 = vmatmul.f32.gmra.mxu0 %v153
  %v468 = vpop.f32.mrf.mxu0
  %v469 = vadd.f32 %v356, %v468
  %470 = vmatmul.f32.gmra.mxu0 %v158
  %v471 = vpop.f32.mrf.mxu0
  %v472 = vadd.f32 %v359, %v471
  %473 = vmatmul.f32.gmra.mxu0 %v163
  %v474 = vpop.f32.mrf.mxu0
  %v475 = vadd.f32 %v362, %v474
  %476 = vmatmul.f32.gmra.mxu0 %v168
  %v477 = vpop.f32.mrf.mxu0
  %v478 = vadd.f32 %v365, %v477
  %479 = vmatmul.f32.gmra.mxu0 %v173
  %v480 = vpop.f32.mrf.mxu0
  %v481 = vadd.f32 %v368, %v480
  %482 = vdwg.mxu0
  %483 = vmatpush.msra.mxu0 %v224
  %484 = vmatpush.msra.mxu0 %v223
  %485 = vmatpush.msra.mxu0 %v222
  %486 = vmatpush.msra.mxu0 %v221
  %487 = vmatpush.msra.mxu0 %v220
  %488 = vmatpush.msra.mxu0 %v219
  %489 = vmatpush.msra.mxu0 %v218
  %490 = vmatpush.msra.mxu0 %v217
  %491 = vmatpush.msra.mxu0 %v216
  %492 = vmatpush.msra.mxu0 %v215
  %493 = vmatpush.msra.mxu0 %v214
  %494 = vmatpush.msra.mxu0 %v213
  %495 = vmatpush.msra.mxu0 %v212
  %496 = vmatpush.msra.mxu0 %v211
  %497 = vmatpush.msra.mxu0 %v210
  %498 = vmatpush.msra.mxu0 %v209
  %499 = vmatmul.f32.gmra.mxu0 %v19
  %v500 = vpop.f32.mrf.mxu0
  %v501 = vadd.f32 %v388, %v500
  %502 = vmatmul.f32.gmra.mxu0 %v24
  %v503 = vpop.f32.mrf.mxu0
  %v504 = vadd.f32 %v391, %v503
  %505 = vmatmul.f32.gmra.mxu0 %v29
  %v506 = vpop.f32.mrf.mxu0
  %v507 = vadd.f32 %v394, %v506
  %508 = vmatmul.f32.gmra.mxu0 %v34
  %v509 = vpop.f32.mrf.mxu0
  %v510 = vadd.f32 %v397, %v509
  %511 = vmatmul.f32.gmra.mxu0 %v39
  %v512 = vpop.f32.mrf.mxu0
  %v513 = vadd.f32 %v400, %v512
  %514 = vmatmul.f32.gmra.mxu0 %v44
  %v515 = vpop.f32.mrf.mxu0
  %v516 = vadd.f32 %v403, %v515
  %517 = vmatmul.f32.gmra.mxu0 %v49
  %v518 = vpop.f32.mrf.mxu0
  %v519 = vadd.f32 %v406, %v518
  %520 = vmatmul.f32.gmra.mxu0 %v54
  %v521 = vpop.f32.mrf.mxu0
  %v522 = vadd.f32 %v409, %v521
  %523 = vmatmul.f32.gmra.mxu0 %v59
  %v524 = vpop.f32.mrf.mxu0
  %v525 = vadd.f32 %v412, %v524
  %526 = vmatmul.f32.gmra.mxu0 %v64
  %v527 = vpop.f32.mrf.mxu0
  %v528 = vadd.f32 %v415, %v527
  %529 = vmatmul.f32.gmra.mxu0 %v69
  %v530 = vpop.f32.mrf.mxu0
  %v531 = vadd.f32 %v418, %v530
  %532 = vmatmul.f32.gmra.mxu0 %v74
  %v533 = vpop.f32.mrf.mxu0
  %v534 = vadd.f32 %v421, %v533
  %535 = vmatmul.f32.gmra.mxu0 %v79
  %v536 = vpop.f32.mrf.mxu0
  %v537 = vadd.f32 %v424, %v536
  %538 = vmatmul.f32.gmra.mxu0 %v84
  %v539 = vpop.f32.mrf.mxu0
  %v540 = vadd.f32 %v427, %v539
  %541 = vmatmul.f32.gmra.mxu0 %v89
  %v542 = vpop.f32.mrf.mxu0
  %v543 = vadd.f32 %v430, %v542
  %544 = vmatmul.f32.gmra.mxu0 %v94
  %v545 = vpop.f32.mrf.mxu0
  %v546 = vadd.f32 %v433, %v545
  %547 = vmatmul.f32.gmra.mxu0 %v99
  %v548 = vpop.f32.mrf.mxu0
  %v549 = vadd.f32 %v436, %v548
  %550 = vmatmul.f32.gmra.mxu0 %v104
  %v551 = vpop.f32.mrf.mxu0
  %v552 = vadd.f32 %v439, %v551
  %553 = vmatmul.f32.gmra.mxu0 %v109
  %v554 = vpop.f32.mrf.mxu0
  %v555 = vadd.f32 %v442, %v554
  %556 = vmatmul.f32.gmra.mxu0 %v114
  %v557 = vpop.f32.mrf.mxu0
  %v558 = vadd.f32 %v445, %v557
  %559 = vmatmul.f32.gmra.mxu0 %v119
  %v560 = vpop.f32.mrf.mxu0
  %v561 = vadd.f32 %v448, %v560
  %562 = vmatmul.f32.gmra.mxu0 %v124
  %v563 = vpop.f32.mrf.mxu0
  %v564 = vadd.f32 %v451, %v563
  %565 = vmatmul.f32.gmra.mxu0 %v129
  %v566 = vpop.f32.mrf.mxu0
  %v567 = vadd.f32 %v454, %v566
  %568 = vmatmul.f32.gmra.mxu0 %v134
  %v569 = vpop.f32.mrf.mxu0
  %v570 = vadd.f32 %v457, %v569
  %571 = vmatmul.f32.gmra.mxu0 %v139
  %v572 = vpop.f32.mrf.mxu0
  %v573 = vadd.f32 %v460, %v572
  %574 = vmatmul.f32.gmra.mxu0 %v144
  %v575 = vpop.f32.mrf.mxu0
  %v576 = vadd.f32 %v463, %v575
  %577 = vmatmul.f32.gmra.mxu0 %v149
  %v578 = vpop.f32.mrf.mxu0
  %v579 = vadd.f32 %v466, %v578
  %580 = vmatmul.f32.gmra.mxu0 %v154
  %v581 = vpop.f32.mrf.mxu0
  %v582 = vadd.f32 %v469, %v581
  %583 = vmatmul.f32.gmra.mxu0 %v159
  %v584 = vpop.f32.mrf.mxu0
  %v585 = vadd.f32 %v472, %v584
  %586 = vmatmul.f32.gmra.mxu0 %v164
  %v587 = vpop.f32.mrf.mxu0
  %v588 = vadd.f32 %v475, %v587
  %589 = vmatmul.f32.gmra.mxu0 %v169
  %v590 = vpop.f32.mrf.mxu0
  %v591 = vadd.f32 %v478, %v590
  %592 = vmatmul.f32.gmra.mxu0 %v174
  %v593 = vpop.f32.mrf.mxu0
  %v594 = vadd.f32 %v481, %v593
  %595 = vdwg.mxu0
  %596 = vmatpush.msra.mxu0 %v240
  %597 = vmatpush.msra.mxu0 %v239
  %598 = vmatpush.msra.mxu0 %v238
  %599 = vmatpush.msra.mxu0 %v237
  %600 = vmatpush.msra.mxu0 %v236
  %601 = vmatpush.msra.mxu0 %v235
  %602 = vmatpush.msra.mxu0 %v234
  %603 = vmatpush.msra.mxu0 %v233
  %604 = vmatpush.msra.mxu0 %v232
  %605 = vmatpush.msra.mxu0 %v231
  %606 = vmatpush.msra.mxu0 %v230
  %607 = vmatpush.msra.mxu0 %v229
  %608 = vmatpush.msra.mxu0 %v228
  %609 = vmatpush.msra.mxu0 %v227
  %610 = vmatpush.msra.mxu0 %v226
  %611 = vmatpush.msra.mxu0 %v225
  %612 = vmatmul.f32.gmra.mxu0 %v20
  %v613 = vpop.f32.mrf.mxu0
  %v614 = vadd.f32 %v501, %v613
  %615 = vmatmul.f32.gmra.mxu0 %v25
  %v616 = vpop.f32.mrf.mxu0
  %v617 = vadd.f32 %v504, %v616
  %618 = vmatmul.f32.gmra.mxu0 %v30
  %v619 = vpop.f32.mrf.mxu0
  %v620 = vadd.f32 %v507, %v619
  %621 = vmatmul.f32.gmra.mxu0 %v35
  %v622 = vpop.f32.mrf.mxu0
  %v623 = vadd.f32 %v510, %v622
  %624 = vmatmul.f32.gmra.mxu0 %v40
  %v625 = vpop.f32.mrf.mxu0
  %v626 = vadd.f32 %v513, %v625
  %627 = vmatmul.f32.gmra.mxu0 %v45
  %v628 = vpop.f32.mrf.mxu0
  %v629 = vadd.f32 %v516, %v628
  %630 = vmatmul.f32.gmra.mxu0 %v50
  %v631 = vpop.f32.mrf.mxu0
  %v632 = vadd.f32 %v519, %v631
  %633 = vmatmul.f32.gmra.mxu0 %v55
  %v634 = vpop.f32.mrf.mxu0
  %v635 = vadd.f32 %v522, %v634
  %636 = vmatmul.f32.gmra.mxu0 %v60
  %v637 = vpop.f32.mrf.mxu0
  %v638 = vadd.f32 %v525, %v637
  %639 = vmatmul.f32.gmra.mxu0 %v65
  %v640 = vpop.f32.mrf.mxu0
  %v641 = vadd.f32 %v528, %v640
  %642 = vmatmul.f32.gmra.mxu0 %v70
  %v643 = vpop.f32.mrf.mxu0
  %v644 = vadd.f32 %v531, %v643
  %645 = vmatmul.f32.gmra.mxu0 %v75
  %v646 = vpop.f32.mrf.mxu0
  %v647 = vadd.f32 %v534, %v646
  %648 = vmatmul.f32.gmra.mxu0 %v80
  %v649 = vpop.f32.mrf.mxu0
  %v650 = vadd.f32 %v537, %v649
  %651 = vmatmul.f32.gmra.mxu0 %v85
  %v652 = vpop.f32.mrf.mxu0
  %v653 = vadd.f32 %v540, %v652
  %654 = vmatmul.f32.gmra.mxu0 %v90
  %v655 = vpop.f32.mrf.mxu0
  %v656 = vadd.f32 %v543, %v655
  %657 = vmatmul.f32.gmra.mxu0 %v95
  %v658 = vpop.f32.mrf.mxu0
  %v659 = vadd.f32 %v546, %v658
  %660 = vmatmul.f32.gmra.mxu0 %v100
  %v661 = vpop.f32.mrf.mxu0
  %v662 = vadd.f32 %v549, %v661
  %663 = vmatmul.f32.gmra.mxu0 %v105
  %v664 = vpop.f32.mrf.mxu0
  %v665 = vadd.f32 %v552, %v664
  %666 = vmatmul.f32.gmra.mxu0 %v110
  %v667 = vpop.f32.mrf.mxu0
  %v668 = vadd.f32 %v555, %v667
  %669 = vmatmul.f32.gmra.mxu0 %v115
  %v670 = vpop.f32.mrf.mxu0
  %v671 = vadd.f32 %v558, %v670
  %672 = vmatmul.f32.gmra.mxu0 %v120
  %v673 = vpop.f32.mrf.mxu0
  %v674 = vadd.f32 %v561, %v673
  %675 = vmatmul.f32.gmra.mxu0 %v125
  %v676 = vpop.f32.mrf.mxu0
  %v677 = vadd.f32 %v564, %v676
  %678 = vmatmul.f32.gmra.mxu0 %v130
  %v679 = vpop.f32.mrf.mxu0
  %v680 = vadd.f32 %v567, %v679
  %681 = vmatmul.f32.gmra.mxu0 %v135
  %v682 = vpop.f32.mrf.mxu0
  %v683 = vadd.f32 %v570, %v682
  %684 = vmatmul.f32.gmra.mxu0 %v140
  %v685 = vpop.f32.mrf.mxu0
  %v686 = vadd.f32 %v573, %v685
  %687 = vmatmul.f32.gmra.mxu0 %v145
  %v688 = vpop.f32.mrf.mxu0
  %v689 = vadd.f32 %v576, %v688
  %690 = vmatmul.f32.gmra.mxu0 %v150
  %v691 = vpop.f32.mrf.mxu0
  %v692 = vadd.f32 %v579, %v691
  %693 = vmatmul.f32.gmra.mxu0 %v155
  %v694 = vpop.f32.mrf.mxu0
  %v695 = vadd.f32 %v582, %v694
  %696 = vmatmul.f32.gmra.mxu0 %v160
  %v697 = vpop.f32.mrf.mxu0
  %v698 = vadd.f32 %v585, %v697
  %699 = vmatmul.f32.gmra.mxu0 %v165
  %v700 = vpop.f32.mrf.mxu0
  %v701 = vadd.f32 %v588, %v700
  %702 = vmatmul.f32.gmra.mxu0 %v170
  %v703 = vpop.f32.mrf.mxu0
  %v704 = vadd.f32 %v591, %v703
  %705 = vmatmul.f32.gmra.mxu0 %v175
  %v706 = vpop.f32.mrf.mxu0
  %v707 = vadd.f32 %v594, %v706
  %708 = vdwg.mxu0
  %709 = vmatpush.msra.mxu0 %v256
  %710 = vmatpush.msra.mxu0 %v255
  %711 = vmatpush.msra.mxu0 %v254
  %712 = vmatpush.msra.mxu0 %v253
  %713 = vmatpush.msra.mxu0 %v252
  %714 = vmatpush.msra.mxu0 %v251
  %715 = vmatpush.msra.mxu0 %v250
  %716 = vmatpush.msra.mxu0 %v249
  %717 = vmatpush.msra.mxu0 %v248
  %718 = vmatpush.msra.mxu0 %v247
  %719 = vmatpush.msra.mxu0 %v246
  %720 = vmatpush.msra.mxu0 %v245
  %721 = vmatpush.msra.mxu0 %v244
  %722 = vmatpush.msra.mxu0 %v243
  %723 = vmatpush.msra.mxu0 %v242
  %724 = vmatpush.msra.mxu0 %v241
  %725 = vmatmul.f32.gmra.mxu0 %v21
  %v726 = vpop.f32.mrf.mxu0
  %v727 = vadd.f32 %v614, %v726
  %728 = vmatmul.f32.gmra.mxu0 %v26
  %v729 = vpop.f32.mrf.mxu0
  %v730 = vadd.f32 %v617, %v729
  %731 = vmatmul.f32.gmra.mxu0 %v31
  %v732 = vpop.f32.mrf.mxu0
  %v733 = vadd.f32 %v620, %v732
  %734 = vmatmul.f32.gmra.mxu0 %v36
  %v735 = vpop.f32.mrf.mxu0
  %v736 = vadd.f32 %v623, %v735
  %737 = vmatmul.f32.gmra.mxu0 %v41
  %v738 = vpop.f32.mrf.mxu0
  %v739 = vadd.f32 %v626, %v738
  %740 = vmatmul.f32.gmra.mxu0 %v46
  %v741 = vpop.f32.mrf.mxu0
  %v742 = vadd.f32 %v629, %v741
  %743 = vmatmul.f32.gmra.mxu0 %v51
  %v744 = vpop.f32.mrf.mxu0
  %v745 = vadd.f32 %v632, %v744
  %746 = vmatmul.f32.gmra.mxu0 %v56
  %v747 = vpop.f32.mrf.mxu0
  %v748 = vadd.f32 %v635, %v747
  %749 = vmatmul.f32.gmra.mxu0 %v61
  %v750 = vpop.f32.mrf.mxu0
  %v751 = vadd.f32 %v638, %v750
  %752 = vmatmul.f32.gmra.mxu0 %v66
  %v753 = vpop.f32.mrf.mxu0
  %v754 = vadd.f32 %v641, %v753
  %755 = vmatmul.f32.gmra.mxu0 %v71
  %v756 = vpop.f32.mrf.mxu0
  %v757 = vadd.f32 %v644, %v756
  %758 = vmatmul.f32.gmra.mxu0 %v76
  %v759 = vpop.f32.mrf.mxu0
  %v760 = vadd.f32 %v647, %v759
  %761 = vmatmul.f32.gmra.mxu0 %v81
  %v762 = vpop.f32.mrf.mxu0
  %v763 = vadd.f32 %v650, %v762
  %764 = vmatmul.f32.gmra.mxu0 %v86
  %v765 = vpop.f32.mrf.mxu0
  %v766 = vadd.f32 %v653, %v765
  %767 = vmatmul.f32.gmra.mxu0 %v91
  %v768 = vpop.f32.mrf.mxu0
  %v769 = vadd.f32 %v656, %v768
  %770 = vmatmul.f32.gmra.mxu0 %v96
  %v771 = vpop.f32.mrf.mxu0
  %v772 = vadd.f32 %v659, %v771
  %773 = vmatmul.f32.gmra.mxu0 %v101
  %v774 = vpop.f32.mrf.mxu0
  %v775 = vadd.f32 %v662, %v774
  %776 = vmatmul.f32.gmra.mxu0 %v106
  %v777 = vpop.f32.mrf.mxu0
  %v778 = vadd.f32 %v665, %v777
  %779 = vmatmul.f32.gmra.mxu0 %v111
  %v780 = vpop.f32.mrf.mxu0
  %v781 = vadd.f32 %v668, %v780
  %782 = vmatmul.f32.gmra.mxu0 %v116
  %v783 = vpop.f32.mrf.mxu0
  %v784 = vadd.f32 %v671, %v783
  %785 = vmatmul.f32.gmra.mxu0 %v121
  %v786 = vpop.f32.mrf.mxu0
  %v787 = vadd.f32 %v674, %v786
  %788 = vmatmul.f32.gmra.mxu0 %v126
  %v789 = vpop.f32.mrf.mxu0
  %v790 = vadd.f32 %v677, %v789
  %791 = vmatmul.f32.gmra.mxu0 %v131
  %v792 = vpop.f32.mrf.mxu0
  %v793 = vadd.f32 %v680, %v792
  %794 = vmatmul.f32.gmra.mxu0 %v136
  %v795 = vpop.f32.mrf.mxu0
  %v796 = vadd.f32 %v683, %v795
  %797 = vmatmul.f32.gmra.mxu0 %v141
  %v798 = vpop.f32.mrf.mxu0
  %v799 = vadd.f32 %v686, %v798
  %800 = vmatmul.f32.gmra.mxu0 %v146
  %v801 = vpop.f32.mrf.mxu0
  %v802 = vadd.f32 %v689, %v801
  %803 = vmatmul.f32.gmra.mxu0 %v151
  %v804 = vpop.f32.mrf.mxu0
  %v805 = vadd.f32 %v692, %v804
  %806 = vmatmul.f32.gmra.mxu0 %v156
  %v807 = vpop.f32.mrf.mxu0
  %v808 = vadd.f32 %v695, %v807
  %809 = vmatmul.f32.gmra.mxu0 %v161
  %v810 = vpop.f32.mrf.mxu0
  %v811 = vadd.f32 %v698, %v810
  %812 = vmatmul.f32.gmra.mxu0 %v166
  %v813 = vpop.f32.mrf.mxu0
  %v814 = vadd.f32 %v701, %v813
  %815 = vmatmul.f32.gmra.mxu0 %v171
  %v816 = vpop.f32.mrf.mxu0
  %v817 = vadd.f32 %v704, %v816
  %818 = vmatmul.f32.gmra.mxu0 %v176
  %v819 = vpop.f32.mrf.mxu0
  %v820 = vadd.f32 %v707, %v819
  %821 = vdwg.mxu0
  %v822 = vld [vmem:[%s2] sm:$0x1]
  %v824 = vperm.slane %v822, 0
  %v826 = vmul.f32 %v727, %v824
  %v827 = vmul.f32 %v730, %v824
  %v828 = vmul.f32 %v733, %v824
  %v829 = vmul.f32 %v736, %v824
  %v830 = vmul.f32 %v739, %v824
  %v831 = vmul.f32 %v742, %v824
  %v832 = vmul.f32 %v745, %v824
  %v833 = vmul.f32 %v748, %v824
  %v834 = vmul.f32 %v751, %v824
  %v835 = vmul.f32 %v754, %v824
  %v836 = vmul.f32 %v757, %v824
  %v837 = vmul.f32 %v760, %v824
  %v838 = vmul.f32 %v763, %v824
  %v839 = vmul.f32 %v766, %v824
  %v840 = vmul.f32 %v769, %v824
  %v841 = vmul.f32 %v772, %v824
  %v842 = vmul.f32 %v775, %v824
  %v843 = vmul.f32 %v778, %v824
  %v844 = vmul.f32 %v781, %v824
  %v845 = vmul.f32 %v784, %v824
  %v846 = vmul.f32 %v787, %v824
  %v847 = vmul.f32 %v790, %v824
  %v848 = vmul.f32 %v793, %v824
  %v849 = vmul.f32 %v796, %v824
  %v850 = vmul.f32 %v799, %v824
  %v851 = vmul.f32 %v802, %v824
  %v852 = vmul.f32 %v805, %v824
  %v853 = vmul.f32 %v808, %v824
  %v854 = vmul.f32 %v811, %v824
  %v855 = vmul.f32 %v814, %v824
  %v856 = vmul.f32 %v817, %v824
  %v857 = vmul.f32 %v820, %v824
  %v858 = vld [vmem:[%s3] sm:$0x1]
  %v860 = vperm.slane %v858, 0
  %v862 = vadd.f32 %v826, %v860
  %v863 = vadd.f32 %v827, %v860
  %v864 = vadd.f32 %v828, %v860
  %v865 = vadd.f32 %v829, %v860
  %v866 = vadd.f32 %v830, %v860
  %v867 = vadd.f32 %v831, %v860
  %v868 = vadd.f32 %v832, %v860
  %v869 = vadd.f32 %v833, %v860
  %v870 = vadd.f32 %v834, %v860
  %v871 = vadd.f32 %v835, %v860
  %v872 = vadd.f32 %v836, %v860
  %v873 = vadd.f32 %v837, %v860
  %v874 = vadd.f32 %v838, %v860
  %v875 = vadd.f32 %v839, %v860
  %v876 = vadd.f32 %v840, %v860
  %v877 = vadd.f32 %v841, %v860
  %v878 = vadd.f32 %v842, %v860
  %v879 = vadd.f32 %v843, %v860
  %v880 = vadd.f32 %v844, %v860
  %v881 = vadd.f32 %v845, %v860
  %v882 = vadd.f32 %v846, %v860
  %v883 = vadd.f32 %v847, %v860
  %v884 = vadd.f32 %v848, %v860
  %v885 = vadd.f32 %v849, %v860
  %v886 = vadd.f32 %v850, %v860
  %v887 = vadd.f32 %v851, %v860
  %v888 = vadd.f32 %v852, %v860
  %v889 = vadd.f32 %v853, %v860
  %v890 = vadd.f32 %v854, %v860
  %v891 = vadd.f32 %v855, %v860
  %v892 = vadd.f32 %v856, %v860
  %v893 = vadd.f32 %v857, %v860
  %vm894 = vcmp.ge.f32.partialorder %v862, 0.0
  %vm895 = vcmp.ge.f32.partialorder %v863, 0.0
  %vm896 = vcmp.ge.f32.partialorder %v864, 0.0
  %vm897 = vcmp.ge.f32.partialorder %v865, 0.0
  %vm898 = vcmp.ge.f32.partialorder %v866, 0.0
  %vm899 = vcmp.ge.f32.partialorder %v867, 0.0
  %vm900 = vcmp.ge.f32.partialorder %v868, 0.0
  %vm901 = vcmp.ge.f32.partialorder %v869, 0.0
  %vm902 = vcmp.ge.f32.partialorder %v870, 0.0
  %vm903 = vcmp.ge.f32.partialorder %v871, 0.0
  %vm904 = vcmp.ge.f32.partialorder %v872, 0.0
  %vm905 = vcmp.ge.f32.partialorder %v873, 0.0
  %vm906 = vcmp.ge.f32.partialorder %v874, 0.0
  %vm907 = vcmp.ge.f32.partialorder %v875, 0.0
  %vm908 = vcmp.ge.f32.partialorder %v876, 0.0
  %vm909 = vcmp.ge.f32.partialorder %v877, 0.0
  %vm910 = vcmp.ge.f32.partialorder %v878, 0.0
  %vm911 = vcmp.ge.f32.partialorder %v879, 0.0
  %vm912 = vcmp.ge.f32.partialorder %v880, 0.0
  %vm913 = vcmp.ge.f32.partialorder %v881, 0.0
  %vm914 = vcmp.ge.f32.partialorder %v882, 0.0
  %vm915 = vcmp.ge.f32.partialorder %v883, 0.0
  %vm916 = vcmp.ge.f32.partialorder %v884, 0.0
  %vm917 = vcmp.ge.f32.partialorder %v885, 0.0
  %vm918 = vcmp.ge.f32.partialorder %v886, 0.0
  %vm919 = vcmp.ge.f32.partialorder %v887, 0.0
  %vm920 = vcmp.ge.f32.partialorder %v888, 0.0
  %vm921 = vcmp.ge.f32.partialorder %v889, 0.0
  %vm922 = vcmp.ge.f32.partialorder %v890, 0.0
  %vm923 = vcmp.ge.f32.partialorder %v891, 0.0
  %vm924 = vcmp.ge.f32.partialorder %v892, 0.0
  %vm925 = vcmp.ge.f32.partialorder %v893, 0.0
  %v926 = vmul.f32 %v862, 0.2
  %v927 = vmul.f32 %v863, 0.2
  %v928 = vmul.f32 %v864, 0.2
  %v929 = vmul.f32 %v865, 0.2
  %v930 = vmul.f32 %v866, 0.2
  %v931 = vmul.f32 %v867, 0.2
  %v932 = vmul.f32 %v868, 0.2
  %v933 = vmul.f32 %v869, 0.2
  %v934 = vmul.f32 %v870, 0.2
  %v935 = vmul.f32 %v871, 0.2
  %v936 = vmul.f32 %v872, 0.2
  %v937 = vmul.f32 %v873, 0.2
  %v938 = vmul.f32 %v874, 0.2
  %v939 = vmul.f32 %v875, 0.2
  %v940 = vmul.f32 %v876, 0.2
  %v941 = vmul.f32 %v877, 0.2
  %v942 = vmul.f32 %v878, 0.2
  %v943 = vmul.f32 %v879, 0.2
  %v944 = vmul.f32 %v880, 0.2
  %v945 = vmul.f32 %v881, 0.2
  %v946 = vmul.f32 %v882, 0.2
  %v947 = vmul.f32 %v883, 0.2
  %v948 = vmul.f32 %v884, 0.2
  %v949 = vmul.f32 %v885, 0.2
  %v950 = vmul.f32 %v886, 0.2
  %v951 = vmul.f32 %v887, 0.2
  %v952 = vmul.f32 %v888, 0.2
  %v953 = vmul.f32 %v889, 0.2
  %v954 = vmul.f32 %v890, 0.2
  %v955 = vmul.f32 %v891, 0.2
  %v956 = vmul.f32 %v892, 0.2
  %v957 = vmul.f32 %v893, 0.2
  %v958 = vsel %vm894, %v862, %v926
  %v959 = vsel %vm895, %v863, %v927
  %v960 = vsel %vm896, %v864, %v928
  %v961 = vsel %vm897, %v865, %v929
  %v962 = vsel %vm898, %v866, %v930
  %v963 = vsel %vm899, %v867, %v931
  %v964 = vsel %vm900, %v868, %v932
  %v965 = vsel %vm901, %v869, %v933
  %v966 = vsel %vm902, %v870, %v934
  %v967 = vsel %vm903, %v871, %v935
  %v968 = vsel %vm904, %v872, %v936
  %v969 = vsel %vm905, %v873, %v937
  %v970 = vsel %vm906, %v874, %v938
  %v971 = vsel %vm907, %v875, %v939
  %v972 = vsel %vm908, %v876, %v940
  %v973 = vsel %vm909, %v877, %v941
  %v974 = vsel %vm910, %v878, %v942
  %v975 = vsel %vm911, %v879, %v943
  %v976 = vsel %vm912, %v880, %v944
  %v977 = vsel %vm913, %v881, %v945
  %v978 = vsel %vm914, %v882, %v946
  %v979 = vsel %vm915, %v883, %v947
  %v980 = vsel %vm916, %v884, %v948
  %v981 = vsel %vm917, %v885, %v949
  %v982 = vsel %vm918, %v886, %v950
  %v983 = vsel %vm919, %v887, %v951
  %v984 = vsel %vm920, %v888, %v952
  %v985 = vsel %vm921, %v889, %v953
  %v986 = vsel %vm922, %v890, %v954
  %v987 = vsel %vm923, %v891, %v955
  %v988 = vsel %vm924, %v892, %v956
  %v989 = vsel %vm925, %v893, %v957
  %990 = vst [vmem:[%s4] sm:$0xff] %v958
  %991 = vst [vmem:[%s4 + $0x8] sm:$0xff] %v959
  %992 = vst [vmem:[%s4 + $0x10] sm:$0xff] %v960
  %993 = vst [vmem:[%s4 + $0x18] sm:$0xff] %v961
  %994 = vst [vmem:[%s4 + $0x20] sm:$0xff] %v962
  %995 = vst [vmem:[%s4 + $0x28] sm:$0xff] %v963
  %996 = vst [vmem:[%s4 + $0x30] sm:$0xff] %v964
  %997 = vst [vmem:[%s4 + $0x38] sm:$0xff] %v965
  %998 = vst [vmem:[%s4 + $0x40] sm:$0xff] %v966
  %999 = vst [vmem:[%s4 + $0x48] sm:$0xff] %v967
  %1000 = vst [vmem:[%s4 + $0x50] sm:$0xff] %v968
  %1001 = vst [vmem:[%s4 + $0x58] sm:$0xff] %v969
  %1002 = vst [vmem:[%s4 + $0x60] sm:$0xff] %v970
  %1003 = vst [vmem:[%s4 + $0x68] sm:$0xff] %v971
  %1004 = vst [vmem:[%s4 + $0x70] sm:$0xff] %v972
  %1005 = vst [vmem:[%s4 + $0x78] sm:$0xff] %v973
  %1006 = vst [vmem:[%s4 + $0x80] sm:$0xff] %v974
  %1007 = vst [vmem:[%s4 + $0x88] sm:$0xff] %v975
  %1008 = vst [vmem:[%s4 + $0x90] sm:$0xff] %v976
  %1009 = vst [vmem:[%s4 + $0x98] sm:$0xff] %v977
  %1010 = vst [vmem:[%s4 + $0xa0] sm:$0xff] %v978
  %1011 = vst [vmem:[%s4 + $0xa8] sm:$0xff] %v979
  %1012 = vst [vmem:[%s4 + $0xb0] sm:$0xff] %v980
  %1013 = vst [vmem:[%s4 + $0xb8] sm:$0xff] %v981
  %1014 = vst [vmem:[%s4 + $0xc0] sm:$0xff] %v982
  %1015 = vst [vmem:[%s4 + $0xc8] sm:$0xff] %v983
  %1016 = vst [vmem:[%s4 + $0xd0] sm:$0xff] %v984
  %1017 = vst [vmem:[%s4 + $0xd8] sm:$0xff] %v985
  %1018 = vst [vmem:[%s4 + $0xe0] sm:$0xff] %v986
  %1019 = vst [vmem:[%s4 + $0xe8] sm:$0xff] %v987
  %1020 = vst [vmem:[%s4 + $0xf0] sm:$0xff] %v988
  %1021 = vst [vmem:[%s4 + $0xf8] sm:$0xff] %v989
  // Predicated region
  $region18: #{_lambda_.8} parent=0 // pred_check
    _
  $region19: #{_lambda_.8} parent=0 // pred_check_branch
    %1023 = sbr.rel (0) target = $region21
  $region20: #{_lambda_.8} parent=0 // pred_region
    _
  $region21: #{_lambda_.8} parent=0 // pred_fallthru
    _
  // Predicated region
  $region22: #{_lambda_.8} parent=0 // pred_check
    _
  $region23: #{_lambda_.8} parent=0 // pred_check_branch
    %1025 = sbr.rel (0) target = $region25
  $region24: #{_lambda_.8} parent=0 // pred_region
    _
  $region25: #{_lambda_.8} parent=0 // pred_fallthru
    _

// kernel: _lambda_.9
$region0: #{_lambda_.9}
  #allocation0 [shape = 'u32[]', space=smem, size = 0x4, offset = 0x4, fixed_abs, tag = 'smem constant byte address 0x4 - core index']
  #allocation1 [shape = 'u32[72,128]{1,0:T(1,128)}', space=vmem, size = 0x9000, scoped, tag = 'internal scratch']
  %s0 = inlined_call_operand.vmem [shape: f32[128,640], index: 0, kind: input, shape index: {}]
  %s1 = inlined_call_operand.vmem [shape: f32[640,128], index: 1, kind: input, shape index: {}]
  %s2 = inlined_call_operand.vmem [shape: f32[1,128], index: 2, kind: input, shape index: {}]
  %s3 = inlined_call_operand.vmem [shape: f32[1,128], index: 3, kind: input, shape index: {}]
  %s4 = inlined_call_operand.vmem [shape: f32[288,128], index: 4, kind: input, shape index: {}]
  %s5 = inlined_call_operand.vmem [shape: f32[1152,256], index: 5, kind: input, shape index: {}]
  %s6 = inlined_call_operand.vmem [shape: f32[1,256], index: 6, kind: input, shape index: {}]
  %s7 = inlined_call_operand.vmem [shape: f32[1,256], index: 7, kind: input, shape index: {}]
  %s8 = inlined_call_operand.vmem [shape: f32[32,256], index: 8, kind: input, shape index: {}]
  %s9 = inlined_call_operand.vmem [shape: f32[2,32], index: 9, kind: input, shape index: {}]
  %s10 = inlined_call_operand.vmem [shape: f32[2,1], index: 10, kind: input, shape index: {}]
  %s11 = inlined_call_operand.vmem [shape: f32[2,1], index: 11, kind: output, shape index: {}]
  %s12 = sld [smem:[#allocation0]]
  $region54: #{_lambda_.9} parent=0
    _
  %s14 = ssub.s32 1, %s12
  %s15 = scalar_select 0, %s14, %s12
  // Predicated region
  $region2: #{_lambda_.9} parent=0 // pred_check
    _
  $region3: #{_lambda_.9} parent=0 // pred_check_branch
    %17 = sbr.rel (0) target = $region5
  $region4: #{_lambda_.9} parent=0 // pred_region
    _
  $region5: #{_lambda_.9} parent=0 // pred_fallthru
    _
  // Predicated region
  $region6: #{_lambda_.9} parent=0 // pred_check
    _
  $region7: #{_lambda_.9} parent=0 // pred_check_branch
    %19 = sbr.rel (0) target = $region9
  $region8: #{_lambda_.9} parent=0 // pred_region
    _
  $region9: #{_lambda_.9} parent=0 // pred_fallthru
    _
  // Predicated region
  $region10: #{_lambda_.9} parent=0 // pred_check
    _
  $region11: #{_lambda_.9} parent=0 // pred_check_branch
    %21 = sbr.rel (0) target = $region13
  $region12: #{_lambda_.9} parent=0 // pred_region
    _
  $region13: #{_lambda_.9} parent=0 // pred_fallthru
    _
  // Predicated region
  $region14: #{_lambda_.9} parent=0 // pred_check
    _
  $region15: #{_lambda_.9} parent=0 // pred_check_branch
    %23 = sbr.rel (0) target = $region17
  $region16: #{_lambda_.9} parent=0 // pred_region
    _
  $region17: #{_lambda_.9} parent=0 // pred_fallthru
    _
  // Predicated region
  $region18: #{_lambda_.9} parent=0 // pred_check
    _
  $region19: #{_lambda_.9} parent=0 // pred_check_branch
    %25 = sbr.rel (0) target = $region21
  $region20: #{_lambda_.9} parent=0 // pred_region
    _
  $region21: #{_lambda_.9} parent=0 // pred_fallthru
    _
  // Predicated region
  $region22: #{_lambda_.9} parent=0 // pred_check
    _
  $region23: #{_lambda_.9} parent=0 // pred_check_branch
    %27 = sbr.rel (0) target = $region25
  $region24: #{_lambda_.9} parent=0 // pred_region
    _
  $region25: #{_lambda_.9} parent=0 // pred_fallthru
    _
  // Predicated region
  $region26: #{_lambda_.9} parent=0 // pred_check
    _
  $region27: #{_lambda_.9} parent=0 // pred_check_branch
    %29 = sbr.rel (0) target = $region29
  $region28: #{_lambda_.9} parent=0 // pred_region
    _
  $region29: #{_lambda_.9} parent=0 // pred_fallthru
    _
  // Predicated region
  $region30: #{_lambda_.9} parent=0 // pred_check
    _
  $region31: #{_lambda_.9} parent=0 // pred_check_branch
    %31 = sbr.rel (0) target = $region33
  $region32: #{_lambda_.9} parent=0 // pred_region
    _
  $region33: #{_lambda_.9} parent=0 // pred_fallthru
    _
  // Predicated region
  $region34: #{_lambda_.9} parent=0 // pred_check
    _
  $region35: #{_lambda_.9} parent=0 // pred_check_branch
    %33 = sbr.rel (0) target = $region37
  $region36: #{_lambda_.9} parent=0 // pred_region
    _
  $region37: #{_lambda_.9} parent=0 // pred_fallthru
    _
  // Predicated region
  $region38: #{_lambda_.9} parent=0 // pred_check
    _
  $region39: #{_lambda_.9} parent=0 // pred_check_branch
    %35 = sbr.rel (0) target = $region41
  $region40: #{_lambda_.9} parent=0 // pred_region
    _
  $region41: #{_lambda_.9} parent=0 // pred_fallthru
    _
  // Predicated region
  $region42: #{_lambda_.9} parent=0 // pred_check
    _
  $region43: #{_lambda_.9} parent=0 // pred_check_branch
    %37 = sbr.rel (0) target = $region45
  $region44: #{_lambda_.9} parent=0 // pred_region
    _
  $region45: #{_lambda_.9} parent=0 // pred_fallthru
    _
  %v38 = vld [vmem:[%s0] sm:$0xff]
  %v39 = vld [vmem:[%s0 + $0x8] sm:$0xff]
  %v40 = vld [vmem:[%s0 + $0x10] sm:$0xff]
  %v41 = vld [vmem:[%s0 + $0x18] sm:$0xff]
  %v42 = vld [vmem:[%s0 + $0x20] sm:$0xff]
  %v43 = vld [vmem:[%s0 + $0x28] sm:$0xff]
  %v44 = vld [vmem:[%s0 + $0x30] sm:$0xff]
  %v45 = vld [vmem:[%s0 + $0x38] sm:$0xff]
  %v46 = vld [vmem:[%s0 + $0x40] sm:$0xff]
  %v47 = vld [vmem:[%s0 + $0x48] sm:$0xff]
  %v48 = vld [vmem:[%s0 + $0x50] sm:$0xff]
  %v49 = vld [vmem:[%s0 + $0x58] sm:$0xff]
  %v50 = vld [vmem:[%s0 + $0x60] sm:$0xff]
  %v51 = vld [vmem:[%s0 + $0x68] sm:$0xff]
  %v52 = vld [vmem:[%s0 + $0x70] sm:$0xff]
  %v53 = vld [vmem:[%s0 + $0x78] sm:$0xff]
  %v54 = vld [vmem:[%s0 + $0x80] sm:$0xff]
  %v55 = vld [vmem:[%s0 + $0x88] sm:$0xff]
  %v56 = vld [vmem:[%s0 + $0x90] sm:$0xff]
  %v57 = vld [vmem:[%s0 + $0x98] sm:$0xff]
  %v58 = vld [vmem:[%s0 + $0xa0] sm:$0xff]
  %v59 = vld [vmem:[%s0 + $0xa8] sm:$0xff]
  %v60 = vld [vmem:[%s0 + $0xb0] sm:$0xff]
  %v61 = vld [vmem:[%s0 + $0xb8] sm:$0xff]
  %v62 = vld [vmem:[%s0 + $0xc0] sm:$0xff]
  %v63 = vld [vmem:[%s0 + $0xc8] sm:$0xff]
  %v64 = vld [vmem:[%s0 + $0xd0] sm:$0xff]
  %v65 = vld [vmem:[%s0 + $0xd8] sm:$0xff]
  %v66 = vld [vmem:[%s0 + $0xe0] sm:$0xff]
  %v67 = vld [vmem:[%s0 + $0xe8] sm:$0xff]
  %v68 = vld [vmem:[%s0 + $0xf0] sm:$0xff]
  %v69 = vld [vmem:[%s0 + $0xf8] sm:$0xff]
  %v70 = vld [vmem:[%s0 + $0x100] sm:$0xff]
  %v71 = vld [vmem:[%s0 + $0x108] sm:$0xff]
  %v72 = vld [vmem:[%s0 + $0x110] sm:$0xff]
  %v73 = vld [vmem:[%s0 + $0x118] sm:$0xff]
  %v74 = vld [vmem:[%s0 + $0x120] sm:$0xff]
  %v75 = vld [vmem:[%s0 + $0x128] sm:$0xff]
  %v76 = vld [vmem:[%s0 + $0x130] sm:$0xff]
  %v77 = vld [vmem:[%s0 + $0x138] sm:$0xff]
  %v78 = vld [vmem:[%s0 + $0x140] sm:$0xff]
  %v79 = vld [vmem:[%s0 + $0x148] sm:$0xff]
  %v80 = vld [vmem:[%s0 + $0x150] sm:$0xff]
  %v81 = vld [vmem:[%s0 + $0x158] sm:$0xff]
  %v82 = vld [vmem:[%s0 + $0x160] sm:$0xff]
  %v83 = vld [vmem:[%s0 + $0x168] sm:$0xff]
  %v84 = vld [vmem:[%s0 + $0x170] sm:$0xff]
  %v85 = vld [vmem:[%s0 + $0x178] sm:$0xff]
  %v86 = vld [vmem:[%s0 + $0x180] sm:$0xff]
  %v87 = vld [vmem:[%s0 + $0x188] sm:$0xff]
  %v88 = vld [vmem:[%s0 + $0x190] sm:$0xff]
  %v89 = vld [vmem:[%s0 + $0x198] sm:$0xff]
  %v90 = vld [vmem:[%s0 + $0x1a0] sm:$0xff]
  %v91 = vld [vmem:[%s0 + $0x1a8] sm:$0xff]
  %v92 = vld [vmem:[%s0 + $0x1b0] sm:$0xff]
  %v93 = vld [vmem:[%s0 + $0x1b8] sm:$0xff]
  %v94 = vld [vmem:[%s0 + $0x1c0] sm:$0xff]
  %v95 = vld [vmem:[%s0 + $0x1c8] sm:$0xff]
  %v96 = vld [vmem:[%s0 + $0x1d0] sm:$0xff]
  %v97 = vld [vmem:[%s0 + $0x1d8] sm:$0xff]
  %v98 = vld [vmem:[%s0 + $0x1e0] sm:$0xff]
  %v99 = vld [vmem:[%s0 + $0x1e8] sm:$0xff]
  %v100 = vld [vmem:[%s0 + $0x1f0] sm:$0xff]
  %v101 = vld [vmem:[%s0 + $0x1f8] sm:$0xff]
  %v102 = vld [vmem:[%s0 + $0x200] sm:$0xff]
  %v103 = vld [vmem:[%s0 + $0x208] sm:$0xff]
  %v104 = vld [vmem:[%s0 + $0x210] sm:$0xff]
  %v105 = vld [vmem:[%s0 + $0x218] sm:$0xff]
  %v106 = vld [vmem:[%s0 + $0x220] sm:$0xff]
  %v107 = vld [vmem:[%s0 + $0x228] sm:$0xff]
  %v108 = vld [vmem:[%s0 + $0x230] sm:$0xff]
  %v109 = vld [vmem:[%s0 + $0x238] sm:$0xff]
  %v110 = vld [vmem:[%s0 + $0x240] sm:$0xff]
  %v111 = vld [vmem:[%s0 + $0x248] sm:$0xff]
  %v112 = vld [vmem:[%s0 + $0x250] sm:$0xff]
  %v113 = vld [vmem:[%s0 + $0x258] sm:$0xff]
  %v114 = vld [vmem:[%s0 + $0x260] sm:$0xff]
  %v115 = vld [vmem:[%s0 + $0x268] sm:$0xff]
  %v116 = vld [vmem:[%s0 + $0x270] sm:$0xff]
  %v117 = vld [vmem:[%s0 + $0x278] sm:$0xff]
  %v118 = vld [vmem:[%s1] sm:$0xff]
  %v119 = vld [vmem:[%s1 + $0x8] sm:$0xff]
  %v120 = vld [vmem:[%s1 + $0x10] sm:$0xff]
  %v121 = vld [vmem:[%s1 + $0x18] sm:$0xff]
  %v122 = vld [vmem:[%s1 + $0x20] sm:$0xff]
  %v123 = vld [vmem:[%s1 + $0x28] sm:$0xff]
  %v124 = vld [vmem:[%s1 + $0x30] sm:$0xff]
  %v125 = vld [vmem:[%s1 + $0x38] sm:$0xff]
  %v126 = vld [vmem:[%s1 + $0x40] sm:$0xff]
  %v127 = vld [vmem:[%s1 + $0x48] sm:$0xff]
  %v128 = vld [vmem:[%s1 + $0x50] sm:$0xff]
  %v129 = vld [vmem:[%s1 + $0x58] sm:$0xff]
  %v130 = vld [vmem:[%s1 + $0x60] sm:$0xff]
  %v131 = vld [vmem:[%s1 + $0x68] sm:$0xff]
  %v132 = vld [vmem:[%s1 + $0x70] sm:$0xff]
  %v133 = vld [vmem:[%s1 + $0x78] sm:$0xff]
  %v134 = vld [vmem:[%s1 + $0x80] sm:$0xff]
  %v135 = vld [vmem:[%s1 + $0x88] sm:$0xff]
  %v136 = vld [vmem:[%s1 + $0x90] sm:$0xff]
  %v137 = vld [vmem:[%s1 + $0x98] sm:$0xff]
  %v138 = vld [vmem:[%s1 + $0xa0] sm:$0xff]
  %v139 = vld [vmem:[%s1 + $0xa8] sm:$0xff]
  %v140 = vld [vmem:[%s1 + $0xb0] sm:$0xff]
  %v141 = vld [vmem:[%s1 + $0xb8] sm:$0xff]
  %v142 = vld [vmem:[%s1 + $0xc0] sm:$0xff]
  %v143 = vld [vmem:[%s1 + $0xc8] sm:$0xff]
  %v144 = vld [vmem:[%s1 + $0xd0] sm:$0xff]
  %v145 = vld [vmem:[%s1 + $0xd8] sm:$0xff]
  %v146 = vld [vmem:[%s1 + $0xe0] sm:$0xff]
  %v147 = vld [vmem:[%s1 + $0xe8] sm:$0xff]
  %v148 = vld [vmem:[%s1 + $0xf0] sm:$0xff]
  %v149 = vld [vmem:[%s1 + $0xf8] sm:$0xff]
  %v150 = vld [vmem:[%s1 + $0x100] sm:$0xff]
  %v151 = vld [vmem:[%s1 + $0x108] sm:$0xff]
  %v152 = vld [vmem:[%s1 + $0x110] sm:$0xff]
  %v153 = vld [vmem:[%s1 + $0x118] sm:$0xff]
  %v154 = vld [vmem:[%s1 + $0x120] sm:$0xff]
  %v155 = vld [vmem:[%s1 + $0x128] sm:$0xff]
  %v156 = vld [vmem:[%s1 + $0x130] sm:$0xff]
  %v157 = vld [vmem:[%s1 + $0x138] sm:$0xff]
  %v158 = vld [vmem:[%s1 + $0x140] sm:$0xff]
  %v159 = vld [vmem:[%s1 + $0x148] sm:$0xff]
  %v160 = vld [vmem:[%s1 + $0x150] sm:$0xff]
  %v161 = vld [vmem:[%s1 + $0x158] sm:$0xff]
  %v162 = vld [vmem:[%s1 + $0x160] sm:$0xff]
  %v163 = vld [vmem:[%s1 + $0x168] sm:$0xff]
  %v164 = vld [vmem:[%s1 + $0x170] sm:$0xff]
  %v165 = vld [vmem:[%s1 + $0x178] sm:$0xff]
  %v166 = vld [vmem:[%s1 + $0x180] sm:$0xff]
  %v167 = vld [vmem:[%s1 + $0x188] sm:$0xff]
  %v168 = vld [vmem:[%s1 + $0x190] sm:$0xff]
  %v169 = vld [vmem:[%s1 + $0x198] sm:$0xff]
  %v170 = vld [vmem:[%s1 + $0x1a0] sm:$0xff]
  %v171 = vld [vmem:[%s1 + $0x1a8] sm:$0xff]
  %v172 = vld [vmem:[%s1 + $0x1b0] sm:$0xff]
  %v173 = vld [vmem:[%s1 + $0x1b8] sm:$0xff]
  %v174 = vld [vmem:[%s1 + $0x1c0] sm:$0xff]
  %v175 = vld [vmem:[%s1 + $0x1c8] sm:$0xff]
  %v176 = vld [vmem:[%s1 + $0x1d0] sm:$0xff]
  %v177 = vld [vmem:[%s1 + $0x1d8] sm:$0xff]
  %v178 = vld [vmem:[%s1 + $0x1e0] sm:$0xff]
  %v179 = vld [vmem:[%s1 + $0x1e8] sm:$0xff]
  %v180 = vld [vmem:[%s1 + $0x1f0] sm:$0xff]
  %v181 = vld [vmem:[%s1 + $0x1f8] sm:$0xff]
  %v182 = vld [vmem:[%s1 + $0x200] sm:$0xff]
  %v183 = vld [vmem:[%s1 + $0x208] sm:$0xff]
  %v184 = vld [vmem:[%s1 + $0x210] sm:$0xff]
  %v185 = vld [vmem:[%s1 + $0x218] sm:$0xff]
  %v186 = vld [vmem:[%s1 + $0x220] sm:$0xff]
  %v187 = vld [vmem:[%s1 + $0x228] sm:$0xff]
  %v188 = vld [vmem:[%s1 + $0x230] sm:$0xff]
  %v189 = vld [vmem:[%s1 + $0x238] sm:$0xff]
  %v190 = vld [vmem:[%s1 + $0x240] sm:$0xff]
  %v191 = vld [vmem:[%s1 + $0x248] sm:$0xff]
  %v192 = vld [vmem:[%s1 + $0x250] sm:$0xff]
  %v193 = vld [vmem:[%s1 + $0x258] sm:$0xff]
  %v194 = vld [vmem:[%s1 + $0x260] sm:$0xff]
  %v195 = vld [vmem:[%s1 + $0x268] sm:$0xff]
  %v196 = vld [vmem:[%s1 + $0x270] sm:$0xff]
  %v197 = vld [vmem:[%s1 + $0x278] sm:$0xff]
  %198 = vmatpush.msra.mxu0 %v133
  %199 = vmatpush.msra.mxu0 %v132
  %200 = vmatpush.msra.mxu0 %v131
  %201 = vmatpush.msra.mxu0 %v130
  %202 = vmatpush.msra.mxu0 %v129
  %203 = vmatpush.msra.mxu0 %v128
  %204 = vmatpush.msra.mxu0 %v127
  %205 = vmatpush.msra.mxu0 %v126
  %206 = vmatpush.msra.mxu0 %v125
  %207 = vmatpush.msra.mxu0 %v124
  %208 = vmatpush.msra.mxu0 %v123
  %209 = vmatpush.msra.mxu0 %v122
  %210 = vmatpush.msra.mxu0 %v121
  %211 = vmatpush.msra.mxu0 %v120
  %212 = vmatpush.msra.mxu0 %v119
  %213 = vmatpush.msra.mxu0 %v118
  %214 = vmatmul.f32.gmra.mxu0 %v38
  %v215 = vpop.f32.mrf.mxu0
  %v216 = vadd.f32 0.0, %v215
  %217 = vmatmul.f32.gmra.mxu0 %v43
  %v218 = vpop.f32.mrf.mxu0
  %v219 = vadd.f32 0.0, %v218
  %220 = vmatmul.f32.gmra.mxu0 %v48
  %v221 = vpop.f32.mrf.mxu0
  %v222 = vadd.f32 0.0, %v221
  %223 = vmatmul.f32.gmra.mxu0 %v53
  %v224 = vpop.f32.mrf.mxu0
  %v225 = vadd.f32 0.0, %v224
  %226 = vmatmul.f32.gmra.mxu0 %v58
  %v227 = vpop.f32.mrf.mxu0
  %v228 = vadd.f32 0.0, %v227
  %229 = vmatmul.f32.gmra.mxu0 %v63
  %v230 = vpop.f32.mrf.mxu0
  %v231 = vadd.f32 0.0, %v230
  %232 = vmatmul.f32.gmra.mxu0 %v68
  %v233 = vpop.f32.mrf.mxu0
  %v234 = vadd.f32 0.0, %v233
  %235 = vmatmul.f32.gmra.mxu0 %v73
  %v236 = vpop.f32.mrf.mxu0
  %v237 = vadd.f32 0.0, %v236
  %238 = vmatmul.f32.gmra.mxu0 %v78
  %v239 = vpop.f32.mrf.mxu0
  %v240 = vadd.f32 0.0, %v239
  %241 = vmatmul.f32.gmra.mxu0 %v83
  %v242 = vpop.f32.mrf.mxu0
  %v243 = vadd.f32 0.0, %v242
  %244 = vmatmul.f32.gmra.mxu0 %v88
  %v245 = vpop.f32.mrf.mxu0
  %v246 = vadd.f32 0.0, %v245
  %247 = vmatmul.f32.gmra.mxu0 %v93
  %v248 = vpop.f32.mrf.mxu0
  %v249 = vadd.f32 0.0, %v248
  %250 = vmatmul.f32.gmra.mxu0 %v98
  %v251 = vpop.f32.mrf.mxu0
  %v252 = vadd.f32 0.0, %v251
  %253 = vmatmul.f32.gmra.mxu0 %v103
  %v254 = vpop.f32.mrf.mxu0
  %v255 = vadd.f32 0.0, %v254
  %256 = vmatmul.f32.gmra.mxu0 %v108
  %v257 = vpop.f32.mrf.mxu0
  %v258 = vadd.f32 0.0, %v257
  %259 = vmatmul.f32.gmra.mxu0 %v113
  %v260 = vpop.f32.mrf.mxu0
  %v261 = vadd.f32 0.0, %v260
  %262 = vdwg.mxu0
  %263 = vmatpush.msra.mxu0 %v149
  %264 = vmatpush.msra.mxu0 %v148
  %265 = vmatpush.msra.mxu0 %v147
  %266 = vmatpush.msra.mxu0 %v146
  %267 = vmatpush.msra.mxu0 %v145
  %268 = vmatpush.msra.mxu0 %v144
  %269 = vmatpush.msra.mxu0 %v143
  %270 = vmatpush.msra.mxu0 %v142
  %271 = vmatpush.msra.mxu0 %v141
  %272 = vmatpush.msra.mxu0 %v140
  %273 = vmatpush.msra.mxu0 %v139
  %274 = vmatpush.msra.mxu0 %v138
  %275 = vmatpush.msra.mxu0 %v137
  %276 = vmatpush.msra.mxu0 %v136
  %277 = vmatpush.msra.mxu0 %v135
  %278 = vmatpush.msra.mxu0 %v134
  %279 = vmatmul.f32.gmra.mxu0 %v39
  %v280 = vpop.f32.mrf.mxu0
  %v281 = vadd.f32 %v216, %v280
  %282 = vmatmul.f32.gmra.mxu0 %v44
  %v283 = vpop.f32.mrf.mxu0
  %v284 = vadd.f32 %v219, %v283
  %285 = vmatmul.f32.gmra.mxu0 %v49
  %v286 = vpop.f32.mrf.mxu0
  %v287 = vadd.f32 %v222, %v286
  %288 = vmatmul.f32.gmra.mxu0 %v54
  %v289 = vpop.f32.mrf.mxu0
  %v290 = vadd.f32 %v225, %v289
  %291 = vmatmul.f32.gmra.mxu0 %v59
  %v292 = vpop.f32.mrf.mxu0
  %v293 = vadd.f32 %v228, %v292
  %294 = vmatmul.f32.gmra.mxu0 %v64
  %v295 = vpop.f32.mrf.mxu0
  %v296 = vadd.f32 %v231, %v295
  %297 = vmatmul.f32.gmra.mxu0 %v69
  %v298 = vpop.f32.mrf.mxu0
  %v299 = vadd.f32 %v234, %v298
  %300 = vmatmul.f32.gmra.mxu0 %v74
  %v301 = vpop.f32.mrf.mxu0
  %v302 = vadd.f32 %v237, %v301
  %303 = vmatmul.f32.gmra.mxu0 %v79
  %v304 = vpop.f32.mrf.mxu0
  %v305 = vadd.f32 %v240, %v304
  %306 = vmatmul.f32.gmra.mxu0 %v84
  %v307 = vpop.f32.mrf.mxu0
  %v308 = vadd.f32 %v243, %v307
  %309 = vmatmul.f32.gmra.mxu0 %v89
  %v310 = vpop.f32.mrf.mxu0
  %v311 = vadd.f32 %v246, %v310
  %312 = vmatmul.f32.gmra.mxu0 %v94
  %v313 = vpop.f32.mrf.mxu0
  %v314 = vadd.f32 %v249, %v313
  %315 = vmatmul.f32.gmra.mxu0 %v99
  %v316 = vpop.f32.mrf.mxu0
  %v317 = vadd.f32 %v252, %v316
  %318 = vmatmul.f32.gmra.mxu0 %v104
  %v319 = vpop.f32.mrf.mxu0
  %v320 = vadd.f32 %v255, %v319
  %321 = vmatmul.f32.gmra.mxu0 %v109
  %v322 = vpop.f32.mrf.mxu0
  %v323 = vadd.f32 %v258, %v322
  %324 = vmatmul.f32.gmra.mxu0 %v114
  %v325 = vpop.f32.mrf.mxu0
  %v326 = vadd.f32 %v261, %v325
  %327 = vdwg.mxu0
  %328 = vmatpush.msra.mxu0 %v165
  %329 = vmatpush.msra.mxu0 %v164
  %330 = vmatpush.msra.mxu0 %v163
  %331 = vmatpush.msra.mxu0 %v162
  %332 = vmatpush.msra.mxu0 %v161
  %333 = vmatpush.msra.mxu0 %v160
  %334 = vmatpush.msra.mxu0 %v159
  %335 = vmatpush.msra.mxu0 %v158
  %336 = vmatpush.msra.mxu0 %v157
  %337 = vmatpush.msra.mxu0 %v156
  %338 = vmatpush.msra.mxu0 %v155
  %339 = vmatpush.msra.mxu0 %v154
  %340 = vmatpush.msra.mxu0 %v153
  %341 = vmatpush.msra.mxu0 %v152
  %342 = vmatpush.msra.mxu0 %v151
  %343 = vmatpush.msra.mxu0 %v150
  %344 = vmatmul.f32.gmra.mxu0 %v40
  %v345 = vpop.f32.mrf.mxu0
  %v346 = vadd.f32 %v281, %v345
  %347 = vmatmul.f32.gmra.mxu0 %v45
  %v348 = vpop.f32.mrf.mxu0
  %v349 = vadd.f32 %v284, %v348
  %350 = vmatmul.f32.gmra.mxu0 %v50
  %v351 = vpop.f32.mrf.mxu0
  %v352 = vadd.f32 %v287, %v351
  %353 = vmatmul.f32.gmra.mxu0 %v55
  %v354 = vpop.f32.mrf.mxu0
  %v355 = vadd.f32 %v290, %v354
  %356 = vmatmul.f32.gmra.mxu0 %v60
  %v357 = vpop.f32.mrf.mxu0
  %v358 = vadd.f32 %v293, %v357
  %359 = vmatmul.f32.gmra.mxu0 %v65
  %v360 = vpop.f32.mrf.mxu0
  %v361 = vadd.f32 %v296, %v360
  %362 = vmatmul.f32.gmra.mxu0 %v70
  %v363 = vpop.f32.mrf.mxu0
  %v364 = vadd.f32 %v299, %v363
  %365 = vmatmul.f32.gmra.mxu0 %v75
  %v366 = vpop.f32.mrf.mxu0
  %v367 = vadd.f32 %v302, %v366
  %368 = vmatmul.f32.gmra.mxu0 %v80
  %v369 = vpop.f32.mrf.mxu0
  %v370 = vadd.f32 %v305, %v369
  %371 = vmatmul.f32.gmra.mxu0 %v85
  %v372 = vpop.f32.mrf.mxu0
  %v373 = vadd.f32 %v308, %v372
  %374 = vmatmul.f32.gmra.mxu0 %v90
  %v375 = vpop.f32.mrf.mxu0
  %v376 = vadd.f32 %v311, %v375
  %377 = vmatmul.f32.gmra.mxu0 %v95
  %v378 = vpop.f32.mrf.mxu0
  %v379 = vadd.f32 %v314, %v378
  %380 = vmatmul.f32.gmra.mxu0 %v100
  %v381 = vpop.f32.mrf.mxu0
  %v382 = vadd.f32 %v317, %v381
  %383 = vmatmul.f32.gmra.mxu0 %v105
  %v384 = vpop.f32.mrf.mxu0
  %v385 = vadd.f32 %v320, %v384
  %386 = vmatmul.f32.gmra.mxu0 %v110
  %v387 = vpop.f32.mrf.mxu0
  %v388 = vadd.f32 %v323, %v387
  %389 = vmatmul.f32.gmra.mxu0 %v115
  %v390 = vpop.f32.mrf.mxu0
  %v391 = vadd.f32 %v326, %v390
  %392 = vdwg.mxu0
  %393 = vmatpush.msra.mxu0 %v181
  %394 = vmatpush.msra.mxu0 %v180
  %395 = vmatpush.msra.mxu0 %v179
  %396 = vmatpush.msra.mxu0 %v178
  %397 = vmatpush.msra.mxu0 %v177
  %398 = vmatpush.msra.mxu0 %v176
  %399 = vmatpush.msra.mxu0 %v175
  %400 = vmatpush.msra.mxu0 %v174
  %401 = vmatpush.msra.mxu0 %v173
  %402 = vmatpush.msra.mxu0 %v172
  %403 = vmatpush.msra.mxu0 %v171
  %404 = vmatpush.msra.mxu0 %v170
  %405 = vmatpush.msra.mxu0 %v169
  %406 = vmatpush.msra.mxu0 %v168
  %407 = vmatpush.msra.mxu0 %v167
  %408 = vmatpush.msra.mxu0 %v166
  %409 = vmatmul.f32.gmra.mxu0 %v41
  %v410 = vpop.f32.mrf.mxu0
  %v411 = vadd.f32 %v346, %v410
  %412 = vmatmul.f32.gmra.mxu0 %v46
  %v413 = vpop.f32.mrf.mxu0
  %v414 = vadd.f32 %v349, %v413
  %415 = vmatmul.f32.gmra.mxu0 %v51
  %v416 = vpop.f32.mrf.mxu0
  %v417 = vadd.f32 %v352, %v416
  %418 = vmatmul.f32.gmra.mxu0 %v56
  %v419 = vpop.f32.mrf.mxu0
  %v420 = vadd.f32 %v355, %v419
  %421 = vmatmul.f32.gmra.mxu0 %v61
  %v422 = vpop.f32.mrf.mxu0
  %v423 = vadd.f32 %v358, %v422
  %424 = vmatmul.f32.gmra.mxu0 %v66
  %v425 = vpop.f32.mrf.mxu0
  %v426 = vadd.f32 %v361, %v425
  %427 = vmatmul.f32.gmra.mxu0 %v71
  %v428 = vpop.f32.mrf.mxu0
  %v429 = vadd.f32 %v364, %v428
  %430 = vmatmul.f32.gmra.mxu0 %v76
  %v431 = vpop.f32.mrf.mxu0
  %v432 = vadd.f32 %v367, %v431
  %433 = vmatmul.f32.gmra.mxu0 %v81
  %v434 = vpop.f32.mrf.mxu0
  %v435 = vadd.f32 %v370, %v434
  %436 = vmatmul.f32.gmra.mxu0 %v86
  %v437 = vpop.f32.mrf.mxu0
  %v438 = vadd.f32 %v373, %v437
  %439 = vmatmul.f32.gmra.mxu0 %v91
  %v440 = vpop.f32.mrf.mxu0
  %v441 = vadd.f32 %v376, %v440
  %442 = vmatmul.f32.gmra.mxu0 %v96
  %v443 = vpop.f32.mrf.mxu0
  %v444 = vadd.f32 %v379, %v443
  %445 = vmatmul.f32.gmra.mxu0 %v101
  %v446 = vpop.f32.mrf.mxu0
  %v447 = vadd.f32 %v382, %v446
  %448 = vmatmul.f32.gmra.mxu0 %v106
  %v449 = vpop.f32.mrf.mxu0
  %v450 = vadd.f32 %v385, %v449
  %451 = vmatmul.f32.gmra.mxu0 %v111
  %v452 = vpop.f32.mrf.mxu0
  %v453 = vadd.f32 %v388, %v452
  %454 = vmatmul.f32.gmra.mxu0 %v116
  %v455 = vpop.f32.mrf.mxu0
  %v456 = vadd.f32 %v391, %v455
  %457 = vdwg.mxu0
  %458 = vmatpush.msra.mxu0 %v197
  %459 = vmatpush.msra.mxu0 %v196
  %460 = vmatpush.msra.mxu0 %v195
  %461 = vmatpush.msra.mxu0 %v194
  %462 = vmatpush.msra.mxu0 %v193
  %463 = vmatpush.msra.mxu0 %v192
  %464 = vmatpush.msra.mxu0 %v191
  %465 = vmatpush.msra.mxu0 %v190
  %466 = vmatpush.msra.mxu0 %v189
  %467 = vmatpush.msra.mxu0 %v188
  %468 = vmatpush.msra.mxu0 %v187
  %469 = vmatpush.msra.mxu0 %v186
  %470 = vmatpush.msra.mxu0 %v185
  %471 = vmatpush.msra.mxu0 %v184
  %472 = vmatpush.msra.mxu0 %v183
  %473 = vmatpush.msra.mxu0 %v182
  %474 = vmatmul.f32.gmra.mxu0 %v42
  %v475 = vpop.f32.mrf.mxu0
  %v476 = vadd.f32 %v411, %v475
  %477 = vmatmul.f32.gmra.mxu0 %v47
  %v478 = vpop.f32.mrf.mxu0
  %v479 = vadd.f32 %v414, %v478
  %480 = vmatmul.f32.gmra.mxu0 %v52
  %v481 = vpop.f32.mrf.mxu0
  %v482 = vadd.f32 %v417, %v481
  %483 = vmatmul.f32.gmra.mxu0 %v57
  %v484 = vpop.f32.mrf.mxu0
  %v485 = vadd.f32 %v420, %v484
  %486 = vmatmul.f32.gmra.mxu0 %v62
  %v487 = vpop.f32.mrf.mxu0
  %v488 = vadd.f32 %v423, %v487
  %489 = vmatmul.f32.gmra.mxu0 %v67
  %v490 = vpop.f32.mrf.mxu0
  %v491 = vadd.f32 %v426, %v490
  %492 = vmatmul.f32.gmra.mxu0 %v72
  %v493 = vpop.f32.mrf.mxu0
  %v494 = vadd.f32 %v429, %v493
  %495 = vmatmul.f32.gmra.mxu0 %v77
  %v496 = vpop.f32.mrf.mxu0
  %v497 = vadd.f32 %v432, %v496
  %498 = vmatmul.f32.gmra.mxu0 %v82
  %v499 = vpop.f32.mrf.mxu0
  %v500 = vadd.f32 %v435, %v499
  %501 = vmatmul.f32.gmra.mxu0 %v87
  %v502 = vpop.f32.mrf.mxu0
  %v503 = vadd.f32 %v438, %v502
  %504 = vmatmul.f32.gmra.mxu0 %v92
  %v505 = vpop.f32.mrf.mxu0
  %v506 = vadd.f32 %v441, %v505
  %507 = vmatmul.f32.gmra.mxu0 %v97
  %v508 = vpop.f32.mrf.mxu0
  %v509 = vadd.f32 %v444, %v508
  %510 = vmatmul.f32.gmra.mxu0 %v102
  %v511 = vpop.f32.mrf.mxu0
  %v512 = vadd.f32 %v447, %v511
  %513 = vmatmul.f32.gmra.mxu0 %v107
  %v514 = vpop.f32.mrf.mxu0
  %v515 = vadd.f32 %v450, %v514
  %516 = vmatmul.f32.gmra.mxu0 %v112
  %v517 = vpop.f32.mrf.mxu0
  %v518 = vadd.f32 %v453, %v517
  %519 = vmatmul.f32.gmra.mxu0 %v117
  %v520 = vpop.f32.mrf.mxu0
  %v521 = vadd.f32 %v456, %v520
  %522 = vdwg.mxu0
  %v523 = vld [vmem:[%s2] sm:$0x1]
  %v525 = vperm.slane %v523, 0
  %v527 = vmul.f32 %v476, %v525
  %v528 = vmul.f32 %v479, %v525
  %v529 = vmul.f32 %v482, %v525
  %v530 = vmul.f32 %v485, %v525
  %v531 = vmul.f32 %v488, %v525
  %v532 = vmul.f32 %v491, %v525
  %v533 = vmul.f32 %v494, %v525
  %v534 = vmul.f32 %v497, %v525
  %v535 = vmul.f32 %v500, %v525
  %v536 = vmul.f32 %v503, %v525
  %v537 = vmul.f32 %v506, %v525
  %v538 = vmul.f32 %v509, %v525
  %v539 = vmul.f32 %v512, %v525
  %v540 = vmul.f32 %v515, %v525
  %v541 = vmul.f32 %v518, %v525
  %v542 = vmul.f32 %v521, %v525
  %v543 = vld [vmem:[%s3] sm:$0x1]
  %v545 = vperm.slane %v543, 0
  %v547 = vadd.f32 %v527, %v545
  %v548 = vadd.f32 %v528, %v545
  %v549 = vadd.f32 %v529, %v545
  %v550 = vadd.f32 %v530, %v545
  %v551 = vadd.f32 %v531, %v545
  %v552 = vadd.f32 %v532, %v545
  %v553 = vadd.f32 %v533, %v545
  %v554 = vadd.f32 %v534, %v545
  %v555 = vadd.f32 %v535, %v545
  %v556 = vadd.f32 %v536, %v545
  %v557 = vadd.f32 %v537, %v545
  %v558 = vadd.f32 %v538, %v545
  %v559 = vadd.f32 %v539, %v545
  %v560 = vadd.f32 %v540, %v545
  %v561 = vadd.f32 %v541, %v545
  %v562 = vadd.f32 %v542, %v545
  %vm563 = vcmp.ge.f32.partialorder %v547, 0.0
  %vm564 = vcmp.ge.f32.partialorder %v548, 0.0
  %vm565 = vcmp.ge.f32.partialorder %v549, 0.0
  %vm566 = vcmp.ge.f32.partialorder %v550, 0.0
  %vm567 = vcmp.ge.f32.partialorder %v551, 0.0
  %vm568 = vcmp.ge.f32.partialorder %v552, 0.0
  %vm569 = vcmp.ge.f32.partialorder %v553, 0.0
  %vm570 = vcmp.ge.f32.partialorder %v554, 0.0
  %vm571 = vcmp.ge.f32.partialorder %v555, 0.0
  %vm572 = vcmp.ge.f32.partialorder %v556, 0.0
  %vm573 = vcmp.ge.f32.partialorder %v557, 0.0
  %vm574 = vcmp.ge.f32.partialorder %v558, 0.0
  %vm575 = vcmp.ge.f32.partialorder %v559, 0.0
  %vm576 = vcmp.ge.f32.partialorder %v560, 0.0
  %vm577 = vcmp.ge.f32.partialorder %v561, 0.0
  %vm578 = vcmp.ge.f32.partialorder %v562, 0.0
  %v579 = vmul.f32 %v547, 0.2
  %v580 = vmul.f32 %v548, 0.2
  %v581 = vmul.f32 %v549, 0.2
  %v582 = vmul.f32 %v550, 0.2
  %v583 = vmul.f32 %v551, 0.2
  %v584 = vmul.f32 %v552, 0.2
  %v585 = vmul.f32 %v553, 0.2
  %v586 = vmul.f32 %v554, 0.2
  %v587 = vmul.f32 %v555, 0.2
  %v588 = vmul.f32 %v556, 0.2
  %v589 = vmul.f32 %v557, 0.2
  %v590 = vmul.f32 %v558, 0.2
  %v591 = vmul.f32 %v559, 0.2
  %v592 = vmul.f32 %v560, 0.2
  %v593 = vmul.f32 %v561, 0.2
  %v594 = vmul.f32 %v562, 0.2
  %v595 = vsel %vm563, %v547, %v579
  %v596 = vsel %vm564, %v548, %v580
  %v597 = vsel %vm565, %v549, %v581
  %v598 = vsel %vm566, %v550, %v582
  %v599 = vsel %vm567, %v551, %v583
  %v600 = vsel %vm568, %v552, %v584
  %v601 = vsel %vm569, %v553, %v585
  %v602 = vsel %vm570, %v554, %v586
  %v603 = vsel %vm571, %v555, %v587
  %v604 = vsel %vm572, %v556, %v588
  %v605 = vsel %vm573, %v557, %v589
  %v606 = vsel %vm574, %v558, %v590
  %v607 = vsel %vm575, %v559, %v591
  %v608 = vsel %vm576, %v560, %v592
  %v609 = vsel %vm577, %v561, %v593
  %v610 = vsel %vm578, %v562, %v594
  %v611 = vld [vmem:[%s4] sm:$0xff]
  %v612 = vld [vmem:[%s4 + $0x8] sm:$0xff]
  %v613 = vld [vmem:[%s4 + $0x10] sm:$0xff]
  %v614 = vld [vmem:[%s4 + $0x18] sm:$0xff]
  %v615 = vld [vmem:[%s4 + $0x20] sm:$0xff]
  %v616 = vld [vmem:[%s4 + $0x28] sm:$0xff]
  %v617 = vld [vmem:[%s4 + $0x30] sm:$0xff]
  %v618 = vld [vmem:[%s4 + $0x38] sm:$0xff]
  %v619 = vld [vmem:[%s4 + $0x40] sm:$0xff]
  %v620 = vld [vmem:[%s4 + $0x48] sm:$0xff]
  %v621 = vld [vmem:[%s4 + $0x50] sm:$0xff]
  %v622 = vld [vmem:[%s4 + $0x58] sm:$0xff]
  %v623 = vld [vmem:[%s4 + $0x60] sm:$0xff]
  %v624 = vld [vmem:[%s4 + $0x68] sm:$0xff]
  %v625 = vld [vmem:[%s4 + $0x70] sm:$0xff]
  %v626 = vld [vmem:[%s4 + $0x78] sm:$0xff]
  %v627 = vld [vmem:[%s4 + $0x80] sm:$0xff]
  %v628 = vld [vmem:[%s4 + $0x88] sm:$0xff]
  %v629 = vld [vmem:[%s4 + $0x90] sm:$0xff]
  %v630 = vld [vmem:[%s4 + $0x98] sm:$0xff]
  %v631 = vld [vmem:[%s4 + $0xa0] sm:$0xff]
  %v632 = vld [vmem:[%s4 + $0xa8] sm:$0xff]
  %v633 = vld [vmem:[%s4 + $0xb0] sm:$0xff]
  %v634 = vld [vmem:[%s4 + $0xb8] sm:$0xff]
  %v635 = vld [vmem:[%s4 + $0xc0] sm:$0xff]
  %v636 = vld [vmem:[%s4 + $0xc8] sm:$0xff]
  %v637 = vld [vmem:[%s4 + $0xd0] sm:$0xff]
  %v638 = vld [vmem:[%s4 + $0xd8] sm:$0xff]
  %v639 = vld [vmem:[%s4 + $0xe0] sm:$0xff]
  %v640 = vld [vmem:[%s4 + $0xe8] sm:$0xff]
  %v641 = vld [vmem:[%s4 + $0xf0] sm:$0xff]
  %v642 = vld [vmem:[%s4 + $0xf8] sm:$0xff]
  %v643 = vld [vmem:[%s4 + $0x100] sm:$0xff]
  %v644 = vld [vmem:[%s4 + $0x108] sm:$0xff]
  %v645 = vld [vmem:[%s4 + $0x110] sm:$0xff]
  %v646 = vld [vmem:[%s4 + $0x118] sm:$0xff]
  %647 = vmatpush.msra.mxu0 %v610
  %648 = vmatpush.msra.mxu0 %v609
  %649 = vmatpush.msra.mxu0 %v608
  %650 = vmatpush.msra.mxu0 %v607
  %651 = vmatpush.msra.mxu0 %v606
  %652 = vmatpush.msra.mxu0 %v605
  %653 = vmatpush.msra.mxu0 %v604
  %654 = vmatpush.msra.mxu0 %v603
  %655 = vmatpush.msra.mxu0 %v602
  %656 = vmatpush.msra.mxu0 %v601
  %657 = vmatpush.msra.mxu0 %v600
  %658 = vmatpush.msra.mxu0 %v599
  %659 = vmatpush.msra.mxu0 %v598
  %660 = vmatpush.msra.mxu0 %v597
  %661 = vmatpush.msra.mxu0 %v596
  %662 = vmatpush.msra.mxu0 %v595
  %663 = vmatmul.f32.gmra.mxu0 %v611
  %v664 = vpop.f32.mrf.mxu0
  %v665 = vadd.f32 0.0, %v664
  %666 = vmatmul.f32.gmra.mxu0 %v612
  %v667 = vpop.f32.mrf.mxu0
  %v668 = vadd.f32 0.0, %v667
  %669 = vmatmul.f32.gmra.mxu0 %v613
  %v670 = vpop.f32.mrf.mxu0
  %v671 = vadd.f32 0.0, %v670
  %672 = vmatmul.f32.gmra.mxu0 %v614
  %v673 = vpop.f32.mrf.mxu0
  %v674 = vadd.f32 0.0, %v673
  %675 = vmatmul.f32.gmra.mxu0 %v615
  %v676 = vpop.f32.mrf.mxu0
  %v677 = vadd.f32 0.0, %v676
  %678 = vmatmul.f32.gmra.mxu0 %v616
  %v679 = vpop.f32.mrf.mxu0
  %v680 = vadd.f32 0.0, %v679
  %681 = vmatmul.f32.gmra.mxu0 %v617
  %v682 = vpop.f32.mrf.mxu0
  %v683 = vadd.f32 0.0, %v682
  %684 = vmatmul.f32.gmra.mxu0 %v618
  %v685 = vpop.f32.mrf.mxu0
  %v686 = vadd.f32 0.0, %v685
  %687 = vmatmul.f32.gmra.mxu0 %v619
  %v688 = vpop.f32.mrf.mxu0
  %v689 = vadd.f32 0.0, %v688
  %690 = vmatmul.f32.gmra.mxu0 %v620
  %v691 = vpop.f32.mrf.mxu0
  %v692 = vadd.f32 0.0, %v691
  %693 = vmatmul.f32.gmra.mxu0 %v621
  %v694 = vpop.f32.mrf.mxu0
  %v695 = vadd.f32 0.0, %v694
  %696 = vmatmul.f32.gmra.mxu0 %v622
  %v697 = vpop.f32.mrf.mxu0
  %v698 = vadd.f32 0.0, %v697
  %699 = vmatmul.f32.gmra.mxu0 %v623
  %v700 = vpop.f32.mrf.mxu0
  %v701 = vadd.f32 0.0, %v700
  %702 = vmatmul.f32.gmra.mxu0 %v624
  %v703 = vpop.f32.mrf.mxu0
  %v704 = vadd.f32 0.0, %v703
  %705 = vmatmul.f32.gmra.mxu0 %v625
  %v706 = vpop.f32.mrf.mxu0
  %v707 = vadd.f32 0.0, %v706
  %708 = vmatmul.f32.gmra.mxu0 %v626
  %v709 = vpop.f32.mrf.mxu0
  %v710 = vadd.f32 0.0, %v709
  %711 = vmatmul.f32.gmra.mxu0 %v627
  %v712 = vpop.f32.mrf.mxu0
  %v713 = vadd.f32 0.0, %v712
  %714 = vmatmul.f32.gmra.mxu0 %v628
  %v715 = vpop.f32.mrf.mxu0
  %v716 = vadd.f32 0.0, %v715
  %717 = vmatmul.f32.gmra.mxu0 %v629
  %v718 = vpop.f32.mrf.mxu0
  %v719 = vadd.f32 0.0, %v718
  %720 = vmatmul.f32.gmra.mxu0 %v630
  %v721 = vpop.f32.mrf.mxu0
  %v722 = vadd.f32 0.0, %v721
  %723 = vmatmul.f32.gmra.mxu0 %v631
  %v724 = vpop.f32.mrf.mxu0
  %v725 = vadd.f32 0.0, %v724
  %726 = vmatmul.f32.gmra.mxu0 %v632
  %v727 = vpop.f32.mrf.mxu0
  %v728 = vadd.f32 0.0, %v727
  %729 = vmatmul.f32.gmra.mxu0 %v633
  %v730 = vpop.f32.mrf.mxu0
  %v731 = vadd.f32 0.0, %v730
  %732 = vmatmul.f32.gmra.mxu0 %v634
  %v733 = vpop.f32.mrf.mxu0
  %v734 = vadd.f32 0.0, %v733
  %735 = vmatmul.f32.gmra.mxu0 %v635
  %v736 = vpop.f32.mrf.mxu0
  %v737 = vadd.f32 0.0, %v736
  %738 = vmatmul.f32.gmra.mxu0 %v636
  %v739 = vpop.f32.mrf.mxu0
  %v740 = vadd.f32 0.0, %v739
  %741 = vmatmul.f32.gmra.mxu0 %v637
  %v742 = vpop.f32.mrf.mxu0
  %v743 = vadd.f32 0.0, %v742
  %744 = vmatmul.f32.gmra.mxu0 %v638
  %v745 = vpop.f32.mrf.mxu0
  %v746 = vadd.f32 0.0, %v745
  %747 = vmatmul.f32.gmra.mxu0 %v639
  %v748 = vpop.f32.mrf.mxu0
  %v749 = vadd.f32 0.0, %v748
  %750 = vmatmul.f32.gmra.mxu0 %v640
  %v751 = vpop.f32.mrf.mxu0
  %v752 = vadd.f32 0.0, %v751
  %753 = vmatmul.f32.gmra.mxu0 %v641
  %v754 = vpop.f32.mrf.mxu0
  %v755 = vadd.f32 0.0, %v754
  %756 = vmatmul.f32.gmra.mxu0 %v642
  %v757 = vpop.f32.mrf.mxu0
  %v758 = vadd.f32 0.0, %v757
  %759 = vmatmul.f32.gmra.mxu0 %v643
  %v760 = vpop.f32.mrf.mxu0
  %v761 = vadd.f32 0.0, %v760
  %762 = vmatmul.f32.gmra.mxu0 %v644
  %v763 = vpop.f32.mrf.mxu0
  %v764 = vadd.f32 0.0, %v763
  %765 = vmatmul.f32.gmra.mxu0 %v645
  %v766 = vpop.f32.mrf.mxu0
  %v767 = vadd.f32 0.0, %v766
  %768 = vmatmul.f32.gmra.mxu0 %v646
  %v769 = vpop.f32.mrf.mxu0
  %v770 = vadd.f32 0.0, %v769
  %771 = vdwg.mxu0
  %v772 = vld [vmem:[%s5] sm:$0xff]
  %v773 = vld [vmem:[%s5 + $0x8] sm:$0xff]
  %v774 = vld [vmem:[%s5 + $0x10] sm:$0xff]
  %v775 = vld [vmem:[%s5 + $0x18] sm:$0xff]
  %v776 = vld [vmem:[%s5 + $0x20] sm:$0xff]
  %v777 = vld [vmem:[%s5 + $0x28] sm:$0xff]
  %v778 = vld [vmem:[%s5 + $0x30] sm:$0xff]
  %v779 = vld [vmem:[%s5 + $0x38] sm:$0xff]
  %v780 = vld [vmem:[%s5 + $0x40] sm:$0xff]
  %v781 = vld [vmem:[%s5 + $0x48] sm:$0xff]
  %v782 = vld [vmem:[%s5 + $0x50] sm:$0xff]
  %v783 = vld [vmem:[%s5 + $0x58] sm:$0xff]
  %v784 = vld [vmem:[%s5 + $0x60] sm:$0xff]
  %v785 = vld [vmem:[%s5 + $0x68] sm:$0xff]
  %v786 = vld [vmem:[%s5 + $0x70] sm:$0xff]
  %v787 = vld [vmem:[%s5 + $0x78] sm:$0xff]
  %v788 = vld [vmem:[%s5 + $0x80] sm:$0xff]
  %v789 = vld [vmem:[%s5 + $0x88] sm:$0xff]
  %v790 = vld [vmem:[%s5 + $0x90] sm:$0xff]
  %v791 = vld [vmem:[%s5 + $0x98] sm:$0xff]
  %v792 = vld [vmem:[%s5 + $0xa0] sm:$0xff]
  %v793 = vld [vmem:[%s5 + $0xa8] sm:$0xff]
  %v794 = vld [vmem:[%s5 + $0xb0] sm:$0xff]
  %v795 = vld [vmem:[%s5 + $0xb8] sm:$0xff]
  %v796 = vld [vmem:[%s5 + $0xc0] sm:$0xff]
  %v797 = vld [vmem:[%s5 + $0xc8] sm:$0xff]
  %v798 = vld [vmem:[%s5 + $0xd0] sm:$0xff]
  %v799 = vld [vmem:[%s5 + $0xd8] sm:$0xff]
  %v800 = vld [vmem:[%s5 + $0xe0] sm:$0xff]
  %v801 = vld [vmem:[%s5 + $0xe8] sm:$0xff]
  %v802 = vld [vmem:[%s5 + $0xf0] sm:$0xff]
  %v803 = vld [vmem:[%s5 + $0xf8] sm:$0xff]
  %v804 = vld [vmem:[%s5 + $0x100] sm:$0xff]
  %v805 = vld [vmem:[%s5 + $0x108] sm:$0xff]
  %v806 = vld [vmem:[%s5 + $0x110] sm:$0xff]
  %v807 = vld [vmem:[%s5 + $0x118] sm:$0xff]
  %v808 = vld [vmem:[%s5 + $0x120] sm:$0xff]
  %v809 = vld [vmem:[%s5 + $0x128] sm:$0xff]
  %v810 = vld [vmem:[%s5 + $0x130] sm:$0xff]
  %v811 = vld [vmem:[%s5 + $0x138] sm:$0xff]
  %v812 = vld [vmem:[%s5 + $0x140] sm:$0xff]
  %v813 = vld [vmem:[%s5 + $0x148] sm:$0xff]
  %v814 = vld [vmem:[%s5 + $0x150] sm:$0xff]
  %v815 = vld [vmem:[%s5 + $0x158] sm:$0xff]
  %v816 = vld [vmem:[%s5 + $0x160] sm:$0xff]
  %v817 = vld [vmem:[%s5 + $0x168] sm:$0xff]
  %v818 = vld [vmem:[%s5 + $0x170] sm:$0xff]
  %v819 = vld [vmem:[%s5 + $0x178] sm:$0xff]
  %v820 = vld [vmem:[%s5 + $0x180] sm:$0xff]
  %v821 = vld [vmem:[%s5 + $0x188] sm:$0xff]
  %v822 = vld [vmem:[%s5 + $0x190] sm:$0xff]
  %v823 = vld [vmem:[%s5 + $0x198] sm:$0xff]
  %v824 = vld [vmem:[%s5 + $0x1a0] sm:$0xff]
  %v825 = vld [vmem:[%s5 + $0x1a8] sm:$0xff]
  %v826 = vld [vmem:[%s5 + $0x1b0] sm:$0xff]
  %v827 = vld [vmem:[%s5 + $0x1b8] sm:$0xff]
  %v828 = vld [vmem:[%s5 + $0x1c0] sm:$0xff]
  %v829 = vld [vmem:[%s5 + $0x1c8] sm:$0xff]
  %v830 = vld [vmem:[%s5 + $0x1d0] sm:$0xff]
  %v831 = vld [vmem:[%s5 + $0x1d8] sm:$0xff]
  %v832 = vld [vmem:[%s5 + $0x1e0] sm:$0xff]
  %v833 = vld [vmem:[%s5 + $0x1e8] sm:$0xff]
  %v834 = vld [vmem:[%s5 + $0x1f0] sm:$0xff]
  %v835 = vld [vmem:[%s5 + $0x1f8] sm:$0xff]
  %836 = vmatpush.msra.mxu0 %v834
  %837 = vmatpush.msra.mxu0 %v832
  %838 = vmatpush.msra.mxu0 %v830
  %839 = vmatpush.msra.mxu0 %v828
  %840 = vmatpush.msra.mxu0 %v826
  %841 = vmatpush.msra.mxu0 %v824
  %842 = vmatpush.msra.mxu0 %v822
  %843 = vmatpush.msra.mxu0 %v820
  %844 = vmatpush.msra.mxu0 %v818
  %845 = vmatpush.msra.mxu0 %v816
  %846 = vmatpush.msra.mxu0 %v814
  %847 = vmatpush.msra.mxu0 %v812
  %848 = vmatpush.msra.mxu0 %v810
  %849 = vmatpush.msra.mxu0 %v808
  %850 = vmatpush.msra.mxu0 %v806
  %851 = vmatpush.msra.mxu0 %v804
  %852 = vmatmul.f32.gmra.mxu0 %v677
  %v853 = vpop.f32.mrf.mxu0
  %v854 = vadd.f32 0.0, %v853
  %855 = vmatmul.f32.gmra.mxu0 %v680
  %v856 = vpop.f32.mrf.mxu0
  %v857 = vadd.f32 0.0, %v856
  %858 = vmatmul.f32.gmra.mxu0 %v683
  %v859 = vpop.f32.mrf.mxu0
  %v860 = vadd.f32 0.0, %v859
  %861 = vmatmul.f32.gmra.mxu0 %v686
  %v862 = vpop.f32.mrf.mxu0
  %v863 = vadd.f32 0.0, %v862
  %864 = vdwg.mxu0
  %865 = vmatpush.msra.mxu0 %v835
  %866 = vmatpush.msra.mxu0 %v833
  %867 = vmatpush.msra.mxu0 %v831
  %868 = vmatpush.msra.mxu0 %v829
  %869 = vmatpush.msra.mxu0 %v827
  %870 = vmatpush.msra.mxu0 %v825
  %871 = vmatpush.msra.mxu0 %v823
  %872 = vmatpush.msra.mxu0 %v821
  %873 = vmatpush.msra.mxu0 %v819
  %874 = vmatpush.msra.mxu0 %v817
  %875 = vmatpush.msra.mxu0 %v815
  %876 = vmatpush.msra.mxu0 %v813
  %877 = vmatpush.msra.mxu0 %v811
  %878 = vmatpush.msra.mxu0 %v809
  %879 = vmatpush.msra.mxu0 %v807
  %880 = vmatpush.msra.mxu0 %v805
  %881 = vmatmul.f32.gmra.mxu0 %v677
  %v882 = vpop.f32.mrf.mxu0
  %v883 = vadd.f32 0.0, %v882
  %884 = vmatmul.f32.gmra.mxu0 %v680
  %v885 = vpop.f32.mrf.mxu0
  %v886 = vadd.f32 0.0, %v885
  %887 = vmatmul.f32.gmra.mxu0 %v683
  %v888 = vpop.f32.mrf.mxu0
  %v889 = vadd.f32 0.0, %v888
  %890 = vmatmul.f32.gmra.mxu0 %v686
  %v891 = vpop.f32.mrf.mxu0
  %v892 = vadd.f32 0.0, %v891
  %893 = vdwg.mxu0
  %894 = vmatpush.msra.mxu0 %v802
  %895 = vmatpush.msra.mxu0 %v800
  %896 = vmatpush.msra.mxu0 %v798
  %897 = vmatpush.msra.mxu0 %v796
  %898 = vmatpush.msra.mxu0 %v794
  %899 = vmatpush.msra.mxu0 %v792
  %900 = vmatpush.msra.mxu0 %v790
  %901 = vmatpush.msra.mxu0 %v788
  %902 = vmatpush.msra.mxu0 %v786
  %903 = vmatpush.msra.mxu0 %v784
  %904 = vmatpush.msra.mxu0 %v782
  %905 = vmatpush.msra.mxu0 %v780
  %906 = vmatpush.msra.mxu0 %v778
  %907 = vmatpush.msra.mxu0 %v776
  %908 = vmatpush.msra.mxu0 %v774
  %909 = vmatpush.msra.mxu0 %v772
  %910 = vmatmul.f32.gmra.mxu0 %v665
  %v911 = vpop.f32.mrf.mxu0
  %v912 = vadd.f32 %v854, %v911
  %913 = vmatmul.f32.gmra.mxu0 %v668
  %v914 = vpop.f32.mrf.mxu0
  %v915 = vadd.f32 %v857, %v914
  %916 = vmatmul.f32.gmra.mxu0 %v671
  %v917 = vpop.f32.mrf.mxu0
  %v918 = vadd.f32 %v860, %v917
  %919 = vmatmul.f32.gmra.mxu0 %v674
  %v920 = vpop.f32.mrf.mxu0
  %v921 = vadd.f32 %v863, %v920
  %922 = vdwg.mxu0
  %923 = vmatpush.msra.mxu0 %v803
  %924 = vmatpush.msra.mxu0 %v801
  %925 = vmatpush.msra.mxu0 %v799
  %926 = vmatpush.msra.mxu0 %v797
  %927 = vmatpush.msra.mxu0 %v795
  %928 = vmatpush.msra.mxu0 %v793
  %929 = vmatpush.msra.mxu0 %v791
  %930 = vmatpush.msra.mxu0 %v789
  %931 = vmatpush.msra.mxu0 %v787
  %932 = vmatpush.msra.mxu0 %v785
  %933 = vmatpush.msra.mxu0 %v783
  %934 = vmatpush.msra.mxu0 %v781
  %935 = vmatpush.msra.mxu0 %v779
  %936 = vmatpush.msra.mxu0 %v777
  %937 = vmatpush.msra.mxu0 %v775
  %938 = vmatpush.msra.mxu0 %v773
  %939 = vmatmul.f32.gmra.mxu0 %v665
  %v940 = vpop.f32.mrf.mxu0
  %v941 = vadd.f32 %v883, %v940
  %942 = vmatmul.f32.gmra.mxu0 %v668
  %v943 = vpop.f32.mrf.mxu0
  %v944 = vadd.f32 %v886, %v943
  %945 = vmatmul.f32.gmra.mxu0 %v671
  %v946 = vpop.f32.mrf.mxu0
  %v947 = vadd.f32 %v889, %v946
  %948 = vmatmul.f32.gmra.mxu0 %v674
  %v949 = vpop.f32.mrf.mxu0
  %v950 = vadd.f32 %v892, %v949
  %951 = vdwg.mxu0
  %v952 = vld [vmem:[%s5 + $0x200] sm:$0xff]
  %v953 = vld [vmem:[%s5 + $0x208] sm:$0xff]
  %v954 = vld [vmem:[%s5 + $0x210] sm:$0xff]
  %v955 = vld [vmem:[%s5 + $0x218] sm:$0xff]
  %v956 = vld [vmem:[%s5 + $0x220] sm:$0xff]
  %v957 = vld [vmem:[%s5 + $0x228] sm:$0xff]
  %v958 = vld [vmem:[%s5 + $0x230] sm:$0xff]
  %v959 = vld [vmem:[%s5 + $0x238] sm:$0xff]
  %v960 = vld [vmem:[%s5 + $0x240] sm:$0xff]
  %v961 = vld [vmem:[%s5 + $0x248] sm:$0xff]
  %v962 = vld [vmem:[%s5 + $0x250] sm:$0xff]
  %v963 = vld [vmem:[%s5 + $0x258] sm:$0xff]
  %v964 = vld [vmem:[%s5 + $0x260] sm:$0xff]
  %v965 = vld [vmem:[%s5 + $0x268] sm:$0xff]
  %v966 = vld [vmem:[%s5 + $0x270] sm:$0xff]
  %v967 = vld [vmem:[%s5 + $0x278] sm:$0xff]
  %v968 = vld [vmem:[%s5 + $0x280] sm:$0xff]
  %v969 = vld [vmem:[%s5 + $0x288] sm:$0xff]
  %v970 = vld [vmem:[%s5 + $0x290] sm:$0xff]
  %v971 = vld [vmem:[%s5 + $0x298] sm:$0xff]
  %v972 = vld [vmem:[%s5 + $0x2a0] sm:$0xff]
  %v973 = vld [vmem:[%s5 + $0x2a8] sm:$0xff]
  %v974 = vld [vmem:[%s5 + $0x2b0] sm:$0xff]
  %v975 = vld [vmem:[%s5 + $0x2b8] sm:$0xff]
  %v976 = vld [vmem:[%s5 + $0x2c0] sm:$0xff]
  %v977 = vld [vmem:[%s5 + $0x2c8] sm:$0xff]
  %v978 = vld [vmem:[%s5 + $0x2d0] sm:$0xff]
  %v979 = vld [vmem:[%s5 + $0x2d8] sm:$0xff]
  %v980 = vld [vmem:[%s5 + $0x2e0] sm:$0xff]
  %v981 = vld [vmem:[%s5 + $0x2e8] sm:$0xff]
  %v982 = vld [vmem:[%s5 + $0x2f0] sm:$0xff]
  %v983 = vld [vmem:[%s5 + $0x2f8] sm:$0xff]
  %984 = vmatpush.msra.mxu0 %v982
  %985 = vmatpush.msra.mxu0 %v980
  %986 = vmatpush.msra.mxu0 %v978
  %987 = vmatpush.msra.mxu0 %v976
  %988 = vmatpush.msra.mxu0 %v974
  %989 = vmatpush.msra.mxu0 %v972
  %990 = vmatpush.msra.mxu0 %v970
  %991 = vmatpush.msra.mxu0 %v968
  %992 = vmatpush.msra.mxu0 %v966
  %993 = vmatpush.msra.mxu0 %v964
  %994 = vmatpush.msra.mxu0 %v962
  %995 = vmatpush.msra.mxu0 %v960
  %996 = vmatpush.msra.mxu0 %v958
  %997 = vmatpush.msra.mxu0 %v956
  %998 = vmatpush.msra.mxu0 %v954
  %999 = vmatpush.msra.mxu0 %v952
  %1000 = vmatmul.f32.gmra.mxu0 %v689
  %v1001 = vpop.f32.mrf.mxu0
  %v1002 = vadd.f32 0.0, %v1001
  %1003 = vmatmul.f32.gmra.mxu0 %v692
  %v1004 = vpop.f32.mrf.mxu0
  %v1005 = vadd.f32 0.0, %v1004
  %1006 = vmatmul.f32.gmra.mxu0 %v695
  %v1007 = vpop.f32.mrf.mxu0
  %v1008 = vadd.f32 0.0, %v1007
  %1009 = vmatmul.f32.gmra.mxu0 %v698
  %v1010 = vpop.f32.mrf.mxu0
  %v1011 = vadd.f32 0.0, %v1010
  %1012 = vdwg.mxu0
  %1013 = vmatpush.msra.mxu0 %v983
  %1014 = vmatpush.msra.mxu0 %v981
  %1015 = vmatpush.msra.mxu0 %v979
  %1016 = vmatpush.msra.mxu0 %v977
  %1017 = vmatpush.msra.mxu0 %v975
  %1018 = vmatpush.msra.mxu0 %v973
  %1019 = vmatpush.msra.mxu0 %v971
  %1020 = vmatpush.msra.mxu0 %v969
  %1021 = vmatpush.msra.mxu0 %v967
  %1022 = vmatpush.msra.mxu0 %v965
  %1023 = vmatpush.msra.mxu0 %v963
  %1024 = vmatpush.msra.mxu0 %v961
  %1025 = vmatpush.msra.mxu0 %v959
  %1026 = vmatpush.msra.mxu0 %v957
  %1027 = vmatpush.msra.mxu0 %v955
  %1028 = vmatpush.msra.mxu0 %v953
  %1029 = vmatmul.f32.gmra.mxu0 %v689
  %v1030 = vpop.f32.mrf.mxu0
  %v1031 = vadd.f32 0.0, %v1030
  %1032 = vmatmul.f32.gmra.mxu0 %v692
  %v1033 = vpop.f32.mrf.mxu0
  %v1034 = vadd.f32 0.0, %v1033
  %1035 = vmatmul.f32.gmra.mxu0 %v695
  %v1036 = vpop.f32.mrf.mxu0
  %v1037 = vadd.f32 0.0, %v1036
  %1038 = vmatmul.f32.gmra.mxu0 %v698
  %v1039 = vpop.f32.mrf.mxu0
  %v1040 = vadd.f32 0.0, %v1039
  %1041 = vdwg.mxu0
  %v1042 = vadd.f32 %v912, %v1002
  %v1043 = vadd.f32 %v941, %v1031
  %v1044 = vadd.f32 %v915, %v1005
  %v1045 = vadd.f32 %v944, %v1034
  %v1046 = vadd.f32 %v918, %v1008
  %v1047 = vadd.f32 %v947, %v1037
  %v1048 = vadd.f32 %v921, %v1011
  %v1049 = vadd.f32 %v950, %v1040
  %v1050 = vld [vmem:[%s5 + $0x300] sm:$0xff]
  %v1051 = vld [vmem:[%s5 + $0x308] sm:$0xff]
  %v1052 = vld [vmem:[%s5 + $0x310] sm:$0xff]
  %v1053 = vld [vmem:[%s5 + $0x318] sm:$0xff]
  %v1054 = vld [vmem:[%s5 + $0x320] sm:$0xff]
  %v1055 = vld [vmem:[%s5 + $0x328] sm:$0xff]
  %v1056 = vld [vmem:[%s5 + $0x330] sm:$0xff]
  %v1057 = vld [vmem:[%s5 + $0x338] sm:$0xff]
  %v1058 = vld [vmem:[%s5 + $0x340] sm:$0xff]
  %v1059 = vld [vmem:[%s5 + $0x348] sm:$0xff]
  %v1060 = vld [vmem:[%s5 + $0x350] sm:$0xff]
  %v1061 = vld [vmem:[%s5 + $0x358] sm:$0xff]
  %v1062 = vld [vmem:[%s5 + $0x360] sm:$0xff]
  %v1063 = vld [vmem:[%s5 + $0x368] sm:$0xff]
  %v1064 = vld [vmem:[%s5 + $0x370] sm:$0xff]
  %v1065 = vld [vmem:[%s5 + $0x378] sm:$0xff]
  %v1066 = vld [vmem:[%s5 + $0x380] sm:$0xff]
  %v1067 = vld [vmem:[%s5 + $0x388] sm:$0xff]
  %v1068 = vld [vmem:[%s5 + $0x390] sm:$0xff]
  %v1069 = vld [vmem:[%s5 + $0x398] sm:$0xff]
  %v1070 = vld [vmem:[%s5 + $0x3a0] sm:$0xff]
  %v1071 = vld [vmem:[%s5 + $0x3a8] sm:$0xff]
  %v1072 = vld [vmem:[%s5 + $0x3b0] sm:$0xff]
  %v1073 = vld [vmem:[%s5 + $0x3b8] sm:$0xff]
  %v1074 = vld [vmem:[%s5 + $0x3c0] sm:$0xff]
  %v1075 = vld [vmem:[%s5 + $0x3c8] sm:$0xff]
  %v1076 = vld [vmem:[%s5 + $0x3d0] sm:$0xff]
  %v1077 = vld [vmem:[%s5 + $0x3d8] sm:$0xff]
  %v1078 = vld [vmem:[%s5 + $0x3e0] sm:$0xff]
  %v1079 = vld [vmem:[%s5 + $0x3e8] sm:$0xff]
  %v1080 = vld [vmem:[%s5 + $0x3f0] sm:$0xff]
  %v1081 = vld [vmem:[%s5 + $0x3f8] sm:$0xff]
  %1082 = vmatpush.msra.mxu0 %v1080
  %1083 = vmatpush.msra.mxu0 %v1078
  %1084 = vmatpush.msra.mxu0 %v1076
  %1085 = vmatpush.msra.mxu0 %v1074
  %1086 = vmatpush.msra.mxu0 %v1072
  %1087 = vmatpush.msra.mxu0 %v1070
  %1088 = vmatpush.msra.mxu0 %v1068
  %1089 = vmatpush.msra.mxu0 %v1066
  %1090 = vmatpush.msra.mxu0 %v1064
  %1091 = vmatpush.msra.mxu0 %v1062
  %1092 = vmatpush.msra.mxu0 %v1060
  %1093 = vmatpush.msra.mxu0 %v1058
  %1094 = vmatpush.msra.mxu0 %v1056
  %1095 = vmatpush.msra.mxu0 %v1054
  %1096 = vmatpush.msra.mxu0 %v1052
  %1097 = vmatpush.msra.mxu0 %v1050
  %1098 = vmatmul.f32.gmra.mxu0 %v701
  %v1099 = vpop.f32.mrf.mxu0
  %v1100 = vadd.f32 0.0, %v1099
  %1101 = vmatmul.f32.gmra.mxu0 %v704
  %v1102 = vpop.f32.mrf.mxu0
  %v1103 = vadd.f32 0.0, %v1102
  %1104 = vmatmul.f32.gmra.mxu0 %v707
  %v1105 = vpop.f32.mrf.mxu0
  %v1106 = vadd.f32 0.0, %v1105
  %1107 = vmatmul.f32.gmra.mxu0 %v710
  %v1108 = vpop.f32.mrf.mxu0
  %v1109 = vadd.f32 0.0, %v1108
  %1110 = vdwg.mxu0
  %1111 = vmatpush.msra.mxu0 %v1081
  %1112 = vmatpush.msra.mxu0 %v1079
  %1113 = vmatpush.msra.mxu0 %v1077
  %1114 = vmatpush.msra.mxu0 %v1075
  %1115 = vmatpush.msra.mxu0 %v1073
  %1116 = vmatpush.msra.mxu0 %v1071
  %1117 = vmatpush.msra.mxu0 %v1069
  %1118 = vmatpush.msra.mxu0 %v1067
  %1119 = vmatpush.msra.mxu0 %v1065
  %1120 = vmatpush.msra.mxu0 %v1063
  %1121 = vmatpush.msra.mxu0 %v1061
  %1122 = vmatpush.msra.mxu0 %v1059
  %1123 = vmatpush.msra.mxu0 %v1057
  %1124 = vmatpush.msra.mxu0 %v1055
  %1125 = vmatpush.msra.mxu0 %v1053
  %1126 = vmatpush.msra.mxu0 %v1051
  %1127 = vmatmul.f32.gmra.mxu0 %v701
  %v1128 = vpop.f32.mrf.mxu0
  %v1129 = vadd.f32 0.0, %v1128
  %1130 = vmatmul.f32.gmra.mxu0 %v704
  %v1131 = vpop.f32.mrf.mxu0
  %v1132 = vadd.f32 0.0, %v1131
  %1133 = vmatmul.f32.gmra.mxu0 %v707
  %v1134 = vpop.f32.mrf.mxu0
  %v1135 = vadd.f32 0.0, %v1134
  %1136 = vmatmul.f32.gmra.mxu0 %v710
  %v1137 = vpop.f32.mrf.mxu0
  %v1138 = vadd.f32 0.0, %v1137
  %1139 = vdwg.mxu0
  %v1140 = vadd.f32 %v1042, %v1100
  %v1141 = vadd.f32 %v1043, %v1129
  %v1142 = vadd.f32 %v1044, %v1103
  %v1143 = vadd.f32 %v1045, %v1132
  %v1144 = vadd.f32 %v1046, %v1106
  %v1145 = vadd.f32 %v1047, %v1135
  %v1146 = vadd.f32 %v1048, %v1109
  %v1147 = vadd.f32 %v1049, %v1138
  %v1148 = vld [vmem:[%s5 + $0x400] sm:$0xff]
  %v1149 = vld [vmem:[%s5 + $0x408] sm:$0xff]
  %v1150 = vld [vmem:[%s5 + $0x410] sm:$0xff]
  %v1151 = vld [vmem:[%s5 + $0x418] sm:$0xff]
  %v1152 = vld [vmem:[%s5 + $0x420] sm:$0xff]
  %v1153 = vld [vmem:[%s5 + $0x428] sm:$0xff]
  %v1154 = vld [vmem:[%s5 + $0x430] sm:$0xff]
  %v1155 = vld [vmem:[%s5 + $0x438] sm:$0xff]
  %v1156 = vld [vmem:[%s5 + $0x440] sm:$0xff]
  %v1157 = vld [vmem:[%s5 + $0x448] sm:$0xff]
  %v1158 = vld [vmem:[%s5 + $0x450] sm:$0xff]
  %v1159 = vld [vmem:[%s5 + $0x458] sm:$0xff]
  %v1160 = vld [vmem:[%s5 + $0x460] sm:$0xff]
  %v1161 = vld [vmem:[%s5 + $0x468] sm:$0xff]
  %v1162 = vld [vmem:[%s5 + $0x470] sm:$0xff]
  %v1163 = vld [vmem:[%s5 + $0x478] sm:$0xff]
  %v1164 = vld [vmem:[%s5 + $0x480] sm:$0xff]
  %v1165 = vld [vmem:[%s5 + $0x488] sm:$0xff]
  %v1166 = vld [vmem:[%s5 + $0x490] sm:$0xff]
  %v1167 = vld [vmem:[%s5 + $0x498] sm:$0xff]
  %v1168 = vld [vmem:[%s5 + $0x4a0] sm:$0xff]
  %v1169 = vld [vmem:[%s5 + $0x4a8] sm:$0xff]
  %v1170 = vld [vmem:[%s5 + $0x4b0] sm:$0xff]
  %v1171 = vld [vmem:[%s5 + $0x4b8] sm:$0xff]
  %v1172 = vld [vmem:[%s5 + $0x4c0] sm:$0xff]
  %v1173 = vld [vmem:[%s5 + $0x4c8] sm:$0xff]
  %v1174 = vld [vmem:[%s5 + $0x4d0] sm:$0xff]
  %v1175 = vld [vmem:[%s5 + $0x4d8] sm:$0xff]
  %v1176 = vld [vmem:[%s5 + $0x4e0] sm:$0xff]
  %v1177 = vld [vmem:[%s5 + $0x4e8] sm:$0xff]
  %v1178 = vld [vmem:[%s5 + $0x4f0] sm:$0xff]
  %v1179 = vld [vmem:[%s5 + $0x4f8] sm:$0xff]
  %1180 = vmatpush.msra.mxu0 %v1178
  %1181 = vmatpush.msra.mxu0 %v1176
  %1182 = vmatpush.msra.mxu0 %v1174
  %1183 = vmatpush.msra.mxu0 %v1172
  %1184 = vmatpush.msra.mxu0 %v1170
  %1185 = vmatpush.msra.mxu0 %v1168
  %1186 = vmatpush.msra.mxu0 %v1166
  %1187 = vmatpush.msra.mxu0 %v1164
  %1188 = vmatpush.msra.mxu0 %v1162
  %1189 = vmatpush.msra.mxu0 %v1160
  %1190 = vmatpush.msra.mxu0 %v1158
  %1191 = vmatpush.msra.mxu0 %v1156
  %1192 = vmatpush.msra.mxu0 %v1154
  %1193 = vmatpush.msra.mxu0 %v1152
  %1194 = vmatpush.msra.mxu0 %v1150
  %1195 = vmatpush.msra.mxu0 %v1148
  %1196 = vmatmul.f32.gmra.mxu0 %v713
  %v1197 = vpop.f32.mrf.mxu0
  %v1198 = vadd.f32 0.0, %v1197
  %1199 = vmatmul.f32.gmra.mxu0 %v716
  %v1200 = vpop.f32.mrf.mxu0
  %v1201 = vadd.f32 0.0, %v1200
  %1202 = vmatmul.f32.gmra.mxu0 %v719
  %v1203 = vpop.f32.mrf.mxu0
  %v1204 = vadd.f32 0.0, %v1203
  %1205 = vmatmul.f32.gmra.mxu0 %v722
  %v1206 = vpop.f32.mrf.mxu0
  %v1207 = vadd.f32 0.0, %v1206
  %1208 = vdwg.mxu0
  %1209 = vmatpush.msra.mxu0 %v1179
  %1210 = vmatpush.msra.mxu0 %v1177
  %1211 = vmatpush.msra.mxu0 %v1175
  %1212 = vmatpush.msra.mxu0 %v1173
  %1213 = vmatpush.msra.mxu0 %v1171
  %1214 = vmatpush.msra.mxu0 %v1169
  %1215 = vmatpush.msra.mxu0 %v1167
  %1216 = vmatpush.msra.mxu0 %v1165
  %1217 = vmatpush.msra.mxu0 %v1163
  %1218 = vmatpush.msra.mxu0 %v1161
  %1219 = vmatpush.msra.mxu0 %v1159
  %1220 = vmatpush.msra.mxu0 %v1157
  %1221 = vmatpush.msra.mxu0 %v1155
  %1222 = vmatpush.msra.mxu0 %v1153
  %1223 = vmatpush.msra.mxu0 %v1151
  %1224 = vmatpush.msra.mxu0 %v1149
  %1225 = vmatmul.f32.gmra.mxu0 %v713
  %v1226 = vpop.f32.mrf.mxu0
  %v1227 = vadd.f32 0.0, %v1226
  %1228 = vmatmul.f32.gmra.mxu0 %v716
  %v1229 = vpop.f32.mrf.mxu0
  %v1230 = vadd.f32 0.0, %v1229
  %1231 = vmatmul.f32.gmra.mxu0 %v719
  %v1232 = vpop.f32.mrf.mxu0
  %v1233 = vadd.f32 0.0, %v1232
  %1234 = vmatmul.f32.gmra.mxu0 %v722
  %v1235 = vpop.f32.mrf.mxu0
  %v1236 = vadd.f32 0.0, %v1235
  %1237 = vdwg.mxu0
  %v1238 = vadd.f32 %v1140, %v1198
  %v1239 = vadd.f32 %v1141, %v1227
  %v1240 = vadd.f32 %v1142, %v1201
  %v1241 = vadd.f32 %v1143, %v1230
  %v1242 = vadd.f32 %v1144, %v1204
  %v1243 = vadd.f32 %v1145, %v1233
  %v1244 = vadd.f32 %v1146, %v1207
  %v1245 = vadd.f32 %v1147, %v1236
  %v1246 = vld [vmem:[%s5 + $0x500] sm:$0xff]
  %v1247 = vld [vmem:[%s5 + $0x508] sm:$0xff]
  %v1248 = vld [vmem:[%s5 + $0x510] sm:$0xff]
  %v1249 = vld [vmem:[%s5 + $0x518] sm:$0xff]
  %v1250 = vld [vmem:[%s5 + $0x520] sm:$0xff]
  %v1251 = vld [vmem:[%s5 + $0x528] sm:$0xff]
  %v1252 = vld [vmem:[%s5 + $0x530] sm:$0xff]
  %v1253 = vld [vmem:[%s5 + $0x538] sm:$0xff]
  %v1254 = vld [vmem:[%s5 + $0x540] sm:$0xff]
  %v1255 = vld [vmem:[%s5 + $0x548] sm:$0xff]
  %v1256 = vld [vmem:[%s5 + $0x550] sm:$0xff]
  %v1257 = vld [vmem:[%s5 + $0x558] sm:$0xff]
  %v1258 = vld [vmem:[%s5 + $0x560] sm:$0xff]
  %v1259 = vld [vmem:[%s5 + $0x568] sm:$0xff]
  %v1260 = vld [vmem:[%s5 + $0x570] sm:$0xff]
  %v1261 = vld [vmem:[%s5 + $0x578] sm:$0xff]
  %v1262 = vld [vmem:[%s5 + $0x580] sm:$0xff]
  %v1263 = vld [vmem:[%s5 + $0x588] sm:$0xff]
  %v1264 = vld [vmem:[%s5 + $0x590] sm:$0xff]
  %v1265 = vld [vmem:[%s5 + $0x598] sm:$0xff]
  %v1266 = vld [vmem:[%s5 + $0x5a0] sm:$0xff]
  %v1267 = vld [vmem:[%s5 + $0x5a8] sm:$0xff]
  %v1268 = vld [vmem:[%s5 + $0x5b0] sm:$0xff]
  %v1269 = vld [vmem:[%s5 + $0x5b8] sm:$0xff]
  %v1270 = vld [vmem:[%s5 + $0x5c0] sm:$0xff]
  %v1271 = vld [vmem:[%s5 + $0x5c8] sm:$0xff]
  %v1272 = vld [vmem:[%s5 + $0x5d0] sm:$0xff]
  %v1273 = vld [vmem:[%s5 + $0x5d8] sm:$0xff]
  %v1274 = vld [vmem:[%s5 + $0x5e0] sm:$0xff]
  %v1275 = vld [vmem:[%s5 + $0x5e8] sm:$0xff]
  %v1276 = vld [vmem:[%s5 + $0x5f0] sm:$0xff]
  %v1277 = vld [vmem:[%s5 + $0x5f8] sm:$0xff]
  %1278 = vmatpush.msra.mxu0 %v1276
  %1279 = vmatpush.msra.mxu0 %v1274
  %1280 = vmatpush.msra.mxu0 %v1272
  %1281 = vmatpush.msra.mxu0 %v1270
  %1282 = vmatpush.msra.mxu0 %v1268
  %1283 = vmatpush.msra.mxu0 %v1266
  %1284 = vmatpush.msra.mxu0 %v1264
  %1285 = vmatpush.msra.mxu0 %v1262
  %1286 = vmatpush.msra.mxu0 %v1260
  %1287 = vmatpush.msra.mxu0 %v1258
  %1288 = vmatpush.msra.mxu0 %v1256
  %1289 = vmatpush.msra.mxu0 %v1254
  %1290 = vmatpush.msra.mxu0 %v1252
  %1291 = vmatpush.msra.mxu0 %v1250
  %1292 = vmatpush.msra.mxu0 %v1248
  %1293 = vmatpush.msra.mxu0 %v1246
  %1294 = vmatmul.f32.gmra.mxu0 %v725
  %v1295 = vpop.f32.mrf.mxu0
  %v1296 = vadd.f32 0.0, %v1295
  %1297 = vmatmul.f32.gmra.mxu0 %v728
  %v1298 = vpop.f32.mrf.mxu0
  %v1299 = vadd.f32 0.0, %v1298
  %1300 = vmatmul.f32.gmra.mxu0 %v731
  %v1301 = vpop.f32.mrf.mxu0
  %v1302 = vadd.f32 0.0, %v1301
  %1303 = vmatmul.f32.gmra.mxu0 %v734
  %v1304 = vpop.f32.mrf.mxu0
  %v1305 = vadd.f32 0.0, %v1304
  %1306 = vdwg.mxu0
  %1307 = vmatpush.msra.mxu0 %v1277
  %1308 = vmatpush.msra.mxu0 %v1275
  %1309 = vmatpush.msra.mxu0 %v1273
  %1310 = vmatpush.msra.mxu0 %v1271
  %1311 = vmatpush.msra.mxu0 %v1269
  %1312 = vmatpush.msra.mxu0 %v1267
  %1313 = vmatpush.msra.mxu0 %v1265
  %1314 = vmatpush.msra.mxu0 %v1263
  %1315 = vmatpush.msra.mxu0 %v1261
  %1316 = vmatpush.msra.mxu0 %v1259
  %1317 = vmatpush.msra.mxu0 %v1257
  %1318 = vmatpush.msra.mxu0 %v1255
  %1319 = vmatpush.msra.mxu0 %v1253
  %1320 = vmatpush.msra.mxu0 %v1251
  %1321 = vmatpush.msra.mxu0 %v1249
  %1322 = vmatpush.msra.mxu0 %v1247
  %1323 = vmatmul.f32.gmra.mxu0 %v725
  %v1324 = vpop.f32.mrf.mxu0
  %v1325 = vadd.f32 0.0, %v1324
  %1326 = vmatmul.f32.gmra.mxu0 %v728
  %v1327 = vpop.f32.mrf.mxu0
  %v1328 = vadd.f32 0.0, %v1327
  %1329 = vmatmul.f32.gmra.mxu0 %v731
  %v1330 = vpop.f32.mrf.mxu0
  %v1331 = vadd.f32 0.0, %v1330
  %1332 = vmatmul.f32.gmra.mxu0 %v734
  %v1333 = vpop.f32.mrf.mxu0
  %v1334 = vadd.f32 0.0, %v1333
  %1335 = vdwg.mxu0
  %v1336 = vadd.f32 %v1238, %v1296
  %v1337 = vadd.f32 %v1239, %v1325
  %v1338 = vadd.f32 %v1240, %v1299
  %v1339 = vadd.f32 %v1241, %v1328
  %v1340 = vadd.f32 %v1242, %v1302
  %v1341 = vadd.f32 %v1243, %v1331
  %v1342 = vadd.f32 %v1244, %v1305
  %v1343 = vadd.f32 %v1245, %v1334
  %v1344 = vld [vmem:[%s5 + $0x600] sm:$0xff]
  %v1345 = vld [vmem:[%s5 + $0x608] sm:$0xff]
  %v1346 = vld [vmem:[%s5 + $0x610] sm:$0xff]
  %v1347 = vld [vmem:[%s5 + $0x618] sm:$0xff]
  %v1348 = vld [vmem:[%s5 + $0x620] sm:$0xff]
  %v1349 = vld [vmem:[%s5 + $0x628] sm:$0xff]
  %v1350 = vld [vmem:[%s5 + $0x630] sm:$0xff]
  %v1351 = vld [vmem:[%s5 + $0x638] sm:$0xff]
  %v1352 = vld [vmem:[%s5 + $0x640] sm:$0xff]
  %v1353 = vld [vmem:[%s5 + $0x648] sm:$0xff]
  %v1354 = vld [vmem:[%s5 + $0x650] sm:$0xff]
  %v1355 = vld [vmem:[%s5 + $0x658] sm:$0xff]
  %v1356 = vld [vmem:[%s5 + $0x660] sm:$0xff]
  %v1357 = vld [vmem:[%s5 + $0x668] sm:$0xff]
  %v1358 = vld [vmem:[%s5 + $0x670] sm:$0xff]
  %v1359 = vld [vmem:[%s5 + $0x678] sm:$0xff]
  %v1360 = vld [vmem:[%s5 + $0x680] sm:$0xff]
  %v1361 = vld [vmem:[%s5 + $0x688] sm:$0xff]
  %v1362 = vld [vmem:[%s5 + $0x690] sm:$0xff]
  %v1363 = vld [vmem:[%s5 + $0x698] sm:$0xff]
  %v1364 = vld [vmem:[%s5 + $0x6a0] sm:$0xff]
  %v1365 = vld [vmem:[%s5 + $0x6a8] sm:$0xff]
  %v1366 = vld [vmem:[%s5 + $0x6b0] sm:$0xff]
  %v1367 = vld [vmem:[%s5 + $0x6b8] sm:$0xff]
  %v1368 = vld [vmem:[%s5 + $0x6c0] sm:$0xff]
  %v1369 = vld [vmem:[%s5 + $0x6c8] sm:$0xff]
  %v1370 = vld [vmem:[%s5 + $0x6d0] sm:$0xff]
  %v1371 = vld [vmem:[%s5 + $0x6d8] sm:$0xff]
  %v1372 = vld [vmem:[%s5 + $0x6e0] sm:$0xff]
  %v1373 = vld [vmem:[%s5 + $0x6e8] sm:$0xff]
  %v1374 = vld [vmem:[%s5 + $0x6f0] sm:$0xff]
  %v1375 = vld [vmem:[%s5 + $0x6f8] sm:$0xff]
  %1376 = vmatpush.msra.mxu0 %v1374
  %1377 = vmatpush.msra.mxu0 %v1372
  %1378 = vmatpush.msra.mxu0 %v1370
  %1379 = vmatpush.msra.mxu0 %v1368
  %1380 = vmatpush.msra.mxu0 %v1366
  %1381 = vmatpush.msra.mxu0 %v1364
  %1382 = vmatpush.msra.mxu0 %v1362
  %1383 = vmatpush.msra.mxu0 %v1360
  %1384 = vmatpush.msra.mxu0 %v1358
  %1385 = vmatpush.msra.mxu0 %v1356
  %1386 = vmatpush.msra.mxu0 %v1354
  %1387 = vmatpush.msra.mxu0 %v1352
  %1388 = vmatpush.msra.mxu0 %v1350
  %1389 = vmatpush.msra.mxu0 %v1348
  %1390 = vmatpush.msra.mxu0 %v1346
  %1391 = vmatpush.msra.mxu0 %v1344
  %1392 = vmatmul.f32.gmra.mxu0 %v737
  %v1393 = vpop.f32.mrf.mxu0
  %v1394 = vadd.f32 0.0, %v1393
  %1395 = vmatmul.f32.gmra.mxu0 %v740
  %v1396 = vpop.f32.mrf.mxu0
  %v1397 = vadd.f32 0.0, %v1396
  %1398 = vmatmul.f32.gmra.mxu0 %v743
  %v1399 = vpop.f32.mrf.mxu0
  %v1400 = vadd.f32 0.0, %v1399
  %1401 = vmatmul.f32.gmra.mxu0 %v746
  %v1402 = vpop.f32.mrf.mxu0
  %v1403 = vadd.f32 0.0, %v1402
  %1404 = vdwg.mxu0
  %1405 = vmatpush.msra.mxu0 %v1375
  %1406 = vmatpush.msra.mxu0 %v1373
  %1407 = vmatpush.msra.mxu0 %v1371
  %1408 = vmatpush.msra.mxu0 %v1369
  %1409 = vmatpush.msra.mxu0 %v1367
  %1410 = vmatpush.msra.mxu0 %v1365
  %1411 = vmatpush.msra.mxu0 %v1363
  %1412 = vmatpush.msra.mxu0 %v1361
  %1413 = vmatpush.msra.mxu0 %v1359
  %1414 = vmatpush.msra.mxu0 %v1357
  %1415 = vmatpush.msra.mxu0 %v1355
  %1416 = vmatpush.msra.mxu0 %v1353
  %1417 = vmatpush.msra.mxu0 %v1351
  %1418 = vmatpush.msra.mxu0 %v1349
  %1419 = vmatpush.msra.mxu0 %v1347
  %1420 = vmatpush.msra.mxu0 %v1345
  %1421 = vmatmul.f32.gmra.mxu0 %v737
  %v1422 = vpop.f32.mrf.mxu0
  %v1423 = vadd.f32 0.0, %v1422
  %1424 = vmatmul.f32.gmra.mxu0 %v740
  %v1425 = vpop.f32.mrf.mxu0
  %v1426 = vadd.f32 0.0, %v1425
  %1427 = vmatmul.f32.gmra.mxu0 %v743
  %v1428 = vpop.f32.mrf.mxu0
  %v1429 = vadd.f32 0.0, %v1428
  %1430 = vmatmul.f32.gmra.mxu0 %v746
  %v1431 = vpop.f32.mrf.mxu0
  %v1432 = vadd.f32 0.0, %v1431
  %1433 = vdwg.mxu0
  %v1434 = vadd.f32 %v1336, %v1394
  %v1435 = vadd.f32 %v1337, %v1423
  %v1436 = vadd.f32 %v1338, %v1397
  %v1437 = vadd.f32 %v1339, %v1426
  %v1438 = vadd.f32 %v1340, %v1400
  %v1439 = vadd.f32 %v1341, %v1429
  %v1440 = vadd.f32 %v1342, %v1403
  %v1441 = vadd.f32 %v1343, %v1432
  %v1442 = vld [vmem:[%s5 + $0x700] sm:$0xff]
  %v1443 = vld [vmem:[%s5 + $0x708] sm:$0xff]
  %v1444 = vld [vmem:[%s5 + $0x710] sm:$0xff]
  %v1445 = vld [vmem:[%s5 + $0x718] sm:$0xff]
  %v1446 = vld [vmem:[%s5 + $0x720] sm:$0xff]
  %v1447 = vld [vmem:[%s5 + $0x728] sm:$0xff]
  %v1448 = vld [vmem:[%s5 + $0x730] sm:$0xff]
  %v1449 = vld [vmem:[%s5 + $0x738] sm:$0xff]
  %v1450 = vld [vmem:[%s5 + $0x740] sm:$0xff]
  %v1451 = vld [vmem:[%s5 + $0x748] sm:$0xff]
  %v1452 = vld [vmem:[%s5 + $0x750] sm:$0xff]
  %v1453 = vld [vmem:[%s5 + $0x758] sm:$0xff]
  %v1454 = vld [vmem:[%s5 + $0x760] sm:$0xff]
  %v1455 = vld [vmem:[%s5 + $0x768] sm:$0xff]
  %v1456 = vld [vmem:[%s5 + $0x770] sm:$0xff]
  %v1457 = vld [vmem:[%s5 + $0x778] sm:$0xff]
  %v1458 = vld [vmem:[%s5 + $0x780] sm:$0xff]
  %v1459 = vld [vmem:[%s5 + $0x788] sm:$0xff]
  %v1460 = vld [vmem:[%s5 + $0x790] sm:$0xff]
  %v1461 = vld [vmem:[%s5 + $0x798] sm:$0xff]
  %v1462 = vld [vmem:[%s5 + $0x7a0] sm:$0xff]
  %v1463 = vld [vmem:[%s5 + $0x7a8] sm:$0xff]
  %v1464 = vld [vmem:[%s5 + $0x7b0] sm:$0xff]
  %v1465 = vld [vmem:[%s5 + $0x7b8] sm:$0xff]
  %v1466 = vld [vmem:[%s5 + $0x7c0] sm:$0xff]
  %v1467 = vld [vmem:[%s5 + $0x7c8] sm:$0xff]
  %v1468 = vld [vmem:[%s5 + $0x7d0] sm:$0xff]
  %v1469 = vld [vmem:[%s5 + $0x7d8] sm:$0xff]
  %v1470 = vld [vmem:[%s5 + $0x7e0] sm:$0xff]
  %v1471 = vld [vmem:[%s5 + $0x7e8] sm:$0xff]
  %v1472 = vld [vmem:[%s5 + $0x7f0] sm:$0xff]
  %v1473 = vld [vmem:[%s5 + $0x7f8] sm:$0xff]
  %1474 = vmatpush.msra.mxu0 %v1472
  %1475 = vmatpush.msra.mxu0 %v1470
  %1476 = vmatpush.msra.mxu0 %v1468
  %1477 = vmatpush.msra.mxu0 %v1466
  %1478 = vmatpush.msra.mxu0 %v1464
  %1479 = vmatpush.msra.mxu0 %v1462
  %1480 = vmatpush.msra.mxu0 %v1460
  %1481 = vmatpush.msra.mxu0 %v1458
  %1482 = vmatpush.msra.mxu0 %v1456
  %1483 = vmatpush.msra.mxu0 %v1454
  %1484 = vmatpush.msra.mxu0 %v1452
  %1485 = vmatpush.msra.mxu0 %v1450
  %1486 = vmatpush.msra.mxu0 %v1448
  %1487 = vmatpush.msra.mxu0 %v1446
  %1488 = vmatpush.msra.mxu0 %v1444
  %1489 = vmatpush.msra.mxu0 %v1442
  %1490 = vmatmul.f32.gmra.mxu0 %v749
  %v1491 = vpop.f32.mrf.mxu0
  %v1492 = vadd.f32 0.0, %v1491
  %1493 = vmatmul.f32.gmra.mxu0 %v752
  %v1494 = vpop.f32.mrf.mxu0
  %v1495 = vadd.f32 0.0, %v1494
  %1496 = vmatmul.f32.gmra.mxu0 %v755
  %v1497 = vpop.f32.mrf.mxu0
  %v1498 = vadd.f32 0.0, %v1497
  %1499 = vmatmul.f32.gmra.mxu0 %v758
  %v1500 = vpop.f32.mrf.mxu0
  %v1501 = vadd.f32 0.0, %v1500
  %1502 = vdwg.mxu0
  %1503 = vmatpush.msra.mxu0 %v1473
  %1504 = vmatpush.msra.mxu0 %v1471
  %1505 = vmatpush.msra.mxu0 %v1469
  %1506 = vmatpush.msra.mxu0 %v1467
  %1507 = vmatpush.msra.mxu0 %v1465
  %1508 = vmatpush.msra.mxu0 %v1463
  %1509 = vmatpush.msra.mxu0 %v1461
  %1510 = vmatpush.msra.mxu0 %v1459
  %1511 = vmatpush.msra.mxu0 %v1457
  %1512 = vmatpush.msra.mxu0 %v1455
  %1513 = vmatpush.msra.mxu0 %v1453
  %1514 = vmatpush.msra.mxu0 %v1451
  %1515 = vmatpush.msra.mxu0 %v1449
  %1516 = vmatpush.msra.mxu0 %v1447
  %1517 = vmatpush.msra.mxu0 %v1445
  %1518 = vmatpush.msra.mxu0 %v1443
  %1519 = vmatmul.f32.gmra.mxu0 %v749
  %v1520 = vpop.f32.mrf.mxu0
  %v1521 = vadd.f32 0.0, %v1520
  %1522 = vmatmul.f32.gmra.mxu0 %v752
  %v1523 = vpop.f32.mrf.mxu0
  %v1524 = vadd.f32 0.0, %v1523
  %1525 = vmatmul.f32.gmra.mxu0 %v755
  %v1526 = vpop.f32.mrf.mxu0
  %v1527 = vadd.f32 0.0, %v1526
  %1528 = vmatmul.f32.gmra.mxu0 %v758
  %v1529 = vpop.f32.mrf.mxu0
  %v1530 = vadd.f32 0.0, %v1529
  %1531 = vdwg.mxu0
  %v1532 = vadd.f32 %v1434, %v1492
  %v1533 = vadd.f32 %v1435, %v1521
  %v1534 = vadd.f32 %v1436, %v1495
  %v1535 = vadd.f32 %v1437, %v1524
  %v1536 = vadd.f32 %v1438, %v1498
  %v1537 = vadd.f32 %v1439, %v1527
  %v1538 = vadd.f32 %v1440, %v1501
  %v1539 = vadd.f32 %v1441, %v1530
  %v1540 = vld [vmem:[%s5 + $0x800] sm:$0xff]
  %v1541 = vld [vmem:[%s5 + $0x808] sm:$0xff]
  %v1542 = vld [vmem:[%s5 + $0x810] sm:$0xff]
  %v1543 = vld [vmem:[%s5 + $0x818] sm:$0xff]
  %v1544 = vld [vmem:[%s5 + $0x820] sm:$0xff]
  %v1545 = vld [vmem:[%s5 + $0x828] sm:$0xff]
  %v1546 = vld [vmem:[%s5 + $0x830] sm:$0xff]
  %v1547 = vld [vmem:[%s5 + $0x838] sm:$0xff]
  %v1548 = vld [vmem:[%s5 + $0x840] sm:$0xff]
  %v1549 = vld [vmem:[%s5 + $0x848] sm:$0xff]
  %v1550 = vld [vmem:[%s5 + $0x850] sm:$0xff]
  %v1551 = vld [vmem:[%s5 + $0x858] sm:$0xff]
  %v1552 = vld [vmem:[%s5 + $0x860] sm:$0xff]
  %v1553 = vld [vmem:[%s5 + $0x868] sm:$0xff]
  %v1554 = vld [vmem:[%s5 + $0x870] sm:$0xff]
  %v1555 = vld [vmem:[%s5 + $0x878] sm:$0xff]
  %v1556 = vld [vmem:[%s5 + $0x880] sm:$0xff]
  %v1557 = vld [vmem:[%s5 + $0x888] sm:$0xff]
  %v1558 = vld [vmem:[%s5 + $0x890] sm:$0xff]
  %v1559 = vld [vmem:[%s5 + $0x898] sm:$0xff]
  %v1560 = vld [vmem:[%s5 + $0x8a0] sm:$0xff]
  %v1561 = vld [vmem:[%s5 + $0x8a8] sm:$0xff]
  %v1562 = vld [vmem:[%s5 + $0x8b0] sm:$0xff]
  %v1563 = vld [vmem:[%s5 + $0x8b8] sm:$0xff]
  %v1564 = vld [vmem:[%s5 + $0x8c0] sm:$0xff]
  %v1565 = vld [vmem:[%s5 + $0x8c8] sm:$0xff]
  %v1566 = vld [vmem:[%s5 + $0x8d0] sm:$0xff]
  %v1567 = vld [vmem:[%s5 + $0x8d8] sm:$0xff]
  %v1568 = vld [vmem:[%s5 + $0x8e0] sm:$0xff]
  %v1569 = vld [vmem:[%s5 + $0x8e8] sm:$0xff]
  %v1570 = vld [vmem:[%s5 + $0x8f0] sm:$0xff]
  %v1571 = vld [vmem:[%s5 + $0x8f8] sm:$0xff]
  %1572 = vmatpush.msra.mxu0 %v1570
  %1573 = vmatpush.msra.mxu0 %v1568
  %1574 = vmatpush.msra.mxu0 %v1566
  %1575 = vmatpush.msra.mxu0 %v1564
  %1576 = vmatpush.msra.mxu0 %v1562
  %1577 = vmatpush.msra.mxu0 %v1560
  %1578 = vmatpush.msra.mxu0 %v1558
  %1579 = vmatpush.msra.mxu0 %v1556
  %1580 = vmatpush.msra.mxu0 %v1554
  %1581 = vmatpush.msra.mxu0 %v1552
  %1582 = vmatpush.msra.mxu0 %v1550
  %1583 = vmatpush.msra.mxu0 %v1548
  %1584 = vmatpush.msra.mxu0 %v1546
  %1585 = vmatpush.msra.mxu0 %v1544
  %1586 = vmatpush.msra.mxu0 %v1542
  %1587 = vmatpush.msra.mxu0 %v1540
  %1588 = vmatmul.f32.gmra.mxu0 %v761
  %v1589 = vpop.f32.mrf.mxu0
  %v1590 = vadd.f32 0.0, %v1589
  %1591 = vmatmul.f32.gmra.mxu0 %v764
  %v1592 = vpop.f32.mrf.mxu0
  %v1593 = vadd.f32 0.0, %v1592
  %1594 = vmatmul.f32.gmra.mxu0 %v767
  %v1595 = vpop.f32.mrf.mxu0
  %v1596 = vadd.f32 0.0, %v1595
  %1597 = vmatmul.f32.gmra.mxu0 %v770
  %v1598 = vpop.f32.mrf.mxu0
  %v1599 = vadd.f32 0.0, %v1598
  %1600 = vdwg.mxu0
  %1601 = vmatpush.msra.mxu0 %v1571
  %1602 = vmatpush.msra.mxu0 %v1569
  %1603 = vmatpush.msra.mxu0 %v1567
  %1604 = vmatpush.msra.mxu0 %v1565
  %1605 = vmatpush.msra.mxu0 %v1563
  %1606 = vmatpush.msra.mxu0 %v1561
  %1607 = vmatpush.msra.mxu0 %v1559
  %1608 = vmatpush.msra.mxu0 %v1557
  %1609 = vmatpush.msra.mxu0 %v1555
  %1610 = vmatpush.msra.mxu0 %v1553
  %1611 = vmatpush.msra.mxu0 %v1551
  %1612 = vmatpush.msra.mxu0 %v1549
  %1613 = vmatpush.msra.mxu0 %v1547
  %1614 = vmatpush.msra.mxu0 %v1545
  %1615 = vmatpush.msra.mxu0 %v1543
  %1616 = vmatpush.msra.mxu0 %v1541
  %1617 = vmatmul.f32.gmra.mxu0 %v761
  %v1618 = vpop.f32.mrf.mxu0
  %v1619 = vadd.f32 0.0, %v1618
  %1620 = vmatmul.f32.gmra.mxu0 %v764
  %v1621 = vpop.f32.mrf.mxu0
  %v1622 = vadd.f32 0.0, %v1621
  %1623 = vmatmul.f32.gmra.mxu0 %v767
  %v1624 = vpop.f32.mrf.mxu0
  %v1625 = vadd.f32 0.0, %v1624
  %1626 = vmatmul.f32.gmra.mxu0 %v770
  %v1627 = vpop.f32.mrf.mxu0
  %v1628 = vadd.f32 0.0, %v1627
  %1629 = vdwg.mxu0
  %v1630 = vadd.f32 %v1532, %v1590
  %v1631 = vadd.f32 %v1533, %v1619
  %v1632 = vadd.f32 %v1534, %v1593
  %v1633 = vadd.f32 %v1535, %v1622
  %v1634 = vadd.f32 %v1536, %v1596
  %v1635 = vadd.f32 %v1537, %v1625
  %v1636 = vadd.f32 %v1538, %v1599
  %v1637 = vadd.f32 %v1539, %v1628
  %v1638 = vld [vmem:[%s6] sm:$0x3]
  %v1640 = vperm.slane %v1638, 0
  %v1641 = vperm.slane %v1638, 1
  %v1644 = vmul.f32 %v1630, %v1640
  %v1645 = vmul.f32 %v1631, %v1641
  %v1646 = vmul.f32 %v1632, %v1640
  %v1647 = vmul.f32 %v1633, %v1641
  %v1648 = vmul.f32 %v1634, %v1640
  %v1649 = vmul.f32 %v1635, %v1641
  %v1650 = vmul.f32 %v1636, %v1640
  %v1651 = vmul.f32 %v1637, %v1641
  %v1652 = vld [vmem:[%s7] sm:$0x3]
  %v1654 = vperm.slane %v1652, 0
  %v1655 = vperm.slane %v1652, 1
  %v1658 = vadd.f32 %v1644, %v1654
  %v1659 = vadd.f32 %v1645, %v1655
  %v1660 = vadd.f32 %v1646, %v1654
  %v1661 = vadd.f32 %v1647, %v1655
  %v1662 = vadd.f32 %v1648, %v1654
  %v1663 = vadd.f32 %v1649, %v1655
  %v1664 = vadd.f32 %v1650, %v1654
  %v1665 = vadd.f32 %v1651, %v1655
  %vm1666 = vcmp.ge.f32.partialorder %v1658, 0.0
  %vm1667 = vcmp.ge.f32.partialorder %v1659, 0.0
  %vm1668 = vcmp.ge.f32.partialorder %v1660, 0.0
  %vm1669 = vcmp.ge.f32.partialorder %v1661, 0.0
  %vm1670 = vcmp.ge.f32.partialorder %v1662, 0.0
  %vm1671 = vcmp.ge.f32.partialorder %v1663, 0.0
  %vm1672 = vcmp.ge.f32.partialorder %v1664, 0.0
  %vm1673 = vcmp.ge.f32.partialorder %v1665, 0.0
  %v1674 = vmul.f32 %v1658, 0.2
  %v1675 = vmul.f32 %v1659, 0.2
  %v1676 = vmul.f32 %v1660, 0.2
  %v1677 = vmul.f32 %v1661, 0.2
  %v1678 = vmul.f32 %v1662, 0.2
  %v1679 = vmul.f32 %v1663, 0.2
  %v1680 = vmul.f32 %v1664, 0.2
  %v1681 = vmul.f32 %v1665, 0.2
  %v1682 = vsel %vm1666, %v1658, %v1674
  %v1683 = vsel %vm1667, %v1659, %v1675
  %v1684 = vsel %vm1668, %v1660, %v1676
  %v1685 = vsel %vm1669, %v1661, %v1677
  %v1686 = vsel %vm1670, %v1662, %v1678
  %v1687 = vsel %vm1671, %v1663, %v1679
  %v1688 = vsel %vm1672, %v1664, %v1680
  %v1689 = vsel %vm1673, %v1665, %v1681
  %v1690 = vld [vmem:[%s8] sm:$0xff]
  %v1691 = vld [vmem:[%s8 + $0x8] sm:$0xff]
  %v1692 = vld [vmem:[%s8 + $0x10] sm:$0xff]
  %v1693 = vld [vmem:[%s8 + $0x18] sm:$0xff]
  %v1694 = vld [vmem:[%s8 + $0x20] sm:$0xff]
  %v1695 = vld [vmem:[%s8 + $0x28] sm:$0xff]
  %v1696 = vld [vmem:[%s8 + $0x30] sm:$0xff]
  %v1697 = vld [vmem:[%s8 + $0x38] sm:$0xff]
  %v1698 = vmul.f32 %v1682, %v1690
  %v1699 = vmul.f32 %v1683, %v1691
  %v1700 = vmul.f32 %v1684, %v1692
  %v1701 = vmul.f32 %v1685, %v1693
  %v1702 = vmul.f32 %v1686, %v1694
  %v1703 = vmul.f32 %v1687, %v1695
  %v1704 = vmul.f32 %v1688, %v1696
  %v1705 = vmul.f32 %v1689, %v1697
  %v1706 = vld [vmem:[%s9] sm:$0x3]
  %vm1707 = vcmask 261120
  %v1709 = vsel %vm1707, %v1706, 0
  %1711 = vmatpush.msra.mxu0 0.0
  %1712 = vmatpush.msra.mxu0 0.0
  %1713 = vmatpush.msra.mxu0 0.0
  %1714 = vmatpush.msra.mxu0 0.0
  %1715 = vmatpush.msra.mxu0 0.0
  %1716 = vmatpush.msra.mxu0 0.0
  %1717 = vmatpush.msra.mxu0 0.0
  %1718 = vmatpush.msra.mxu0 0.0
  %1719 = vmatpush.msra.mxu0 0.0
  %1720 = vmatpush.msra.mxu0 0.0
  %1721 = vmatpush.msra.mxu0 0.0
  %1722 = vmatpush.msra.mxu0 0.0
  %1723 = vmatpush.msra.mxu0 %v1704
  %1724 = vmatpush.msra.mxu0 %v1702
  %1725 = vmatpush.msra.mxu0 %v1700
  %1726 = vmatpush.msra.mxu0 %v1698
  %1727 = vmatmul.f32.gmra.mxu0 %v1709
  %v1728 = vpop.f32.mrf.mxu0
  %v1729 = vadd.f32 0.0, %v1728
  %1730 = vdwg.mxu0
  %1731 = vmatpush.msra.mxu0 0.0
  %1732 = vmatpush.msra.mxu0 0.0
  %1733 = vmatpush.msra.mxu0 0.0
  %1734 = vmatpush.msra.mxu0 0.0
  %1735 = vmatpush.msra.mxu0 0.0
  %1736 = vmatpush.msra.mxu0 0.0
  %1737 = vmatpush.msra.mxu0 0.0
  %1738 = vmatpush.msra.mxu0 0.0
  %1739 = vmatpush.msra.mxu0 0.0
  %1740 = vmatpush.msra.mxu0 0.0
  %1741 = vmatpush.msra.mxu0 0.0
  %1742 = vmatpush.msra.mxu0 0.0
  %1743 = vmatpush.msra.mxu0 %v1705
  %1744 = vmatpush.msra.mxu0 %v1703
  %1745 = vmatpush.msra.mxu0 %v1701
  %1746 = vmatpush.msra.mxu0 %v1699
  %1747 = vmatmul.f32.gmra.mxu0 %v1709
  %v1748 = vpop.f32.mrf.mxu0
  %v1749 = vadd.f32 0.0, %v1748
  %1750 = vdwg.mxu0
  %vm1751 = vcmask 1041408
  %v1752 = vsel %vm1751, %v1729, 0.0
  %v1753 = vsel %vm1751, %v1749, 0.0
  %v1754 = vadd.f32 %v1752, %v1753
  %1755 = vadd.xlane.f32.xlu0 %v1754
  %v1756 = vpop.xlane.xlu0 %1755
  %v1757 = vld [vmem:[%s10] sm:$0x3]
  %v1758 = vadd.f32 %v1756, %v1757
  %vm1759 = vcmask 1024
  %1760 = vst.msk [vmem:[%s11] sm:$0x3] %vm1759, %v1758
  // Predicated region
  $region46: #{_lambda_.9} parent=0 // pred_check
    _
  $region47: #{_lambda_.9} parent=0 // pred_check_branch
    %1762 = sbr.rel (0) target = $region49
  $region48: #{_lambda_.9} parent=0 // pred_region
    _
  $region49: #{_lambda_.9} parent=0 // pred_fallthru
    _
  // Predicated region
  $region50: #{_lambda_.9} parent=0 // pred_check
    _
  $region51: #{_lambda_.9} parent=0 // pred_check_branch
    %1764 = sbr.rel (0) target = $region53
  $region52: #{_lambda_.9} parent=0 // pred_region
    _
  $region53: #{_lambda_.9} parent=0 // pred_fallthru
    _

</llo_original>
